<compile_context>
chip_gen: v6e
topology: v6e:2x2x1
jax: 0.10.0
libtpu: 0.0.40
codegen_flags: <defaults>
</compile_context>

<pallas_src>
import functools
import math

import jax
import jax.numpy as jnp
from jax import lax
from jax.experimental import pallas as pl
from jax.experimental.pallas import tpu as pltpu

_F32 = jnp.float32
_BF16 = jnp.bfloat16


# ----------------------------- in-kernel helpers -----------------------------

def _layernorm(x, gamma, beta, eps=1e-5):
    mu = jnp.mean(x, axis=-1, keepdims=True)
    var = jnp.mean((x - mu) ** 2, axis=-1, keepdims=True)
    inv = lax.rsqrt(var + eps)
    return (x - mu) * inv * gamma + beta


def _linear(x, w_ref, b_ref):
    """x: [T, Din] f32, w: [Din, Dout] bf16, b: [1, Dout] f32 -> [T, Dout] f32."""
    return (jnp.dot(x.astype(_BF16), w_ref[...],
                    preferred_element_type=_F32) + b_ref[...])


def _split_heads(x2d, num_heads, dh):
    """[T, H*dh] -> [H, T, dh] via static slices (no matmuls)."""
    return jnp.stack(
        [x2d[:, h * dh:(h + 1) * dh] for h in range(num_heads)], axis=0)


def _merge_heads(ctx):
    """[H, T, dh] -> [T, H*dh] via lane concat (no matmuls)."""
    return jnp.concatenate([ctx[h] for h in range(ctx.shape[0])], axis=1)


def _attention(q, k, v, *, num_heads, causal):
    """q: [Tq, D] f32, k/v: [Tk, D] f32 -> [Tq, D] f32.

    All contractions are single head-batched einsums (batch dim leading).
    """
    Tq, D = q.shape
    Tk = k.shape[0]
    dh = D // num_heads
    scale = 1.0 / math.sqrt(dh)

    qh = _split_heads(q, num_heads, dh).astype(_BF16)   # [H, Tq, dh]
    kh = _split_heads(k, num_heads, dh).astype(_BF16)   # [H, Tk, dh]
    vh = _split_heads(v, num_heads, dh).astype(_BF16)   # [H, Tk, dh]

    s = jnp.einsum('hqd,hkd->hqk', qh, kh,
                   preferred_element_type=_F32) * scale  # [H, Tq, Tk] f32
    if causal:  # mask built once per kernel (not per head)
        row = lax.broadcasted_iota(jnp.int32, (Tq, Tk), 0)
        col = lax.broadcasted_iota(jnp.int32, (Tq, Tk), 1)
        s = jnp.where((col <= row)[None, :, :], s, jnp.float32(-1e9))

    s = s - jnp.max(s, axis=-1, keepdims=True)
    p = jnp.exp(s)
    p = p * pl.reciprocal(jnp.sum(p, axis=-1, keepdims=True), approx=True)

    ctx = jnp.einsum('hqk,hkd->hqd', p.astype(_BF16), vh,
                     preferred_element_type=_F32)        # [H, Tq, dh] f32
    return _merge_heads(ctx)                             # [Tq, D] f32


# --------------------------------- kernels -----------------------------------

def encoder_layer_kernel(x_ref,
                         wqkv, bqkv, wo, bo, g1, be1,
                         w1, b1, w2, b2, g2, be2,
                         out_ref, *, num_heads):
    x = x_ref[0]                                   # [S, D] f32 (one batch row)
    D = x.shape[-1]
    qkv = _linear(x, wqkv, bqkv)                   # fused QKV: [S, 3D]
    ctx = _attention(qkv[:, :D], qkv[:, D:2 * D], qkv[:, 2 * D:],
                     num_heads=num_heads, causal=False)
    attn = _linear(ctx, wo, bo)                    # single output projection
    y = _layernorm(x + attn, g1[...], be1[...])
    h = jnp.maximum(_linear(y, w1, b1), 0.0)
    f = _linear(h, w2, b2)
    out_ref[0] = _layernorm(y + f, g2[...], be2[...])


def decoder_layer_kernel(y_ref, enc_ref,
                         swqkv, sbqkv, swo, sbo, g1, be1,
                         cwq, cbq, cwkv, cbkv, cwo, cbo, g2, be2,
                         w1, b1, w2, b2, g3, be3,
                         out_ref, *, num_heads):
    y = y_ref[0]                                   # [T, D] f32
    enc = enc_ref[0]                               # [S, D] f32
    D = y.shape[-1]

    # causal (look-ahead masked) self-attention, post-LN residual
    qkv = _linear(y, swqkv, sbqkv)                 # fused QKV: [T, 3D]
    sa = _linear(_attention(qkv[:, :D], qkv[:, D:2 * D], qkv[:, 2 * D:],
                            num_heads=num_heads, causal=True), swo, sbo)
    y1 = _layernorm(y + sa, g1[...], be1[...])

    # cross-attention over encoder output (fused K/V projection)
    q = _linear(y1, cwq, cbq)                      # [T, D]
    kv = _linear(enc, cwkv, cbkv)                  # [S, 2D]
    ca = _linear(_attention(q, kv[:, :D], kv[:, D:],
                            num_heads=num_heads, causal=False), cwo, cbo)
    y2 = _layernorm(y1 + ca, g2[...], be2[...])

    # FFN
    h = jnp.maximum(_linear(y2, w1, b1), 0.0)
    f = _linear(h, w2, b2)
    out_ref[0] = _layernorm(y2 + f, g3[...], be3[...])


# --------------------------------- wrappers ----------------------------------

def _act_spec(shape):
    _, S, D = shape
    return pl.BlockSpec((1, S, D), lambda b: (b, 0, 0))


def _full_spec(a):
    return pl.BlockSpec(a.shape, lambda b, _n=a.ndim: (0,) * _n)


def _cost(flops, transcendentals, args, out_bytes):
    bytes_accessed = int(sum(int(a.size) * a.dtype.itemsize for a in args)
                         + out_bytes)
    return pl.CostEstimate(flops=int(flops),
                           transcendentals=int(transcendentals),
                           bytes_accessed=bytes_accessed)


_COMPILER_PARAMS = pltpu.CompilerParams(
    dimension_semantics=("parallel",),            # shard batch across TCs (v7x)
    vmem_limit_bytes=32 * 1024 * 1024)


def encoder_layer(x, p, num_heads):
    B, S, D = x.shape
    dff = p['w1'].shape[1]
    params = (p['wqkv'], p['bqkv'], p['wo'], p['bo'], p['g1'], p['be1'],
              p['w1'], p['b1'], p['w2'], p['b2'], p['g2'], p['be2'])
    flops = 2 * B * S * (4 * D * D + 2 * S * D + 2 * D * dff)
    trans = B * num_heads * S * S + 4 * B * S
    return pl.pallas_call(
        functools.partial(encoder_layer_kernel, num_heads=num_heads),
        grid=(B,),
        in_specs=[_act_spec(x.shape)] + [_full_spec(a) for a in params],
        out_specs=_act_spec(x.shape),
        out_shape=jax.ShapeDtypeStruct(x.shape, _F32),
        compiler_params=_COMPILER_PARAMS,
        cost_estimate=_cost(flops, trans, (x,) + params, x.size * 4),
    )(x, *params)


def decoder_layer(y, enc, p, num_heads):
    B, T, D = y.shape
    S = enc.shape[1]
    dff = p['w1'].shape[1]
    params = (p['swqkv'], p['sbqkv'], p['swo'], p['sbo'], p['g1'], p['be1'],
              p['cwq'], p['cbq'], p['cwkv'], p['cbkv'], p['cwo'], p['cbo'],
              p['g2'], p['be2'],
              p['w1'], p['b1'], p['w2'], p['b2'], p['g3'], p['be3'])
    flops = 2 * B * (T * 6 * D * D + S * 2 * D * D
                     + 2 * T * T * D + 2 * T * S * D + 2 * T * D * dff)
    trans = B * num_heads * (T * T + T * S) + 8 * B * T
    return pl.pallas_call(
        functools.partial(decoder_layer_kernel, num_heads=num_heads),
        grid=(B,),
        in_specs=[_act_spec(y.shape), _act_spec(enc.shape)]
                 + [_full_spec(a) for a in params],
        out_specs=_act_spec(y.shape),
        out_shape=jax.ShapeDtypeStruct(y.shape, _F32),
        compiler_params=_COMPILER_PARAMS,
        cost_estimate=_cost(flops, trans, (y, enc) + params, y.size * 4),
    )(y, enc, *params)


def sinusoidal_pe(seq_len, d_model):
    pos = jnp.arange(seq_len, dtype=_F32)[:, None]
    i = jnp.arange(d_model, dtype=_F32)[None, :]
    rates = 1.0 / jnp.power(10000.0, (2.0 * jnp.floor(i / 2.0)) / d_model)
    ang = pos * rates
    even = (jnp.arange(d_model)[None, :] % 2) == 0
    return jnp.where(even, jnp.sin(ang), jnp.cos(ang)).astype(_F32)


def transformer_forward(params, input_embedding, output_embedding, *, num_heads):
    B, S, D = input_embedding.shape
    T = output_embedding.shape[1]
    pe_s = sinusoidal_pe(S, D)               # constant-folded under jit
    pe_t = pe_s if T == S else sinusoidal_pe(T, D)

    x = input_embedding + pe_s[None, :, :]
    for lp in params['enc']:
        x = encoder_layer(x, lp, num_heads)

    y = output_embedding + pe_t[None, :, :]
    for lp in params['dec']:
        y = decoder_layer(y, x, lp, num_heads)
    return y


# ----------------------------- parameter init --------------------------------

def _init_linear(key, din, dout):
    kw, kb = jax.random.split(key)
    bound = 1.0 / math.sqrt(din)
    w = jax.random.uniform(kw, (din, dout), _F32, -bound, bound)
    b = jax.random.uniform(kb, (dout,), _F32, -bound, bound)
    return w, b


def init_encoder_layer(key, d_model, dff):
    ks = jax.random.split(key, 6)
    wq, bq = _init_linear(ks[0], d_model, d_model)
    wk, bk = _init_linear(ks[1], d_model, d_model)
    wv, bv = _init_linear(ks[2], d_model, d_model)
    wo, bo = _init_linear(ks[3], d_model, d_model)
    w1, b1 = _init_linear(ks[4], d_model, dff)
    w2, b2 = _init_linear(ks[5], dff, d_model)
    ones = jnp.ones((1, d_model), _F32)
    zeros = jnp.zeros((1, d_model), _F32)
    return dict(
        wqkv=jnp.concatenate([wq, wk, wv], axis=1).astype(_BF16),
        bqkv=jnp.concatenate([bq, bk, bv])[None, :],
        wo=wo.astype(_BF16), bo=bo[None, :], g1=ones, be1=zeros,
        w1=w1.astype(_BF16), b1=b1[None, :],
        w2=w2.astype(_BF16), b2=b2[None, :], g2=ones, be2=zeros)


def init_decoder_layer(key, d_model, dff):
    ks = jax.random.split(key, 10)
    swq, sbq = _init_linear(ks[0], d_model, d_model)
    swk, sbk = _init_linear(ks[1], d_model, d_model)
    swv, sbv = _init_linear(ks[2], d_model, d_model)
    swo, sbo = _init_linear(ks[3], d_model, d_model)
    cwq, cbq = _init_linear(ks[4], d_model, d_model)
    cwk, cbk = _init_linear(ks[5], d_model, d_model)
    cwv, cbv = _init_linear(ks[6], d_model, d_model)
    cwo, cbo = _init_linear(ks[7], d_model, d_model)
    w1, b1 = _init_linear(ks[8], d_model, dff)
    w2, b2 = _init_linear(ks[9], dff, d_model)
    ones = jnp.ones((1, d_model), _F32)
    zeros = jnp.zeros((1, d_model), _F32)
    return dict(
        swqkv=jnp.concatenate([swq, swk, swv], axis=1).astype(_BF16),
        sbqkv=jnp.concatenate([sbq, sbk, sbv])[None, :],
        swo=swo.astype(_BF16), sbo=sbo[None, :], g1=ones, be1=zeros,
        cwq=cwq.astype(_BF16), cbq=cbq[None, :],
        cwkv=jnp.concatenate([cwk, cwv], axis=1).astype(_BF16),
        cbkv=jnp.concatenate([cbk, cbv])[None, :],
        cwo=cwo.astype(_BF16), cbo=cbo[None, :], g2=ones, be2=zeros,
        w1=w1.astype(_BF16), b1=b1[None, :],
        w2=w2.astype(_BF16), b2=b2[None, :], g3=ones, be3=zeros)


def init_transformer(key, num_layers, d_model, dff):
    keys = jax.random.split(key, 2 * num_layers)
    enc = [init_encoder_layer(keys[i], d_model, dff) for i in range(num_layers)]
    dec = [init_decoder_layer(keys[num_layers + i], d_model, dff)
           for i in range(num_layers)]
    # out_vocab_size is an __init__ arg of the reference but unused in forward().
    return dict(enc=enc, dec=dec)


# ----------------------------------- main -------------------------------------

if __name__ == "__main__":
    num_layers, d_model, num_heads, dff = 2, 32, 4, 64
    B, S, T = 2, 8, 8

    root = jax.random.PRNGKey(0)
    k_params, k_in, k_out = jax.random.split(root, 3)
    params = init_transformer(k_params, num_layers, d_model, dff)

    input_embedding = jax.random.normal(k_in, (B, S, d_model), _F32)
    output_embedding = jax.random.normal(k_out, (B, T, d_model), _F32)

    fwd = jax.jit(functools.partial(transformer_forward, num_heads=num_heads))
    out = jax.block_until_ready(fwd(params, input_embedding, output_embedding))
    assert out.shape == (B, T, d_model) and out.dtype == _F32
    print("KERNEL_OK")
</pallas_src>

<mosaic_0001>
module attributes {stable_mosaic.version = 11 : i64} {
  func.func @encoder_layer_kernel(%arg0: i32, %arg1: memref<1x8x32xf32, #tpu.memory_space<vmem>>, %arg2: memref<32x96xbf16, #tpu.memory_space<vmem>>, %arg3: memref<1x96xf32, #tpu.memory_space<vmem>>, %arg4: memref<32x32xbf16, #tpu.memory_space<vmem>>, %arg5: memref<1x32xf32, #tpu.memory_space<vmem>>, %arg6: memref<1x32xf32, #tpu.memory_space<vmem>>, %arg7: memref<1x32xf32, #tpu.memory_space<vmem>>, %arg8: memref<32x64xbf16, #tpu.memory_space<vmem>>, %arg9: memref<1x64xf32, #tpu.memory_space<vmem>>, %arg10: memref<64x32xbf16, #tpu.memory_space<vmem>>, %arg11: memref<1x32xf32, #tpu.memory_space<vmem>>, %arg12: memref<1x32xf32, #tpu.memory_space<vmem>>, %arg13: memref<1x32xf32, #tpu.memory_space<vmem>>, %arg14: memref<1x8x32xf32, #tpu.memory_space<vmem>>) attributes {dimension_semantics = [#tpu.dimension_semantics<parallel>], iteration_bounds = array<i64: 2>, scalar_prefetch = 0 : i64, scratch_operands = 0 : i64, tpu.core_type = #tpu.core_type<tc>, window_params = [{transform_indices = @transform_0, window_bounds = array<i64: 1, 8, 32>}, {pipeline_mode = #tpu.pipeline_mode<synchronous>, transform_indices = @transform_1, window_bounds = array<i64: 32, 96>}, {pipeline_mode = #tpu.pipeline_mode<synchronous>, transform_indices = @transform_2, window_bounds = array<i64: 1, 96>}, {pipeline_mode = #tpu.pipeline_mode<synchronous>, transform_indices = @transform_3, window_bounds = array<i64: 32, 32>}, {pipeline_mode = #tpu.pipeline_mode<synchronous>, transform_indices = @transform_4, window_bounds = array<i64: 1, 32>}, {pipeline_mode = #tpu.pipeline_mode<synchronous>, transform_indices = @transform_5, window_bounds = array<i64: 1, 32>}, {pipeline_mode = #tpu.pipeline_mode<synchronous>, transform_indices = @transform_6, window_bounds = array<i64: 1, 32>}, {pipeline_mode = #tpu.pipeline_mode<synchronous>, transform_indices = @transform_7, window_bounds = array<i64: 32, 64>}, {pipeline_mode = #tpu.pipeline_mode<synchronous>, transform_indices = @transform_8, window_bounds = array<i64: 1, 64>}, {pipeline_mode = #tpu.pipeline_mode<synchronous>, transform_indices = @transform_9, window_bounds = array<i64: 64, 32>}, {pipeline_mode = #tpu.pipeline_mode<synchronous>, transform_indices = @transform_10, window_bounds = array<i64: 1, 32>}, {pipeline_mode = #tpu.pipeline_mode<synchronous>, transform_indices = @transform_11, window_bounds = array<i64: 1, 32>}, {pipeline_mode = #tpu.pipeline_mode<synchronous>, transform_indices = @transform_12, window_bounds = array<i64: 1, 32>}, {transform_indices = @transform_13, window_bounds = array<i64: 1, 8, 32>}]} {
    %c0 = arith.constant 0 : index
    %c0_0 = arith.constant 0 : index
    %c0_1 = arith.constant 0 : index
    %0 = vector.load %arg1[%c0, %c0_0, %c0_1] : memref<1x8x32xf32, #tpu.memory_space<vmem>>, vector<1x8x32xf32>
    %1 = vector.shape_cast %0 : vector<1x8x32xf32> to vector<8x32xf32>
    %2 = arith.truncf %1 : vector<8x32xf32> to vector<8x32xbf16>
    %c0_2 = arith.constant 0 : index
    %c0_3 = arith.constant 0 : index
    %3 = vector.load %arg2[%c0_2, %c0_3] : memref<32x96xbf16, #tpu.memory_space<vmem>>, vector<32x96xbf16>
    %cst = arith.constant dense<0.000000e+00> : vector<8x96xf32>
    %4 = tpu.matmul %2, %3, %cst {dimension_numbers = #tpu.dot_dimension_numbers<[1], [0], [0], [1], [0, 0, 1, 1], [], []>} : vector<8x32xbf16>, vector<32x96xbf16>, vector<8x96xf32> -> vector<8x96xf32>
    %c0_4 = arith.constant 0 : index
    %c0_5 = arith.constant 0 : index
    %5 = vector.load %arg3[%c0_4, %c0_5] : memref<1x96xf32, #tpu.memory_space<vmem>>, vector<1x96xf32>
    %6 = vector.broadcast %5 : vector<1x96xf32> to vector<8x96xf32>
    %7 = arith.addf %4, %6 : vector<8x96xf32>
    %8 = vector.extract_strided_slice %7 {offsets = [0, 0], sizes = [8, 32], strides = [1, 1]} : vector<8x96xf32> to vector<8x32xf32>
    %9 = vector.extract_strided_slice %7 {offsets = [0, 32], sizes = [8, 32], strides = [1, 1]} : vector<8x96xf32> to vector<8x32xf32>
    %10 = vector.extract_strided_slice %7 {offsets = [0, 64], sizes = [8, 32], strides = [1, 1]} : vector<8x96xf32> to vector<8x32xf32>
    %11 = vector.extract_strided_slice %8 {offsets = [0, 0], sizes = [8, 8], strides = [1, 1]} : vector<8x32xf32> to vector<8x8xf32>
    %12 = vector.extract_strided_slice %8 {offsets = [0, 8], sizes = [8, 8], strides = [1, 1]} : vector<8x32xf32> to vector<8x8xf32>
    %13 = vector.extract_strided_slice %8 {offsets = [0, 16], sizes = [8, 8], strides = [1, 1]} : vector<8x32xf32> to vector<8x8xf32>
    %14 = vector.extract_strided_slice %8 {offsets = [0, 24], sizes = [8, 8], strides = [1, 1]} : vector<8x32xf32> to vector<8x8xf32>
    %15 = vector.shape_cast %11 : vector<8x8xf32> to vector<1x8x8xf32>
    %16 = vector.shape_cast %12 : vector<8x8xf32> to vector<1x8x8xf32>
    %17 = vector.shape_cast %13 : vector<8x8xf32> to vector<1x8x8xf32>
    %18 = vector.shape_cast %14 : vector<8x8xf32> to vector<1x8x8xf32>
    %19 = tpu.concatenate %15, %16, %17, %18 in 0 : vector<1x8x8xf32>, vector<1x8x8xf32>, vector<1x8x8xf32>, vector<1x8x8xf32> -> vector<4x8x8xf32>
    %20 = arith.truncf %19 : vector<4x8x8xf32> to vector<4x8x8xbf16>
    %21 = vector.extract_strided_slice %9 {offsets = [0, 0], sizes = [8, 8], strides = [1, 1]} : vector<8x32xf32> to vector<8x8xf32>
    %22 = vector.extract_strided_slice %9 {offsets = [0, 8], sizes = [8, 8], strides = [1, 1]} : vector<8x32xf32> to vector<8x8xf32>
    %23 = vector.extract_strided_slice %9 {offsets = [0, 16], sizes = [8, 8], strides = [1, 1]} : vector<8x32xf32> to vector<8x8xf32>
    %24 = vector.extract_strided_slice %9 {offsets = [0, 24], sizes = [8, 8], strides = [1, 1]} : vector<8x32xf32> to vector<8x8xf32>
    %25 = vector.shape_cast %21 : vector<8x8xf32> to vector<1x8x8xf32>
    %26 = vector.shape_cast %22 : vector<8x8xf32> to vector<1x8x8xf32>
    %27 = vector.shape_cast %23 : vector<8x8xf32> to vector<1x8x8xf32>
    %28 = vector.shape_cast %24 : vector<8x8xf32> to vector<1x8x8xf32>
    %29 = tpu.concatenate %25, %26, %27, %28 in 0 : vector<1x8x8xf32>, vector<1x8x8xf32>, vector<1x8x8xf32>, vector<1x8x8xf32> -> vector<4x8x8xf32>
    %30 = arith.truncf %29 : vector<4x8x8xf32> to vector<4x8x8xbf16>
    %31 = vector.extract_strided_slice %10 {offsets = [0, 0], sizes = [8, 8], strides = [1, 1]} : vector<8x32xf32> to vector<8x8xf32>
    %32 = vector.extract_strided_slice %10 {offsets = [0, 8], sizes = [8, 8], strides = [1, 1]} : vector<8x32xf32> to vector<8x8xf32>
    %33 = vector.extract_strided_slice %10 {offsets = [0, 16], sizes = [8, 8], strides = [1, 1]} : vector<8x32xf32> to vector<8x8xf32>
    %34 = vector.extract_strided_slice %10 {offsets = [0, 24], sizes = [8, 8], strides = [1, 1]} : vector<8x32xf32> to vector<8x8xf32>
    %35 = vector.shape_cast %31 : vector<8x8xf32> to vector<1x8x8xf32>
    %36 = vector.shape_cast %32 : vector<8x8xf32> to vector<1x8x8xf32>
    %37 = vector.shape_cast %33 : vector<8x8xf32> to vector<1x8x8xf32>
    %38 = vector.shape_cast %34 : vector<8x8xf32> to vector<1x8x8xf32>
    %39 = tpu.concatenate %35, %36, %37, %38 in 0 : vector<1x8x8xf32>, vector<1x8x8xf32>, vector<1x8x8xf32>, vector<1x8x8xf32> -> vector<4x8x8xf32>
    %40 = arith.truncf %39 : vector<4x8x8xf32> to vector<4x8x8xbf16>
    "tpu.trace_start"() <{level = 10 : i32, message = "hqd,hkd->hqk"}> : () -> ()
    %cst_6 = arith.constant dense<0.000000e+00> : vector<4x8x8xf32>
    %41 = tpu.matmul %20, %30, %cst_6 {dimension_numbers = #tpu.dot_dimension_numbers<[2], [2], [1], [1], [0, 0, 0, 1, 1, 1], [0], [0]>} : vector<4x8x8xbf16>, vector<4x8x8xbf16>, vector<4x8x8xf32> -> vector<4x8x8xf32>
    "tpu.trace_stop"() : () -> ()
    %cst_7 = arith.constant 0.353553385 : f32
    %42 = vector.broadcast %cst_7 : f32 to vector<4x8x8xf32>
    %43 = arith.mulf %41, %42 : vector<4x8x8xf32>
    %cst_8 = arith.constant dense<0xFF800000> : vector<4x8xf32>
    %44 = vector.multi_reduction <maximumf>, %43, %cst_8 [2] : vector<4x8x8xf32> to vector<4x8xf32>
    %45 = vector.shape_cast %44 : vector<4x8xf32> to vector<4x8x1xf32>
    %46 = vector.broadcast %45 : vector<4x8x1xf32> to vector<4x8x8xf32>
    %47 = arith.subf %43, %46 : vector<4x8x8xf32>
    %48 = math.exp %47 : vector<4x8x8xf32>
    %cst_9 = arith.constant dense<0.000000e+00> : vector<4x8xf32>
    %49 = vector.multi_reduction <add>, %48, %cst_9 [2] : vector<4x8x8xf32> to vector<4x8xf32>
    %50 = vector.shape_cast %49 : vector<4x8xf32> to vector<4x8x1xf32>
    %51 = tpu.reciprocal %50 {approx = true} : vector<4x8x1xf32> -> vector<4x8x1xf32>
    %52 = vector.broadcast %51 : vector<4x8x1xf32> to vector<4x8x8xf32>
    %53 = arith.mulf %48, %52 : vector<4x8x8xf32>
    %54 = arith.truncf %53 : vector<4x8x8xf32> to vector<4x8x8xbf16>
    "tpu.trace_start"() <{level = 10 : i32, message = "hqk,hkd->hqd"}> : () -> ()
    %cst_10 = arith.constant dense<0.000000e+00> : vector<4x8x8xf32>
    %55 = tpu.matmul %54, %40, %cst_10 {dimension_numbers = #tpu.dot_dimension_numbers<[2], [1], [1], [2], [0, 0, 0, 1, 1, 2], [0], [0]>} : vector<4x8x8xbf16>, vector<4x8x8xbf16>, vector<4x8x8xf32> -> vector<4x8x8xf32>
    "tpu.trace_stop"() : () -> ()
    %56 = vector.extract_strided_slice %55 {offsets = [0, 0, 0], sizes = [1, 8, 8], strides = [1, 1, 1]} : vector<4x8x8xf32> to vector<1x8x8xf32>
    %57 = vector.shape_cast %56 : vector<1x8x8xf32> to vector<8x8xf32>
    %58 = vector.extract_strided_slice %55 {offsets = [1, 0, 0], sizes = [1, 8, 8], strides = [1, 1, 1]} : vector<4x8x8xf32> to vector<1x8x8xf32>
    %59 = vector.shape_cast %58 : vector<1x8x8xf32> to vector<8x8xf32>
    %60 = vector.extract_strided_slice %55 {offsets = [2, 0, 0], sizes = [1, 8, 8], strides = [1, 1, 1]} : vector<4x8x8xf32> to vector<1x8x8xf32>
    %61 = vector.shape_cast %60 : vector<1x8x8xf32> to vector<8x8xf32>
    %62 = vector.extract_strided_slice %55 {offsets = [3, 0, 0], sizes = [1, 8, 8], strides = [1, 1, 1]} : vector<4x8x8xf32> to vector<1x8x8xf32>
    %63 = vector.shape_cast %62 : vector<1x8x8xf32> to vector<8x8xf32>
    %64 = tpu.concatenate %57, %59, %61, %63 in 1 : vector<8x8xf32>, vector<8x8xf32>, vector<8x8xf32>, vector<8x8xf32> -> vector<8x32xf32>
    %65 = arith.truncf %64 : vector<8x32xf32> to vector<8x32xbf16>
    %c0_11 = arith.constant 0 : index
    %c0_12 = arith.constant 0 : index
    %66 = vector.load %arg4[%c0_11, %c0_12] : memref<32x32xbf16, #tpu.memory_space<vmem>>, vector<32x32xbf16>
    %cst_13 = arith.constant dense<0.000000e+00> : vector<8x32xf32>
    %67 = tpu.matmul %65, %66, %cst_13 {dimension_numbers = #tpu.dot_dimension_numbers<[1], [0], [0], [1], [0, 0, 1, 1], [], []>} : vector<8x32xbf16>, vector<32x32xbf16>, vector<8x32xf32> -> vector<8x32xf32>
    %c0_14 = arith.constant 0 : index
    %c0_15 = arith.constant 0 : index
    %68 = vector.load %arg5[%c0_14, %c0_15] : memref<1x32xf32, #tpu.memory_space<vmem>>, vector<1x32xf32>
    %69 = vector.broadcast %68 : vector<1x32xf32> to vector<8x32xf32>
    %70 = arith.addf %67, %69 : vector<8x32xf32>
    %71 = arith.addf %1, %70 : vector<8x32xf32>
    %c0_16 = arith.constant 0 : index
    %c0_17 = arith.constant 0 : index
    %72 = vector.load %arg6[%c0_16, %c0_17] : memref<1x32xf32, #tpu.memory_space<vmem>>, vector<1x32xf32>
    %c0_18 = arith.constant 0 : index
    %c0_19 = arith.constant 0 : index
    %73 = vector.load %arg7[%c0_18, %c0_19] : memref<1x32xf32, #tpu.memory_space<vmem>>, vector<1x32xf32>
    %cst_20 = arith.constant dense<0.000000e+00> : vector<8xf32>
    %74 = vector.multi_reduction <add>, %71, %cst_20 [1] : vector<8x32xf32> to vector<8xf32>
    %75 = vector.shape_cast %74 : vector<8xf32> to vector<8x1xf32>
    %cst_21 = arith.constant 3.200000e+01 : f32
    %76 = vector.broadcast %cst_21 : f32 to vector<8x1xf32>
    %77 = arith.divf %75, %76 : vector<8x1xf32>
    %78 = vector.broadcast %77 : vector<8x1xf32> to vector<8x32xf32>
    %79 = arith.subf %71, %78 : vector<8x32xf32>
    %80 = arith.mulf %79, %79 : vector<8x32xf32>
    %cst_22 = arith.constant dense<0.000000e+00> : vector<8xf32>
    %81 = vector.multi_reduction <add>, %80, %cst_22 [1] : vector<8x32xf32> to vector<8xf32>
    %82 = vector.shape_cast %81 : vector<8xf32> to vector<8x1xf32>
    %cst_23 = arith.constant 3.200000e+01 : f32
    %83 = vector.broadcast %cst_23 : f32 to vector<8x1xf32>
    %84 = arith.divf %82, %83 : vector<8x1xf32>
    %cst_24 = arith.constant 9.99999974E-6 : f32
    %85 = vector.broadcast %cst_24 : f32 to vector<8x1xf32>
    %86 = arith.addf %84, %85 : vector<8x1xf32>
    %87 = math.rsqrt %86 : vector<8x1xf32>
    %88 = vector.broadcast %77 : vector<8x1xf32> to vector<8x32xf32>
    %89 = arith.subf %71, %88 : vector<8x32xf32>
    %90 = vector.broadcast %87 : vector<8x1xf32> to vector<8x32xf32>
    %91 = arith.mulf %89, %90 : vector<8x32xf32>
    %92 = vector.broadcast %72 : vector<1x32xf32> to vector<8x32xf32>
    %93 = arith.mulf %91, %92 : vector<8x32xf32>
    %94 = vector.broadcast %73 : vector<1x32xf32> to vector<8x32xf32>
    %95 = arith.addf %93, %94 : vector<8x32xf32>
    %96 = arith.truncf %95 : vector<8x32xf32> to vector<8x32xbf16>
    %c0_25 = arith.constant 0 : index
    %c0_26 = arith.constant 0 : index
    %97 = vector.load %arg8[%c0_25, %c0_26] : memref<32x64xbf16, #tpu.memory_space<vmem>>, vector<32x64xbf16>
    %cst_27 = arith.constant dense<0.000000e+00> : vector<8x64xf32>
    %98 = tpu.matmul %96, %97, %cst_27 {dimension_numbers = #tpu.dot_dimension_numbers<[1], [0], [0], [1], [0, 0, 1, 1], [], []>} : vector<8x32xbf16>, vector<32x64xbf16>, vector<8x64xf32> -> vector<8x64xf32>
    %c0_28 = arith.constant 0 : index
    %c0_29 = arith.constant 0 : index
    %99 = vector.load %arg9[%c0_28, %c0_29] : memref<1x64xf32, #tpu.memory_space<vmem>>, vector<1x64xf32>
    %100 = vector.broadcast %99 : vector<1x64xf32> to vector<8x64xf32>
    %101 = arith.addf %98, %100 : vector<8x64xf32>
    %cst_30 = arith.constant 0.000000e+00 : f32
    %102 = vector.broadcast %cst_30 : f32 to vector<8x64xf32>
    %103 = arith.maximumf %101, %102 : vector<8x64xf32>
    %104 = arith.truncf %103 : vector<8x64xf32> to vector<8x64xbf16>
    %c0_31 = arith.constant 0 : index
    %c0_32 = arith.constant 0 : index
    %105 = vector.load %arg10[%c0_31, %c0_32] : memref<64x32xbf16, #tpu.memory_space<vmem>>, vector<64x32xbf16>
    %cst_33 = arith.constant dense<0.000000e+00> : vector<8x32xf32>
    %106 = tpu.matmul %104, %105, %cst_33 {dimension_numbers = #tpu.dot_dimension_numbers<[1], [0], [0], [1], [0, 0, 1, 1], [], []>} : vector<8x64xbf16>, vector<64x32xbf16>, vector<8x32xf32> -> vector<8x32xf32>
    %c0_34 = arith.constant 0 : index
    %c0_35 = arith.constant 0 : index
    %107 = vector.load %arg11[%c0_34, %c0_35] : memref<1x32xf32, #tpu.memory_space<vmem>>, vector<1x32xf32>
    %108 = vector.broadcast %107 : vector<1x32xf32> to vector<8x32xf32>
    %109 = arith.addf %106, %108 : vector<8x32xf32>
    %110 = arith.addf %95, %109 : vector<8x32xf32>
    %c0_36 = arith.constant 0 : index
    %c0_37 = arith.constant 0 : index
    %111 = vector.load %arg12[%c0_36, %c0_37] : memref<1x32xf32, #tpu.memory_space<vmem>>, vector<1x32xf32>
    %c0_38 = arith.constant 0 : index
    %c0_39 = arith.constant 0 : index
    %112 = vector.load %arg13[%c0_38, %c0_39] : memref<1x32xf32, #tpu.memory_space<vmem>>, vector<1x32xf32>
    %cst_40 = arith.constant dense<0.000000e+00> : vector<8xf32>
    %113 = vector.multi_reduction <add>, %110, %cst_40 [1] : vector<8x32xf32> to vector<8xf32>
    %114 = vector.shape_cast %113 : vector<8xf32> to vector<8x1xf32>
    %cst_41 = arith.constant 3.200000e+01 : f32
    %115 = vector.broadcast %cst_41 : f32 to vector<8x1xf32>
    %116 = arith.divf %114, %115 : vector<8x1xf32>
    %117 = vector.broadcast %116 : vector<8x1xf32> to vector<8x32xf32>
    %118 = arith.subf %110, %117 : vector<8x32xf32>
    %119 = arith.mulf %118, %118 : vector<8x32xf32>
    %cst_42 = arith.constant dense<0.000000e+00> : vector<8xf32>
    %120 = vector.multi_reduction <add>, %119, %cst_42 [1] : vector<8x32xf32> to vector<8xf32>
    %121 = vector.shape_cast %120 : vector<8xf32> to vector<8x1xf32>
    %cst_43 = arith.constant 3.200000e+01 : f32
    %122 = vector.broadcast %cst_43 : f32 to vector<8x1xf32>
    %123 = arith.divf %121, %122 : vector<8x1xf32>
    %cst_44 = arith.constant 9.99999974E-6 : f32
    %124 = vector.broadcast %cst_44 : f32 to vector<8x1xf32>
    %125 = arith.addf %123, %124 : vector<8x1xf32>
    %126 = math.rsqrt %125 : vector<8x1xf32>
    %127 = vector.broadcast %116 : vector<8x1xf32> to vector<8x32xf32>
    %128 = arith.subf %110, %127 : vector<8x32xf32>
    %129 = vector.broadcast %126 : vector<8x1xf32> to vector<8x32xf32>
    %130 = arith.mulf %128, %129 : vector<8x32xf32>
    %131 = vector.broadcast %111 : vector<1x32xf32> to vector<8x32xf32>
    %132 = arith.mulf %130, %131 : vector<8x32xf32>
    %133 = vector.broadcast %112 : vector<1x32xf32> to vector<8x32xf32>
    %134 = arith.addf %132, %133 : vector<8x32xf32>
    %c0_45 = arith.constant 0 : index
    %c0_46 = arith.constant 0 : index
    %c0_47 = arith.constant 0 : index
    %135 = vector.load %arg14[%c0_45, %c0_46, %c0_47] : memref<1x8x32xf32, #tpu.memory_space<vmem>>, vector<1x8x32xf32>
    %136 = vector.shape_cast %135 : vector<1x8x32xf32> to vector<8x32xf32>
    %137 = vector.shape_cast %134 : vector<8x32xf32> to vector<1x8x32xf32>
    tpu.vector_store %arg14[%c0_45, %c0_46, %c0_47], %137 {strides = array<i32>} : memref<1x8x32xf32, #tpu.memory_space<vmem>>, vector<1x8x32xf32>,
    return
  }
  func.func @transform_0(%arg0: i32) -> (i32, i32, i32) {
    %c0_i32 = arith.constant 0 : i32
    %c0_i32_0 = arith.constant 0 : i32
    %c0_i32_1 = arith.constant 0 : i32
    return %arg0, %c0_i32, %c0_i32_0 : i32, i32, i32
  }
  func.func @transform_1(%arg0: i32) -> (i32, i32) {
    %c0_i32 = arith.constant 0 : i32
    %c0_i32_0 = arith.constant 0 : i32
    %c0_i32_1 = arith.constant 0 : i32
    return %c0_i32, %c0_i32_0 : i32, i32
  }
  func.func @transform_2(%arg0: i32) -> (i32, i32) {
    %c0_i32 = arith.constant 0 : i32
    %c0_i32_0 = arith.constant 0 : i32
    %c0_i32_1 = arith.constant 0 : i32
    return %c0_i32, %c0_i32_0 : i32, i32
  }
  func.func @transform_3(%arg0: i32) -> (i32, i32) {
    %c0_i32 = arith.constant 0 : i32
    %c0_i32_0 = arith.constant 0 : i32
    %c0_i32_1 = arith.constant 0 : i32
    return %c0_i32, %c0_i32_0 : i32, i32
  }
  func.func @transform_4(%arg0: i32) -> (i32, i32) {
    %c0_i32 = arith.constant 0 : i32
    %c0_i32_0 = arith.constant 0 : i32
    %c0_i32_1 = arith.constant 0 : i32
    return %c0_i32, %c0_i32_0 : i32, i32
  }
  func.func @transform_5(%arg0: i32) -> (i32, i32) {
    %c0_i32 = arith.constant 0 : i32
    %c0_i32_0 = arith.constant 0 : i32
    %c0_i32_1 = arith.constant 0 : i32
    return %c0_i32, %c0_i32_0 : i32, i32
  }
  func.func @transform_6(%arg0: i32) -> (i32, i32) {
    %c0_i32 = arith.constant 0 : i32
    %c0_i32_0 = arith.constant 0 : i32
    %c0_i32_1 = arith.constant 0 : i32
    return %c0_i32, %c0_i32_0 : i32, i32
  }
  func.func @transform_7(%arg0: i32) -> (i32, i32) {
    %c0_i32 = arith.constant 0 : i32
    %c0_i32_0 = arith.constant 0 : i32
    %c0_i32_1 = arith.constant 0 : i32
    return %c0_i32, %c0_i32_0 : i32, i32
  }
  func.func @transform_8(%arg0: i32) -> (i32, i32) {
    %c0_i32 = arith.constant 0 : i32
    %c0_i32_0 = arith.constant 0 : i32
    %c0_i32_1 = arith.constant 0 : i32
    return %c0_i32, %c0_i32_0 : i32, i32
  }
  func.func @transform_9(%arg0: i32) -> (i32, i32) {
    %c0_i32 = arith.constant 0 : i32
    %c0_i32_0 = arith.constant 0 : i32
    %c0_i32_1 = arith.constant 0 : i32
    return %c0_i32, %c0_i32_0 : i32, i32
  }
  func.func @transform_10(%arg0: i32) -> (i32, i32) {
    %c0_i32 = arith.constant 0 : i32
    %c0_i32_0 = arith.constant 0 : i32
    %c0_i32_1 = arith.constant 0 : i32
    return %c0_i32, %c0_i32_0 : i32, i32
  }
  func.func @transform_11(%arg0: i32) -> (i32, i32) {
    %c0_i32 = arith.constant 0 : i32
    %c0_i32_0 = arith.constant 0 : i32
    %c0_i32_1 = arith.constant 0 : i32
    return %c0_i32, %c0_i32_0 : i32, i32
  }
  func.func @transform_12(%arg0: i32) -> (i32, i32) {
    %c0_i32 = arith.constant 0 : i32
    %c0_i32_0 = arith.constant 0 : i32
    %c0_i32_1 = arith.constant 0 : i32
    return %c0_i32, %c0_i32_0 : i32, i32
  }
  func.func @transform_13(%arg0: i32) -> (i32, i32, i32) {
    %c0_i32 = arith.constant 0 : i32
    %c0_i32_0 = arith.constant 0 : i32
    %c0_i32_1 = arith.constant 0 : i32
    return %arg0, %c0_i32, %c0_i32_0 : i32, i32, i32
  }
}

module attributes {stable_mosaic.version = 11 : i64} {
  func.func @decoder_layer_kernel(%arg0: i32, %arg1: memref<1x8x32xf32, #tpu.memory_space<vmem>>, %arg2: memref<1x8x32xf32, #tpu.memory_space<vmem>>, %arg3: memref<32x96xbf16, #tpu.memory_space<vmem>>, %arg4: memref<1x96xf32, #tpu.memory_space<vmem>>, %arg5: memref<32x32xbf16, #tpu.memory_space<vmem>>, %arg6: memref<1x32xf32, #tpu.memory_space<vmem>>, %arg7: memref<1x32xf32, #tpu.memory_space<vmem>>, %arg8: memref<1x32xf32, #tpu.memory_space<vmem>>, %arg9: memref<32x32xbf16, #tpu.memory_space<vmem>>, %arg10: memref<1x32xf32, #tpu.memory_space<vmem>>, %arg11: memref<32x64xbf16, #tpu.memory_space<vmem>>, %arg12: memref<1x64xf32, #tpu.memory_space<vmem>>, %arg13: memref<32x32xbf16, #tpu.memory_space<vmem>>, %arg14: memref<1x32xf32, #tpu.memory_space<vmem>>, %arg15: memref<1x32xf32, #tpu.memory_space<vmem>>, %arg16: memref<1x32xf32, #tpu.memory_space<vmem>>, %arg17: memref<32x64xbf16, #tpu.memory_space<vmem>>, %arg18: memref<1x64xf32, #tpu.memory_space<vmem>>, %arg19: memref<64x32xbf16, #tpu.memory_space<vmem>>, %arg20: memref<1x32xf32, #tpu.memory_space<vmem>>, %arg21: memref<1x32xf32, #tpu.memory_space<vmem>>, %arg22: memref<1x32xf32, #tpu.memory_space<vmem>>, %arg23: memref<1x8x32xf32, #tpu.memory_space<vmem>>) attributes {dimension_semantics = [#tpu.dimension_semantics<parallel>], iteration_bounds = array<i64: 2>, scalar_prefetch = 0 : i64, scratch_operands = 0 : i64, tpu.core_type = #tpu.core_type<tc>, window_params = [{transform_indices = @transform_0, window_bounds = array<i64: 1, 8, 32>}, {transform_indices = @transform_1, window_bounds = array<i64: 1, 8, 32>}, {pipeline_mode = #tpu.pipeline_mode<synchronous>, transform_indices = @transform_2, window_bounds = array<i64: 32, 96>}, {pipeline_mode = #tpu.pipeline_mode<synchronous>, transform_indices = @transform_3, window_bounds = array<i64: 1, 96>}, {pipeline_mode = #tpu.pipeline_mode<synchronous>, transform_indices = @transform_4, window_bounds = array<i64: 32, 32>}, {pipeline_mode = #tpu.pipeline_mode<synchronous>, transform_indices = @transform_5, window_bounds = array<i64: 1, 32>}, {pipeline_mode = #tpu.pipeline_mode<synchronous>, transform_indices = @transform_6, window_bounds = array<i64: 1, 32>}, {pipeline_mode = #tpu.pipeline_mode<synchronous>, transform_indices = @transform_7, window_bounds = array<i64: 1, 32>}, {pipeline_mode = #tpu.pipeline_mode<synchronous>, transform_indices = @transform_8, window_bounds = array<i64: 32, 32>}, {pipeline_mode = #tpu.pipeline_mode<synchronous>, transform_indices = @transform_9, window_bounds = array<i64: 1, 32>}, {pipeline_mode = #tpu.pipeline_mode<synchronous>, transform_indices = @transform_10, window_bounds = array<i64: 32, 64>}, {pipeline_mode = #tpu.pipeline_mode<synchronous>, transform_indices = @transform_11, window_bounds = array<i64: 1, 64>}, {pipeline_mode = #tpu.pipeline_mode<synchronous>, transform_indices = @transform_12, window_bounds = array<i64: 32, 32>}, {pipeline_mode = #tpu.pipeline_mode<synchronous>, transform_indices = @transform_13, window_bounds = array<i64: 1, 32>}, {pipeline_mode = #tpu.pipeline_mode<synchronous>, transform_indices = @transform_14, window_bounds = array<i64: 1, 32>}, {pipeline_mode = #tpu.pipeline_mode<synchronous>, transform_indices = @transform_15, window_bounds = array<i64: 1, 32>}, {pipeline_mode = #tpu.pipeline_mode<synchronous>, transform_indices = @transform_16, window_bounds = array<i64: 32, 64>}, {pipeline_mode = #tpu.pipeline_mode<synchronous>, transform_indices = @transform_17, window_bounds = array<i64: 1, 64>}, {pipeline_mode = #tpu.pipeline_mode<synchronous>, transform_indices = @transform_18, window_bounds = array<i64: 64, 32>}, {pipeline_mode = #tpu.pipeline_mode<synchronous>, transform_indices = @transform_19, window_bounds = array<i64: 1, 32>}, {pipeline_mode = #tpu.pipeline_mode<synchronous>, transform_indices = @transform_20, window_bounds = array<i64: 1, 32>}, {pipeline_mode = #tpu.pipeline_mode<synchronous>, transform_indices = @transform_21, window_bounds = array<i64: 1, 32>}, {transform_indices = @transform_22, window_bounds = array<i64: 1, 8, 32>}]} {
    %c0 = arith.constant 0 : index
    %c0_0 = arith.constant 0 : index
    %c0_1 = arith.constant 0 : index
    %0 = vector.load %arg1[%c0, %c0_0, %c0_1] : memref<1x8x32xf32, #tpu.memory_space<vmem>>, vector<1x8x32xf32>
    %1 = vector.shape_cast %0 : vector<1x8x32xf32> to vector<8x32xf32>
    %c0_2 = arith.constant 0 : index
    %c0_3 = arith.constant 0 : index
    %c0_4 = arith.constant 0 : index
    %2 = vector.load %arg2[%c0_2, %c0_3, %c0_4] : memref<1x8x32xf32, #tpu.memory_space<vmem>>, vector<1x8x32xf32>
    %3 = vector.shape_cast %2 : vector<1x8x32xf32> to vector<8x32xf32>
    %4 = arith.truncf %1 : vector<8x32xf32> to vector<8x32xbf16>
    %c0_5 = arith.constant 0 : index
    %c0_6 = arith.constant 0 : index
    %5 = vector.load %arg3[%c0_5, %c0_6] : memref<32x96xbf16, #tpu.memory_space<vmem>>, vector<32x96xbf16>
    %cst = arith.constant dense<0.000000e+00> : vector<8x96xf32>
    %6 = tpu.matmul %4, %5, %cst {dimension_numbers = #tpu.dot_dimension_numbers<[1], [0], [0], [1], [0, 0, 1, 1], [], []>} : vector<8x32xbf16>, vector<32x96xbf16>, vector<8x96xf32> -> vector<8x96xf32>
    %c0_7 = arith.constant 0 : index
    %c0_8 = arith.constant 0 : index
    %7 = vector.load %arg4[%c0_7, %c0_8] : memref<1x96xf32, #tpu.memory_space<vmem>>, vector<1x96xf32>
    %8 = vector.broadcast %7 : vector<1x96xf32> to vector<8x96xf32>
    %9 = arith.addf %6, %8 : vector<8x96xf32>
    %10 = vector.extract_strided_slice %9 {offsets = [0, 0], sizes = [8, 32], strides = [1, 1]} : vector<8x96xf32> to vector<8x32xf32>
    %11 = vector.extract_strided_slice %9 {offsets = [0, 32], sizes = [8, 32], strides = [1, 1]} : vector<8x96xf32> to vector<8x32xf32>
    %12 = vector.extract_strided_slice %9 {offsets = [0, 64], sizes = [8, 32], strides = [1, 1]} : vector<8x96xf32> to vector<8x32xf32>
    %13 = vector.extract_strided_slice %10 {offsets = [0, 0], sizes = [8, 8], strides = [1, 1]} : vector<8x32xf32> to vector<8x8xf32>
    %14 = vector.extract_strided_slice %10 {offsets = [0, 8], sizes = [8, 8], strides = [1, 1]} : vector<8x32xf32> to vector<8x8xf32>
    %15 = vector.extract_strided_slice %10 {offsets = [0, 16], sizes = [8, 8], strides = [1, 1]} : vector<8x32xf32> to vector<8x8xf32>
    %16 = vector.extract_strided_slice %10 {offsets = [0, 24], sizes = [8, 8], strides = [1, 1]} : vector<8x32xf32> to vector<8x8xf32>
    %17 = vector.shape_cast %13 : vector<8x8xf32> to vector<1x8x8xf32>
    %18 = vector.shape_cast %14 : vector<8x8xf32> to vector<1x8x8xf32>
    %19 = vector.shape_cast %15 : vector<8x8xf32> to vector<1x8x8xf32>
    %20 = vector.shape_cast %16 : vector<8x8xf32> to vector<1x8x8xf32>
    %21 = tpu.concatenate %17, %18, %19, %20 in 0 : vector<1x8x8xf32>, vector<1x8x8xf32>, vector<1x8x8xf32>, vector<1x8x8xf32> -> vector<4x8x8xf32>
    %22 = arith.truncf %21 : vector<4x8x8xf32> to vector<4x8x8xbf16>
    %23 = vector.extract_strided_slice %11 {offsets = [0, 0], sizes = [8, 8], strides = [1, 1]} : vector<8x32xf32> to vector<8x8xf32>
    %24 = vector.extract_strided_slice %11 {offsets = [0, 8], sizes = [8, 8], strides = [1, 1]} : vector<8x32xf32> to vector<8x8xf32>
    %25 = vector.extract_strided_slice %11 {offsets = [0, 16], sizes = [8, 8], strides = [1, 1]} : vector<8x32xf32> to vector<8x8xf32>
    %26 = vector.extract_strided_slice %11 {offsets = [0, 24], sizes = [8, 8], strides = [1, 1]} : vector<8x32xf32> to vector<8x8xf32>
    %27 = vector.shape_cast %23 : vector<8x8xf32> to vector<1x8x8xf32>
    %28 = vector.shape_cast %24 : vector<8x8xf32> to vector<1x8x8xf32>
    %29 = vector.shape_cast %25 : vector<8x8xf32> to vector<1x8x8xf32>
    %30 = vector.shape_cast %26 : vector<8x8xf32> to vector<1x8x8xf32>
    %31 = tpu.concatenate %27, %28, %29, %30 in 0 : vector<1x8x8xf32>, vector<1x8x8xf32>, vector<1x8x8xf32>, vector<1x8x8xf32> -> vector<4x8x8xf32>
    %32 = arith.truncf %31 : vector<4x8x8xf32> to vector<4x8x8xbf16>
    %33 = vector.extract_strided_slice %12 {offsets = [0, 0], sizes = [8, 8], strides = [1, 1]} : vector<8x32xf32> to vector<8x8xf32>
    %34 = vector.extract_strided_slice %12 {offsets = [0, 8], sizes = [8, 8], strides = [1, 1]} : vector<8x32xf32> to vector<8x8xf32>
    %35 = vector.extract_strided_slice %12 {offsets = [0, 16], sizes = [8, 8], strides = [1, 1]} : vector<8x32xf32> to vector<8x8xf32>
    %36 = vector.extract_strided_slice %12 {offsets = [0, 24], sizes = [8, 8], strides = [1, 1]} : vector<8x32xf32> to vector<8x8xf32>
    %37 = vector.shape_cast %33 : vector<8x8xf32> to vector<1x8x8xf32>
    %38 = vector.shape_cast %34 : vector<8x8xf32> to vector<1x8x8xf32>
    %39 = vector.shape_cast %35 : vector<8x8xf32> to vector<1x8x8xf32>
    %40 = vector.shape_cast %36 : vector<8x8xf32> to vector<1x8x8xf32>
    %41 = tpu.concatenate %37, %38, %39, %40 in 0 : vector<1x8x8xf32>, vector<1x8x8xf32>, vector<1x8x8xf32>, vector<1x8x8xf32> -> vector<4x8x8xf32>
    %42 = arith.truncf %41 : vector<4x8x8xf32> to vector<4x8x8xbf16>
    "tpu.trace_start"() <{level = 10 : i32, message = "hqd,hkd->hqk"}> : () -> ()
    %cst_9 = arith.constant dense<0.000000e+00> : vector<4x8x8xf32>
    %43 = tpu.matmul %22, %32, %cst_9 {dimension_numbers = #tpu.dot_dimension_numbers<[2], [2], [1], [1], [0, 0, 0, 1, 1, 1], [0], [0]>} : vector<4x8x8xbf16>, vector<4x8x8xbf16>, vector<4x8x8xf32> -> vector<4x8x8xf32>
    "tpu.trace_stop"() : () -> ()
    %cst_10 = arith.constant 0.353553385 : f32
    %44 = vector.broadcast %cst_10 : f32 to vector<4x8x8xf32>
    %45 = arith.mulf %43, %44 : vector<4x8x8xf32>
    %46 = tpu.iota {dimensions = array<i32: 0>} : vector<8x8xi32>
    %47 = tpu.iota {dimensions = array<i32: 1>} : vector<8x8xi32>
    %48 = arith.cmpi sle, %47, %46 : vector<8x8xi32>
    %49 = vector.shape_cast %48 : vector<8x8xi1> to vector<1x8x8xi1>
    %cst_11 = arith.constant -1.000000e+09 : f32
    %50 = vector.shape_cast %49 : vector<1x8x8xi1> to vector<1x8x8xi1>
    %51 = vector.broadcast %50 : vector<1x8x8xi1> to vector<4x8x8xi1>
    %52 = vector.broadcast %cst_11 : f32 to vector<4x8x8xf32>
    %53 = arith.select %51, %45, %52 : vector<4x8x8xi1>, vector<4x8x8xf32>
    %cst_12 = arith.constant dense<0xFF800000> : vector<4x8xf32>
    %54 = vector.multi_reduction <maximumf>, %53, %cst_12 [2] : vector<4x8x8xf32> to vector<4x8xf32>
    %55 = vector.shape_cast %54 : vector<4x8xf32> to vector<4x8x1xf32>
    %56 = vector.broadcast %55 : vector<4x8x1xf32> to vector<4x8x8xf32>
    %57 = arith.subf %53, %56 : vector<4x8x8xf32>
    %58 = math.exp %57 : vector<4x8x8xf32>
    %cst_13 = arith.constant dense<0.000000e+00> : vector<4x8xf32>
    %59 = vector.multi_reduction <add>, %58, %cst_13 [2] : vector<4x8x8xf32> to vector<4x8xf32>
    %60 = vector.shape_cast %59 : vector<4x8xf32> to vector<4x8x1xf32>
    %61 = tpu.reciprocal %60 {approx = true} : vector<4x8x1xf32> -> vector<4x8x1xf32>
    %62 = vector.broadcast %61 : vector<4x8x1xf32> to vector<4x8x8xf32>
    %63 = arith.mulf %58, %62 : vector<4x8x8xf32>
    %64 = arith.truncf %63 : vector<4x8x8xf32> to vector<4x8x8xbf16>
    "tpu.trace_start"() <{level = 10 : i32, message = "hqk,hkd->hqd"}> : () -> ()
    %cst_14 = arith.constant dense<0.000000e+00> : vector<4x8x8xf32>
    %65 = tpu.matmul %64, %42, %cst_14 {dimension_numbers = #tpu.dot_dimension_numbers<[2], [1], [1], [2], [0, 0, 0, 1, 1, 2], [0], [0]>} : vector<4x8x8xbf16>, vector<4x8x8xbf16>, vector<4x8x8xf32> -> vector<4x8x8xf32>
    "tpu.trace_stop"() : () -> ()
    %66 = vector.extract_strided_slice %65 {offsets = [0, 0, 0], sizes = [1, 8, 8], strides = [1, 1, 1]} : vector<4x8x8xf32> to vector<1x8x8xf32>
    %67 = vector.shape_cast %66 : vector<1x8x8xf32> to vector<8x8xf32>
    %68 = vector.extract_strided_slice %65 {offsets = [1, 0, 0], sizes = [1, 8, 8], strides = [1, 1, 1]} : vector<4x8x8xf32> to vector<1x8x8xf32>
    %69 = vector.shape_cast %68 : vector<1x8x8xf32> to vector<8x8xf32>
    %70 = vector.extract_strided_slice %65 {offsets = [2, 0, 0], sizes = [1, 8, 8], strides = [1, 1, 1]} : vector<4x8x8xf32> to vector<1x8x8xf32>
    %71 = vector.shape_cast %70 : vector<1x8x8xf32> to vector<8x8xf32>
    %72 = vector.extract_strided_slice %65 {offsets = [3, 0, 0], sizes = [1, 8, 8], strides = [1, 1, 1]} : vector<4x8x8xf32> to vector<1x8x8xf32>
    %73 = vector.shape_cast %72 : vector<1x8x8xf32> to vector<8x8xf32>
    %74 = tpu.concatenate %67, %69, %71, %73 in 1 : vector<8x8xf32>, vector<8x8xf32>, vector<8x8xf32>, vector<8x8xf32> -> vector<8x32xf32>
    %75 = arith.truncf %74 : vector<8x32xf32> to vector<8x32xbf16>
    %c0_15 = arith.constant 0 : index
    %c0_16 = arith.constant 0 : index
    %76 = vector.load %arg5[%c0_15, %c0_16] : memref<32x32xbf16, #tpu.memory_space<vmem>>, vector<32x32xbf16>
    %cst_17 = arith.constant dense<0.000000e+00> : vector<8x32xf32>
    %77 = tpu.matmul %75, %76, %cst_17 {dimension_numbers = #tpu.dot_dimension_numbers<[1], [0], [0], [1], [0, 0, 1, 1], [], []>} : vector<8x32xbf16>, vector<32x32xbf16>, vector<8x32xf32> -> vector<8x32xf32>
    %c0_18 = arith.constant 0 : index
    %c0_19 = arith.constant 0 : index
    %78 = vector.load %arg6[%c0_18, %c0_19] : memref<1x32xf32, #tpu.memory_space<vmem>>, vector<1x32xf32>
    %79 = vector.broadcast %78 : vector<1x32xf32> to vector<8x32xf32>
    %80 = arith.addf %77, %79 : vector<8x32xf32>
    %81 = arith.addf %1, %80 : vector<8x32xf32>
    %c0_20 = arith.constant 0 : index
    %c0_21 = arith.constant 0 : index
    %82 = vector.load %arg7[%c0_20, %c0_21] : memref<1x32xf32, #tpu.memory_space<vmem>>, vector<1x32xf32>
    %c0_22 = arith.constant 0 : index
    %c0_23 = arith.constant 0 : index
    %83 = vector.load %arg8[%c0_22, %c0_23] : memref<1x32xf32, #tpu.memory_space<vmem>>, vector<1x32xf32>
    %cst_24 = arith.constant dense<0.000000e+00> : vector<8xf32>
    %84 = vector.multi_reduction <add>, %81, %cst_24 [1] : vector<8x32xf32> to vector<8xf32>
    %85 = vector.shape_cast %84 : vector<8xf32> to vector<8x1xf32>
    %cst_25 = arith.constant 3.200000e+01 : f32
    %86 = vector.broadcast %cst_25 : f32 to vector<8x1xf32>
    %87 = arith.divf %85, %86 : vector<8x1xf32>
    %88 = vector.broadcast %87 : vector<8x1xf32> to vector<8x32xf32>
    %89 = arith.subf %81, %88 : vector<8x32xf32>
    %90 = arith.mulf %89, %89 : vector<8x32xf32>
    %cst_26 = arith.constant dense<0.000000e+00> : vector<8xf32>
    %91 = vector.multi_reduction <add>, %90, %cst_26 [1] : vector<8x32xf32> to vector<8xf32>
    %92 = vector.shape_cast %91 : vector<8xf32> to vector<8x1xf32>
    %cst_27 = arith.constant 3.200000e+01 : f32
    %93 = vector.broadcast %cst_27 : f32 to vector<8x1xf32>
    %94 = arith.divf %92, %93 : vector<8x1xf32>
    %cst_28 = arith.constant 9.99999974E-6 : f32
    %95 = vector.broadcast %cst_28 : f32 to vector<8x1xf32>
    %96 = arith.addf %94, %95 : vector<8x1xf32>
    %97 = math.rsqrt %96 : vector<8x1xf32>
    %98 = vector.broadcast %87 : vector<8x1xf32> to vector<8x32xf32>
    %99 = arith.subf %81, %98 : vector<8x32xf32>
    %100 = vector.broadcast %97 : vector<8x1xf32> to vector<8x32xf32>
    %101 = arith.mulf %99, %100 : vector<8x32xf32>
    %102 = vector.broadcast %82 : vector<1x32xf32> to vector<8x32xf32>
    %103 = arith.mulf %101, %102 : vector<8x32xf32>
    %104 = vector.broadcast %83 : vector<1x32xf32> to vector<8x32xf32>
    %105 = arith.addf %103, %104 : vector<8x32xf32>
    %106 = arith.truncf %105 : vector<8x32xf32> to vector<8x32xbf16>
    %c0_29 = arith.constant 0 : index
    %c0_30 = arith.constant 0 : index
    %107 = vector.load %arg9[%c0_29, %c0_30] : memref<32x32xbf16, #tpu.memory_space<vmem>>, vector<32x32xbf16>
    %cst_31 = arith.constant dense<0.000000e+00> : vector<8x32xf32>
    %108 = tpu.matmul %106, %107, %cst_31 {dimension_numbers = #tpu.dot_dimension_numbers<[1], [0], [0], [1], [0, 0, 1, 1], [], []>} : vector<8x32xbf16>, vector<32x32xbf16>, vector<8x32xf32> -> vector<8x32xf32>
    %c0_32 = arith.constant 0 : index
    %c0_33 = arith.constant 0 : index
    %109 = vector.load %arg10[%c0_32, %c0_33] : memref<1x32xf32, #tpu.memory_space<vmem>>, vector<1x32xf32>
    %110 = vector.broadcast %109 : vector<1x32xf32> to vector<8x32xf32>
    %111 = arith.addf %108, %110 : vector<8x32xf32>
    %112 = arith.truncf %3 : vector<8x32xf32> to vector<8x32xbf16>
    %c0_34 = arith.constant 0 : index
    %c0_35 = arith.constant 0 : index
    %113 = vector.load %arg11[%c0_34, %c0_35] : memref<32x64xbf16, #tpu.memory_space<vmem>>, vector<32x64xbf16>
    %cst_36 = arith.constant dense<0.000000e+00> : vector<8x64xf32>
    %114 = tpu.matmul %112, %113, %cst_36 {dimension_numbers = #tpu.dot_dimension_numbers<[1], [0], [0], [1], [0, 0, 1, 1], [], []>} : vector<8x32xbf16>, vector<32x64xbf16>, vector<8x64xf32> -> vector<8x64xf32>
    %c0_37 = arith.constant 0 : index
    %c0_38 = arith.constant 0 : index
    %115 = vector.load %arg12[%c0_37, %c0_38] : memref<1x64xf32, #tpu.memory_space<vmem>>, vector<1x64xf32>
    %116 = vector.broadcast %115 : vector<1x64xf32> to vector<8x64xf32>
    %117 = arith.addf %114, %116 : vector<8x64xf32>
    %118 = vector.extract_strided_slice %117 {offsets = [0, 0], sizes = [8, 32], strides = [1, 1]} : vector<8x64xf32> to vector<8x32xf32>
    %119 = vector.extract_strided_slice %117 {offsets = [0, 32], sizes = [8, 32], strides = [1, 1]} : vector<8x64xf32> to vector<8x32xf32>
    %120 = vector.extract_strided_slice %111 {offsets = [0, 0], sizes = [8, 8], strides = [1, 1]} : vector<8x32xf32> to vector<8x8xf32>
    %121 = vector.extract_strided_slice %111 {offsets = [0, 8], sizes = [8, 8], strides = [1, 1]} : vector<8x32xf32> to vector<8x8xf32>
    %122 = vector.extract_strided_slice %111 {offsets = [0, 16], sizes = [8, 8], strides = [1, 1]} : vector<8x32xf32> to vector<8x8xf32>
    %123 = vector.extract_strided_slice %111 {offsets = [0, 24], sizes = [8, 8], strides = [1, 1]} : vector<8x32xf32> to vector<8x8xf32>
    %124 = vector.shape_cast %120 : vector<8x8xf32> to vector<1x8x8xf32>
    %125 = vector.shape_cast %121 : vector<8x8xf32> to vector<1x8x8xf32>
    %126 = vector.shape_cast %122 : vector<8x8xf32> to vector<1x8x8xf32>
    %127 = vector.shape_cast %123 : vector<8x8xf32> to vector<1x8x8xf32>
    %128 = tpu.concatenate %124, %125, %126, %127 in 0 : vector<1x8x8xf32>, vector<1x8x8xf32>, vector<1x8x8xf32>, vector<1x8x8xf32> -> vector<4x8x8xf32>
    %129 = arith.truncf %128 : vector<4x8x8xf32> to vector<4x8x8xbf16>
    %130 = vector.extract_strided_slice %118 {offsets = [0, 0], sizes = [8, 8], strides = [1, 1]} : vector<8x32xf32> to vector<8x8xf32>
    %131 = vector.extract_strided_slice %118 {offsets = [0, 8], sizes = [8, 8], strides = [1, 1]} : vector<8x32xf32> to vector<8x8xf32>
    %132 = vector.extract_strided_slice %118 {offsets = [0, 16], sizes = [8, 8], strides = [1, 1]} : vector<8x32xf32> to vector<8x8xf32>
    %133 = vector.extract_strided_slice %118 {offsets = [0, 24], sizes = [8, 8], strides = [1, 1]} : vector<8x32xf32> to vector<8x8xf32>
    %134 = vector.shape_cast %130 : vector<8x8xf32> to vector<1x8x8xf32>
    %135 = vector.shape_cast %131 : vector<8x8xf32> to vector<1x8x8xf32>
    %136 = vector.shape_cast %132 : vector<8x8xf32> to vector<1x8x8xf32>
    %137 = vector.shape_cast %133 : vector<8x8xf32> to vector<1x8x8xf32>
    %138 = tpu.concatenate %134, %135, %136, %137 in 0 : vector<1x8x8xf32>, vector<1x8x8xf32>, vector<1x8x8xf32>, vector<1x8x8xf32> -> vector<4x8x8xf32>
    %139 = arith.truncf %138 : vector<4x8x8xf32> to vector<4x8x8xbf16>
    %140 = vector.extract_strided_slice %119 {offsets = [0, 0], sizes = [8, 8], strides = [1, 1]} : vector<8x32xf32> to vector<8x8xf32>
    %141 = vector.extract_strided_slice %119 {offsets = [0, 8], sizes = [8, 8], strides = [1, 1]} : vector<8x32xf32> to vector<8x8xf32>
    %142 = vector.extract_strided_slice %119 {offsets = [0, 16], sizes = [8, 8], strides = [1, 1]} : vector<8x32xf32> to vector<8x8xf32>
    %143 = vector.extract_strided_slice %119 {offsets = [0, 24], sizes = [8, 8], strides = [1, 1]} : vector<8x32xf32> to vector<8x8xf32>
    %144 = vector.shape_cast %140 : vector<8x8xf32> to vector<1x8x8xf32>
    %145 = vector.shape_cast %141 : vector<8x8xf32> to vector<1x8x8xf32>
    %146 = vector.shape_cast %142 : vector<8x8xf32> to vector<1x8x8xf32>
    %147 = vector.shape_cast %143 : vector<8x8xf32> to vector<1x8x8xf32>
    %148 = tpu.concatenate %144, %145, %146, %147 in 0 : vector<1x8x8xf32>, vector<1x8x8xf32>, vector<1x8x8xf32>, vector<1x8x8xf32> -> vector<4x8x8xf32>
    %149 = arith.truncf %148 : vector<4x8x8xf32> to vector<4x8x8xbf16>
    "tpu.trace_start"() <{level = 10 : i32, message = "hqd,hkd->hqk"}> : () -> ()
    %cst_39 = arith.constant dense<0.000000e+00> : vector<4x8x8xf32>
    %150 = tpu.matmul %129, %139, %cst_39 {dimension_numbers = #tpu.dot_dimension_numbers<[2], [2], [1], [1], [0, 0, 0, 1, 1, 1], [0], [0]>} : vector<4x8x8xbf16>, vector<4x8x8xbf16>, vector<4x8x8xf32> -> vector<4x8x8xf32>
    "tpu.trace_stop"() : () -> ()
    %cst_40 = arith.constant 0.353553385 : f32
    %151 = vector.broadcast %cst_40 : f32 to vector<4x8x8xf32>
    %152 = arith.mulf %150, %151 : vector<4x8x8xf32>
    %cst_41 = arith.constant dense<0xFF800000> : vector<4x8xf32>
    %153 = vector.multi_reduction <maximumf>, %152, %cst_41 [2] : vector<4x8x8xf32> to vector<4x8xf32>
    %154 = vector.shape_cast %153 : vector<4x8xf32> to vector<4x8x1xf32>
    %155 = vector.broadcast %154 : vector<4x8x1xf32> to vector<4x8x8xf32>
    %156 = arith.subf %152, %155 : vector<4x8x8xf32>
    %157 = math.exp %156 : vector<4x8x8xf32>
    %cst_42 = arith.constant dense<0.000000e+00> : vector<4x8xf32>
    %158 = vector.multi_reduction <add>, %157, %cst_42 [2] : vector<4x8x8xf32> to vector<4x8xf32>
    %159 = vector.shape_cast %158 : vector<4x8xf32> to vector<4x8x1xf32>
    %160 = tpu.reciprocal %159 {approx = true} : vector<4x8x1xf32> -> vector<4x8x1xf32>
    %161 = vector.broadcast %160 : vector<4x8x1xf32> to vector<4x8x8xf32>
    %162 = arith.mulf %157, %161 : vector<4x8x8xf32>
    %163 = arith.truncf %162 : vector<4x8x8xf32> to vector<4x8x8xbf16>
    "tpu.trace_start"() <{level = 10 : i32, message = "hqk,hkd->hqd"}> : () -> ()
    %cst_43 = arith.constant dense<0.000000e+00> : vector<4x8x8xf32>
    %164 = tpu.matmul %163, %149, %cst_43 {dimension_numbers = #tpu.dot_dimension_numbers<[2], [1], [1], [2], [0, 0, 0, 1, 1, 2], [0], [0]>} : vector<4x8x8xbf16>, vector<4x8x8xbf16>, vector<4x8x8xf32> -> vector<4x8x8xf32>
    "tpu.trace_stop"() : () -> ()
    %165 = vector.extract_strided_slice %164 {offsets = [0, 0, 0], sizes = [1, 8, 8], strides = [1, 1, 1]} : vector<4x8x8xf32> to vector<1x8x8xf32>
    %166 = vector.shape_cast %165 : vector<1x8x8xf32> to vector<8x8xf32>
    %167 = vector.extract_strided_slice %164 {offsets = [1, 0, 0], sizes = [1, 8, 8], strides = [1, 1, 1]} : vector<4x8x8xf32> to vector<1x8x8xf32>
    %168 = vector.shape_cast %167 : vector<1x8x8xf32> to vector<8x8xf32>
    %169 = vector.extract_strided_slice %164 {offsets = [2, 0, 0], sizes = [1, 8, 8], strides = [1, 1, 1]} : vector<4x8x8xf32> to vector<1x8x8xf32>
    %170 = vector.shape_cast %169 : vector<1x8x8xf32> to vector<8x8xf32>
    %171 = vector.extract_strided_slice %164 {offsets = [3, 0, 0], sizes = [1, 8, 8], strides = [1, 1, 1]} : vector<4x8x8xf32> to vector<1x8x8xf32>
    %172 = vector.shape_cast %171 : vector<1x8x8xf32> to vector<8x8xf32>
    %173 = tpu.concatenate %166, %168, %170, %172 in 1 : vector<8x8xf32>, vector<8x8xf32>, vector<8x8xf32>, vector<8x8xf32> -> vector<8x32xf32>
    %174 = arith.truncf %173 : vector<8x32xf32> to vector<8x32xbf16>
    %c0_44 = arith.constant 0 : index
    %c0_45 = arith.constant 0 : index
    %175 = vector.load %arg13[%c0_44, %c0_45] : memref<32x32xbf16, #tpu.memory_space<vmem>>, vector<32x32xbf16>
    %cst_46 = arith.constant dense<0.000000e+00> : vector<8x32xf32>
    %176 = tpu.matmul %174, %175, %cst_46 {dimension_numbers = #tpu.dot_dimension_numbers<[1], [0], [0], [1], [0, 0, 1, 1], [], []>} : vector<8x32xbf16>, vector<32x32xbf16>, vector<8x32xf32> -> vector<8x32xf32>
    %c0_47 = arith.constant 0 : index
    %c0_48 = arith.constant 0 : index
    %177 = vector.load %arg14[%c0_47, %c0_48] : memref<1x32xf32, #tpu.memory_space<vmem>>, vector<1x32xf32>
    %178 = vector.broadcast %177 : vector<1x32xf32> to vector<8x32xf32>
    %179 = arith.addf %176, %178 : vector<8x32xf32>
    %180 = arith.addf %105, %179 : vector<8x32xf32>
    %c0_49 = arith.constant 0 : index
    %c0_50 = arith.constant 0 : index
    %181 = vector.load %arg15[%c0_49, %c0_50] : memref<1x32xf32, #tpu.memory_space<vmem>>, vector<1x32xf32>
    %c0_51 = arith.constant 0 : index
    %c0_52 = arith.constant 0 : index
    %182 = vector.load %arg16[%c0_51, %c0_52] : memref<1x32xf32, #tpu.memory_space<vmem>>, vector<1x32xf32>
    %cst_53 = arith.constant dense<0.000000e+00> : vector<8xf32>
    %183 = vector.multi_reduction <add>, %180, %cst_53 [1] : vector<8x32xf32> to vector<8xf32>
    %184 = vector.shape_cast %183 : vector<8xf32> to vector<8x1xf32>
    %cst_54 = arith.constant 3.200000e+01 : f32
    %185 = vector.broadcast %cst_54 : f32 to vector<8x1xf32>
    %186 = arith.divf %184, %185 : vector<8x1xf32>
    %187 = vector.broadcast %186 : vector<8x1xf32> to vector<8x32xf32>
    %188 = arith.subf %180, %187 : vector<8x32xf32>
    %189 = arith.mulf %188, %188 : vector<8x32xf32>
    %cst_55 = arith.constant dense<0.000000e+00> : vector<8xf32>
    %190 = vector.multi_reduction <add>, %189, %cst_55 [1] : vector<8x32xf32> to vector<8xf32>
    %191 = vector.shape_cast %190 : vector<8xf32> to vector<8x1xf32>
    %cst_56 = arith.constant 3.200000e+01 : f32
    %192 = vector.broadcast %cst_56 : f32 to vector<8x1xf32>
    %193 = arith.divf %191, %192 : vector<8x1xf32>
    %cst_57 = arith.constant 9.99999974E-6 : f32
    %194 = vector.broadcast %cst_57 : f32 to vector<8x1xf32>
    %195 = arith.addf %193, %194 : vector<8x1xf32>
    %196 = math.rsqrt %195 : vector<8x1xf32>
    %197 = vector.broadcast %186 : vector<8x1xf32> to vector<8x32xf32>
    %198 = arith.subf %180, %197 : vector<8x32xf32>
    %199 = vector.broadcast %196 : vector<8x1xf32> to vector<8x32xf32>
    %200 = arith.mulf %198, %199 : vector<8x32xf32>
    %201 = vector.broadcast %181 : vector<1x32xf32> to vector<8x32xf32>
    %202 = arith.mulf %200, %201 : vector<8x32xf32>
    %203 = vector.broadcast %182 : vector<1x32xf32> to vector<8x32xf32>
    %204 = arith.addf %202, %203 : vector<8x32xf32>
    %205 = arith.truncf %204 : vector<8x32xf32> to vector<8x32xbf16>
    %c0_58 = arith.constant 0 : index
    %c0_59 = arith.constant 0 : index
    %206 = vector.load %arg17[%c0_58, %c0_59] : memref<32x64xbf16, #tpu.memory_space<vmem>>, vector<32x64xbf16>
    %cst_60 = arith.constant dense<0.000000e+00> : vector<8x64xf32>
    %207 = tpu.matmul %205, %206, %cst_60 {dimension_numbers = #tpu.dot_dimension_numbers<[1], [0], [0], [1], [0, 0, 1, 1], [], []>} : vector<8x32xbf16>, vector<32x64xbf16>, vector<8x64xf32> -> vector<8x64xf32>
    %c0_61 = arith.constant 0 : index
    %c0_62 = arith.constant 0 : index
    %208 = vector.load %arg18[%c0_61, %c0_62] : memref<1x64xf32, #tpu.memory_space<vmem>>, vector<1x64xf32>
    %209 = vector.broadcast %208 : vector<1x64xf32> to vector<8x64xf32>
    %210 = arith.addf %207, %209 : vector<8x64xf32>
    %cst_63 = arith.constant 0.000000e+00 : f32
    %211 = vector.broadcast %cst_63 : f32 to vector<8x64xf32>
    %212 = arith.maximumf %210, %211 : vector<8x64xf32>
    %213 = arith.truncf %212 : vector<8x64xf32> to vector<8x64xbf16>
    %c0_64 = arith.constant 0 : index
    %c0_65 = arith.constant 0 : index
    %214 = vector.load %arg19[%c0_64, %c0_65] : memref<64x32xbf16, #tpu.memory_space<vmem>>, vector<64x32xbf16>
    %cst_66 = arith.constant dense<0.000000e+00> : vector<8x32xf32>
    %215 = tpu.matmul %213, %214, %cst_66 {dimension_numbers = #tpu.dot_dimension_numbers<[1], [0], [0], [1], [0, 0, 1, 1], [], []>} : vector<8x64xbf16>, vector<64x32xbf16>, vector<8x32xf32> -> vector<8x32xf32>
    %c0_67 = arith.constant 0 : index
    %c0_68 = arith.constant 0 : index
    %216 = vector.load %arg20[%c0_67, %c0_68] : memref<1x32xf32, #tpu.memory_space<vmem>>, vector<1x32xf32>
    %217 = vector.broadcast %216 : vector<1x32xf32> to vector<8x32xf32>
    %218 = arith.addf %215, %217 : vector<8x32xf32>
    %219 = arith.addf %204, %218 : vector<8x32xf32>
    %c0_69 = arith.constant 0 : index
    %c0_70 = arith.constant 0 : index
    %220 = vector.load %arg21[%c0_69, %c0_70] : memref<1x32xf32, #tpu.memory_space<vmem>>, vector<1x32xf32>
    %c0_71 = arith.constant 0 : index
    %c0_72 = arith.constant 0 : index
    %221 = vector.load %arg22[%c0_71, %c0_72] : memref<1x32xf32, #tpu.memory_space<vmem>>, vector<1x32xf32>
    %cst_73 = arith.constant dense<0.000000e+00> : vector<8xf32>
    %222 = vector.multi_reduction <add>, %219, %cst_73 [1] : vector<8x32xf32> to vector<8xf32>
    %223 = vector.shape_cast %222 : vector<8xf32> to vector<8x1xf32>
    %cst_74 = arith.constant 3.200000e+01 : f32
    %224 = vector.broadcast %cst_74 : f32 to vector<8x1xf32>
    %225 = arith.divf %223, %224 : vector<8x1xf32>
    %226 = vector.broadcast %225 : vector<8x1xf32> to vector<8x32xf32>
    %227 = arith.subf %219, %226 : vector<8x32xf32>
    %228 = arith.mulf %227, %227 : vector<8x32xf32>
    %cst_75 = arith.constant dense<0.000000e+00> : vector<8xf32>
    %229 = vector.multi_reduction <add>, %228, %cst_75 [1] : vector<8x32xf32> to vector<8xf32>
    %230 = vector.shape_cast %229 : vector<8xf32> to vector<8x1xf32>
    %cst_76 = arith.constant 3.200000e+01 : f32
    %231 = vector.broadcast %cst_76 : f32 to vector<8x1xf32>
    %232 = arith.divf %230, %231 : vector<8x1xf32>
    %cst_77 = arith.constant 9.99999974E-6 : f32
    %233 = vector.broadcast %cst_77 : f32 to vector<8x1xf32>
    %234 = arith.addf %232, %233 : vector<8x1xf32>
    %235 = math.rsqrt %234 : vector<8x1xf32>
    %236 = vector.broadcast %225 : vector<8x1xf32> to vector<8x32xf32>
    %237 = arith.subf %219, %236 : vector<8x32xf32>
    %238 = vector.broadcast %235 : vector<8x1xf32> to vector<8x32xf32>
    %239 = arith.mulf %237, %238 : vector<8x32xf32>
    %240 = vector.broadcast %220 : vector<1x32xf32> to vector<8x32xf32>
    %241 = arith.mulf %239, %240 : vector<8x32xf32>
    %242 = vector.broadcast %221 : vector<1x32xf32> to vector<8x32xf32>
    %243 = arith.addf %241, %242 : vector<8x32xf32>
    %c0_78 = arith.constant 0 : index
    %c0_79 = arith.constant 0 : index
    %c0_80 = arith.constant 0 : index
    %244 = vector.load %arg23[%c0_78, %c0_79, %c0_80] : memref<1x8x32xf32, #tpu.memory_space<vmem>>, vector<1x8x32xf32>
    %245 = vector.shape_cast %244 : vector<1x8x32xf32> to vector<8x32xf32>
    %246 = vector.shape_cast %243 : vector<8x32xf32> to vector<1x8x32xf32>
    tpu.vector_store %arg23[%c0_78, %c0_79, %c0_80], %246 {strides = array<i32>} : memref<1x8x32xf32, #tpu.memory_space<vmem>>, vector<1x8x32xf32>,
    return
  }
  func.func @transform_0(%arg0: i32) -> (i32, i32, i32) {
    %c0_i32 = arith.constant 0 : i32
    %c0_i32_0 = arith.constant 0 : i32
    %c0_i32_1 = arith.constant 0 : i32
    return %arg0, %c0_i32, %c0_i32_0 : i32, i32, i32
  }
  func.func @transform_1(%arg0: i32) -> (i32, i32, i32) {
    %c0_i32 = arith.constant 0 : i32
    %c0_i32_0 = arith.constant 0 : i32
    %c0_i32_1 = arith.constant 0 : i32
    return %arg0, %c0_i32, %c0_i32_0 : i32, i32, i32
  }
  func.func @transform_2(%arg0: i32) -> (i32, i32) {
    %c0_i32 = arith.constant 0 : i32
    %c0_i32_0 = arith.constant 0 : i32
    %c0_i32_1 = arith.constant 0 : i32
    return %c0_i32, %c0_i32_0 : i32, i32
  }
  func.func @transform_3(%arg0: i32) -> (i32, i32) {
    %c0_i32 = arith.constant 0 : i32
    %c0_i32_0 = arith.constant 0 : i32
    %c0_i32_1 = arith.constant 0 : i32
    return %c0_i32, %c0_i32_0 : i32, i32
  }
  func.func @transform_4(%arg0: i32) -> (i32, i32) {
    %c0_i32 = arith.constant 0 : i32
    %c0_i32_0 = arith.constant 0 : i32
    %c0_i32_1 = arith.constant 0 : i32
    return %c0_i32, %c0_i32_0 : i32, i32
  }
  func.func @transform_5(%arg0: i32) -> (i32, i32) {
    %c0_i32 = arith.constant 0 : i32
    %c0_i32_0 = arith.constant 0 : i32
    %c0_i32_1 = arith.constant 0 : i32
    return %c0_i32, %c0_i32_0 : i32, i32
  }
  func.func @transform_6(%arg0: i32) -> (i32, i32) {
    %c0_i32 = arith.constant 0 : i32
    %c0_i32_0 = arith.constant 0 : i32
    %c0_i32_1 = arith.constant 0 : i32
    return %c0_i32, %c0_i32_0 : i32, i32
  }
  func.func @transform_7(%arg0: i32) -> (i32, i32) {
    %c0_i32 = arith.constant 0 : i32
    %c0_i32_0 = arith.constant 0 : i32
    %c0_i32_1 = arith.constant 0 : i32
    return %c0_i32, %c0_i32_0 : i32, i32
  }
  func.func @transform_8(%arg0: i32) -> (i32, i32) {
    %c0_i32 = arith.constant 0 : i32
    %c0_i32_0 = arith.constant 0 : i32
    %c0_i32_1 = arith.constant 0 : i32
    return %c0_i32, %c0_i32_0 : i32, i32
  }
  func.func @transform_9(%arg0: i32) -> (i32, i32) {
    %c0_i32 = arith.constant 0 : i32
    %c0_i32_0 = arith.constant 0 : i32
    %c0_i32_1 = arith.constant 0 : i32
    return %c0_i32, %c0_i32_0 : i32, i32
  }
  func.func @transform_10(%arg0: i32) -> (i32, i32) {
    %c0_i32 = arith.constant 0 : i32
    %c0_i32_0 = arith.constant 0 : i32
    %c0_i32_1 = arith.constant 0 : i32
    return %c0_i32, %c0_i32_0 : i32, i32
  }
  func.func @transform_11(%arg0: i32) -> (i32, i32) {
    %c0_i32 = arith.constant 0 : i32
    %c0_i32_0 = arith.constant 0 : i32
    %c0_i32_1 = arith.constant 0 : i32
    return %c0_i32, %c0_i32_0 : i32, i32
  }
  func.func @transform_12(%arg0: i32) -> (i32, i32) {
    %c0_i32 = arith.constant 0 : i32
    %c0_i32_0 = arith.constant 0 : i32
    %c0_i32_1 = arith.constant 0 : i32
    return %c0_i32, %c0_i32_0 : i32, i32
  }
  func.func @transform_13(%arg0: i32) -> (i32, i32) {
    %c0_i32 = arith.constant 0 : i32
    %c0_i32_0 = arith.constant 0 : i32
    %c0_i32_1 = arith.constant 0 : i32
    return %c0_i32, %c0_i32_0 : i32, i32
  }
  func.func @transform_14(%arg0: i32) -> (i32, i32) {
    %c0_i32 = arith.constant 0 : i32
    %c0_i32_0 = arith.constant 0 : i32
    %c0_i32_1 = arith.constant 0 : i32
    return %c0_i32, %c0_i32_0 : i32, i32
  }
  func.func @transform_15(%arg0: i32) -> (i32, i32) {
    %c0_i32 = arith.constant 0 : i32
    %c0_i32_0 = arith.constant 0 : i32
    %c0_i32_1 = arith.constant 0 : i32
    return %c0_i32, %c0_i32_0 : i32, i32
  }
  func.func @transform_16(%arg0: i32) -> (i32, i32) {
    %c0_i32 = arith.constant 0 : i32
    %c0_i32_0 = arith.constant 0 : i32
    %c0_i32_1 = arith.constant 0 : i32
    return %c0_i32, %c0_i32_0 : i32, i32
  }
  func.func @transform_17(%arg0: i32) -> (i32, i32) {
    %c0_i32 = arith.constant 0 : i32
    %c0_i32_0 = arith.constant 0 : i32
    %c0_i32_1 = arith.constant 0 : i32
    return %c0_i32, %c0_i32_0 : i32, i32
  }
  func.func @transform_18(%arg0: i32) -> (i32, i32) {
    %c0_i32 = arith.constant 0 : i32
    %c0_i32_0 = arith.constant 0 : i32
    %c0_i32_1 = arith.constant 0 : i32
    return %c0_i32, %c0_i32_0 : i32, i32
  }
  func.func @transform_19(%arg0: i32) -> (i32, i32) {
    %c0_i32 = arith.constant 0 : i32
    %c0_i32_0 = arith.constant 0 : i32
    %c0_i32_1 = arith.constant 0 : i32
    return %c0_i32, %c0_i32_0 : i32, i32
  }
  func.func @transform_20(%arg0: i32) -> (i32, i32) {
    %c0_i32 = arith.constant 0 : i32
    %c0_i32_0 = arith.constant 0 : i32
    %c0_i32_1 = arith.constant 0 : i32
    return %c0_i32, %c0_i32_0 : i32, i32
  }
  func.func @transform_21(%arg0: i32) -> (i32, i32) {
    %c0_i32 = arith.constant 0 : i32
    %c0_i32_0 = arith.constant 0 : i32
    %c0_i32_1 = arith.constant 0 : i32
    return %c0_i32, %c0_i32_0 : i32, i32
  }
  func.func @transform_22(%arg0: i32) -> (i32, i32, i32) {
    %c0_i32 = arith.constant 0 : i32
    %c0_i32_0 = arith.constant 0 : i32
    %c0_i32_1 = arith.constant 0 : i32
    return %arg0, %c0_i32, %c0_i32_0 : i32, i32, i32
  }
}

module attributes {stable_mosaic.version = 11 : i64} {
  func.func @encoder_layer_kernel(%arg0: i32, %arg1: memref<1x8x32xf32, #tpu.memory_space<vmem>>, %arg2: memref<32x96xbf16, #tpu.memory_space<vmem>>, %arg3: memref<1x96xf32, #tpu.memory_space<vmem>>, %arg4: memref<32x32xbf16, #tpu.memory_space<vmem>>, %arg5: memref<1x32xf32, #tpu.memory_space<vmem>>, %arg6: memref<1x32xf32, #tpu.memory_space<vmem>>, %arg7: memref<1x32xf32, #tpu.memory_space<vmem>>, %arg8: memref<32x64xbf16, #tpu.memory_space<vmem>>, %arg9: memref<1x64xf32, #tpu.memory_space<vmem>>, %arg10: memref<64x32xbf16, #tpu.memory_space<vmem>>, %arg11: memref<1x32xf32, #tpu.memory_space<vmem>>, %arg12: memref<1x32xf32, #tpu.memory_space<vmem>>, %arg13: memref<1x32xf32, #tpu.memory_space<vmem>>, %arg14: memref<1x8x32xf32, #tpu.memory_space<vmem>>) attributes {dimension_semantics = [#tpu.dimension_semantics<parallel>], iteration_bounds = array<i64: 2>, scalar_prefetch = 0 : i64, scratch_operands = 0 : i64, tpu.core_type = #tpu.core_type<tc>, window_params = [{transform_indices = @transform_0, window_bounds = array<i64: 1, 8, 32>}, {pipeline_mode = #tpu.pipeline_mode<synchronous>, transform_indices = @transform_1, window_bounds = array<i64: 32, 96>}, {pipeline_mode = #tpu.pipeline_mode<synchronous>, transform_indices = @transform_2, window_bounds = array<i64: 1, 96>}, {pipeline_mode = #tpu.pipeline_mode<synchronous>, transform_indices = @transform_3, window_bounds = array<i64: 32, 32>}, {pipeline_mode = #tpu.pipeline_mode<synchronous>, transform_indices = @transform_4, window_bounds = array<i64: 1, 32>}, {pipeline_mode = #tpu.pipeline_mode<synchronous>, transform_indices = @transform_5, window_bounds = array<i64: 1, 32>}, {pipeline_mode = #tpu.pipeline_mode<synchronous>, transform_indices = @transform_6, window_bounds = array<i64: 1, 32>}, {pipeline_mode = #tpu.pipeline_mode<synchronous>, transform_indices = @transform_7, window_bounds = array<i64: 32, 64>}, {pipeline_mode = #tpu.pipeline_mode<synchronous>, transform_indices = @transform_8, window_bounds = array<i64: 1, 64>}, {pipeline_mode = #tpu.pipeline_mode<synchronous>, transform_indices = @transform_9, window_bounds = array<i64: 64, 32>}, {pipeline_mode = #tpu.pipeline_mode<synchronous>, transform_indices = @transform_10, window_bounds = array<i64: 1, 32>}, {pipeline_mode = #tpu.pipeline_mode<synchronous>, transform_indices = @transform_11, window_bounds = array<i64: 1, 32>}, {pipeline_mode = #tpu.pipeline_mode<synchronous>, transform_indices = @transform_12, window_bounds = array<i64: 1, 32>}, {transform_indices = @transform_13, window_bounds = array<i64: 1, 8, 32>}]} {
    %c0 = arith.constant 0 : index
    %c0_0 = arith.constant 0 : index
    %c0_1 = arith.constant 0 : index
    %0 = vector.load %arg1[%c0, %c0_0, %c0_1] : memref<1x8x32xf32, #tpu.memory_space<vmem>>, vector<1x8x32xf32>
    %1 = vector.shape_cast %0 : vector<1x8x32xf32> to vector<8x32xf32>
    %2 = arith.truncf %1 : vector<8x32xf32> to vector<8x32xbf16>
    %c0_2 = arith.constant 0 : index
    %c0_3 = arith.constant 0 : index
    %3 = vector.load %arg2[%c0_2, %c0_3] : memref<32x96xbf16, #tpu.memory_space<vmem>>, vector<32x96xbf16>
    %cst = arith.constant dense<0.000000e+00> : vector<8x96xf32>
    %4 = tpu.matmul %2, %3, %cst {dimension_numbers = #tpu.dot_dimension_numbers<[1], [0], [0], [1], [0, 0, 1, 1], [], []>} : vector<8x32xbf16>, vector<32x96xbf16>, vector<8x96xf32> -> vector<8x96xf32>
    %c0_4 = arith.constant 0 : index
    %c0_5 = arith.constant 0 : index
    %5 = vector.load %arg3[%c0_4, %c0_5] : memref<1x96xf32, #tpu.memory_space<vmem>>, vector<1x96xf32>
    %6 = vector.broadcast %5 : vector<1x96xf32> to vector<8x96xf32>
    %7 = arith.addf %4, %6 : vector<8x96xf32>
    %8 = vector.extract_strided_slice %7 {offsets = [0, 0], sizes = [8, 32], strides = [1, 1]} : vector<8x96xf32> to vector<8x32xf32>
    %9 = vector.extract_strided_slice %7 {offsets = [0, 32], sizes = [8, 32], strides = [1, 1]} : vector<8x96xf32> to vector<8x32xf32>
    %10 = vector.extract_strided_slice %7 {offsets = [0, 64], sizes = [8, 32], strides = [1, 1]} : vector<8x96xf32> to vector<8x32xf32>
    %11 = vector.extract_strided_slice %8 {offsets = [0, 0], sizes = [8, 8], strides = [1, 1]} : vector<8x32xf32> to vector<8x8xf32>
    %12 = vector.extract_strided_slice %8 {offsets = [0, 8], sizes = [8, 8], strides = [1, 1]} : vector<8x32xf32> to vector<8x8xf32>
    %13 = vector.extract_strided_slice %8 {offsets = [0, 16], sizes = [8, 8], strides = [1, 1]} : vector<8x32xf32> to vector<8x8xf32>
    %14 = vector.extract_strided_slice %8 {offsets = [0, 24], sizes = [8, 8], strides = [1, 1]} : vector<8x32xf32> to vector<8x8xf32>
    %15 = vector.shape_cast %11 : vector<8x8xf32> to vector<1x8x8xf32>
    %16 = vector.shape_cast %12 : vector<8x8xf32> to vector<1x8x8xf32>
    %17 = vector.shape_cast %13 : vector<8x8xf32> to vector<1x8x8xf32>
    %18 = vector.shape_cast %14 : vector<8x8xf32> to vector<1x8x8xf32>
    %19 = tpu.concatenate %15, %16, %17, %18 in 0 : vector<1x8x8xf32>, vector<1x8x8xf32>, vector<1x8x8xf32>, vector<1x8x8xf32> -> vector<4x8x8xf32>
    %20 = arith.truncf %19 : vector<4x8x8xf32> to vector<4x8x8xbf16>
    %21 = vector.extract_strided_slice %9 {offsets = [0, 0], sizes = [8, 8], strides = [1, 1]} : vector<8x32xf32> to vector<8x8xf32>
    %22 = vector.extract_strided_slice %9 {offsets = [0, 8], sizes = [8, 8], strides = [1, 1]} : vector<8x32xf32> to vector<8x8xf32>
    %23 = vector.extract_strided_slice %9 {offsets = [0, 16], sizes = [8, 8], strides = [1, 1]} : vector<8x32xf32> to vector<8x8xf32>
    %24 = vector.extract_strided_slice %9 {offsets = [0, 24], sizes = [8, 8], strides = [1, 1]} : vector<8x32xf32> to vector<8x8xf32>
    %25 = vector.shape_cast %21 : vector<8x8xf32> to vector<1x8x8xf32>
    %26 = vector.shape_cast %22 : vector<8x8xf32> to vector<1x8x8xf32>
    %27 = vector.shape_cast %23 : vector<8x8xf32> to vector<1x8x8xf32>
    %28 = vector.shape_cast %24 : vector<8x8xf32> to vector<1x8x8xf32>
    %29 = tpu.concatenate %25, %26, %27, %28 in 0 : vector<1x8x8xf32>, vector<1x8x8xf32>, vector<1x8x8xf32>, vector<1x8x8xf32> -> vector<4x8x8xf32>
    %30 = arith.truncf %29 : vector<4x8x8xf32> to vector<4x8x8xbf16>
    %31 = vector.extract_strided_slice %10 {offsets = [0, 0], sizes = [8, 8], strides = [1, 1]} : vector<8x32xf32> to vector<8x8xf32>
    %32 = vector.extract_strided_slice %10 {offsets = [0, 8], sizes = [8, 8], strides = [1, 1]} : vector<8x32xf32> to vector<8x8xf32>
    %33 = vector.extract_strided_slice %10 {offsets = [0, 16], sizes = [8, 8], strides = [1, 1]} : vector<8x32xf32> to vector<8x8xf32>
    %34 = vector.extract_strided_slice %10 {offsets = [0, 24], sizes = [8, 8], strides = [1, 1]} : vector<8x32xf32> to vector<8x8xf32>
    %35 = vector.shape_cast %31 : vector<8x8xf32> to vector<1x8x8xf32>
    %36 = vector.shape_cast %32 : vector<8x8xf32> to vector<1x8x8xf32>
    %37 = vector.shape_cast %33 : vector<8x8xf32> to vector<1x8x8xf32>
    %38 = vector.shape_cast %34 : vector<8x8xf32> to vector<1x8x8xf32>
    %39 = tpu.concatenate %35, %36, %37, %38 in 0 : vector<1x8x8xf32>, vector<1x8x8xf32>, vector<1x8x8xf32>, vector<1x8x8xf32> -> vector<4x8x8xf32>
    %40 = arith.truncf %39 : vector<4x8x8xf32> to vector<4x8x8xbf16>
    "tpu.trace_start"() <{level = 10 : i32, message = "hqd,hkd->hqk"}> : () -> ()
    %cst_6 = arith.constant dense<0.000000e+00> : vector<4x8x8xf32>
    %41 = tpu.matmul %20, %30, %cst_6 {dimension_numbers = #tpu.dot_dimension_numbers<[2], [2], [1], [1], [0, 0, 0, 1, 1, 1], [0], [0]>} : vector<4x8x8xbf16>, vector<4x8x8xbf16>, vector<4x8x8xf32> -> vector<4x8x8xf32>
    "tpu.trace_stop"() : () -> ()
    %cst_7 = arith.constant 0.353553385 : f32
    %42 = vector.broadcast %cst_7 : f32 to vector<4x8x8xf32>
    %43 = arith.mulf %41, %42 : vector<4x8x8xf32>
    %cst_8 = arith.constant dense<0xFF800000> : vector<4x8xf32>
    %44 = vector.multi_reduction <maximumf>, %43, %cst_8 [2] : vector<4x8x8xf32> to vector<4x8xf32>
    %45 = vector.shape_cast %44 : vector<4x8xf32> to vector<4x8x1xf32>
    %46 = vector.broadcast %45 : vector<4x8x1xf32> to vector<4x8x8xf32>
    %47 = arith.subf %43, %46 : vector<4x8x8xf32>
    %48 = math.exp %47 : vector<4x8x8xf32>
    %cst_9 = arith.constant dense<0.000000e+00> : vector<4x8xf32>
    %49 = vector.multi_reduction <add>, %48, %cst_9 [2] : vector<4x8x8xf32> to vector<4x8xf32>
    %50 = vector.shape_cast %49 : vector<4x8xf32> to vector<4x8x1xf32>
    %51 = tpu.reciprocal %50 {approx = true} : vector<4x8x1xf32> -> vector<4x8x1xf32>
    %52 = vector.broadcast %51 : vector<4x8x1xf32> to vector<4x8x8xf32>
    %53 = arith.mulf %48, %52 : vector<4x8x8xf32>
    %54 = arith.truncf %53 : vector<4x8x8xf32> to vector<4x8x8xbf16>
    "tpu.trace_start"() <{level = 10 : i32, message = "hqk,hkd->hqd"}> : () -> ()
    %cst_10 = arith.constant dense<0.000000e+00> : vector<4x8x8xf32>
    %55 = tpu.matmul %54, %40, %cst_10 {dimension_numbers = #tpu.dot_dimension_numbers<[2], [1], [1], [2], [0, 0, 0, 1, 1, 2], [0], [0]>} : vector<4x8x8xbf16>, vector<4x8x8xbf16>, vector<4x8x8xf32> -> vector<4x8x8xf32>
    "tpu.trace_stop"() : () -> ()
    %56 = vector.extract_strided_slice %55 {offsets = [0, 0, 0], sizes = [1, 8, 8], strides = [1, 1, 1]} : vector<4x8x8xf32> to vector<1x8x8xf32>
    %57 = vector.shape_cast %56 : vector<1x8x8xf32> to vector<8x8xf32>
    %58 = vector.extract_strided_slice %55 {offsets = [1, 0, 0], sizes = [1, 8, 8], strides = [1, 1, 1]} : vector<4x8x8xf32> to vector<1x8x8xf32>
    %59 = vector.shape_cast %58 : vector<1x8x8xf32> to vector<8x8xf32>
    %60 = vector.extract_strided_slice %55 {offsets = [2, 0, 0], sizes = [1, 8, 8], strides = [1, 1, 1]} : vector<4x8x8xf32> to vector<1x8x8xf32>
    %61 = vector.shape_cast %60 : vector<1x8x8xf32> to vector<8x8xf32>
    %62 = vector.extract_strided_slice %55 {offsets = [3, 0, 0], sizes = [1, 8, 8], strides = [1, 1, 1]} : vector<4x8x8xf32> to vector<1x8x8xf32>
    %63 = vector.shape_cast %62 : vector<1x8x8xf32> to vector<8x8xf32>
    %64 = tpu.concatenate %57, %59, %61, %63 in 1 : vector<8x8xf32>, vector<8x8xf32>, vector<8x8xf32>, vector<8x8xf32> -> vector<8x32xf32>
    %65 = arith.truncf %64 : vector<8x32xf32> to vector<8x32xbf16>
    %c0_11 = arith.constant 0 : index
    %c0_12 = arith.constant 0 : index
    %66 = vector.load %arg4[%c0_11, %c0_12] : memref<32x32xbf16, #tpu.memory_space<vmem>>, vector<32x32xbf16>
    %cst_13 = arith.constant dense<0.000000e+00> : vector<8x32xf32>
    %67 = tpu.matmul %65, %66, %cst_13 {dimension_numbers = #tpu.dot_dimension_numbers<[1], [0], [0], [1], [0, 0, 1, 1], [], []>} : vector<8x32xbf16>, vector<32x32xbf16>, vector<8x32xf32> -> vector<8x32xf32>
    %c0_14 = arith.constant 0 : index
    %c0_15 = arith.constant 0 : index
    %68 = vector.load %arg5[%c0_14, %c0_15] : memref<1x32xf32, #tpu.memory_space<vmem>>, vector<1x32xf32>
    %69 = vector.broadcast %68 : vector<1x32xf32> to vector<8x32xf32>
    %70 = arith.addf %67, %69 : vector<8x32xf32>
    %71 = arith.addf %1, %70 : vector<8x32xf32>
    %c0_16 = arith.constant 0 : index
    %c0_17 = arith.constant 0 : index
    %72 = vector.load %arg6[%c0_16, %c0_17] : memref<1x32xf32, #tpu.memory_space<vmem>>, vector<1x32xf32>
    %c0_18 = arith.constant 0 : index
    %c0_19 = arith.constant 0 : index
    %73 = vector.load %arg7[%c0_18, %c0_19] : memref<1x32xf32, #tpu.memory_space<vmem>>, vector<1x32xf32>
    %cst_20 = arith.constant dense<0.000000e+00> : vector<8xf32>
    %74 = vector.multi_reduction <add>, %71, %cst_20 [1] : vector<8x32xf32> to vector<8xf32>
    %75 = vector.shape_cast %74 : vector<8xf32> to vector<8x1xf32>
    %cst_21 = arith.constant 3.200000e+01 : f32
    %76 = vector.broadcast %cst_21 : f32 to vector<8x1xf32>
    %77 = arith.divf %75, %76 : vector<8x1xf32>
    %78 = vector.broadcast %77 : vector<8x1xf32> to vector<8x32xf32>
    %79 = arith.subf %71, %78 : vector<8x32xf32>
    %80 = arith.mulf %79, %79 : vector<8x32xf32>
    %cst_22 = arith.constant dense<0.000000e+00> : vector<8xf32>
    %81 = vector.multi_reduction <add>, %80, %cst_22 [1] : vector<8x32xf32> to vector<8xf32>
    %82 = vector.shape_cast %81 : vector<8xf32> to vector<8x1xf32>
    %cst_23 = arith.constant 3.200000e+01 : f32
    %83 = vector.broadcast %cst_23 : f32 to vector<8x1xf32>
    %84 = arith.divf %82, %83 : vector<8x1xf32>
    %cst_24 = arith.constant 9.99999974E-6 : f32
    %85 = vector.broadcast %cst_24 : f32 to vector<8x1xf32>
    %86 = arith.addf %84, %85 : vector<8x1xf32>
    %87 = math.rsqrt %86 : vector<8x1xf32>
    %88 = vector.broadcast %77 : vector<8x1xf32> to vector<8x32xf32>
    %89 = arith.subf %71, %88 : vector<8x32xf32>
    %90 = vector.broadcast %87 : vector<8x1xf32> to vector<8x32xf32>
    %91 = arith.mulf %89, %90 : vector<8x32xf32>
    %92 = vector.broadcast %72 : vector<1x32xf32> to vector<8x32xf32>
    %93 = arith.mulf %91, %92 : vector<8x32xf32>
    %94 = vector.broadcast %73 : vector<1x32xf32> to vector<8x32xf32>
    %95 = arith.addf %93, %94 : vector<8x32xf32>
    %96 = arith.truncf %95 : vector<8x32xf32> to vector<8x32xbf16>
    %c0_25 = arith.constant 0 : index
    %c0_26 = arith.constant 0 : index
    %97 = vector.load %arg8[%c0_25, %c0_26] : memref<32x64xbf16, #tpu.memory_space<vmem>>, vector<32x64xbf16>
    %cst_27 = arith.constant dense<0.000000e+00> : vector<8x64xf32>
    %98 = tpu.matmul %96, %97, %cst_27 {dimension_numbers = #tpu.dot_dimension_numbers<[1], [0], [0], [1], [0, 0, 1, 1], [], []>} : vector<8x32xbf16>, vector<32x64xbf16>, vector<8x64xf32> -> vector<8x64xf32>
    %c0_28 = arith.constant 0 : index
    %c0_29 = arith.constant 0 : index
    %99 = vector.load %arg9[%c0_28, %c0_29] : memref<1x64xf32, #tpu.memory_space<vmem>>, vector<1x64xf32>
    %100 = vector.broadcast %99 : vector<1x64xf32> to vector<8x64xf32>
    %101 = arith.addf %98, %100 : vector<8x64xf32>
    %cst_30 = arith.constant 0.000000e+00 : f32
    %102 = vector.broadcast %cst_30 : f32 to vector<8x64xf32>
    %103 = arith.maximumf %101, %102 : vector<8x64xf32>
    %104 = arith.truncf %103 : vector<8x64xf32> to vector<8x64xbf16>
    %c0_31 = arith.constant 0 : index
    %c0_32 = arith.constant 0 : index
    %105 = vector.load %arg10[%c0_31, %c0_32] : memref<64x32xbf16, #tpu.memory_space<vmem>>, vector<64x32xbf16>
    %cst_33 = arith.constant dense<0.000000e+00> : vector<8x32xf32>
    %106 = tpu.matmul %104, %105, %cst_33 {dimension_numbers = #tpu.dot_dimension_numbers<[1], [0], [0], [1], [0, 0, 1, 1], [], []>} : vector<8x64xbf16>, vector<64x32xbf16>, vector<8x32xf32> -> vector<8x32xf32>
    %c0_34 = arith.constant 0 : index
    %c0_35 = arith.constant 0 : index
    %107 = vector.load %arg11[%c0_34, %c0_35] : memref<1x32xf32, #tpu.memory_space<vmem>>, vector<1x32xf32>
    %108 = vector.broadcast %107 : vector<1x32xf32> to vector<8x32xf32>
    %109 = arith.addf %106, %108 : vector<8x32xf32>
    %110 = arith.addf %95, %109 : vector<8x32xf32>
    %c0_36 = arith.constant 0 : index
    %c0_37 = arith.constant 0 : index
    %111 = vector.load %arg12[%c0_36, %c0_37] : memref<1x32xf32, #tpu.memory_space<vmem>>, vector<1x32xf32>
    %c0_38 = arith.constant 0 : index
    %c0_39 = arith.constant 0 : index
    %112 = vector.load %arg13[%c0_38, %c0_39] : memref<1x32xf32, #tpu.memory_space<vmem>>, vector<1x32xf32>
    %cst_40 = arith.constant dense<0.000000e+00> : vector<8xf32>
    %113 = vector.multi_reduction <add>, %110, %cst_40 [1] : vector<8x32xf32> to vector<8xf32>
    %114 = vector.shape_cast %113 : vector<8xf32> to vector<8x1xf32>
    %cst_41 = arith.constant 3.200000e+01 : f32
    %115 = vector.broadcast %cst_41 : f32 to vector<8x1xf32>
    %116 = arith.divf %114, %115 : vector<8x1xf32>
    %117 = vector.broadcast %116 : vector<8x1xf32> to vector<8x32xf32>
    %118 = arith.subf %110, %117 : vector<8x32xf32>
    %119 = arith.mulf %118, %118 : vector<8x32xf32>
    %cst_42 = arith.constant dense<0.000000e+00> : vector<8xf32>
    %120 = vector.multi_reduction <add>, %119, %cst_42 [1] : vector<8x32xf32> to vector<8xf32>
    %121 = vector.shape_cast %120 : vector<8xf32> to vector<8x1xf32>
    %cst_43 = arith.constant 3.200000e+01 : f32
    %122 = vector.broadcast %cst_43 : f32 to vector<8x1xf32>
    %123 = arith.divf %121, %122 : vector<8x1xf32>
    %cst_44 = arith.constant 9.99999974E-6 : f32
    %124 = vector.broadcast %cst_44 : f32 to vector<8x1xf32>
    %125 = arith.addf %123, %124 : vector<8x1xf32>
    %126 = math.rsqrt %125 : vector<8x1xf32>
    %127 = vector.broadcast %116 : vector<8x1xf32> to vector<8x32xf32>
    %128 = arith.subf %110, %127 : vector<8x32xf32>
    %129 = vector.broadcast %126 : vector<8x1xf32> to vector<8x32xf32>
    %130 = arith.mulf %128, %129 : vector<8x32xf32>
    %131 = vector.broadcast %111 : vector<1x32xf32> to vector<8x32xf32>
    %132 = arith.mulf %130, %131 : vector<8x32xf32>
    %133 = vector.broadcast %112 : vector<1x32xf32> to vector<8x32xf32>
    %134 = arith.addf %132, %133 : vector<8x32xf32>
    %c0_45 = arith.constant 0 : index
    %c0_46 = arith.constant 0 : index
    %c0_47 = arith.constant 0 : index
    %135 = vector.load %arg14[%c0_45, %c0_46, %c0_47] : memref<1x8x32xf32, #tpu.memory_space<vmem>>, vector<1x8x32xf32>
    %136 = vector.shape_cast %135 : vector<1x8x32xf32> to vector<8x32xf32>
    %137 = vector.shape_cast %134 : vector<8x32xf32> to vector<1x8x32xf32>
    tpu.vector_store %arg14[%c0_45, %c0_46, %c0_47], %137 {strides = array<i32>} : memref<1x8x32xf32, #tpu.memory_space<vmem>>, vector<1x8x32xf32>,
    return
  }
  func.func @transform_0(%arg0: i32) -> (i32, i32, i32) {
    %c0_i32 = arith.constant 0 : i32
    %c0_i32_0 = arith.constant 0 : i32
    %c0_i32_1 = arith.constant 0 : i32
    return %arg0, %c0_i32, %c0_i32_0 : i32, i32, i32
  }
  func.func @transform_1(%arg0: i32) -> (i32, i32) {
    %c0_i32 = arith.constant 0 : i32
    %c0_i32_0 = arith.constant 0 : i32
    %c0_i32_1 = arith.constant 0 : i32
    return %c0_i32, %c0_i32_0 : i32, i32
  }
  func.func @transform_2(%arg0: i32) -> (i32, i32) {
    %c0_i32 = arith.constant 0 : i32
    %c0_i32_0 = arith.constant 0 : i32
    %c0_i32_1 = arith.constant 0 : i32
    return %c0_i32, %c0_i32_0 : i32, i32
  }
  func.func @transform_3(%arg0: i32) -> (i32, i32) {
    %c0_i32 = arith.constant 0 : i32
    %c0_i32_0 = arith.constant 0 : i32
    %c0_i32_1 = arith.constant 0 : i32
    return %c0_i32, %c0_i32_0 : i32, i32
  }
  func.func @transform_4(%arg0: i32) -> (i32, i32) {
    %c0_i32 = arith.constant 0 : i32
    %c0_i32_0 = arith.constant 0 : i32
    %c0_i32_1 = arith.constant 0 : i32
    return %c0_i32, %c0_i32_0 : i32, i32
  }
  func.func @transform_5(%arg0: i32) -> (i32, i32) {
    %c0_i32 = arith.constant 0 : i32
    %c0_i32_0 = arith.constant 0 : i32
    %c0_i32_1 = arith.constant 0 : i32
    return %c0_i32, %c0_i32_0 : i32, i32
  }
  func.func @transform_6(%arg0: i32) -> (i32, i32) {
    %c0_i32 = arith.constant 0 : i32
    %c0_i32_0 = arith.constant 0 : i32
    %c0_i32_1 = arith.constant 0 : i32
    return %c0_i32, %c0_i32_0 : i32, i32
  }
  func.func @transform_7(%arg0: i32) -> (i32, i32) {
    %c0_i32 = arith.constant 0 : i32
    %c0_i32_0 = arith.constant 0 : i32
    %c0_i32_1 = arith.constant 0 : i32
    return %c0_i32, %c0_i32_0 : i32, i32
  }
  func.func @transform_8(%arg0: i32) -> (i32, i32) {
    %c0_i32 = arith.constant 0 : i32
    %c0_i32_0 = arith.constant 0 : i32
    %c0_i32_1 = arith.constant 0 : i32
    return %c0_i32, %c0_i32_0 : i32, i32
  }
  func.func @transform_9(%arg0: i32) -> (i32, i32) {
    %c0_i32 = arith.constant 0 : i32
    %c0_i32_0 = arith.constant 0 : i32
    %c0_i32_1 = arith.constant 0 : i32
    return %c0_i32, %c0_i32_0 : i32, i32
  }
  func.func @transform_10(%arg0: i32) -> (i32, i32) {
    %c0_i32 = arith.constant 0 : i32
    %c0_i32_0 = arith.constant 0 : i32
    %c0_i32_1 = arith.constant 0 : i32
    return %c0_i32, %c0_i32_0 : i32, i32
  }
  func.func @transform_11(%arg0: i32) -> (i32, i32) {
    %c0_i32 = arith.constant 0 : i32
    %c0_i32_0 = arith.constant 0 : i32
    %c0_i32_1 = arith.constant 0 : i32
    return %c0_i32, %c0_i32_0 : i32, i32
  }
  func.func @transform_12(%arg0: i32) -> (i32, i32) {
    %c0_i32 = arith.constant 0 : i32
    %c0_i32_0 = arith.constant 0 : i32
    %c0_i32_1 = arith.constant 0 : i32
    return %c0_i32, %c0_i32_0 : i32, i32
  }
  func.func @transform_13(%arg0: i32) -> (i32, i32, i32) {
    %c0_i32 = arith.constant 0 : i32
    %c0_i32_0 = arith.constant 0 : i32
    %c0_i32_1 = arith.constant 0 : i32
    return %arg0, %c0_i32, %c0_i32_0 : i32, i32, i32
  }
}

module attributes {stable_mosaic.version = 11 : i64} {
  func.func @decoder_layer_kernel(%arg0: i32, %arg1: memref<1x8x32xf32, #tpu.memory_space<vmem>>, %arg2: memref<1x8x32xf32, #tpu.memory_space<vmem>>, %arg3: memref<32x96xbf16, #tpu.memory_space<vmem>>, %arg4: memref<1x96xf32, #tpu.memory_space<vmem>>, %arg5: memref<32x32xbf16, #tpu.memory_space<vmem>>, %arg6: memref<1x32xf32, #tpu.memory_space<vmem>>, %arg7: memref<1x32xf32, #tpu.memory_space<vmem>>, %arg8: memref<1x32xf32, #tpu.memory_space<vmem>>, %arg9: memref<32x32xbf16, #tpu.memory_space<vmem>>, %arg10: memref<1x32xf32, #tpu.memory_space<vmem>>, %arg11: memref<32x64xbf16, #tpu.memory_space<vmem>>, %arg12: memref<1x64xf32, #tpu.memory_space<vmem>>, %arg13: memref<32x32xbf16, #tpu.memory_space<vmem>>, %arg14: memref<1x32xf32, #tpu.memory_space<vmem>>, %arg15: memref<1x32xf32, #tpu.memory_space<vmem>>, %arg16: memref<1x32xf32, #tpu.memory_space<vmem>>, %arg17: memref<32x64xbf16, #tpu.memory_space<vmem>>, %arg18: memref<1x64xf32, #tpu.memory_space<vmem>>, %arg19: memref<64x32xbf16, #tpu.memory_space<vmem>>, %arg20: memref<1x32xf32, #tpu.memory_space<vmem>>, %arg21: memref<1x32xf32, #tpu.memory_space<vmem>>, %arg22: memref<1x32xf32, #tpu.memory_space<vmem>>, %arg23: memref<1x8x32xf32, #tpu.memory_space<vmem>>) attributes {dimension_semantics = [#tpu.dimension_semantics<parallel>], iteration_bounds = array<i64: 2>, scalar_prefetch = 0 : i64, scratch_operands = 0 : i64, tpu.core_type = #tpu.core_type<tc>, window_params = [{transform_indices = @transform_0, window_bounds = array<i64: 1, 8, 32>}, {transform_indices = @transform_1, window_bounds = array<i64: 1, 8, 32>}, {pipeline_mode = #tpu.pipeline_mode<synchronous>, transform_indices = @transform_2, window_bounds = array<i64: 32, 96>}, {pipeline_mode = #tpu.pipeline_mode<synchronous>, transform_indices = @transform_3, window_bounds = array<i64: 1, 96>}, {pipeline_mode = #tpu.pipeline_mode<synchronous>, transform_indices = @transform_4, window_bounds = array<i64: 32, 32>}, {pipeline_mode = #tpu.pipeline_mode<synchronous>, transform_indices = @transform_5, window_bounds = array<i64: 1, 32>}, {pipeline_mode = #tpu.pipeline_mode<synchronous>, transform_indices = @transform_6, window_bounds = array<i64: 1, 32>}, {pipeline_mode = #tpu.pipeline_mode<synchronous>, transform_indices = @transform_7, window_bounds = array<i64: 1, 32>}, {pipeline_mode = #tpu.pipeline_mode<synchronous>, transform_indices = @transform_8, window_bounds = array<i64: 32, 32>}, {pipeline_mode = #tpu.pipeline_mode<synchronous>, transform_indices = @transform_9, window_bounds = array<i64: 1, 32>}, {pipeline_mode = #tpu.pipeline_mode<synchronous>, transform_indices = @transform_10, window_bounds = array<i64: 32, 64>}, {pipeline_mode = #tpu.pipeline_mode<synchronous>, transform_indices = @transform_11, window_bounds = array<i64: 1, 64>}, {pipeline_mode = #tpu.pipeline_mode<synchronous>, transform_indices = @transform_12, window_bounds = array<i64: 32, 32>}, {pipeline_mode = #tpu.pipeline_mode<synchronous>, transform_indices = @transform_13, window_bounds = array<i64: 1, 32>}, {pipeline_mode = #tpu.pipeline_mode<synchronous>, transform_indices = @transform_14, window_bounds = array<i64: 1, 32>}, {pipeline_mode = #tpu.pipeline_mode<synchronous>, transform_indices = @transform_15, window_bounds = array<i64: 1, 32>}, {pipeline_mode = #tpu.pipeline_mode<synchronous>, transform_indices = @transform_16, window_bounds = array<i64: 32, 64>}, {pipeline_mode = #tpu.pipeline_mode<synchronous>, transform_indices = @transform_17, window_bounds = array<i64: 1, 64>}, {pipeline_mode = #tpu.pipeline_mode<synchronous>, transform_indices = @transform_18, window_bounds = array<i64: 64, 32>}, {pipeline_mode = #tpu.pipeline_mode<synchronous>, transform_indices = @transform_19, window_bounds = array<i64: 1, 32>}, {pipeline_mode = #tpu.pipeline_mode<synchronous>, transform_indices = @transform_20, window_bounds = array<i64: 1, 32>}, {pipeline_mode = #tpu.pipeline_mode<synchronous>, transform_indices = @transform_21, window_bounds = array<i64: 1, 32>}, {transform_indices = @transform_22, window_bounds = array<i64: 1, 8, 32>}]} {
    %c0 = arith.constant 0 : index
    %c0_0 = arith.constant 0 : index
    %c0_1 = arith.constant 0 : index
    %0 = vector.load %arg1[%c0, %c0_0, %c0_1] : memref<1x8x32xf32, #tpu.memory_space<vmem>>, vector<1x8x32xf32>
    %1 = vector.shape_cast %0 : vector<1x8x32xf32> to vector<8x32xf32>
    %c0_2 = arith.constant 0 : index
    %c0_3 = arith.constant 0 : index
    %c0_4 = arith.constant 0 : index
    %2 = vector.load %arg2[%c0_2, %c0_3, %c0_4] : memref<1x8x32xf32, #tpu.memory_space<vmem>>, vector<1x8x32xf32>
    %3 = vector.shape_cast %2 : vector<1x8x32xf32> to vector<8x32xf32>
    %4 = arith.truncf %1 : vector<8x32xf32> to vector<8x32xbf16>
    %c0_5 = arith.constant 0 : index
    %c0_6 = arith.constant 0 : index
    %5 = vector.load %arg3[%c0_5, %c0_6] : memref<32x96xbf16, #tpu.memory_space<vmem>>, vector<32x96xbf16>
    %cst = arith.constant dense<0.000000e+00> : vector<8x96xf32>
    %6 = tpu.matmul %4, %5, %cst {dimension_numbers = #tpu.dot_dimension_numbers<[1], [0], [0], [1], [0, 0, 1, 1], [], []>} : vector<8x32xbf16>, vector<32x96xbf16>, vector<8x96xf32> -> vector<8x96xf32>
    %c0_7 = arith.constant 0 : index
    %c0_8 = arith.constant 0 : index
    %7 = vector.load %arg4[%c0_7, %c0_8] : memref<1x96xf32, #tpu.memory_space<vmem>>, vector<1x96xf32>
    %8 = vector.broadcast %7 : vector<1x96xf32> to vector<8x96xf32>
    %9 = arith.addf %6, %8 : vector<8x96xf32>
    %10 = vector.extract_strided_slice %9 {offsets = [0, 0], sizes = [8, 32], strides = [1, 1]} : vector<8x96xf32> to vector<8x32xf32>
    %11 = vector.extract_strided_slice %9 {offsets = [0, 32], sizes = [8, 32], strides = [1, 1]} : vector<8x96xf32> to vector<8x32xf32>
    %12 = vector.extract_strided_slice %9 {offsets = [0, 64], sizes = [8, 32], strides = [1, 1]} : vector<8x96xf32> to vector<8x32xf32>
    %13 = vector.extract_strided_slice %10 {offsets = [0, 0], sizes = [8, 8], strides = [1, 1]} : vector<8x32xf32> to vector<8x8xf32>
    %14 = vector.extract_strided_slice %10 {offsets = [0, 8], sizes = [8, 8], strides = [1, 1]} : vector<8x32xf32> to vector<8x8xf32>
    %15 = vector.extract_strided_slice %10 {offsets = [0, 16], sizes = [8, 8], strides = [1, 1]} : vector<8x32xf32> to vector<8x8xf32>
    %16 = vector.extract_strided_slice %10 {offsets = [0, 24], sizes = [8, 8], strides = [1, 1]} : vector<8x32xf32> to vector<8x8xf32>
    %17 = vector.shape_cast %13 : vector<8x8xf32> to vector<1x8x8xf32>
    %18 = vector.shape_cast %14 : vector<8x8xf32> to vector<1x8x8xf32>
    %19 = vector.shape_cast %15 : vector<8x8xf32> to vector<1x8x8xf32>
    %20 = vector.shape_cast %16 : vector<8x8xf32> to vector<1x8x8xf32>
    %21 = tpu.concatenate %17, %18, %19, %20 in 0 : vector<1x8x8xf32>, vector<1x8x8xf32>, vector<1x8x8xf32>, vector<1x8x8xf32> -> vector<4x8x8xf32>
    %22 = arith.truncf %21 : vector<4x8x8xf32> to vector<4x8x8xbf16>
    %23 = vector.extract_strided_slice %11 {offsets = [0, 0], sizes = [8, 8], strides = [1, 1]} : vector<8x32xf32> to vector<8x8xf32>
    %24 = vector.extract_strided_slice %11 {offsets = [0, 8], sizes = [8, 8], strides = [1, 1]} : vector<8x32xf32> to vector<8x8xf32>
    %25 = vector.extract_strided_slice %11 {offsets = [0, 16], sizes = [8, 8], strides = [1, 1]} : vector<8x32xf32> to vector<8x8xf32>
    %26 = vector.extract_strided_slice %11 {offsets = [0, 24], sizes = [8, 8], strides = [1, 1]} : vector<8x32xf32> to vector<8x8xf32>
    %27 = vector.shape_cast %23 : vector<8x8xf32> to vector<1x8x8xf32>
    %28 = vector.shape_cast %24 : vector<8x8xf32> to vector<1x8x8xf32>
    %29 = vector.shape_cast %25 : vector<8x8xf32> to vector<1x8x8xf32>
    %30 = vector.shape_cast %26 : vector<8x8xf32> to vector<1x8x8xf32>
    %31 = tpu.concatenate %27, %28, %29, %30 in 0 : vector<1x8x8xf32>, vector<1x8x8xf32>, vector<1x8x8xf32>, vector<1x8x8xf32> -> vector<4x8x8xf32>
    %32 = arith.truncf %31 : vector<4x8x8xf32> to vector<4x8x8xbf16>
    %33 = vector.extract_strided_slice %12 {offsets = [0, 0], sizes = [8, 8], strides = [1, 1]} : vector<8x32xf32> to vector<8x8xf32>
    %34 = vector.extract_strided_slice %12 {offsets = [0, 8], sizes = [8, 8], strides = [1, 1]} : vector<8x32xf32> to vector<8x8xf32>
    %35 = vector.extract_strided_slice %12 {offsets = [0, 16], sizes = [8, 8], strides = [1, 1]} : vector<8x32xf32> to vector<8x8xf32>
    %36 = vector.extract_strided_slice %12 {offsets = [0, 24], sizes = [8, 8], strides = [1, 1]} : vector<8x32xf32> to vector<8x8xf32>
    %37 = vector.shape_cast %33 : vector<8x8xf32> to vector<1x8x8xf32>
    %38 = vector.shape_cast %34 : vector<8x8xf32> to vector<1x8x8xf32>
    %39 = vector.shape_cast %35 : vector<8x8xf32> to vector<1x8x8xf32>
    %40 = vector.shape_cast %36 : vector<8x8xf32> to vector<1x8x8xf32>
    %41 = tpu.concatenate %37, %38, %39, %40 in 0 : vector<1x8x8xf32>, vector<1x8x8xf32>, vector<1x8x8xf32>, vector<1x8x8xf32> -> vector<4x8x8xf32>
    %42 = arith.truncf %41 : vector<4x8x8xf32> to vector<4x8x8xbf16>
    "tpu.trace_start"() <{level = 10 : i32, message = "hqd,hkd->hqk"}> : () -> ()
    %cst_9 = arith.constant dense<0.000000e+00> : vector<4x8x8xf32>
    %43 = tpu.matmul %22, %32, %cst_9 {dimension_numbers = #tpu.dot_dimension_numbers<[2], [2], [1], [1], [0, 0, 0, 1, 1, 1], [0], [0]>} : vector<4x8x8xbf16>, vector<4x8x8xbf16>, vector<4x8x8xf32> -> vector<4x8x8xf32>
    "tpu.trace_stop"() : () -> ()
    %cst_10 = arith.constant 0.353553385 : f32
    %44 = vector.broadcast %cst_10 : f32 to vector<4x8x8xf32>
    %45 = arith.mulf %43, %44 : vector<4x8x8xf32>
    %46 = tpu.iota {dimensions = array<i32: 0>} : vector<8x8xi32>
    %47 = tpu.iota {dimensions = array<i32: 1>} : vector<8x8xi32>
    %48 = arith.cmpi sle, %47, %46 : vector<8x8xi32>
    %49 = vector.shape_cast %48 : vector<8x8xi1> to vector<1x8x8xi1>
    %cst_11 = arith.constant -1.000000e+09 : f32
    %50 = vector.shape_cast %49 : vector<1x8x8xi1> to vector<1x8x8xi1>
    %51 = vector.broadcast %50 : vector<1x8x8xi1> to vector<4x8x8xi1>
    %52 = vector.broadcast %cst_11 : f32 to vector<4x8x8xf32>
    %53 = arith.select %51, %45, %52 : vector<4x8x8xi1>, vector<4x8x8xf32>
    %cst_12 = arith.constant dense<0xFF800000> : vector<4x8xf32>
    %54 = vector.multi_reduction <maximumf>, %53, %cst_12 [2] : vector<4x8x8xf32> to vector<4x8xf32>
    %55 = vector.shape_cast %54 : vector<4x8xf32> to vector<4x8x1xf32>
    %56 = vector.broadcast %55 : vector<4x8x1xf32> to vector<4x8x8xf32>
    %57 = arith.subf %53, %56 : vector<4x8x8xf32>
    %58 = math.exp %57 : vector<4x8x8xf32>
    %cst_13 = arith.constant dense<0.000000e+00> : vector<4x8xf32>
    %59 = vector.multi_reduction <add>, %58, %cst_13 [2] : vector<4x8x8xf32> to vector<4x8xf32>
    %60 = vector.shape_cast %59 : vector<4x8xf32> to vector<4x8x1xf32>
    %61 = tpu.reciprocal %60 {approx = true} : vector<4x8x1xf32> -> vector<4x8x1xf32>
    %62 = vector.broadcast %61 : vector<4x8x1xf32> to vector<4x8x8xf32>
    %63 = arith.mulf %58, %62 : vector<4x8x8xf32>
    %64 = arith.truncf %63 : vector<4x8x8xf32> to vector<4x8x8xbf16>
    "tpu.trace_start"() <{level = 10 : i32, message = "hqk,hkd->hqd"}> : () -> ()
    %cst_14 = arith.constant dense<0.000000e+00> : vector<4x8x8xf32>
    %65 = tpu.matmul %64, %42, %cst_14 {dimension_numbers = #tpu.dot_dimension_numbers<[2], [1], [1], [2], [0, 0, 0, 1, 1, 2], [0], [0]>} : vector<4x8x8xbf16>, vector<4x8x8xbf16>, vector<4x8x8xf32> -> vector<4x8x8xf32>
    "tpu.trace_stop"() : () -> ()
    %66 = vector.extract_strided_slice %65 {offsets = [0, 0, 0], sizes = [1, 8, 8], strides = [1, 1, 1]} : vector<4x8x8xf32> to vector<1x8x8xf32>
    %67 = vector.shape_cast %66 : vector<1x8x8xf32> to vector<8x8xf32>
    %68 = vector.extract_strided_slice %65 {offsets = [1, 0, 0], sizes = [1, 8, 8], strides = [1, 1, 1]} : vector<4x8x8xf32> to vector<1x8x8xf32>
    %69 = vector.shape_cast %68 : vector<1x8x8xf32> to vector<8x8xf32>
    %70 = vector.extract_strided_slice %65 {offsets = [2, 0, 0], sizes = [1, 8, 8], strides = [1, 1, 1]} : vector<4x8x8xf32> to vector<1x8x8xf32>
    %71 = vector.shape_cast %70 : vector<1x8x8xf32> to vector<8x8xf32>
    %72 = vector.extract_strided_slice %65 {offsets = [3, 0, 0], sizes = [1, 8, 8], strides = [1, 1, 1]} : vector<4x8x8xf32> to vector<1x8x8xf32>
    %73 = vector.shape_cast %72 : vector<1x8x8xf32> to vector<8x8xf32>
    %74 = tpu.concatenate %67, %69, %71, %73 in 1 : vector<8x8xf32>, vector<8x8xf32>, vector<8x8xf32>, vector<8x8xf32> -> vector<8x32xf32>
    %75 = arith.truncf %74 : vector<8x32xf32> to vector<8x32xbf16>
    %c0_15 = arith.constant 0 : index
    %c0_16 = arith.constant 0 : index
    %76 = vector.load %arg5[%c0_15, %c0_16] : memref<32x32xbf16, #tpu.memory_space<vmem>>, vector<32x32xbf16>
    %cst_17 = arith.constant dense<0.000000e+00> : vector<8x32xf32>
    %77 = tpu.matmul %75, %76, %cst_17 {dimension_numbers = #tpu.dot_dimension_numbers<[1], [0], [0], [1], [0, 0, 1, 1], [], []>} : vector<8x32xbf16>, vector<32x32xbf16>, vector<8x32xf32> -> vector<8x32xf32>
    %c0_18 = arith.constant 0 : index
    %c0_19 = arith.constant 0 : index
    %78 = vector.load %arg6[%c0_18, %c0_19] : memref<1x32xf32, #tpu.memory_space<vmem>>, vector<1x32xf32>
    %79 = vector.broadcast %78 : vector<1x32xf32> to vector<8x32xf32>
    %80 = arith.addf %77, %79 : vector<8x32xf32>
    %81 = arith.addf %1, %80 : vector<8x32xf32>
    %c0_20 = arith.constant 0 : index
    %c0_21 = arith.constant 0 : index
    %82 = vector.load %arg7[%c0_20, %c0_21] : memref<1x32xf32, #tpu.memory_space<vmem>>, vector<1x32xf32>
    %c0_22 = arith.constant 0 : index
    %c0_23 = arith.constant 0 : index
    %83 = vector.load %arg8[%c0_22, %c0_23] : memref<1x32xf32, #tpu.memory_space<vmem>>, vector<1x32xf32>
    %cst_24 = arith.constant dense<0.000000e+00> : vector<8xf32>
    %84 = vector.multi_reduction <add>, %81, %cst_24 [1] : vector<8x32xf32> to vector<8xf32>
    %85 = vector.shape_cast %84 : vector<8xf32> to vector<8x1xf32>
    %cst_25 = arith.constant 3.200000e+01 : f32
    %86 = vector.broadcast %cst_25 : f32 to vector<8x1xf32>
    %87 = arith.divf %85, %86 : vector<8x1xf32>
    %88 = vector.broadcast %87 : vector<8x1xf32> to vector<8x32xf32>
    %89 = arith.subf %81, %88 : vector<8x32xf32>
    %90 = arith.mulf %89, %89 : vector<8x32xf32>
    %cst_26 = arith.constant dense<0.000000e+00> : vector<8xf32>
    %91 = vector.multi_reduction <add>, %90, %cst_26 [1] : vector<8x32xf32> to vector<8xf32>
    %92 = vector.shape_cast %91 : vector<8xf32> to vector<8x1xf32>
    %cst_27 = arith.constant 3.200000e+01 : f32
    %93 = vector.broadcast %cst_27 : f32 to vector<8x1xf32>
    %94 = arith.divf %92, %93 : vector<8x1xf32>
    %cst_28 = arith.constant 9.99999974E-6 : f32
    %95 = vector.broadcast %cst_28 : f32 to vector<8x1xf32>
    %96 = arith.addf %94, %95 : vector<8x1xf32>
    %97 = math.rsqrt %96 : vector<8x1xf32>
    %98 = vector.broadcast %87 : vector<8x1xf32> to vector<8x32xf32>
    %99 = arith.subf %81, %98 : vector<8x32xf32>
    %100 = vector.broadcast %97 : vector<8x1xf32> to vector<8x32xf32>
    %101 = arith.mulf %99, %100 : vector<8x32xf32>
    %102 = vector.broadcast %82 : vector<1x32xf32> to vector<8x32xf32>
    %103 = arith.mulf %101, %102 : vector<8x32xf32>
    %104 = vector.broadcast %83 : vector<1x32xf32> to vector<8x32xf32>
    %105 = arith.addf %103, %104 : vector<8x32xf32>
    %106 = arith.truncf %105 : vector<8x32xf32> to vector<8x32xbf16>
    %c0_29 = arith.constant 0 : index
    %c0_30 = arith.constant 0 : index
    %107 = vector.load %arg9[%c0_29, %c0_30] : memref<32x32xbf16, #tpu.memory_space<vmem>>, vector<32x32xbf16>
    %cst_31 = arith.constant dense<0.000000e+00> : vector<8x32xf32>
    %108 = tpu.matmul %106, %107, %cst_31 {dimension_numbers = #tpu.dot_dimension_numbers<[1], [0], [0], [1], [0, 0, 1, 1], [], []>} : vector<8x32xbf16>, vector<32x32xbf16>, vector<8x32xf32> -> vector<8x32xf32>
    %c0_32 = arith.constant 0 : index
    %c0_33 = arith.constant 0 : index
    %109 = vector.load %arg10[%c0_32, %c0_33] : memref<1x32xf32, #tpu.memory_space<vmem>>, vector<1x32xf32>
    %110 = vector.broadcast %109 : vector<1x32xf32> to vector<8x32xf32>
    %111 = arith.addf %108, %110 : vector<8x32xf32>
    %112 = arith.truncf %3 : vector<8x32xf32> to vector<8x32xbf16>
    %c0_34 = arith.constant 0 : index
    %c0_35 = arith.constant 0 : index
    %113 = vector.load %arg11[%c0_34, %c0_35] : memref<32x64xbf16, #tpu.memory_space<vmem>>, vector<32x64xbf16>
    %cst_36 = arith.constant dense<0.000000e+00> : vector<8x64xf32>
    %114 = tpu.matmul %112, %113, %cst_36 {dimension_numbers = #tpu.dot_dimension_numbers<[1], [0], [0], [1], [0, 0, 1, 1], [], []>} : vector<8x32xbf16>, vector<32x64xbf16>, vector<8x64xf32> -> vector<8x64xf32>
    %c0_37 = arith.constant 0 : index
    %c0_38 = arith.constant 0 : index
    %115 = vector.load %arg12[%c0_37, %c0_38] : memref<1x64xf32, #tpu.memory_space<vmem>>, vector<1x64xf32>
    %116 = vector.broadcast %115 : vector<1x64xf32> to vector<8x64xf32>
    %117 = arith.addf %114, %116 : vector<8x64xf32>
    %118 = vector.extract_strided_slice %117 {offsets = [0, 0], sizes = [8, 32], strides = [1, 1]} : vector<8x64xf32> to vector<8x32xf32>
    %119 = vector.extract_strided_slice %117 {offsets = [0, 32], sizes = [8, 32], strides = [1, 1]} : vector<8x64xf32> to vector<8x32xf32>
    %120 = vector.extract_strided_slice %111 {offsets = [0, 0], sizes = [8, 8], strides = [1, 1]} : vector<8x32xf32> to vector<8x8xf32>
    %121 = vector.extract_strided_slice %111 {offsets = [0, 8], sizes = [8, 8], strides = [1, 1]} : vector<8x32xf32> to vector<8x8xf32>
    %122 = vector.extract_strided_slice %111 {offsets = [0, 16], sizes = [8, 8], strides = [1, 1]} : vector<8x32xf32> to vector<8x8xf32>
    %123 = vector.extract_strided_slice %111 {offsets = [0, 24], sizes = [8, 8], strides = [1, 1]} : vector<8x32xf32> to vector<8x8xf32>
    %124 = vector.shape_cast %120 : vector<8x8xf32> to vector<1x8x8xf32>
    %125 = vector.shape_cast %121 : vector<8x8xf32> to vector<1x8x8xf32>
    %126 = vector.shape_cast %122 : vector<8x8xf32> to vector<1x8x8xf32>
    %127 = vector.shape_cast %123 : vector<8x8xf32> to vector<1x8x8xf32>
    %128 = tpu.concatenate %124, %125, %126, %127 in 0 : vector<1x8x8xf32>, vector<1x8x8xf32>, vector<1x8x8xf32>, vector<1x8x8xf32> -> vector<4x8x8xf32>
    %129 = arith.truncf %128 : vector<4x8x8xf32> to vector<4x8x8xbf16>
    %130 = vector.extract_strided_slice %118 {offsets = [0, 0], sizes = [8, 8], strides = [1, 1]} : vector<8x32xf32> to vector<8x8xf32>
    %131 = vector.extract_strided_slice %118 {offsets = [0, 8], sizes = [8, 8], strides = [1, 1]} : vector<8x32xf32> to vector<8x8xf32>
    %132 = vector.extract_strided_slice %118 {offsets = [0, 16], sizes = [8, 8], strides = [1, 1]} : vector<8x32xf32> to vector<8x8xf32>
    %133 = vector.extract_strided_slice %118 {offsets = [0, 24], sizes = [8, 8], strides = [1, 1]} : vector<8x32xf32> to vector<8x8xf32>
    %134 = vector.shape_cast %130 : vector<8x8xf32> to vector<1x8x8xf32>
    %135 = vector.shape_cast %131 : vector<8x8xf32> to vector<1x8x8xf32>
    %136 = vector.shape_cast %132 : vector<8x8xf32> to vector<1x8x8xf32>
    %137 = vector.shape_cast %133 : vector<8x8xf32> to vector<1x8x8xf32>
    %138 = tpu.concatenate %134, %135, %136, %137 in 0 : vector<1x8x8xf32>, vector<1x8x8xf32>, vector<1x8x8xf32>, vector<1x8x8xf32> -> vector<4x8x8xf32>
    %139 = arith.truncf %138 : vector<4x8x8xf32> to vector<4x8x8xbf16>
    %140 = vector.extract_strided_slice %119 {offsets = [0, 0], sizes = [8, 8], strides = [1, 1]} : vector<8x32xf32> to vector<8x8xf32>
    %141 = vector.extract_strided_slice %119 {offsets = [0, 8], sizes = [8, 8], strides = [1, 1]} : vector<8x32xf32> to vector<8x8xf32>
    %142 = vector.extract_strided_slice %119 {offsets = [0, 16], sizes = [8, 8], strides = [1, 1]} : vector<8x32xf32> to vector<8x8xf32>
    %143 = vector.extract_strided_slice %119 {offsets = [0, 24], sizes = [8, 8], strides = [1, 1]} : vector<8x32xf32> to vector<8x8xf32>
    %144 = vector.shape_cast %140 : vector<8x8xf32> to vector<1x8x8xf32>
    %145 = vector.shape_cast %141 : vector<8x8xf32> to vector<1x8x8xf32>
    %146 = vector.shape_cast %142 : vector<8x8xf32> to vector<1x8x8xf32>
    %147 = vector.shape_cast %143 : vector<8x8xf32> to vector<1x8x8xf32>
    %148 = tpu.concatenate %144, %145, %146, %147 in 0 : vector<1x8x8xf32>, vector<1x8x8xf32>, vector<1x8x8xf32>, vector<1x8x8xf32> -> vector<4x8x8xf32>
    %149 = arith.truncf %148 : vector<4x8x8xf32> to vector<4x8x8xbf16>
    "tpu.trace_start"() <{level = 10 : i32, message = "hqd,hkd->hqk"}> : () -> ()
    %cst_39 = arith.constant dense<0.000000e+00> : vector<4x8x8xf32>
    %150 = tpu.matmul %129, %139, %cst_39 {dimension_numbers = #tpu.dot_dimension_numbers<[2], [2], [1], [1], [0, 0, 0, 1, 1, 1], [0], [0]>} : vector<4x8x8xbf16>, vector<4x8x8xbf16>, vector<4x8x8xf32> -> vector<4x8x8xf32>
    "tpu.trace_stop"() : () -> ()
    %cst_40 = arith.constant 0.353553385 : f32
    %151 = vector.broadcast %cst_40 : f32 to vector<4x8x8xf32>
    %152 = arith.mulf %150, %151 : vector<4x8x8xf32>
    %cst_41 = arith.constant dense<0xFF800000> : vector<4x8xf32>
    %153 = vector.multi_reduction <maximumf>, %152, %cst_41 [2] : vector<4x8x8xf32> to vector<4x8xf32>
    %154 = vector.shape_cast %153 : vector<4x8xf32> to vector<4x8x1xf32>
    %155 = vector.broadcast %154 : vector<4x8x1xf32> to vector<4x8x8xf32>
    %156 = arith.subf %152, %155 : vector<4x8x8xf32>
    %157 = math.exp %156 : vector<4x8x8xf32>
    %cst_42 = arith.constant dense<0.000000e+00> : vector<4x8xf32>
    %158 = vector.multi_reduction <add>, %157, %cst_42 [2] : vector<4x8x8xf32> to vector<4x8xf32>
    %159 = vector.shape_cast %158 : vector<4x8xf32> to vector<4x8x1xf32>
    %160 = tpu.reciprocal %159 {approx = true} : vector<4x8x1xf32> -> vector<4x8x1xf32>
    %161 = vector.broadcast %160 : vector<4x8x1xf32> to vector<4x8x8xf32>
    %162 = arith.mulf %157, %161 : vector<4x8x8xf32>
    %163 = arith.truncf %162 : vector<4x8x8xf32> to vector<4x8x8xbf16>
    "tpu.trace_start"() <{level = 10 : i32, message = "hqk,hkd->hqd"}> : () -> ()
    %cst_43 = arith.constant dense<0.000000e+00> : vector<4x8x8xf32>
    %164 = tpu.matmul %163, %149, %cst_43 {dimension_numbers = #tpu.dot_dimension_numbers<[2], [1], [1], [2], [0, 0, 0, 1, 1, 2], [0], [0]>} : vector<4x8x8xbf16>, vector<4x8x8xbf16>, vector<4x8x8xf32> -> vector<4x8x8xf32>
    "tpu.trace_stop"() : () -> ()
    %165 = vector.extract_strided_slice %164 {offsets = [0, 0, 0], sizes = [1, 8, 8], strides = [1, 1, 1]} : vector<4x8x8xf32> to vector<1x8x8xf32>
    %166 = vector.shape_cast %165 : vector<1x8x8xf32> to vector<8x8xf32>
    %167 = vector.extract_strided_slice %164 {offsets = [1, 0, 0], sizes = [1, 8, 8], strides = [1, 1, 1]} : vector<4x8x8xf32> to vector<1x8x8xf32>
    %168 = vector.shape_cast %167 : vector<1x8x8xf32> to vector<8x8xf32>
    %169 = vector.extract_strided_slice %164 {offsets = [2, 0, 0], sizes = [1, 8, 8], strides = [1, 1, 1]} : vector<4x8x8xf32> to vector<1x8x8xf32>
    %170 = vector.shape_cast %169 : vector<1x8x8xf32> to vector<8x8xf32>
    %171 = vector.extract_strided_slice %164 {offsets = [3, 0, 0], sizes = [1, 8, 8], strides = [1, 1, 1]} : vector<4x8x8xf32> to vector<1x8x8xf32>
    %172 = vector.shape_cast %171 : vector<1x8x8xf32> to vector<8x8xf32>
    %173 = tpu.concatenate %166, %168, %170, %172 in 1 : vector<8x8xf32>, vector<8x8xf32>, vector<8x8xf32>, vector<8x8xf32> -> vector<8x32xf32>
    %174 = arith.truncf %173 : vector<8x32xf32> to vector<8x32xbf16>
    %c0_44 = arith.constant 0 : index
    %c0_45 = arith.constant 0 : index
    %175 = vector.load %arg13[%c0_44, %c0_45] : memref<32x32xbf16, #tpu.memory_space<vmem>>, vector<32x32xbf16>
    %cst_46 = arith.constant dense<0.000000e+00> : vector<8x32xf32>
    %176 = tpu.matmul %174, %175, %cst_46 {dimension_numbers = #tpu.dot_dimension_numbers<[1], [0], [0], [1], [0, 0, 1, 1], [], []>} : vector<8x32xbf16>, vector<32x32xbf16>, vector<8x32xf32> -> vector<8x32xf32>
    %c0_47 = arith.constant 0 : index
    %c0_48 = arith.constant 0 : index
    %177 = vector.load %arg14[%c0_47, %c0_48] : memref<1x32xf32, #tpu.memory_space<vmem>>, vector<1x32xf32>
    %178 = vector.broadcast %177 : vector<1x32xf32> to vector<8x32xf32>
    %179 = arith.addf %176, %178 : vector<8x32xf32>
    %180 = arith.addf %105, %179 : vector<8x32xf32>
    %c0_49 = arith.constant 0 : index
    %c0_50 = arith.constant 0 : index
    %181 = vector.load %arg15[%c0_49, %c0_50] : memref<1x32xf32, #tpu.memory_space<vmem>>, vector<1x32xf32>
    %c0_51 = arith.constant 0 : index
    %c0_52 = arith.constant 0 : index
    %182 = vector.load %arg16[%c0_51, %c0_52] : memref<1x32xf32, #tpu.memory_space<vmem>>, vector<1x32xf32>
    %cst_53 = arith.constant dense<0.000000e+00> : vector<8xf32>
    %183 = vector.multi_reduction <add>, %180, %cst_53 [1] : vector<8x32xf32> to vector<8xf32>
    %184 = vector.shape_cast %183 : vector<8xf32> to vector<8x1xf32>
    %cst_54 = arith.constant 3.200000e+01 : f32
    %185 = vector.broadcast %cst_54 : f32 to vector<8x1xf32>
    %186 = arith.divf %184, %185 : vector<8x1xf32>
    %187 = vector.broadcast %186 : vector<8x1xf32> to vector<8x32xf32>
    %188 = arith.subf %180, %187 : vector<8x32xf32>
    %189 = arith.mulf %188, %188 : vector<8x32xf32>
    %cst_55 = arith.constant dense<0.000000e+00> : vector<8xf32>
    %190 = vector.multi_reduction <add>, %189, %cst_55 [1] : vector<8x32xf32> to vector<8xf32>
    %191 = vector.shape_cast %190 : vector<8xf32> to vector<8x1xf32>
    %cst_56 = arith.constant 3.200000e+01 : f32
    %192 = vector.broadcast %cst_56 : f32 to vector<8x1xf32>
    %193 = arith.divf %191, %192 : vector<8x1xf32>
    %cst_57 = arith.constant 9.99999974E-6 : f32
    %194 = vector.broadcast %cst_57 : f32 to vector<8x1xf32>
    %195 = arith.addf %193, %194 : vector<8x1xf32>
    %196 = math.rsqrt %195 : vector<8x1xf32>
    %197 = vector.broadcast %186 : vector<8x1xf32> to vector<8x32xf32>
    %198 = arith.subf %180, %197 : vector<8x32xf32>
    %199 = vector.broadcast %196 : vector<8x1xf32> to vector<8x32xf32>
    %200 = arith.mulf %198, %199 : vector<8x32xf32>
    %201 = vector.broadcast %181 : vector<1x32xf32> to vector<8x32xf32>
    %202 = arith.mulf %200, %201 : vector<8x32xf32>
    %203 = vector.broadcast %182 : vector<1x32xf32> to vector<8x32xf32>
    %204 = arith.addf %202, %203 : vector<8x32xf32>
    %205 = arith.truncf %204 : vector<8x32xf32> to vector<8x32xbf16>
    %c0_58 = arith.constant 0 : index
    %c0_59 = arith.constant 0 : index
    %206 = vector.load %arg17[%c0_58, %c0_59] : memref<32x64xbf16, #tpu.memory_space<vmem>>, vector<32x64xbf16>
    %cst_60 = arith.constant dense<0.000000e+00> : vector<8x64xf32>
    %207 = tpu.matmul %205, %206, %cst_60 {dimension_numbers = #tpu.dot_dimension_numbers<[1], [0], [0], [1], [0, 0, 1, 1], [], []>} : vector<8x32xbf16>, vector<32x64xbf16>, vector<8x64xf32> -> vector<8x64xf32>
    %c0_61 = arith.constant 0 : index
    %c0_62 = arith.constant 0 : index
    %208 = vector.load %arg18[%c0_61, %c0_62] : memref<1x64xf32, #tpu.memory_space<vmem>>, vector<1x64xf32>
    %209 = vector.broadcast %208 : vector<1x64xf32> to vector<8x64xf32>
    %210 = arith.addf %207, %209 : vector<8x64xf32>
    %cst_63 = arith.constant 0.000000e+00 : f32
    %211 = vector.broadcast %cst_63 : f32 to vector<8x64xf32>
    %212 = arith.maximumf %210, %211 : vector<8x64xf32>
    %213 = arith.truncf %212 : vector<8x64xf32> to vector<8x64xbf16>
    %c0_64 = arith.constant 0 : index
    %c0_65 = arith.constant 0 : index
    %214 = vector.load %arg19[%c0_64, %c0_65] : memref<64x32xbf16, #tpu.memory_space<vmem>>, vector<64x32xbf16>
    %cst_66 = arith.constant dense<0.000000e+00> : vector<8x32xf32>
    %215 = tpu.matmul %213, %214, %cst_66 {dimension_numbers = #tpu.dot_dimension_numbers<[1], [0], [0], [1], [0, 0, 1, 1], [], []>} : vector<8x64xbf16>, vector<64x32xbf16>, vector<8x32xf32> -> vector<8x32xf32>
    %c0_67 = arith.constant 0 : index
    %c0_68 = arith.constant 0 : index
    %216 = vector.load %arg20[%c0_67, %c0_68] : memref<1x32xf32, #tpu.memory_space<vmem>>, vector<1x32xf32>
    %217 = vector.broadcast %216 : vector<1x32xf32> to vector<8x32xf32>
    %218 = arith.addf %215, %217 : vector<8x32xf32>
    %219 = arith.addf %204, %218 : vector<8x32xf32>
    %c0_69 = arith.constant 0 : index
    %c0_70 = arith.constant 0 : index
    %220 = vector.load %arg21[%c0_69, %c0_70] : memref<1x32xf32, #tpu.memory_space<vmem>>, vector<1x32xf32>
    %c0_71 = arith.constant 0 : index
    %c0_72 = arith.constant 0 : index
    %221 = vector.load %arg22[%c0_71, %c0_72] : memref<1x32xf32, #tpu.memory_space<vmem>>, vector<1x32xf32>
    %cst_73 = arith.constant dense<0.000000e+00> : vector<8xf32>
    %222 = vector.multi_reduction <add>, %219, %cst_73 [1] : vector<8x32xf32> to vector<8xf32>
    %223 = vector.shape_cast %222 : vector<8xf32> to vector<8x1xf32>
    %cst_74 = arith.constant 3.200000e+01 : f32
    %224 = vector.broadcast %cst_74 : f32 to vector<8x1xf32>
    %225 = arith.divf %223, %224 : vector<8x1xf32>
    %226 = vector.broadcast %225 : vector<8x1xf32> to vector<8x32xf32>
    %227 = arith.subf %219, %226 : vector<8x32xf32>
    %228 = arith.mulf %227, %227 : vector<8x32xf32>
    %cst_75 = arith.constant dense<0.000000e+00> : vector<8xf32>
    %229 = vector.multi_reduction <add>, %228, %cst_75 [1] : vector<8x32xf32> to vector<8xf32>
    %230 = vector.shape_cast %229 : vector<8xf32> to vector<8x1xf32>
    %cst_76 = arith.constant 3.200000e+01 : f32
    %231 = vector.broadcast %cst_76 : f32 to vector<8x1xf32>
    %232 = arith.divf %230, %231 : vector<8x1xf32>
    %cst_77 = arith.constant 9.99999974E-6 : f32
    %233 = vector.broadcast %cst_77 : f32 to vector<8x1xf32>
    %234 = arith.addf %232, %233 : vector<8x1xf32>
    %235 = math.rsqrt %234 : vector<8x1xf32>
    %236 = vector.broadcast %225 : vector<8x1xf32> to vector<8x32xf32>
    %237 = arith.subf %219, %236 : vector<8x32xf32>
    %238 = vector.broadcast %235 : vector<8x1xf32> to vector<8x32xf32>
    %239 = arith.mulf %237, %238 : vector<8x32xf32>
    %240 = vector.broadcast %220 : vector<1x32xf32> to vector<8x32xf32>
    %241 = arith.mulf %239, %240 : vector<8x32xf32>
    %242 = vector.broadcast %221 : vector<1x32xf32> to vector<8x32xf32>
    %243 = arith.addf %241, %242 : vector<8x32xf32>
    %c0_78 = arith.constant 0 : index
    %c0_79 = arith.constant 0 : index
    %c0_80 = arith.constant 0 : index
    %244 = vector.load %arg23[%c0_78, %c0_79, %c0_80] : memref<1x8x32xf32, #tpu.memory_space<vmem>>, vector<1x8x32xf32>
    %245 = vector.shape_cast %244 : vector<1x8x32xf32> to vector<8x32xf32>
    %246 = vector.shape_cast %243 : vector<8x32xf32> to vector<1x8x32xf32>
    tpu.vector_store %arg23[%c0_78, %c0_79, %c0_80], %246 {strides = array<i32>} : memref<1x8x32xf32, #tpu.memory_space<vmem>>, vector<1x8x32xf32>,
    return
  }
  func.func @transform_0(%arg0: i32) -> (i32, i32, i32) {
    %c0_i32 = arith.constant 0 : i32
    %c0_i32_0 = arith.constant 0 : i32
    %c0_i32_1 = arith.constant 0 : i32
    return %arg0, %c0_i32, %c0_i32_0 : i32, i32, i32
  }
  func.func @transform_1(%arg0: i32) -> (i32, i32, i32) {
    %c0_i32 = arith.constant 0 : i32
    %c0_i32_0 = arith.constant 0 : i32
    %c0_i32_1 = arith.constant 0 : i32
    return %arg0, %c0_i32, %c0_i32_0 : i32, i32, i32
  }
  func.func @transform_2(%arg0: i32) -> (i32, i32) {
    %c0_i32 = arith.constant 0 : i32
    %c0_i32_0 = arith.constant 0 : i32
    %c0_i32_1 = arith.constant 0 : i32
    return %c0_i32, %c0_i32_0 : i32, i32
  }
  func.func @transform_3(%arg0: i32) -> (i32, i32) {
    %c0_i32 = arith.constant 0 : i32
    %c0_i32_0 = arith.constant 0 : i32
    %c0_i32_1 = arith.constant 0 : i32
    return %c0_i32, %c0_i32_0 : i32, i32
  }
  func.func @transform_4(%arg0: i32) -> (i32, i32) {
    %c0_i32 = arith.constant 0 : i32
    %c0_i32_0 = arith.constant 0 : i32
    %c0_i32_1 = arith.constant 0 : i32
    return %c0_i32, %c0_i32_0 : i32, i32
  }
  func.func @transform_5(%arg0: i32) -> (i32, i32) {
    %c0_i32 = arith.constant 0 : i32
    %c0_i32_0 = arith.constant 0 : i32
    %c0_i32_1 = arith.constant 0 : i32
    return %c0_i32, %c0_i32_0 : i32, i32
  }
  func.func @transform_6(%arg0: i32) -> (i32, i32) {
    %c0_i32 = arith.constant 0 : i32
    %c0_i32_0 = arith.constant 0 : i32
    %c0_i32_1 = arith.constant 0 : i32
    return %c0_i32, %c0_i32_0 : i32, i32
  }
  func.func @transform_7(%arg0: i32) -> (i32, i32) {
    %c0_i32 = arith.constant 0 : i32
    %c0_i32_0 = arith.constant 0 : i32
    %c0_i32_1 = arith.constant 0 : i32
    return %c0_i32, %c0_i32_0 : i32, i32
  }
  func.func @transform_8(%arg0: i32) -> (i32, i32) {
    %c0_i32 = arith.constant 0 : i32
    %c0_i32_0 = arith.constant 0 : i32
    %c0_i32_1 = arith.constant 0 : i32
    return %c0_i32, %c0_i32_0 : i32, i32
  }
  func.func @transform_9(%arg0: i32) -> (i32, i32) {
    %c0_i32 = arith.constant 0 : i32
    %c0_i32_0 = arith.constant 0 : i32
    %c0_i32_1 = arith.constant 0 : i32
    return %c0_i32, %c0_i32_0 : i32, i32
  }
  func.func @transform_10(%arg0: i32) -> (i32, i32) {
    %c0_i32 = arith.constant 0 : i32
    %c0_i32_0 = arith.constant 0 : i32
    %c0_i32_1 = arith.constant 0 : i32
    return %c0_i32, %c0_i32_0 : i32, i32
  }
  func.func @transform_11(%arg0: i32) -> (i32, i32) {
    %c0_i32 = arith.constant 0 : i32
    %c0_i32_0 = arith.constant 0 : i32
    %c0_i32_1 = arith.constant 0 : i32
    return %c0_i32, %c0_i32_0 : i32, i32
  }
  func.func @transform_12(%arg0: i32) -> (i32, i32) {
    %c0_i32 = arith.constant 0 : i32
    %c0_i32_0 = arith.constant 0 : i32
    %c0_i32_1 = arith.constant 0 : i32
    return %c0_i32, %c0_i32_0 : i32, i32
  }
  func.func @transform_13(%arg0: i32) -> (i32, i32) {
    %c0_i32 = arith.constant 0 : i32
    %c0_i32_0 = arith.constant 0 : i32
    %c0_i32_1 = arith.constant 0 : i32
    return %c0_i32, %c0_i32_0 : i32, i32
  }
  func.func @transform_14(%arg0: i32) -> (i32, i32) {
    %c0_i32 = arith.constant 0 : i32
    %c0_i32_0 = arith.constant 0 : i32
    %c0_i32_1 = arith.constant 0 : i32
    return %c0_i32, %c0_i32_0 : i32, i32
  }
  func.func @transform_15(%arg0: i32) -> (i32, i32) {
    %c0_i32 = arith.constant 0 : i32
    %c0_i32_0 = arith.constant 0 : i32
    %c0_i32_1 = arith.constant 0 : i32
    return %c0_i32, %c0_i32_0 : i32, i32
  }
  func.func @transform_16(%arg0: i32) -> (i32, i32) {
    %c0_i32 = arith.constant 0 : i32
    %c0_i32_0 = arith.constant 0 : i32
    %c0_i32_1 = arith.constant 0 : i32
    return %c0_i32, %c0_i32_0 : i32, i32
  }
  func.func @transform_17(%arg0: i32) -> (i32, i32) {
    %c0_i32 = arith.constant 0 : i32
    %c0_i32_0 = arith.constant 0 : i32
    %c0_i32_1 = arith.constant 0 : i32
    return %c0_i32, %c0_i32_0 : i32, i32
  }
  func.func @transform_18(%arg0: i32) -> (i32, i32) {
    %c0_i32 = arith.constant 0 : i32
    %c0_i32_0 = arith.constant 0 : i32
    %c0_i32_1 = arith.constant 0 : i32
    return %c0_i32, %c0_i32_0 : i32, i32
  }
  func.func @transform_19(%arg0: i32) -> (i32, i32) {
    %c0_i32 = arith.constant 0 : i32
    %c0_i32_0 = arith.constant 0 : i32
    %c0_i32_1 = arith.constant 0 : i32
    return %c0_i32, %c0_i32_0 : i32, i32
  }
  func.func @transform_20(%arg0: i32) -> (i32, i32) {
    %c0_i32 = arith.constant 0 : i32
    %c0_i32_0 = arith.constant 0 : i32
    %c0_i32_1 = arith.constant 0 : i32
    return %c0_i32, %c0_i32_0 : i32, i32
  }
  func.func @transform_21(%arg0: i32) -> (i32, i32) {
    %c0_i32 = arith.constant 0 : i32
    %c0_i32_0 = arith.constant 0 : i32
    %c0_i32_1 = arith.constant 0 : i32
    return %c0_i32, %c0_i32_0 : i32, i32
  }
  func.func @transform_22(%arg0: i32) -> (i32, i32, i32) {
    %c0_i32 = arith.constant 0 : i32
    %c0_i32_0 = arith.constant 0 : i32
    %c0_i32_1 = arith.constant 0 : i32
    return %arg0, %c0_i32, %c0_i32_0 : i32, i32, i32
  }
}

</mosaic_0001>

<llo_original>
// kernel: transformer_forward.4
$region0: #{transformer_forward.4}
  #allocation0 [shape = 'u32[]', space=smem, size = 0x4, offset = 0x4, fixed_abs, tag = 'smem constant byte address 0x4 - core index']
  #allocation1 [shape = 'u32[144,128]{1,0:T(1,128)}', space=vmem, size = 0x12000, scoped, tag = 'internal scratch']
  %s0 = inlined_call_operand.vmem [shape: f32[2,8,32], index: 0, kind: input, shape index: {}]
  %s1 = inlined_call_operand.vmem [shape: bf16[32,96], index: 1, kind: input, shape index: {}]
  %s2 = inlined_call_operand.vmem [shape: f32[1,96], index: 2, kind: input, shape index: {}]
  %s3 = inlined_call_operand.vmem [shape: bf16[32,32], index: 3, kind: input, shape index: {}]
  %s4 = inlined_call_operand.vmem [shape: f32[1,32], index: 4, kind: input, shape index: {}]
  %s5 = inlined_call_operand.vmem [shape: f32[1,32], index: 5, kind: input, shape index: {}]
  %s6 = inlined_call_operand.vmem [shape: f32[1,32], index: 6, kind: input, shape index: {}]
  %s7 = inlined_call_operand.vmem [shape: bf16[32,64], index: 7, kind: input, shape index: {}]
  %s8 = inlined_call_operand.vmem [shape: f32[1,64], index: 8, kind: input, shape index: {}]
  %s9 = inlined_call_operand.vmem [shape: bf16[64,32], index: 9, kind: input, shape index: {}]
  %s10 = inlined_call_operand.vmem [shape: f32[1,32], index: 10, kind: input, shape index: {}]
  %s11 = inlined_call_operand.vmem [shape: f32[1,32], index: 11, kind: input, shape index: {}]
  %s12 = inlined_call_operand.vmem [shape: f32[1,32], index: 12, kind: input, shape index: {}]
  %s13 = inlined_call_operand.vmem [shape: f32[2,8,32], index: 13, kind: output, shape index: {}]
  %s14 = sld [smem:[#allocation0]]
  $region85: #{transformer_forward.4} parent=0
    _
  %s16 = ssub.s32 1, %s14
  %s17 = scalar_select 0, %s16, %s14
  loop: start=0, step=1, limit=4
  $region2: #{transformer_forward.4} parent=0 // loop_pre_header
    _
  $region3: #{transformer_forward.4} parent=0 // loop_header
    %s19 = sphi 0, %s23
    %p20 = scmp.ge.s32.totalorder %s19, 4
    %s29 = sphi 0, %s31
    %s32 = sphi 0, %s29
    %s33 = sphi 0, %s32
    %s49 = sphi 0, %s33
    %s53 = sphi 0, %s53
    %s55 = sphi 0, %s53
    %s56 = sphi 0, %s55
    %s70 = sphi 0, %s56
    %s74 = sphi 0, %s74
    %s76 = sphi 0, %s74
    %s77 = sphi 0, %s76
    %s91 = sphi 0, %s77
    %s95 = sphi 0, %s95
    %s97 = sphi 0, %s95
    %s98 = sphi 0, %s97
    %s112 = sphi 0, %s98
    %s116 = sphi 0, %s116
    %s118 = sphi 0, %s116
    %s119 = sphi 0, %s118
    %s133 = sphi 0, %s119
    %s137 = sphi 0, %s137
    %s139 = sphi 0, %s137
    %s140 = sphi 0, %s139
    %s154 = sphi 0, %s140
    %s158 = sphi 0, %s158
    %s160 = sphi 0, %s158
    %s161 = sphi 0, %s160
    %s175 = sphi 0, %s161
    %s179 = sphi 0, %s179
    %s181 = sphi 0, %s179
    %s182 = sphi 0, %s181
    %s196 = sphi 0, %s182
    %s200 = sphi 0, %s200
    %s202 = sphi 0, %s200
    %s203 = sphi 0, %s202
    %s217 = sphi 0, %s203
    %s221 = sphi 0, %s221
    %s223 = sphi 0, %s221
    %s224 = sphi 0, %s223
    %s238 = sphi 0, %s224
    %s242 = sphi 0, %s242
    %s244 = sphi 0, %s242
    %s245 = sphi 0, %s244
    %s259 = sphi 0, %s245
    %s263 = sphi 0, %s263
    %s265 = sphi 0, %s263
    %s266 = sphi 0, %s265
    %s280 = sphi 0, %s266
    %s284 = sphi 0, %s284
    %s286 = sphi 0, %s284
    %s287 = sphi 0, %s286
    %s301 = sphi 0, %s287
    %s307 = sphi 0, %s309
    %s310 = sphi 0, %s307
    %s311 = sphi 0, %s310
    %s327 = sphi 0, %s311
  $region4: #{transformer_forward.4} parent=0 // loop_header_branch
    %22 = sbr.rel (%p20) target = $region8
  $region5: #{transformer_forward.4} parent=0 // loop_body
    %s24 = ssub.s32 %s19, 1
    %s25 = ssub.s32 %s19, 2
    %s26 = sadd.s32 %s19, 1
    %s27 = ssub.s32 %s19, %s26
    %p28 = scmp.eq.s32.totalorder %s27, 0
    %s30 = sadd.s32 %s29, 1
    %s31 = scalar_select %p28, %s29, %s30
    %p34 = pneg %p28
    %p35 = scmp.eq.s32.totalorder %s19, 1
    %p36 = por %p34, %p35
    %p37 = scmp.ne.s32.totalorder %s29, %s32
    %p38 = scmp.eq.s32.totalorder %s19, 0
    %p39 = por %p37, %p38
    %p40 = scmp.ne.s32.totalorder %s29, %s32
    %p41 = scmp.eq.s32.totalorder %s24, 1
    %p42 = por %p40, %p41
    %p43 = scmp.ne.s32.totalorder %s32, %s33
    %p44 = scmp.eq.s32.totalorder %s24, 0
    %p45 = por %p43, %p44
    %p46 = scmp.ne.s32.totalorder %s32, %s33
    %p47 = scmp.eq.s32.totalorder %s25, 1
    %p48 = por %p46, %p47
    %p50 = scmp.ne.s32.totalorder %s33, %s49
    %p51 = scmp.eq.s32.totalorder %s25, 0
    %p52 = por %p50, %p51
    %s54 = sadd.s32 %s53, 1
    %p57 = scmp.eq.s32.totalorder %s19, 1
    %p58 = scmp.ne.s32.totalorder %s53, %s55
    %p59 = scmp.eq.s32.totalorder %s19, 0
    %p60 = por %p58, %p59
    %p61 = scmp.ne.s32.totalorder %s53, %s55
    %p62 = scmp.eq.s32.totalorder %s24, 1
    %p63 = por %p61, %p62
    %p64 = scmp.ne.s32.totalorder %s55, %s56
    %p65 = scmp.eq.s32.totalorder %s24, 0
    %p66 = por %p64, %p65
    %p67 = scmp.ne.s32.totalorder %s55, %s56
    %p68 = scmp.eq.s32.totalorder %s25, 1
    %p69 = por %p67, %p68
    %p71 = scmp.ne.s32.totalorder %s56, %s70
    %p72 = scmp.eq.s32.totalorder %s25, 0
    %p73 = por %p71, %p72
    %s75 = sadd.s32 %s74, 1
    %p78 = scmp.eq.s32.totalorder %s19, 1
    %p79 = scmp.ne.s32.totalorder %s74, %s76
    %p80 = scmp.eq.s32.totalorder %s19, 0
    %p81 = por %p79, %p80
    %p82 = scmp.ne.s32.totalorder %s74, %s76
    %p83 = scmp.eq.s32.totalorder %s24, 1
    %p84 = por %p82, %p83
    %p85 = scmp.ne.s32.totalorder %s76, %s77
    %p86 = scmp.eq.s32.totalorder %s24, 0
    %p87 = por %p85, %p86
    %p88 = scmp.ne.s32.totalorder %s76, %s77
    %p89 = scmp.eq.s32.totalorder %s25, 1
    %p90 = por %p88, %p89
    %p92 = scmp.ne.s32.totalorder %s77, %s91
    %p93 = scmp.eq.s32.totalorder %s25, 0
    %p94 = por %p92, %p93
    %s96 = sadd.s32 %s95, 1
    %p99 = scmp.eq.s32.totalorder %s19, 1
    %p100 = scmp.ne.s32.totalorder %s95, %s97
    %p101 = scmp.eq.s32.totalorder %s19, 0
    %p102 = por %p100, %p101
    %p103 = scmp.ne.s32.totalorder %s95, %s97
    %p104 = scmp.eq.s32.totalorder %s24, 1
    %p105 = por %p103, %p104
    %p106 = scmp.ne.s32.totalorder %s97, %s98
    %p107 = scmp.eq.s32.totalorder %s24, 0
    %p108 = por %p106, %p107
    %p109 = scmp.ne.s32.totalorder %s97, %s98
    %p110 = scmp.eq.s32.totalorder %s25, 1
    %p111 = por %p109, %p110
    %p113 = scmp.ne.s32.totalorder %s98, %s112
    %p114 = scmp.eq.s32.totalorder %s25, 0
    %p115 = por %p113, %p114
    %s117 = sadd.s32 %s116, 1
    %p120 = scmp.eq.s32.totalorder %s19, 1
    %p121 = scmp.ne.s32.totalorder %s116, %s118
    %p122 = scmp.eq.s32.totalorder %s19, 0
    %p123 = por %p121, %p122
    %p124 = scmp.ne.s32.totalorder %s116, %s118
    %p125 = scmp.eq.s32.totalorder %s24, 1
    %p126 = por %p124, %p125
    %p127 = scmp.ne.s32.totalorder %s118, %s119
    %p128 = scmp.eq.s32.totalorder %s24, 0
    %p129 = por %p127, %p128
    %p130 = scmp.ne.s32.totalorder %s118, %s119
    %p131 = scmp.eq.s32.totalorder %s25, 1
    %p132 = por %p130, %p131
    %p134 = scmp.ne.s32.totalorder %s119, %s133
    %p135 = scmp.eq.s32.totalorder %s25, 0
    %p136 = por %p134, %p135
    %s138 = sadd.s32 %s137, 1
    %p141 = scmp.eq.s32.totalorder %s19, 1
    %p142 = scmp.ne.s32.totalorder %s137, %s139
    %p143 = scmp.eq.s32.totalorder %s19, 0
    %p144 = por %p142, %p143
    %p145 = scmp.ne.s32.totalorder %s137, %s139
    %p146 = scmp.eq.s32.totalorder %s24, 1
    %p147 = por %p145, %p146
    %p148 = scmp.ne.s32.totalorder %s139, %s140
    %p149 = scmp.eq.s32.totalorder %s24, 0
    %p150 = por %p148, %p149
    %p151 = scmp.ne.s32.totalorder %s139, %s140
    %p152 = scmp.eq.s32.totalorder %s25, 1
    %p153 = por %p151, %p152
    %p155 = scmp.ne.s32.totalorder %s140, %s154
    %p156 = scmp.eq.s32.totalorder %s25, 0
    %p157 = por %p155, %p156
    %s159 = sadd.s32 %s158, 1
    %p162 = scmp.eq.s32.totalorder %s19, 1
    %p163 = scmp.ne.s32.totalorder %s158, %s160
    %p164 = scmp.eq.s32.totalorder %s19, 0
    %p165 = por %p163, %p164
    %p166 = scmp.ne.s32.totalorder %s158, %s160
    %p167 = scmp.eq.s32.totalorder %s24, 1
    %p168 = por %p166, %p167
    %p169 = scmp.ne.s32.totalorder %s160, %s161
    %p170 = scmp.eq.s32.totalorder %s24, 0
    %p171 = por %p169, %p170
    %p172 = scmp.ne.s32.totalorder %s160, %s161
    %p173 = scmp.eq.s32.totalorder %s25, 1
    %p174 = por %p172, %p173
    %p176 = scmp.ne.s32.totalorder %s161, %s175
    %p177 = scmp.eq.s32.totalorder %s25, 0
    %p178 = por %p176, %p177
    %s180 = sadd.s32 %s179, 1
    %p183 = scmp.eq.s32.totalorder %s19, 1
    %p184 = scmp.ne.s32.totalorder %s179, %s181
    %p185 = scmp.eq.s32.totalorder %s19, 0
    %p186 = por %p184, %p185
    %p187 = scmp.ne.s32.totalorder %s179, %s181
    %p188 = scmp.eq.s32.totalorder %s24, 1
    %p189 = por %p187, %p188
    %p190 = scmp.ne.s32.totalorder %s181, %s182
    %p191 = scmp.eq.s32.totalorder %s24, 0
    %p192 = por %p190, %p191
    %p193 = scmp.ne.s32.totalorder %s181, %s182
    %p194 = scmp.eq.s32.totalorder %s25, 1
    %p195 = por %p193, %p194
    %p197 = scmp.ne.s32.totalorder %s182, %s196
    %p198 = scmp.eq.s32.totalorder %s25, 0
    %p199 = por %p197, %p198
    %s201 = sadd.s32 %s200, 1
    %p204 = scmp.eq.s32.totalorder %s19, 1
    %p205 = scmp.ne.s32.totalorder %s200, %s202
    %p206 = scmp.eq.s32.totalorder %s19, 0
    %p207 = por %p205, %p206
    %p208 = scmp.ne.s32.totalorder %s200, %s202
    %p209 = scmp.eq.s32.totalorder %s24, 1
    %p210 = por %p208, %p209
    %p211 = scmp.ne.s32.totalorder %s202, %s203
    %p212 = scmp.eq.s32.totalorder %s24, 0
    %p213 = por %p211, %p212
    %p214 = scmp.ne.s32.totalorder %s202, %s203
    %p215 = scmp.eq.s32.totalorder %s25, 1
    %p216 = por %p214, %p215
    %p218 = scmp.ne.s32.totalorder %s203, %s217
    %p219 = scmp.eq.s32.totalorder %s25, 0
    %p220 = por %p218, %p219
    %s222 = sadd.s32 %s221, 1
    %p225 = scmp.eq.s32.totalorder %s19, 1
    %p226 = scmp.ne.s32.totalorder %s221, %s223
    %p227 = scmp.eq.s32.totalorder %s19, 0
    %p228 = por %p226, %p227
    %p229 = scmp.ne.s32.totalorder %s221, %s223
    %p230 = scmp.eq.s32.totalorder %s24, 1
    %p231 = por %p229, %p230
    %p232 = scmp.ne.s32.totalorder %s223, %s224
    %p233 = scmp.eq.s32.totalorder %s24, 0
    %p234 = por %p232, %p233
    %p235 = scmp.ne.s32.totalorder %s223, %s224
    %p236 = scmp.eq.s32.totalorder %s25, 1
    %p237 = por %p235, %p236
    %p239 = scmp.ne.s32.totalorder %s224, %s238
    %p240 = scmp.eq.s32.totalorder %s25, 0
    %p241 = por %p239, %p240
    %s243 = sadd.s32 %s242, 1
    %p246 = scmp.eq.s32.totalorder %s19, 1
    %p247 = scmp.ne.s32.totalorder %s242, %s244
    %p248 = scmp.eq.s32.totalorder %s19, 0
    %p249 = por %p247, %p248
    %p250 = scmp.ne.s32.totalorder %s242, %s244
    %p251 = scmp.eq.s32.totalorder %s24, 1
    %p252 = por %p250, %p251
    %p253 = scmp.ne.s32.totalorder %s244, %s245
    %p254 = scmp.eq.s32.totalorder %s24, 0
    %p255 = por %p253, %p254
    %p256 = scmp.ne.s32.totalorder %s244, %s245
    %p257 = scmp.eq.s32.totalorder %s25, 1
    %p258 = por %p256, %p257
    %p260 = scmp.ne.s32.totalorder %s245, %s259
    %p261 = scmp.eq.s32.totalorder %s25, 0
    %p262 = por %p260, %p261
    %s264 = sadd.s32 %s263, 1
    %p267 = scmp.eq.s32.totalorder %s19, 1
    %p268 = scmp.ne.s32.totalorder %s263, %s265
    %p269 = scmp.eq.s32.totalorder %s19, 0
    %p270 = por %p268, %p269
    %p271 = scmp.ne.s32.totalorder %s263, %s265
    %p272 = scmp.eq.s32.totalorder %s24, 1
    %p273 = por %p271, %p272
    %p274 = scmp.ne.s32.totalorder %s265, %s266
    %p275 = scmp.eq.s32.totalorder %s24, 0
    %p276 = por %p274, %p275
    %p277 = scmp.ne.s32.totalorder %s265, %s266
    %p278 = scmp.eq.s32.totalorder %s25, 1
    %p279 = por %p277, %p278
    %p281 = scmp.ne.s32.totalorder %s266, %s280
    %p282 = scmp.eq.s32.totalorder %s25, 0
    %p283 = por %p281, %p282
    %s285 = sadd.s32 %s284, 1
    %p288 = scmp.eq.s32.totalorder %s19, 1
    %p289 = scmp.ne.s32.totalorder %s284, %s286
    %p290 = scmp.eq.s32.totalorder %s19, 0
    %p291 = por %p289, %p290
    %p292 = scmp.ne.s32.totalorder %s284, %s286
    %p293 = scmp.eq.s32.totalorder %s24, 1
    %p294 = por %p292, %p293
    %p295 = scmp.ne.s32.totalorder %s286, %s287
    %p296 = scmp.eq.s32.totalorder %s24, 0
    %p297 = por %p295, %p296
    %p298 = scmp.ne.s32.totalorder %s286, %s287
    %p299 = scmp.eq.s32.totalorder %s25, 1
    %p300 = por %p298, %p299
    %p302 = scmp.ne.s32.totalorder %s287, %s301
    %p303 = scmp.eq.s32.totalorder %s25, 0
    %p304 = por %p302, %p303
    %s305 = ssub.s32 %s19, %s26
    %p306 = scmp.eq.s32.totalorder %s305, 0
    %s308 = sadd.s32 %s307, 1
    %s309 = scalar_select %p306, %s307, %s308
    %p312 = pneg %p306
    %p313 = scmp.eq.s32.totalorder %s19, 1
    %p314 = por %p312, %p313
    %p315 = scmp.ne.s32.totalorder %s307, %s310
    %p316 = scmp.eq.s32.totalorder %s19, 0
    %p317 = por %p315, %p316
    %p318 = scmp.ne.s32.totalorder %s307, %s310
    %p319 = scmp.eq.s32.totalorder %s24, 1
    %p320 = por %p318, %p319
    %p321 = scmp.ne.s32.totalorder %s310, %s311
    %p322 = scmp.eq.s32.totalorder %s24, 0
    %p323 = por %p321, %p322
    %p324 = scmp.ne.s32.totalorder %s310, %s311
    %p325 = scmp.eq.s32.totalorder %s25, 1
    %p326 = por %p324, %p325
    %p328 = scmp.ne.s32.totalorder %s311, %s327
    %p329 = scmp.eq.s32.totalorder %s25, 0
    %p330 = por %p328, %p329
    %p331 = scmp.le.s32.totalorder 1, %s19
    %p332 = scmp.lt.s32.totalorder %s19, 3
    %p333 = pnand %p331, %p332
    %p334 = pneg %p333
    // Predicated region
    $region9: #{transformer_forward.4} parent=5 // pred_check
      _
    $region10: #{transformer_forward.4} parent=5 // pred_check_branch
      %336 = sbr.rel (%p333) target = $region12
    $region11: #{transformer_forward.4} parent=5 // pred_region
      %s337 = ssub.s32 %s19, 1
      // Predicated region
      $region13: #{transformer_forward.4} parent=11 // pred_check
        %p338 = pneg %p66
      $region14: #{transformer_forward.4} parent=11 // pred_check_branch
        %340 = sbr.rel (%p338) target = $region16
      $region15: #{transformer_forward.4} parent=11 // pred_region
        _
      $region16: #{transformer_forward.4} parent=11 // pred_fallthru
        _
      // Predicated region
      $region17: #{transformer_forward.4} parent=11 // pred_check
        %p341 = pneg %p87
      $region18: #{transformer_forward.4} parent=11 // pred_check_branch
        %343 = sbr.rel (%p341) target = $region20
      $region19: #{transformer_forward.4} parent=11 // pred_region
        _
      $region20: #{transformer_forward.4} parent=11 // pred_fallthru
        _
      // Predicated region
      $region21: #{transformer_forward.4} parent=11 // pred_check
        %p344 = pneg %p108
      $region22: #{transformer_forward.4} parent=11 // pred_check_branch
        %346 = sbr.rel (%p344) target = $region24
      $region23: #{transformer_forward.4} parent=11 // pred_region
        _
      $region24: #{transformer_forward.4} parent=11 // pred_fallthru
        _
      // Predicated region
      $region25: #{transformer_forward.4} parent=11 // pred_check
        %p347 = pneg %p129
      $region26: #{transformer_forward.4} parent=11 // pred_check_branch
        %349 = sbr.rel (%p347) target = $region28
      $region27: #{transformer_forward.4} parent=11 // pred_region
        _
      $region28: #{transformer_forward.4} parent=11 // pred_fallthru
        _
      // Predicated region
      $region29: #{transformer_forward.4} parent=11 // pred_check
        %p350 = pneg %p150
      $region30: #{transformer_forward.4} parent=11 // pred_check_branch
        %352 = sbr.rel (%p350) target = $region32
      $region31: #{transformer_forward.4} parent=11 // pred_region
        _
      $region32: #{transformer_forward.4} parent=11 // pred_fallthru
        _
      // Predicated region
      $region33: #{transformer_forward.4} parent=11 // pred_check
        %p353 = pneg %p171
      $region34: #{transformer_forward.4} parent=11 // pred_check_branch
        %355 = sbr.rel (%p353) target = $region36
      $region35: #{transformer_forward.4} parent=11 // pred_region
        _
      $region36: #{transformer_forward.4} parent=11 // pred_fallthru
        _
      // Predicated region
      $region37: #{transformer_forward.4} parent=11 // pred_check
        %p356 = pneg %p192
      $region38: #{transformer_forward.4} parent=11 // pred_check_branch
        %358 = sbr.rel (%p356) target = $region40
      $region39: #{transformer_forward.4} parent=11 // pred_region
        _
      $region40: #{transformer_forward.4} parent=11 // pred_fallthru
        _
      // Predicated region
      $region41: #{transformer_forward.4} parent=11 // pred_check
        %p359 = pneg %p213
      $region42: #{transformer_forward.4} parent=11 // pred_check_branch
        %361 = sbr.rel (%p359) target = $region44
      $region43: #{transformer_forward.4} parent=11 // pred_region
        _
      $region44: #{transformer_forward.4} parent=11 // pred_fallthru
        _
      // Predicated region
      $region45: #{transformer_forward.4} parent=11 // pred_check
        %p362 = pneg %p234
      $region46: #{transformer_forward.4} parent=11 // pred_check_branch
        %364 = sbr.rel (%p362) target = $region48
      $region47: #{transformer_forward.4} parent=11 // pred_region
        _
      $region48: #{transformer_forward.4} parent=11 // pred_fallthru
        _
      // Predicated region
      $region49: #{transformer_forward.4} parent=11 // pred_check
        %p365 = pneg %p255
      $region50: #{transformer_forward.4} parent=11 // pred_check_branch
        %367 = sbr.rel (%p365) target = $region52
      $region51: #{transformer_forward.4} parent=11 // pred_region
        _
      $region52: #{transformer_forward.4} parent=11 // pred_fallthru
        _
      // Predicated region
      $region53: #{transformer_forward.4} parent=11 // pred_check
        %p368 = pneg %p276
      $region54: #{transformer_forward.4} parent=11 // pred_check_branch
        %370 = sbr.rel (%p368) target = $region56
      $region55: #{transformer_forward.4} parent=11 // pred_region
        _
      $region56: #{transformer_forward.4} parent=11 // pred_fallthru
        _
      // Predicated region
      $region57: #{transformer_forward.4} parent=11 // pred_check
        %p371 = pneg %p297
      $region58: #{transformer_forward.4} parent=11 // pred_check_branch
        %373 = sbr.rel (%p371) target = $region60
      $region59: #{transformer_forward.4} parent=11 // pred_region
        _
      $region60: #{transformer_forward.4} parent=11 // pred_fallthru
        _
    $region12: #{transformer_forward.4} parent=5 // pred_fallthru
      _
    %p374 = scmp.lt.s32.totalorder %s19, 2
    // Predicated region
    $region61: #{transformer_forward.4} parent=5 // pred_check
      %p375 = pneg %p374
    $region62: #{transformer_forward.4} parent=5 // pred_check_branch
      %377 = sbr.rel (%p375) target = $region64
    $region63: #{transformer_forward.4} parent=5 // pred_region
      // Predicated region
      $region65: #{transformer_forward.4} parent=63 // pred_check
        %p378 = pneg %p39
      $region66: #{transformer_forward.4} parent=63 // pred_check_branch
        %380 = sbr.rel (%p378) target = $region68
      $region67: #{transformer_forward.4} parent=63 // pred_region
        %p381 = scmp.lt.s32.totalorder %s19, 1
        %s382 = scalar_select %p381, %s19, 1
        %s383 = smul.addr %s382, 8
        %s384 = scalar_lea.vmem %s0, %s383
      $region68: #{transformer_forward.4} parent=63 // pred_fallthru
        _
    $region64: #{transformer_forward.4} parent=5 // pred_fallthru
      _
    %p385 = scmp.le.s32.totalorder 1, %s19
    %p386 = scmp.lt.s32.totalorder %s19, 3
    %p387 = pnand %p385, %p386
    %p388 = pneg %p387
    // Predicated region
    $region69: #{transformer_forward.4} parent=5 // pred_check
      _
    $region70: #{transformer_forward.4} parent=5 // pred_check_branch
      %390 = sbr.rel (%p387) target = $region72
    $region71: #{transformer_forward.4} parent=5 // pred_region
      %s391 = ssub.s32 %s19, 1
      %p392 = scmp.lt.s32.totalorder %s24, 1
      %s393 = scalar_select %p392, %s24, 1
      %s394 = smul.addr %s393, 8
      %s395 = scalar_lea.vmem %s0, %s394
      %p396 = pneg %p45
      %p397 = pneg %p42
      %p398 = pneg %p66
      %p399 = pneg %p63
      %p400 = pneg %p87
      %p401 = pneg %p84
      %p402 = pneg %p108
      %p403 = pneg %p105
      %p404 = pneg %p129
      %p405 = pneg %p126
      %p406 = pneg %p150
      %p407 = pneg %p147
      %p408 = pneg %p171
      %p409 = pneg %p168
      %p410 = pneg %p192
      %p411 = pneg %p189
      %p412 = pneg %p213
      %p413 = pneg %p210
      %p414 = pneg %p234
      %p415 = pneg %p231
      %p416 = pneg %p255
      %p417 = pneg %p252
      %p418 = pneg %p276
      %p419 = pneg %p273
      %p420 = pneg %p297
      %p421 = pneg %p294
      %p422 = pneg %p323
      %p423 = pneg %p320
      %p424 = scmp.lt.s32.totalorder %s24, 1
      %s425 = scalar_select %p424, %s24, 1
      %s426 = smul.addr %s425, 8
      %s427 = scalar_lea.vmem %s13, %s426
      %p428 = scmp.lt.s32.totalorder %s24, 1
      %s429 = scalar_select %p428, %s24, 1
      %s430 = smul.addr %s429, 8
      %s431 = scalar_lea.vmem %s0, %s430
      %p432 = scmp.lt.s32.totalorder %s24, 1
      %s433 = scalar_select %p432, %s24, 1
      %s434 = smul.addr %s433, 8
      %s435 = scalar_lea.vmem %s13, %s434
      %v437 = vld [vmem:[%s431] sm:$0xff]
      %v438 = vpack.c.bf16 %v437, %v437
      %v439 = vld [vmem:[%s1] sm:$0xf]
      %v440 = vld [vmem:[%s1 + $0x4] sm:$0xf]
      %v441 = vld [vmem:[%s1 + $0x8] sm:$0xf]
      %v442 = vld [vmem:[%s1 + $0xc] sm:$0xf]
      %v443 = vld [vmem:[%s2] sm:$0x1]
      %v445 = vlaneseq
      %v446 = vshrl.u32 %v445, 7
      %v447 = vsub.s32 0, %v446
      %v448 = vrot.slane %v443, %v447
      %v454 = vunpack.c.l.b16 %v439
      %v455 = vunpack.c.l.b16 %v440
      %v456 = vunpack.c.l.b16 %v441
      %v457 = vunpack.c.l.b16 %v442
      %v458 = vpack.c.b16 %v455, %v454
      %v459 = vpack.c.b16 %v457, %v456
      %vm462 = vcmask 261120
      %v464 = vsel %vm462, %v438, 0
      %466 = vmatprep.subr.bf16.mxu0 0
      %467 = vmatpush1.bf16.msra.mxu0 0
      %468 = vmatprep.subr.bf16.mxu0 0
      %469 = vmatpush1.bf16.msra.mxu0 0
      %470 = vmatprep.subr.bf16.mxu0 0
      %471 = vmatpush1.bf16.msra.mxu0 0
      %472 = vmatprep.subr.bf16.mxu0 0
      %473 = vmatpush1.bf16.msra.mxu0 0
      %474 = vmatprep.subr.bf16.mxu0 0
      %475 = vmatpush1.bf16.msra.mxu0 0
      %476 = vmatprep.subr.bf16.mxu0 0
      %477 = vmatpush1.bf16.msra.mxu0 0
      %478 = vmatprep.subr.bf16.mxu0 0
      %479 = vmatpush1.bf16.msra.mxu0 %v459
      %480 = vmatprep.subr.bf16.mxu0 0
      %481 = vmatpush1.bf16.msra.mxu0 %v458
      %482 = vmatprep.subr.bf16.mxu0 0
      %483 = vmatpush2.bf16.msra.mxu0 0
      %484 = vmatprep.subr.bf16.mxu0 0
      %485 = vmatpush2.bf16.msra.mxu0 0
      %486 = vmatprep.subr.bf16.mxu0 0
      %487 = vmatpush2.bf16.msra.mxu0 0
      %488 = vmatprep.subr.bf16.mxu0 0
      %489 = vmatpush2.bf16.msra.mxu0 0
      %490 = vmatprep.subr.bf16.mxu0 0
      %491 = vmatpush2.bf16.msra.mxu0 0
      %492 = vmatprep.subr.bf16.mxu0 0
      %493 = vmatpush2.bf16.msra.mxu0 0
      %494 = vmatprep.subr.bf16.mxu0 0
      %495 = vmatpush2.bf16.msra.mxu0 0
      %496 = vmatprep.subr.bf16.mxu0 0
      %497 = vmatpush2.bf16.msra.mxu0 0
      %498 = vmatprep.mubr.bf16.mxu0 0
      %499 = vmatmul.mubr.bf16.gmra.mxu0 %v464
      %v500 = vpop.f32.mrf.mxu0
      %v501 = vadd.f32 %v448, %v500
      %v502 = vpop.f32.mrf.mxu0
      %v503 = vpop.f32.mrf.mxu0
      %v504 = vpop.f32.mrf.mxu0
      %505 = vdwg.mxu0
      %507 = vrot.lane.b32.xlu0 %v501, 120
      %v508 = vpop.permute.xlu0 %507
      %510 = vrot.lane.b32.xlu0 %v501, 112
      %v511 = vpop.permute.xlu0 %510
      %513 = vrot.lane.b32.xlu0 %v501, 104
      %v514 = vpop.permute.xlu0 %513
      %v516 = vpack.c.bf16 %v501, %v501
      %v517 = vpack.c.bf16 %v508, %v508
      %v518 = vpack.c.bf16 %v511, %v511
      %v519 = vpack.c.bf16 %v514, %v514
      %521 = vrot.lane.b32.xlu0 %v516, 96
      %v522 = vpop.permute.xlu0 %521
      %vm523 = vcmask 64512
      %v525 = vsel %vm523, %v516, 0
      %v528 = vsel %vm523, %v522, 0
      %530 = vmatprep.subr.bf16.mxu0 0
      %531 = vmatpush1.bf16.xpose.msra.mxu0 0
      %532 = vmatprep.subr.bf16.mxu0 0
      %533 = vmatpush1.bf16.xpose.msra.mxu0 0
      %534 = vmatprep.subr.bf16.mxu0 0
      %535 = vmatpush1.bf16.xpose.msra.mxu0 0
      %536 = vmatprep.subr.bf16.mxu0 0
      %537 = vmatpush1.bf16.xpose.msra.mxu0 0
      %538 = vmatprep.subr.bf16.mxu0 0
      %539 = vmatpush1.bf16.xpose.msra.mxu0 0
      %540 = vmatprep.subr.bf16.mxu0 0
      %541 = vmatpush1.bf16.xpose.msra.mxu0 0
      %542 = vmatprep.subr.bf16.mxu0 0
      %543 = vmatpush1.bf16.xpose.msra.mxu0 0
      %544 = vmatprep.subr.bf16.mxu0 0
      %545 = vmatpush1.bf16.xpose.msra.mxu0 %v528
      %546 = vmatprep.subr.bf16.mxu0 0
      %547 = vmatpush2.bf16.xpose.msra.mxu0 0
      %548 = vmatprep.subr.bf16.mxu0 0
      %549 = vmatpush2.bf16.xpose.msra.mxu0 0
      %550 = vmatprep.subr.bf16.mxu0 0
      %551 = vmatpush2.bf16.xpose.msra.mxu0 0
      %552 = vmatprep.subr.bf16.mxu0 0
      %553 = vmatpush2.bf16.xpose.msra.mxu0 0
      %554 = vmatprep.subr.bf16.mxu0 0
      %555 = vmatpush2.bf16.xpose.msra.mxu0 0
      %556 = vmatprep.subr.bf16.mxu0 0
      %557 = vmatpush2.bf16.xpose.msra.mxu0 0
      %558 = vmatprep.subr.bf16.mxu0 0
      %559 = vmatpush2.bf16.xpose.msra.mxu0 0
      %560 = vmatprep.subr.bf16.mxu0 0
      %561 = vmatpush2.bf16.xpose.msra.mxu0 0
      %562 = vmatprep.mubr.bf16.mxu0 0
      %563 = vmatmul.mubr.bf16.gmra.mxu0 %v525
      %v564 = vpop.f32.mrf.mxu0
      %v565 = vadd.f32 0.0, %v564
      %v566 = vpop.f32.mrf.mxu0
      %v567 = vpop.f32.mrf.mxu0
      %v568 = vpop.f32.mrf.mxu0
      %569 = vdwg.mxu0
      %571 = vrot.lane.b32.xlu0 %v517, 96
      %v572 = vpop.permute.xlu0 %571
      %v574 = vsel %vm523, %v517, 0
      %v577 = vsel %vm523, %v572, 0
      %579 = vmatprep.subr.bf16.mxu0 0
      %580 = vmatpush1.bf16.xpose.msra.mxu0 0
      %581 = vmatprep.subr.bf16.mxu0 0
      %582 = vmatpush1.bf16.xpose.msra.mxu0 0
      %583 = vmatprep.subr.bf16.mxu0 0
      %584 = vmatpush1.bf16.xpose.msra.mxu0 0
      %585 = vmatprep.subr.bf16.mxu0 0
      %586 = vmatpush1.bf16.xpose.msra.mxu0 0
      %587 = vmatprep.subr.bf16.mxu0 0
      %588 = vmatpush1.bf16.xpose.msra.mxu0 0
      %589 = vmatprep.subr.bf16.mxu0 0
      %590 = vmatpush1.bf16.xpose.msra.mxu0 0
      %591 = vmatprep.subr.bf16.mxu0 0
      %592 = vmatpush1.bf16.xpose.msra.mxu0 0
      %593 = vmatprep.subr.bf16.mxu0 0
      %594 = vmatpush1.bf16.xpose.msra.mxu0 %v577
      %595 = vmatprep.subr.bf16.mxu0 0
      %596 = vmatpush2.bf16.xpose.msra.mxu0 0
      %597 = vmatprep.subr.bf16.mxu0 0
      %598 = vmatpush2.bf16.xpose.msra.mxu0 0
      %599 = vmatprep.subr.bf16.mxu0 0
      %600 = vmatpush2.bf16.xpose.msra.mxu0 0
      %601 = vmatprep.subr.bf16.mxu0 0
      %602 = vmatpush2.bf16.xpose.msra.mxu0 0
      %603 = vmatprep.subr.bf16.mxu0 0
      %604 = vmatpush2.bf16.xpose.msra.mxu0 0
      %605 = vmatprep.subr.bf16.mxu0 0
      %606 = vmatpush2.bf16.xpose.msra.mxu0 0
      %607 = vmatprep.subr.bf16.mxu0 0
      %608 = vmatpush2.bf16.xpose.msra.mxu0 0
      %609 = vmatprep.subr.bf16.mxu0 0
      %610 = vmatpush2.bf16.xpose.msra.mxu0 0
      %611 = vmatprep.mubr.bf16.mxu0 0
      %612 = vmatmul.mubr.bf16.gmra.mxu0 %v574
      %v613 = vpop.f32.mrf.mxu0
      %v614 = vadd.f32 0.0, %v613
      %v615 = vpop.f32.mrf.mxu0
      %v616 = vpop.f32.mrf.mxu0
      %v617 = vpop.f32.mrf.mxu0
      %618 = vdwg.mxu0
      %620 = vrot.lane.b32.xlu0 %v518, 96
      %v621 = vpop.permute.xlu0 %620
      %v623 = vsel %vm523, %v518, 0
      %v626 = vsel %vm523, %v621, 0
      %628 = vmatprep.subr.bf16.mxu0 0
      %629 = vmatpush1.bf16.xpose.msra.mxu0 0
      %630 = vmatprep.subr.bf16.mxu0 0
      %631 = vmatpush1.bf16.xpose.msra.mxu0 0
      %632 = vmatprep.subr.bf16.mxu0 0
      %633 = vmatpush1.bf16.xpose.msra.mxu0 0
      %634 = vmatprep.subr.bf16.mxu0 0
      %635 = vmatpush1.bf16.xpose.msra.mxu0 0
      %636 = vmatprep.subr.bf16.mxu0 0
      %637 = vmatpush1.bf16.xpose.msra.mxu0 0
      %638 = vmatprep.subr.bf16.mxu0 0
      %639 = vmatpush1.bf16.xpose.msra.mxu0 0
      %640 = vmatprep.subr.bf16.mxu0 0
      %641 = vmatpush1.bf16.xpose.msra.mxu0 0
      %642 = vmatprep.subr.bf16.mxu0 0
      %643 = vmatpush1.bf16.xpose.msra.mxu0 %v626
      %644 = vmatprep.subr.bf16.mxu0 0
      %645 = vmatpush2.bf16.xpose.msra.mxu0 0
      %646 = vmatprep.subr.bf16.mxu0 0
      %647 = vmatpush2.bf16.xpose.msra.mxu0 0
      %648 = vmatprep.subr.bf16.mxu0 0
      %649 = vmatpush2.bf16.xpose.msra.mxu0 0
      %650 = vmatprep.subr.bf16.mxu0 0
      %651 = vmatpush2.bf16.xpose.msra.mxu0 0
      %652 = vmatprep.subr.bf16.mxu0 0
      %653 = vmatpush2.bf16.xpose.msra.mxu0 0
      %654 = vmatprep.subr.bf16.mxu0 0
      %655 = vmatpush2.bf16.xpose.msra.mxu0 0
      %656 = vmatprep.subr.bf16.mxu0 0
      %657 = vmatpush2.bf16.xpose.msra.mxu0 0
      %658 = vmatprep.subr.bf16.mxu0 0
      %659 = vmatpush2.bf16.xpose.msra.mxu0 0
      %660 = vmatprep.mubr.bf16.mxu0 0
      %661 = vmatmul.mubr.bf16.gmra.mxu0 %v623
      %v662 = vpop.f32.mrf.mxu0
      %v663 = vadd.f32 0.0, %v662
      %v664 = vpop.f32.mrf.mxu0
      %v665 = vpop.f32.mrf.mxu0
      %v666 = vpop.f32.mrf.mxu0
      %667 = vdwg.mxu0
      %669 = vrot.lane.b32.xlu0 %v519, 96
      %v670 = vpop.permute.xlu0 %669
      %v672 = vsel %vm523, %v519, 0
      %v675 = vsel %vm523, %v670, 0
      %677 = vmatprep.subr.bf16.mxu0 0
      %678 = vmatpush1.bf16.xpose.msra.mxu0 0
      %679 = vmatprep.subr.bf16.mxu0 0
      %680 = vmatpush1.bf16.xpose.msra.mxu0 0
      %681 = vmatprep.subr.bf16.mxu0 0
      %682 = vmatpush1.bf16.xpose.msra.mxu0 0
      %683 = vmatprep.subr.bf16.mxu0 0
      %684 = vmatpush1.bf16.xpose.msra.mxu0 0
      %685 = vmatprep.subr.bf16.mxu0 0
      %686 = vmatpush1.bf16.xpose.msra.mxu0 0
      %687 = vmatprep.subr.bf16.mxu0 0
      %688 = vmatpush1.bf16.xpose.msra.mxu0 0
      %689 = vmatprep.subr.bf16.mxu0 0
      %690 = vmatpush1.bf16.xpose.msra.mxu0 0
      %691 = vmatprep.subr.bf16.mxu0 0
      %692 = vmatpush1.bf16.xpose.msra.mxu0 %v675
      %693 = vmatprep.subr.bf16.mxu0 0
      %694 = vmatpush2.bf16.xpose.msra.mxu0 0
      %695 = vmatprep.subr.bf16.mxu0 0
      %696 = vmatpush2.bf16.xpose.msra.mxu0 0
      %697 = vmatprep.subr.bf16.mxu0 0
      %698 = vmatpush2.bf16.xpose.msra.mxu0 0
      %699 = vmatprep.subr.bf16.mxu0 0
      %700 = vmatpush2.bf16.xpose.msra.mxu0 0
      %701 = vmatprep.subr.bf16.mxu0 0
      %702 = vmatpush2.bf16.xpose.msra.mxu0 0
      %703 = vmatprep.subr.bf16.mxu0 0
      %704 = vmatpush2.bf16.xpose.msra.mxu0 0
      %705 = vmatprep.subr.bf16.mxu0 0
      %706 = vmatpush2.bf16.xpose.msra.mxu0 0
      %707 = vmatprep.subr.bf16.mxu0 0
      %708 = vmatpush2.bf16.xpose.msra.mxu0 0
      %709 = vmatprep.mubr.bf16.mxu0 0
      %710 = vmatmul.mubr.bf16.gmra.mxu0 %v672
      %v711 = vpop.f32.mrf.mxu0
      %v712 = vadd.f32 0.0, %v711
      %v713 = vpop.f32.mrf.mxu0
      %v714 = vpop.f32.mrf.mxu0
      %v715 = vpop.f32.mrf.mxu0
      %716 = vdwg.mxu0
      %v717 = vmul.f32 %v565, 0.35355338
      %v718 = vmul.f32 %v614, 0.35355338
      %v719 = vmul.f32 %v663, 0.35355338
      %v720 = vmul.f32 %v712, 0.35355338
      %v721 = vsel %vm523, %v717, -inf
      %722 = vmax.xlane.f32.xlu0 %v721
      %v723 = vpop.xlane.xlu0 %722
      %v724 = vsel %vm523, %v718, -inf
      %725 = vmax.xlane.f32.xlu0 %v724
      %v726 = vpop.xlane.xlu0 %725
      %v727 = vsel %vm523, %v719, -inf
      %728 = vmax.xlane.f32.xlu0 %v727
      %v729 = vpop.xlane.xlu0 %728
      %v730 = vsel %vm523, %v720, -inf
      %731 = vmax.xlane.f32.xlu0 %v730
      %v732 = vpop.xlane.xlu0 %731
      %v733 = vsub.f32 %v717, %v723
      %v734 = vsub.f32 %v718, %v726
      %v735 = vsub.f32 %v719, %v729
      %v736 = vsub.f32 %v720, %v732
      %v737 = vmul.f32 %v733, 1.442695
      %v738 = vpow.pop %v737
      %v739 = vmul.f32 %v734, 1.442695
      %v740 = vpow.pop %v739
      %v741 = vmul.f32 %v735, 1.442695
      %v742 = vpow.pop %v741
      %v743 = vmul.f32 %v736, 1.442695
      %v744 = vpow.pop %v743
      %v745 = vsel %vm523, %v738, 0.0
      %746 = vadd.xlane.f32.xlu0 %v745
      %v747 = vpop.xlane.xlu0 %746
      %v748 = vsel %vm523, %v740, 0.0
      %749 = vadd.xlane.f32.xlu0 %v748
      %v750 = vpop.xlane.xlu0 %749
      %v751 = vsel %vm523, %v742, 0.0
      %752 = vadd.xlane.f32.xlu0 %v751
      %v753 = vpop.xlane.xlu0 %752
      %v754 = vsel %vm523, %v744, 0.0
      %755 = vadd.xlane.f32.xlu0 %v754
      %v756 = vpop.xlane.xlu0 %755
      %v757 = vrcp.pop %v747
      %v758 = vrcp.pop %v750
      %v759 = vrcp.pop %v753
      %v760 = vrcp.pop %v756
      %v761 = vmul.f32 %v738, %v757
      %v762 = vmul.f32 %v740, %v758
      %v763 = vmul.f32 %v742, %v759
      %v764 = vmul.f32 %v744, %v760
      %v765 = vpack.c.bf16 %v761, %v761
      %v766 = vpack.c.bf16 %v762, %v762
      %v767 = vpack.c.bf16 %v763, %v763
      %v768 = vpack.c.bf16 %v764, %v764
      %769 = vrot.lane.b32.xlu0 %v516, 64
      %v770 = vpop.permute.xlu0 %769
      %v772 = vsel %vm523, %v765, 0
      %vm774 = vcmask 1043456
      %v776 = vsel %vm774, %v770, 0
      %778 = vmatprep.subr.bf16.mxu0 0
      %779 = vmatpush1.bf16.msra.mxu0 0
      %780 = vmatprep.subr.bf16.mxu0 0
      %781 = vmatpush1.bf16.msra.mxu0 0
      %782 = vmatprep.subr.bf16.mxu0 0
      %783 = vmatpush1.bf16.msra.mxu0 0
      %784 = vmatprep.subr.bf16.mxu0 0
      %785 = vmatpush1.bf16.msra.mxu0 0
      %786 = vmatprep.subr.bf16.mxu0 0
      %787 = vmatpush1.bf16.msra.mxu0 0
      %788 = vmatprep.subr.bf16.mxu0 0
      %789 = vmatpush1.bf16.msra.mxu0 0
      %790 = vmatprep.subr.bf16.mxu0 0
      %791 = vmatpush1.bf16.msra.mxu0 0
      %792 = vmatprep.subr.bf16.mxu0 0
      %793 = vmatpush1.bf16.msra.mxu0 %v776
      %794 = vmatprep.subr.bf16.mxu0 0
      %795 = vmatpush2.bf16.msra.mxu0 0
      %796 = vmatprep.subr.bf16.mxu0 0
      %797 = vmatpush2.bf16.msra.mxu0 0
      %798 = vmatprep.subr.bf16.mxu0 0
      %799 = vmatpush2.bf16.msra.mxu0 0
      %800 = vmatprep.subr.bf16.mxu0 0
      %801 = vmatpush2.bf16.msra.mxu0 0
      %802 = vmatprep.subr.bf16.mxu0 0
      %803 = vmatpush2.bf16.msra.mxu0 0
      %804 = vmatprep.subr.bf16.mxu0 0
      %805 = vmatpush2.bf16.msra.mxu0 0
      %806 = vmatprep.subr.bf16.mxu0 0
      %807 = vmatpush2.bf16.msra.mxu0 0
      %808 = vmatprep.subr.bf16.mxu0 0
      %809 = vmatpush2.bf16.msra.mxu0 0
      %810 = vmatprep.mubr.bf16.mxu0 0
      %811 = vmatmul.mubr.bf16.gmra.mxu0 %v772
      %v812 = vpop.f32.mrf.mxu0
      %v813 = vadd.f32 0.0, %v812
      %v814 = vpop.f32.mrf.mxu0
      %v815 = vpop.f32.mrf.mxu0
      %v816 = vpop.f32.mrf.mxu0
      %817 = vdwg.mxu0
      %818 = vrot.lane.b32.xlu0 %v517, 64
      %v819 = vpop.permute.xlu0 %818
      %v821 = vsel %vm523, %v766, 0
      %v824 = vsel %vm774, %v819, 0
      %826 = vmatprep.subr.bf16.mxu0 0
      %827 = vmatpush1.bf16.msra.mxu0 0
      %828 = vmatprep.subr.bf16.mxu0 0
      %829 = vmatpush1.bf16.msra.mxu0 0
      %830 = vmatprep.subr.bf16.mxu0 0
      %831 = vmatpush1.bf16.msra.mxu0 0
      %832 = vmatprep.subr.bf16.mxu0 0
      %833 = vmatpush1.bf16.msra.mxu0 0
      %834 = vmatprep.subr.bf16.mxu0 0
      %835 = vmatpush1.bf16.msra.mxu0 0
      %836 = vmatprep.subr.bf16.mxu0 0
      %837 = vmatpush1.bf16.msra.mxu0 0
      %838 = vmatprep.subr.bf16.mxu0 0
      %839 = vmatpush1.bf16.msra.mxu0 0
      %840 = vmatprep.subr.bf16.mxu0 0
      %841 = vmatpush1.bf16.msra.mxu0 %v824
      %842 = vmatprep.subr.bf16.mxu0 0
      %843 = vmatpush2.bf16.msra.mxu0 0
      %844 = vmatprep.subr.bf16.mxu0 0
      %845 = vmatpush2.bf16.msra.mxu0 0
      %846 = vmatprep.subr.bf16.mxu0 0
      %847 = vmatpush2.bf16.msra.mxu0 0
      %848 = vmatprep.subr.bf16.mxu0 0
      %849 = vmatpush2.bf16.msra.mxu0 0
      %850 = vmatprep.subr.bf16.mxu0 0
      %851 = vmatpush2.bf16.msra.mxu0 0
      %852 = vmatprep.subr.bf16.mxu0 0
      %853 = vmatpush2.bf16.msra.mxu0 0
      %854 = vmatprep.subr.bf16.mxu0 0
      %855 = vmatpush2.bf16.msra.mxu0 0
      %856 = vmatprep.subr.bf16.mxu0 0
      %857 = vmatpush2.bf16.msra.mxu0 0
      %858 = vmatprep.mubr.bf16.mxu0 0
      %859 = vmatmul.mubr.bf16.gmra.mxu0 %v821
      %v860 = vpop.f32.mrf.mxu0
      %v861 = vadd.f32 0.0, %v860
      %v862 = vpop.f32.mrf.mxu0
      %v863 = vpop.f32.mrf.mxu0
      %v864 = vpop.f32.mrf.mxu0
      %865 = vdwg.mxu0
      %866 = vrot.lane.b32.xlu0 %v518, 64
      %v867 = vpop.permute.xlu0 %866
      %v869 = vsel %vm523, %v767, 0
      %v872 = vsel %vm774, %v867, 0
      %874 = vmatprep.subr.bf16.mxu0 0
      %875 = vmatpush1.bf16.msra.mxu0 0
      %876 = vmatprep.subr.bf16.mxu0 0
      %877 = vmatpush1.bf16.msra.mxu0 0
      %878 = vmatprep.subr.bf16.mxu0 0
      %879 = vmatpush1.bf16.msra.mxu0 0
      %880 = vmatprep.subr.bf16.mxu0 0
      %881 = vmatpush1.bf16.msra.mxu0 0
      %882 = vmatprep.subr.bf16.mxu0 0
      %883 = vmatpush1.bf16.msra.mxu0 0
      %884 = vmatprep.subr.bf16.mxu0 0
      %885 = vmatpush1.bf16.msra.mxu0 0
      %886 = vmatprep.subr.bf16.mxu0 0
      %887 = vmatpush1.bf16.msra.mxu0 0
      %888 = vmatprep.subr.bf16.mxu0 0
      %889 = vmatpush1.bf16.msra.mxu0 %v872
      %890 = vmatprep.subr.bf16.mxu0 0
      %891 = vmatpush2.bf16.msra.mxu0 0
      %892 = vmatprep.subr.bf16.mxu0 0
      %893 = vmatpush2.bf16.msra.mxu0 0
      %894 = vmatprep.subr.bf16.mxu0 0
      %895 = vmatpush2.bf16.msra.mxu0 0
      %896 = vmatprep.subr.bf16.mxu0 0
      %897 = vmatpush2.bf16.msra.mxu0 0
      %898 = vmatprep.subr.bf16.mxu0 0
      %899 = vmatpush2.bf16.msra.mxu0 0
      %900 = vmatprep.subr.bf16.mxu0 0
      %901 = vmatpush2.bf16.msra.mxu0 0
      %902 = vmatprep.subr.bf16.mxu0 0
      %903 = vmatpush2.bf16.msra.mxu0 0
      %904 = vmatprep.subr.bf16.mxu0 0
      %905 = vmatpush2.bf16.msra.mxu0 0
      %906 = vmatprep.mubr.bf16.mxu0 0
      %907 = vmatmul.mubr.bf16.gmra.mxu0 %v869
      %v908 = vpop.f32.mrf.mxu0
      %v909 = vadd.f32 0.0, %v908
      %v910 = vpop.f32.mrf.mxu0
      %v911 = vpop.f32.mrf.mxu0
      %v912 = vpop.f32.mrf.mxu0
      %913 = vdwg.mxu0
      %914 = vrot.lane.b32.xlu0 %v519, 64
      %v915 = vpop.permute.xlu0 %914
      %v917 = vsel %vm523, %v768, 0
      %v920 = vsel %vm774, %v915, 0
      %922 = vmatprep.subr.bf16.mxu0 0
      %923 = vmatpush1.bf16.msra.mxu0 0
      %924 = vmatprep.subr.bf16.mxu0 0
      %925 = vmatpush1.bf16.msra.mxu0 0
      %926 = vmatprep.subr.bf16.mxu0 0
      %927 = vmatpush1.bf16.msra.mxu0 0
      %928 = vmatprep.subr.bf16.mxu0 0
      %929 = vmatpush1.bf16.msra.mxu0 0
      %930 = vmatprep.subr.bf16.mxu0 0
      %931 = vmatpush1.bf16.msra.mxu0 0
      %932 = vmatprep.subr.bf16.mxu0 0
      %933 = vmatpush1.bf16.msra.mxu0 0
      %934 = vmatprep.subr.bf16.mxu0 0
      %935 = vmatpush1.bf16.msra.mxu0 0
      %936 = vmatprep.subr.bf16.mxu0 0
      %937 = vmatpush1.bf16.msra.mxu0 %v920
      %938 = vmatprep.subr.bf16.mxu0 0
      %939 = vmatpush2.bf16.msra.mxu0 0
      %940 = vmatprep.subr.bf16.mxu0 0
      %941 = vmatpush2.bf16.msra.mxu0 0
      %942 = vmatprep.subr.bf16.mxu0 0
      %943 = vmatpush2.bf16.msra.mxu0 0
      %944 = vmatprep.subr.bf16.mxu0 0
      %945 = vmatpush2.bf16.msra.mxu0 0
      %946 = vmatprep.subr.bf16.mxu0 0
      %947 = vmatpush2.bf16.msra.mxu0 0
      %948 = vmatprep.subr.bf16.mxu0 0
      %949 = vmatpush2.bf16.msra.mxu0 0
      %950 = vmatprep.subr.bf16.mxu0 0
      %951 = vmatpush2.bf16.msra.mxu0 0
      %952 = vmatprep.subr.bf16.mxu0 0
      %953 = vmatpush2.bf16.msra.mxu0 0
      %954 = vmatprep.mubr.bf16.mxu0 0
      %955 = vmatmul.mubr.bf16.gmra.mxu0 %v917
      %v956 = vpop.f32.mrf.mxu0
      %v957 = vadd.f32 0.0, %v956
      %v958 = vpop.f32.mrf.mxu0
      %v959 = vpop.f32.mrf.mxu0
      %v960 = vpop.f32.mrf.mxu0
      %961 = vdwg.mxu0
      %963 = vrot.lane.b32.xlu0 %v861, 8
      %v964 = vpop.permute.xlu0 %963
      %967 = vrot.lane.b32.xlu0 %v909, 16
      %v968 = vpop.permute.xlu0 %967
      %971 = vrot.lane.b32.xlu0 %v957, 24
      %v972 = vpop.permute.xlu0 %971
      %v974 = vsel %vm523, %v813, %v964
      %vm975 = vcmask 130048
      %v976 = vsel %vm975, %v974, %v968
      %vm977 = vcmask 195584
      %v978 = vsel %vm977, %v976, %v972
      %v979 = vpack.c.bf16 %v978, %v978
      %v980 = vld [vmem:[%s3] sm:$0xf]
      %v981 = vld [vmem:[%s3 + $0x4] sm:$0xf]
      %v982 = vld [vmem:[%s3 + $0x8] sm:$0xf]
      %v983 = vld [vmem:[%s3 + $0xc] sm:$0xf]
      %v984 = vld [vmem:[%s4] sm:$0x1]
      %v986 = vlaneseq
      %v987 = vshrl.u32 %v986, 7
      %v988 = vsub.s32 0, %v987
      %v989 = vrot.slane %v984, %v988
      %v995 = vunpack.c.l.b16 %v980
      %v996 = vunpack.c.l.b16 %v981
      %v997 = vunpack.c.l.b16 %v982
      %v998 = vunpack.c.l.b16 %v983
      %v999 = vpack.c.b16 %v996, %v995
      %v1000 = vpack.c.b16 %v998, %v997
      %v1004 = vsel %vm462, %v979, 0
      %1006 = vmatprep.subr.bf16.mxu0 0
      %1007 = vmatpush1.bf16.msra.mxu0 0
      %1008 = vmatprep.subr.bf16.mxu0 0
      %1009 = vmatpush1.bf16.msra.mxu0 0
      %1010 = vmatprep.subr.bf16.mxu0 0
      %1011 = vmatpush1.bf16.msra.mxu0 0
      %1012 = vmatprep.subr.bf16.mxu0 0
      %1013 = vmatpush1.bf16.msra.mxu0 0
      %1014 = vmatprep.subr.bf16.mxu0 0
      %1015 = vmatpush1.bf16.msra.mxu0 0
      %1016 = vmatprep.subr.bf16.mxu0 0
      %1017 = vmatpush1.bf16.msra.mxu0 0
      %1018 = vmatprep.subr.bf16.mxu0 0
      %1019 = vmatpush1.bf16.msra.mxu0 %v1000
      %1020 = vmatprep.subr.bf16.mxu0 0
      %1021 = vmatpush1.bf16.msra.mxu0 %v999
      %1022 = vmatprep.subr.bf16.mxu0 0
      %1023 = vmatpush2.bf16.msra.mxu0 0
      %1024 = vmatprep.subr.bf16.mxu0 0
      %1025 = vmatpush2.bf16.msra.mxu0 0
      %1026 = vmatprep.subr.bf16.mxu0 0
      %1027 = vmatpush2.bf16.msra.mxu0 0
      %1028 = vmatprep.subr.bf16.mxu0 0
      %1029 = vmatpush2.bf16.msra.mxu0 0
      %1030 = vmatprep.subr.bf16.mxu0 0
      %1031 = vmatpush2.bf16.msra.mxu0 0
      %1032 = vmatprep.subr.bf16.mxu0 0
      %1033 = vmatpush2.bf16.msra.mxu0 0
      %1034 = vmatprep.subr.bf16.mxu0 0
      %1035 = vmatpush2.bf16.msra.mxu0 0
      %1036 = vmatprep.subr.bf16.mxu0 0
      %1037 = vmatpush2.bf16.msra.mxu0 0
      %1038 = vmatprep.mubr.bf16.mxu0 0
      %1039 = vmatmul.mubr.bf16.gmra.mxu0 %v1004
      %v1040 = vpop.f32.mrf.mxu0
      %v1041 = vadd.f32 %v989, %v1040
      %v1042 = vpop.f32.mrf.mxu0
      %v1043 = vpop.f32.mrf.mxu0
      %v1044 = vpop.f32.mrf.mxu0
      %1045 = vdwg.mxu0
      %v1046 = vadd.f32 %v437, %v1041
      %v1047 = vld [vmem:[%s5] sm:$0x1]
      %v1048 = vld [vmem:[%s6] sm:$0x1]
      %v1049 = vsel %vm462, %v1046, 0.0
      %1050 = vadd.xlane.f32.xlu0 %v1049
      %v1051 = vpop.xlane.xlu0 %1050
      %v1052 = vrcp.pop 32.0
      %v1053 = vmul.f32 %v1051, %v1052
      %v1054 = vsub.f32 %v1046, %v1053
      %v1055 = vmul.f32 %v1054, %v1054
      %v1056 = vsel %vm462, %v1055, 0.0
      %1057 = vadd.xlane.f32.xlu0 %v1056
      %v1058 = vpop.xlane.xlu0 %1057
      %v1059 = vmul.f32 %v1058, %v1052
      %v1060 = vadd.f32 %v1059, 1e-05
      %v1061 = vrsqrt.pop %v1060
      %v1062 = vmul.f32 %v1054, %v1061
      %v1064 = vlaneseq
      %v1065 = vshrl.u32 %v1064, 7
      %v1066 = vsub.s32 0, %v1065
      %v1067 = vrot.slane %v1047, %v1066
      %v1069 = vmul.f32 %v1062, %v1067
      %v1071 = vlaneseq
      %v1072 = vshrl.u32 %v1071, 7
      %v1073 = vsub.s32 0, %v1072
      %v1074 = vrot.slane %v1048, %v1073
      %v1076 = vadd.f32 %v1069, %v1074
      %v1077 = vpack.c.bf16 %v1076, %v1076
      %v1078 = vld [vmem:[%s7] sm:$0xf]
      %v1079 = vld [vmem:[%s7 + $0x4] sm:$0xf]
      %v1080 = vld [vmem:[%s7 + $0x8] sm:$0xf]
      %v1081 = vld [vmem:[%s7 + $0xc] sm:$0xf]
      %v1082 = vld [vmem:[%s8] sm:$0x1]
      %v1084 = vlaneseq
      %v1085 = vshrl.u32 %v1084, 7
      %v1086 = vsub.s32 0, %v1085
      %v1087 = vrot.slane %v1082, %v1086
      %v1093 = vunpack.c.l.b16 %v1078
      %v1094 = vunpack.c.l.b16 %v1079
      %v1095 = vunpack.c.l.b16 %v1080
      %v1096 = vunpack.c.l.b16 %v1081
      %v1097 = vpack.c.b16 %v1094, %v1093
      %v1098 = vpack.c.b16 %v1096, %v1095
      %v1102 = vsel %vm462, %v1077, 0
      %1104 = vmatprep.subr.bf16.mxu0 0
      %1105 = vmatpush1.bf16.msra.mxu0 0
      %1106 = vmatprep.subr.bf16.mxu0 0
      %1107 = vmatpush1.bf16.msra.mxu0 0
      %1108 = vmatprep.subr.bf16.mxu0 0
      %1109 = vmatpush1.bf16.msra.mxu0 0
      %1110 = vmatprep.subr.bf16.mxu0 0
      %1111 = vmatpush1.bf16.msra.mxu0 0
      %1112 = vmatprep.subr.bf16.mxu0 0
      %1113 = vmatpush1.bf16.msra.mxu0 0
      %1114 = vmatprep.subr.bf16.mxu0 0
      %1115 = vmatpush1.bf16.msra.mxu0 0
      %1116 = vmatprep.subr.bf16.mxu0 0
      %1117 = vmatpush1.bf16.msra.mxu0 %v1098
      %1118 = vmatprep.subr.bf16.mxu0 0
      %1119 = vmatpush1.bf16.msra.mxu0 %v1097
      %1120 = vmatprep.subr.bf16.mxu0 0
      %1121 = vmatpush2.bf16.msra.mxu0 0
      %1122 = vmatprep.subr.bf16.mxu0 0
      %1123 = vmatpush2.bf16.msra.mxu0 0
      %1124 = vmatprep.subr.bf16.mxu0 0
      %1125 = vmatpush2.bf16.msra.mxu0 0
      %1126 = vmatprep.subr.bf16.mxu0 0
      %1127 = vmatpush2.bf16.msra.mxu0 0
      %1128 = vmatprep.subr.bf16.mxu0 0
      %1129 = vmatpush2.bf16.msra.mxu0 0
      %1130 = vmatprep.subr.bf16.mxu0 0
      %1131 = vmatpush2.bf16.msra.mxu0 0
      %1132 = vmatprep.subr.bf16.mxu0 0
      %1133 = vmatpush2.bf16.msra.mxu0 0
      %1134 = vmatprep.subr.bf16.mxu0 0
      %1135 = vmatpush2.bf16.msra.mxu0 0
      %1136 = vmatprep.mubr.bf16.mxu0 0
      %1137 = vmatmul.mubr.bf16.gmra.mxu0 %v1102
      %v1138 = vpop.f32.mrf.mxu0
      %v1139 = vadd.f32 %v1087, %v1138
      %v1140 = vpop.f32.mrf.mxu0
      %v1141 = vpop.f32.mrf.mxu0
      %v1142 = vpop.f32.mrf.mxu0
      %1143 = vdwg.mxu0
      %v1144 = vmax.f32 %v1139, 0.0
      %v1145 = vpack.c.bf16 %v1144, %v1144
      %v1146 = vld [vmem:[%s9] sm:$0xf]
      %v1147 = vld [vmem:[%s9 + $0x4] sm:$0xf]
      %v1148 = vld [vmem:[%s9 + $0x8] sm:$0xf]
      %v1149 = vld [vmem:[%s9 + $0xc] sm:$0xf]
      %v1150 = vld [vmem:[%s9 + $0x10] sm:$0xf]
      %v1151 = vld [vmem:[%s9 + $0x14] sm:$0xf]
      %v1152 = vld [vmem:[%s9 + $0x18] sm:$0xf]
      %v1153 = vld [vmem:[%s9 + $0x1c] sm:$0xf]
      %v1154 = vld [vmem:[%s10] sm:$0x1]
      %v1156 = vlaneseq
      %v1157 = vshrl.u32 %v1156, 7
      %v1158 = vsub.s32 0, %v1157
      %v1159 = vrot.slane %v1154, %v1158
      %v1169 = vunpack.c.l.b16 %v1146
      %v1170 = vunpack.c.l.b16 %v1147
      %v1171 = vunpack.c.l.b16 %v1148
      %v1172 = vunpack.c.l.b16 %v1149
      %v1173 = vunpack.c.l.b16 %v1150
      %v1174 = vunpack.c.l.b16 %v1151
      %v1175 = vunpack.c.l.b16 %v1152
      %v1176 = vunpack.c.l.b16 %v1153
      %v1177 = vpack.c.b16 %v1170, %v1169
      %v1178 = vpack.c.b16 %v1172, %v1171
      %v1179 = vpack.c.b16 %v1174, %v1173
      %v1180 = vpack.c.b16 %v1176, %v1175
      %vm1185 = vcmask 523264
      %v1187 = vsel %vm1185, %v1145, 0
      %1189 = vmatprep.subr.bf16.mxu0 0
      %1190 = vmatpush1.bf16.msra.mxu0 0
      %1191 = vmatprep.subr.bf16.mxu0 0
      %1192 = vmatpush1.bf16.msra.mxu0 0
      %1193 = vmatprep.subr.bf16.mxu0 0
      %1194 = vmatpush1.bf16.msra.mxu0 0
      %1195 = vmatprep.subr.bf16.mxu0 0
      %1196 = vmatpush1.bf16.msra.mxu0 0
      %1197 = vmatprep.subr.bf16.mxu0 0
      %1198 = vmatpush1.bf16.msra.mxu0 %v1180
      %1199 = vmatprep.subr.bf16.mxu0 0
      %1200 = vmatpush1.bf16.msra.mxu0 %v1179
      %1201 = vmatprep.subr.bf16.mxu0 0
      %1202 = vmatpush1.bf16.msra.mxu0 %v1178
      %1203 = vmatprep.subr.bf16.mxu0 0
      %1204 = vmatpush1.bf16.msra.mxu0 %v1177
      %1205 = vmatprep.subr.bf16.mxu0 0
      %1206 = vmatpush2.bf16.msra.mxu0 0
      %1207 = vmatprep.subr.bf16.mxu0 0
      %1208 = vmatpush2.bf16.msra.mxu0 0
      %1209 = vmatprep.subr.bf16.mxu0 0
      %1210 = vmatpush2.bf16.msra.mxu0 0
      %1211 = vmatprep.subr.bf16.mxu0 0
      %1212 = vmatpush2.bf16.msra.mxu0 0
      %1213 = vmatprep.subr.bf16.mxu0 0
      %1214 = vmatpush2.bf16.msra.mxu0 0
      %1215 = vmatprep.subr.bf16.mxu0 0
      %1216 = vmatpush2.bf16.msra.mxu0 0
      %1217 = vmatprep.subr.bf16.mxu0 0
      %1218 = vmatpush2.bf16.msra.mxu0 0
      %1219 = vmatprep.subr.bf16.mxu0 0
      %1220 = vmatpush2.bf16.msra.mxu0 0
      %1221 = vmatprep.mubr.bf16.mxu0 0
      %1222 = vmatmul.mubr.bf16.gmra.mxu0 %v1187
      %v1223 = vpop.f32.mrf.mxu0
      %v1224 = vadd.f32 %v1159, %v1223
      %v1225 = vpop.f32.mrf.mxu0
      %v1226 = vpop.f32.mrf.mxu0
      %v1227 = vpop.f32.mrf.mxu0
      %1228 = vdwg.mxu0
      %v1229 = vadd.f32 %v1076, %v1224
      %v1230 = vld [vmem:[%s11] sm:$0x1]
      %v1231 = vld [vmem:[%s12] sm:$0x1]
      %v1232 = vsel %vm462, %v1229, 0.0
      %1233 = vadd.xlane.f32.xlu0 %v1232
      %v1234 = vpop.xlane.xlu0 %1233
      %v1235 = vmul.f32 %v1234, %v1052
      %v1236 = vsub.f32 %v1229, %v1235
      %v1237 = vmul.f32 %v1236, %v1236
      %v1238 = vsel %vm462, %v1237, 0.0
      %1239 = vadd.xlane.f32.xlu0 %v1238
      %v1240 = vpop.xlane.xlu0 %1239
      %v1241 = vmul.f32 %v1240, %v1052
      %v1242 = vadd.f32 %v1241, 1e-05
      %v1243 = vrsqrt.pop %v1242
      %v1244 = vmul.f32 %v1236, %v1243
      %v1246 = vlaneseq
      %v1247 = vshrl.u32 %v1246, 7
      %v1248 = vsub.s32 0, %v1247
      %v1249 = vrot.slane %v1230, %v1248
      %v1251 = vmul.f32 %v1244, %v1249
      %v1253 = vlaneseq
      %v1254 = vshrl.u32 %v1253, 7
      %v1255 = vsub.s32 0, %v1254
      %v1256 = vrot.slane %v1231, %v1255
      %v1258 = vadd.f32 %v1251, %v1256
      %1259 = vst.msk [vmem:[%s435] sm:$0xff] %vm462, %v1258
      %p1260 = scmp.lt.s32.totalorder %s24, 1
      %s1261 = scalar_select %p1260, %s24, 1
      %s1262 = smul.addr %s1261, 8
      %s1263 = scalar_lea.vmem %s13, %s1262
      // Predicated region
      $region73: #{transformer_forward.4} parent=71 // pred_check
        %p1264 = pneg %p320
      $region74: #{transformer_forward.4} parent=71 // pred_check_branch
        %1266 = sbr.rel (%p1264) target = $region76
      $region75: #{transformer_forward.4} parent=71 // pred_region
        _
      $region76: #{transformer_forward.4} parent=71 // pred_fallthru
        _
    $region72: #{transformer_forward.4} parent=5 // pred_fallthru
      _
    %p1267 = scmp.le.s32.totalorder 2, %s19
    // Predicated region
    $region77: #{transformer_forward.4} parent=5 // pred_check
      %p1268 = pneg %p1267
    $region78: #{transformer_forward.4} parent=5 // pred_check_branch
      %1270 = sbr.rel (%p1268) target = $region80
    $region79: #{transformer_forward.4} parent=5 // pred_region
      %s1271 = ssub.s32 %s19, 2
      // Predicated region
      $region81: #{transformer_forward.4} parent=79 // pred_check
        %p1272 = pneg %p326
      $region82: #{transformer_forward.4} parent=79 // pred_check_branch
        %1274 = sbr.rel (%p1272) target = $region84
      $region83: #{transformer_forward.4} parent=79 // pred_region
        %p1275 = scmp.lt.s32.totalorder %s25, 1
        %s1276 = scalar_select %p1275, %s25, 1
        %s1277 = smul.addr %s1276, 8
        %s1278 = scalar_lea.vmem %s13, %s1277
      $region84: #{transformer_forward.4} parent=79 // pred_fallthru
        _
    $region80: #{transformer_forward.4} parent=5 // pred_fallthru
      _
  $region6: #{transformer_forward.4} parent=0 // loop_footer
    %s23 = sadd.s32 1, %s19
  $region7: #{transformer_forward.4} parent=0 // loop_footer_branch
    %18 = sbr.rel target = $region3
  $region8: #{transformer_forward.4} parent=0 // loop_exit
    _

// kernel: transformer_forward.5
$region0: #{transformer_forward.5}
  #allocation0 [shape = 'u32[]', space=smem, size = 0x4, offset = 0x4, fixed_abs, tag = 'smem constant byte address 0x4 - core index']
  #allocation1 [shape = 'u32[144,128]{1,0:T(1,128)}', space=vmem, size = 0x12000, scoped, tag = 'internal scratch']
  %s0 = inlined_call_operand.vmem [shape: f32[2,8,32], index: 0, kind: input, shape index: {}]
  %s1 = inlined_call_operand.vmem [shape: bf16[32,96], index: 1, kind: input, shape index: {}]
  %s2 = inlined_call_operand.vmem [shape: f32[1,96], index: 2, kind: input, shape index: {}]
  %s3 = inlined_call_operand.vmem [shape: bf16[32,32], index: 3, kind: input, shape index: {}]
  %s4 = inlined_call_operand.vmem [shape: f32[1,32], index: 4, kind: input, shape index: {}]
  %s5 = inlined_call_operand.vmem [shape: f32[1,32], index: 5, kind: input, shape index: {}]
  %s6 = inlined_call_operand.vmem [shape: f32[1,32], index: 6, kind: input, shape index: {}]
  %s7 = inlined_call_operand.vmem [shape: bf16[32,64], index: 7, kind: input, shape index: {}]
  %s8 = inlined_call_operand.vmem [shape: f32[1,64], index: 8, kind: input, shape index: {}]
  %s9 = inlined_call_operand.vmem [shape: bf16[64,32], index: 9, kind: input, shape index: {}]
  %s10 = inlined_call_operand.vmem [shape: f32[1,32], index: 10, kind: input, shape index: {}]
  %s11 = inlined_call_operand.vmem [shape: f32[1,32], index: 11, kind: input, shape index: {}]
  %s12 = inlined_call_operand.hbm [shape: f32[1,32], index: 12, kind: input, shape index: {}]
  %s13 = inlined_call_operand.vmem [shape: f32[2,8,32], index: 13, kind: output, shape index: {}]
  %s14 = sld [smem:[#allocation0]]
  $region89: #{transformer_forward.5} parent=0
    _
  %s16 = ssub.s32 1, %s14
  %s17 = scalar_select 0, %s16, %s14
  $region1: #{transformer_forward.5} parent=0
    #allocation2 [shape = 'u8[512]{0}', space=vmem, size = 0x400, scoped, tag = 'input window, operand 12, single buffered']
    #allocation3 [shape = 's32[2]{0}', space=sflag, size = 0x8, scoped, tag = 'scoped memory for transformer_forward.5']
    %18 = vsyncpa [#allocation3], 0
    loop: start=0, step=1, limit=4
    $region2: #{transformer_forward.5} parent=1 // loop_pre_header
      _
    $region3: #{transformer_forward.5} parent=1 // loop_header
      %s20 = sphi 0, %s24
      %p21 = scmp.ge.s32.totalorder %s20, 4
      %s30 = sphi 0, %s32
      %s33 = sphi 0, %s30
      %s34 = sphi 0, %s33
      %s50 = sphi 0, %s34
      %s54 = sphi 0, %s54
      %s56 = sphi 0, %s54
      %s57 = sphi 0, %s56
      %s71 = sphi 0, %s57
      %s75 = sphi 0, %s75
      %s77 = sphi 0, %s75
      %s78 = sphi 0, %s77
      %s92 = sphi 0, %s78
      %s96 = sphi 0, %s96
      %s98 = sphi 0, %s96
      %s99 = sphi 0, %s98
      %s113 = sphi 0, %s99
      %s117 = sphi 0, %s117
      %s119 = sphi 0, %s117
      %s120 = sphi 0, %s119
      %s134 = sphi 0, %s120
      %s138 = sphi 0, %s138
      %s140 = sphi 0, %s138
      %s141 = sphi 0, %s140
      %s155 = sphi 0, %s141
      %s159 = sphi 0, %s159
      %s161 = sphi 0, %s159
      %s162 = sphi 0, %s161
      %s176 = sphi 0, %s162
      %s180 = sphi 0, %s180
      %s182 = sphi 0, %s180
      %s183 = sphi 0, %s182
      %s197 = sphi 0, %s183
      %s201 = sphi 0, %s201
      %s203 = sphi 0, %s201
      %s204 = sphi 0, %s203
      %s218 = sphi 0, %s204
      %s222 = sphi 0, %s222
      %s224 = sphi 0, %s222
      %s225 = sphi 0, %s224
      %s239 = sphi 0, %s225
      %s243 = sphi 0, %s243
      %s245 = sphi 0, %s243
      %s246 = sphi 0, %s245
      %s260 = sphi 0, %s246
      %s264 = sphi 0, %s264
      %s266 = sphi 0, %s264
      %s267 = sphi 0, %s266
      %s281 = sphi 0, %s267
      %s285 = sphi 0, %s285
      %s287 = sphi 0, %s285
      %s288 = sphi 0, %s287
      %s302 = sphi 0, %s288
      %s308 = sphi 0, %s310
      %s311 = sphi 0, %s308
      %s312 = sphi 0, %s311
      %s328 = sphi 0, %s312
    $region4: #{transformer_forward.5} parent=1 // loop_header_branch
      %23 = sbr.rel (%p21) target = $region8
    $region5: #{transformer_forward.5} parent=1 // loop_body
      %s25 = ssub.s32 %s20, 1
      %s26 = ssub.s32 %s20, 2
      %s27 = sadd.s32 %s20, 1
      %s28 = ssub.s32 %s20, %s27
      %p29 = scmp.eq.s32.totalorder %s28, 0
      %s31 = sadd.s32 %s30, 1
      %s32 = scalar_select %p29, %s30, %s31
      %p35 = pneg %p29
      %p36 = scmp.eq.s32.totalorder %s20, 1
      %p37 = por %p35, %p36
      %p38 = scmp.ne.s32.totalorder %s30, %s33
      %p39 = scmp.eq.s32.totalorder %s20, 0
      %p40 = por %p38, %p39
      %p41 = scmp.ne.s32.totalorder %s30, %s33
      %p42 = scmp.eq.s32.totalorder %s25, 1
      %p43 = por %p41, %p42
      %p44 = scmp.ne.s32.totalorder %s33, %s34
      %p45 = scmp.eq.s32.totalorder %s25, 0
      %p46 = por %p44, %p45
      %p47 = scmp.ne.s32.totalorder %s33, %s34
      %p48 = scmp.eq.s32.totalorder %s26, 1
      %p49 = por %p47, %p48
      %p51 = scmp.ne.s32.totalorder %s34, %s50
      %p52 = scmp.eq.s32.totalorder %s26, 0
      %p53 = por %p51, %p52
      %s55 = sadd.s32 %s54, 1
      %p58 = scmp.eq.s32.totalorder %s20, 1
      %p59 = scmp.ne.s32.totalorder %s54, %s56
      %p60 = scmp.eq.s32.totalorder %s20, 0
      %p61 = por %p59, %p60
      %p62 = scmp.ne.s32.totalorder %s54, %s56
      %p63 = scmp.eq.s32.totalorder %s25, 1
      %p64 = por %p62, %p63
      %p65 = scmp.ne.s32.totalorder %s56, %s57
      %p66 = scmp.eq.s32.totalorder %s25, 0
      %p67 = por %p65, %p66
      %p68 = scmp.ne.s32.totalorder %s56, %s57
      %p69 = scmp.eq.s32.totalorder %s26, 1
      %p70 = por %p68, %p69
      %p72 = scmp.ne.s32.totalorder %s57, %s71
      %p73 = scmp.eq.s32.totalorder %s26, 0
      %p74 = por %p72, %p73
      %s76 = sadd.s32 %s75, 1
      %p79 = scmp.eq.s32.totalorder %s20, 1
      %p80 = scmp.ne.s32.totalorder %s75, %s77
      %p81 = scmp.eq.s32.totalorder %s20, 0
      %p82 = por %p80, %p81
      %p83 = scmp.ne.s32.totalorder %s75, %s77
      %p84 = scmp.eq.s32.totalorder %s25, 1
      %p85 = por %p83, %p84
      %p86 = scmp.ne.s32.totalorder %s77, %s78
      %p87 = scmp.eq.s32.totalorder %s25, 0
      %p88 = por %p86, %p87
      %p89 = scmp.ne.s32.totalorder %s77, %s78
      %p90 = scmp.eq.s32.totalorder %s26, 1
      %p91 = por %p89, %p90
      %p93 = scmp.ne.s32.totalorder %s78, %s92
      %p94 = scmp.eq.s32.totalorder %s26, 0
      %p95 = por %p93, %p94
      %s97 = sadd.s32 %s96, 1
      %p100 = scmp.eq.s32.totalorder %s20, 1
      %p101 = scmp.ne.s32.totalorder %s96, %s98
      %p102 = scmp.eq.s32.totalorder %s20, 0
      %p103 = por %p101, %p102
      %p104 = scmp.ne.s32.totalorder %s96, %s98
      %p105 = scmp.eq.s32.totalorder %s25, 1
      %p106 = por %p104, %p105
      %p107 = scmp.ne.s32.totalorder %s98, %s99
      %p108 = scmp.eq.s32.totalorder %s25, 0
      %p109 = por %p107, %p108
      %p110 = scmp.ne.s32.totalorder %s98, %s99
      %p111 = scmp.eq.s32.totalorder %s26, 1
      %p112 = por %p110, %p111
      %p114 = scmp.ne.s32.totalorder %s99, %s113
      %p115 = scmp.eq.s32.totalorder %s26, 0
      %p116 = por %p114, %p115
      %s118 = sadd.s32 %s117, 1
      %p121 = scmp.eq.s32.totalorder %s20, 1
      %p122 = scmp.ne.s32.totalorder %s117, %s119
      %p123 = scmp.eq.s32.totalorder %s20, 0
      %p124 = por %p122, %p123
      %p125 = scmp.ne.s32.totalorder %s117, %s119
      %p126 = scmp.eq.s32.totalorder %s25, 1
      %p127 = por %p125, %p126
      %p128 = scmp.ne.s32.totalorder %s119, %s120
      %p129 = scmp.eq.s32.totalorder %s25, 0
      %p130 = por %p128, %p129
      %p131 = scmp.ne.s32.totalorder %s119, %s120
      %p132 = scmp.eq.s32.totalorder %s26, 1
      %p133 = por %p131, %p132
      %p135 = scmp.ne.s32.totalorder %s120, %s134
      %p136 = scmp.eq.s32.totalorder %s26, 0
      %p137 = por %p135, %p136
      %s139 = sadd.s32 %s138, 1
      %p142 = scmp.eq.s32.totalorder %s20, 1
      %p143 = scmp.ne.s32.totalorder %s138, %s140
      %p144 = scmp.eq.s32.totalorder %s20, 0
      %p145 = por %p143, %p144
      %p146 = scmp.ne.s32.totalorder %s138, %s140
      %p147 = scmp.eq.s32.totalorder %s25, 1
      %p148 = por %p146, %p147
      %p149 = scmp.ne.s32.totalorder %s140, %s141
      %p150 = scmp.eq.s32.totalorder %s25, 0
      %p151 = por %p149, %p150
      %p152 = scmp.ne.s32.totalorder %s140, %s141
      %p153 = scmp.eq.s32.totalorder %s26, 1
      %p154 = por %p152, %p153
      %p156 = scmp.ne.s32.totalorder %s141, %s155
      %p157 = scmp.eq.s32.totalorder %s26, 0
      %p158 = por %p156, %p157
      %s160 = sadd.s32 %s159, 1
      %p163 = scmp.eq.s32.totalorder %s20, 1
      %p164 = scmp.ne.s32.totalorder %s159, %s161
      %p165 = scmp.eq.s32.totalorder %s20, 0
      %p166 = por %p164, %p165
      %p167 = scmp.ne.s32.totalorder %s159, %s161
      %p168 = scmp.eq.s32.totalorder %s25, 1
      %p169 = por %p167, %p168
      %p170 = scmp.ne.s32.totalorder %s161, %s162
      %p171 = scmp.eq.s32.totalorder %s25, 0
      %p172 = por %p170, %p171
      %p173 = scmp.ne.s32.totalorder %s161, %s162
      %p174 = scmp.eq.s32.totalorder %s26, 1
      %p175 = por %p173, %p174
      %p177 = scmp.ne.s32.totalorder %s162, %s176
      %p178 = scmp.eq.s32.totalorder %s26, 0
      %p179 = por %p177, %p178
      %s181 = sadd.s32 %s180, 1
      %p184 = scmp.eq.s32.totalorder %s20, 1
      %p185 = scmp.ne.s32.totalorder %s180, %s182
      %p186 = scmp.eq.s32.totalorder %s20, 0
      %p187 = por %p185, %p186
      %p188 = scmp.ne.s32.totalorder %s180, %s182
      %p189 = scmp.eq.s32.totalorder %s25, 1
      %p190 = por %p188, %p189
      %p191 = scmp.ne.s32.totalorder %s182, %s183
      %p192 = scmp.eq.s32.totalorder %s25, 0
      %p193 = por %p191, %p192
      %p194 = scmp.ne.s32.totalorder %s182, %s183
      %p195 = scmp.eq.s32.totalorder %s26, 1
      %p196 = por %p194, %p195
      %p198 = scmp.ne.s32.totalorder %s183, %s197
      %p199 = scmp.eq.s32.totalorder %s26, 0
      %p200 = por %p198, %p199
      %s202 = sadd.s32 %s201, 1
      %p205 = scmp.eq.s32.totalorder %s20, 1
      %p206 = scmp.ne.s32.totalorder %s201, %s203
      %p207 = scmp.eq.s32.totalorder %s20, 0
      %p208 = por %p206, %p207
      %p209 = scmp.ne.s32.totalorder %s201, %s203
      %p210 = scmp.eq.s32.totalorder %s25, 1
      %p211 = por %p209, %p210
      %p212 = scmp.ne.s32.totalorder %s203, %s204
      %p213 = scmp.eq.s32.totalorder %s25, 0
      %p214 = por %p212, %p213
      %p215 = scmp.ne.s32.totalorder %s203, %s204
      %p216 = scmp.eq.s32.totalorder %s26, 1
      %p217 = por %p215, %p216
      %p219 = scmp.ne.s32.totalorder %s204, %s218
      %p220 = scmp.eq.s32.totalorder %s26, 0
      %p221 = por %p219, %p220
      %s223 = sadd.s32 %s222, 1
      %p226 = scmp.eq.s32.totalorder %s20, 1
      %p227 = scmp.ne.s32.totalorder %s222, %s224
      %p228 = scmp.eq.s32.totalorder %s20, 0
      %p229 = por %p227, %p228
      %p230 = scmp.ne.s32.totalorder %s222, %s224
      %p231 = scmp.eq.s32.totalorder %s25, 1
      %p232 = por %p230, %p231
      %p233 = scmp.ne.s32.totalorder %s224, %s225
      %p234 = scmp.eq.s32.totalorder %s25, 0
      %p235 = por %p233, %p234
      %p236 = scmp.ne.s32.totalorder %s224, %s225
      %p237 = scmp.eq.s32.totalorder %s26, 1
      %p238 = por %p236, %p237
      %p240 = scmp.ne.s32.totalorder %s225, %s239
      %p241 = scmp.eq.s32.totalorder %s26, 0
      %p242 = por %p240, %p241
      %s244 = sadd.s32 %s243, 1
      %p247 = scmp.eq.s32.totalorder %s20, 1
      %p248 = scmp.ne.s32.totalorder %s243, %s245
      %p249 = scmp.eq.s32.totalorder %s20, 0
      %p250 = por %p248, %p249
      %p251 = scmp.ne.s32.totalorder %s243, %s245
      %p252 = scmp.eq.s32.totalorder %s25, 1
      %p253 = por %p251, %p252
      %p254 = scmp.ne.s32.totalorder %s245, %s246
      %p255 = scmp.eq.s32.totalorder %s25, 0
      %p256 = por %p254, %p255
      %p257 = scmp.ne.s32.totalorder %s245, %s246
      %p258 = scmp.eq.s32.totalorder %s26, 1
      %p259 = por %p257, %p258
      %p261 = scmp.ne.s32.totalorder %s246, %s260
      %p262 = scmp.eq.s32.totalorder %s26, 0
      %p263 = por %p261, %p262
      %s265 = sadd.s32 %s264, 1
      %p268 = scmp.eq.s32.totalorder %s20, 1
      %p269 = scmp.ne.s32.totalorder %s264, %s266
      %p270 = scmp.eq.s32.totalorder %s20, 0
      %p271 = por %p269, %p270
      %p272 = scmp.ne.s32.totalorder %s264, %s266
      %p273 = scmp.eq.s32.totalorder %s25, 1
      %p274 = por %p272, %p273
      %p275 = scmp.ne.s32.totalorder %s266, %s267
      %p276 = scmp.eq.s32.totalorder %s25, 0
      %p277 = por %p275, %p276
      %p278 = scmp.ne.s32.totalorder %s266, %s267
      %p279 = scmp.eq.s32.totalorder %s26, 1
      %p280 = por %p278, %p279
      %p282 = scmp.ne.s32.totalorder %s267, %s281
      %p283 = scmp.eq.s32.totalorder %s26, 0
      %p284 = por %p282, %p283
      %s286 = sadd.s32 %s285, 1
      %p289 = scmp.eq.s32.totalorder %s20, 1
      %p290 = scmp.ne.s32.totalorder %s285, %s287
      %p291 = scmp.eq.s32.totalorder %s20, 0
      %p292 = por %p290, %p291
      %p293 = scmp.ne.s32.totalorder %s285, %s287
      %p294 = scmp.eq.s32.totalorder %s25, 1
      %p295 = por %p293, %p294
      %p296 = scmp.ne.s32.totalorder %s287, %s288
      %p297 = scmp.eq.s32.totalorder %s25, 0
      %p298 = por %p296, %p297
      %p299 = scmp.ne.s32.totalorder %s287, %s288
      %p300 = scmp.eq.s32.totalorder %s26, 1
      %p301 = por %p299, %p300
      %p303 = scmp.ne.s32.totalorder %s288, %s302
      %p304 = scmp.eq.s32.totalorder %s26, 0
      %p305 = por %p303, %p304
      %s306 = ssub.s32 %s20, %s27
      %p307 = scmp.eq.s32.totalorder %s306, 0
      %s309 = sadd.s32 %s308, 1
      %s310 = scalar_select %p307, %s308, %s309
      %p313 = pneg %p307
      %p314 = scmp.eq.s32.totalorder %s20, 1
      %p315 = por %p313, %p314
      %p316 = scmp.ne.s32.totalorder %s308, %s311
      %p317 = scmp.eq.s32.totalorder %s20, 0
      %p318 = por %p316, %p317
      %p319 = scmp.ne.s32.totalorder %s308, %s311
      %p320 = scmp.eq.s32.totalorder %s25, 1
      %p321 = por %p319, %p320
      %p322 = scmp.ne.s32.totalorder %s311, %s312
      %p323 = scmp.eq.s32.totalorder %s25, 0
      %p324 = por %p322, %p323
      %p325 = scmp.ne.s32.totalorder %s311, %s312
      %p326 = scmp.eq.s32.totalorder %s26, 1
      %p327 = por %p325, %p326
      %p329 = scmp.ne.s32.totalorder %s312, %s328
      %p330 = scmp.eq.s32.totalorder %s26, 0
      %p331 = por %p329, %p330
      %p332 = scmp.le.s32.totalorder 1, %s20
      %p333 = scmp.lt.s32.totalorder %s20, 3
      %p334 = pnand %p332, %p333
      %p335 = pneg %p334
      // Predicated region
      $region9: #{transformer_forward.5} parent=5 // pred_check
        _
      $region10: #{transformer_forward.5} parent=5 // pred_check_branch
        %337 = sbr.rel (%p334) target = $region12
      $region11: #{transformer_forward.5} parent=5 // pred_region
        %s338 = ssub.s32 %s20, 1
        // Predicated region
        $region13: #{transformer_forward.5} parent=11 // pred_check
          %p339 = pneg %p67
        $region14: #{transformer_forward.5} parent=11 // pred_check_branch
          %341 = sbr.rel (%p339) target = $region16
        $region15: #{transformer_forward.5} parent=11 // pred_region
          _
        $region16: #{transformer_forward.5} parent=11 // pred_fallthru
          _
        // Predicated region
        $region17: #{transformer_forward.5} parent=11 // pred_check
          %p342 = pneg %p88
        $region18: #{transformer_forward.5} parent=11 // pred_check_branch
          %344 = sbr.rel (%p342) target = $region20
        $region19: #{transformer_forward.5} parent=11 // pred_region
          _
        $region20: #{transformer_forward.5} parent=11 // pred_fallthru
          _
        // Predicated region
        $region21: #{transformer_forward.5} parent=11 // pred_check
          %p345 = pneg %p109
        $region22: #{transformer_forward.5} parent=11 // pred_check_branch
          %347 = sbr.rel (%p345) target = $region24
        $region23: #{transformer_forward.5} parent=11 // pred_region
          _
        $region24: #{transformer_forward.5} parent=11 // pred_fallthru
          _
        // Predicated region
        $region25: #{transformer_forward.5} parent=11 // pred_check
          %p348 = pneg %p130
        $region26: #{transformer_forward.5} parent=11 // pred_check_branch
          %350 = sbr.rel (%p348) target = $region28
        $region27: #{transformer_forward.5} parent=11 // pred_region
          _
        $region28: #{transformer_forward.5} parent=11 // pred_fallthru
          _
        // Predicated region
        $region29: #{transformer_forward.5} parent=11 // pred_check
          %p351 = pneg %p151
        $region30: #{transformer_forward.5} parent=11 // pred_check_branch
          %353 = sbr.rel (%p351) target = $region32
        $region31: #{transformer_forward.5} parent=11 // pred_region
          _
        $region32: #{transformer_forward.5} parent=11 // pred_fallthru
          _
        // Predicated region
        $region33: #{transformer_forward.5} parent=11 // pred_check
          %p354 = pneg %p172
        $region34: #{transformer_forward.5} parent=11 // pred_check_branch
          %356 = sbr.rel (%p354) target = $region36
        $region35: #{transformer_forward.5} parent=11 // pred_region
          _
        $region36: #{transformer_forward.5} parent=11 // pred_fallthru
          _
        // Predicated region
        $region37: #{transformer_forward.5} parent=11 // pred_check
          %p357 = pneg %p193
        $region38: #{transformer_forward.5} parent=11 // pred_check_branch
          %359 = sbr.rel (%p357) target = $region40
        $region39: #{transformer_forward.5} parent=11 // pred_region
          _
        $region40: #{transformer_forward.5} parent=11 // pred_fallthru
          _
        // Predicated region
        $region41: #{transformer_forward.5} parent=11 // pred_check
          %p360 = pneg %p214
        $region42: #{transformer_forward.5} parent=11 // pred_check_branch
          %362 = sbr.rel (%p360) target = $region44
        $region43: #{transformer_forward.5} parent=11 // pred_region
          _
        $region44: #{transformer_forward.5} parent=11 // pred_fallthru
          _
        // Predicated region
        $region45: #{transformer_forward.5} parent=11 // pred_check
          %p363 = pneg %p235
        $region46: #{transformer_forward.5} parent=11 // pred_check_branch
          %365 = sbr.rel (%p363) target = $region48
        $region47: #{transformer_forward.5} parent=11 // pred_region
          _
        $region48: #{transformer_forward.5} parent=11 // pred_fallthru
          _
        // Predicated region
        $region49: #{transformer_forward.5} parent=11 // pred_check
          %p366 = pneg %p256
        $region50: #{transformer_forward.5} parent=11 // pred_check_branch
          %368 = sbr.rel (%p366) target = $region52
        $region51: #{transformer_forward.5} parent=11 // pred_region
          _
        $region52: #{transformer_forward.5} parent=11 // pred_fallthru
          _
        // Predicated region
        $region53: #{transformer_forward.5} parent=11 // pred_check
          %p369 = pneg %p277
        $region54: #{transformer_forward.5} parent=11 // pred_check_branch
          %371 = sbr.rel (%p369) target = $region56
        $region55: #{transformer_forward.5} parent=11 // pred_region
          _
        $region56: #{transformer_forward.5} parent=11 // pred_fallthru
          _
        // Predicated region
        $region57: #{transformer_forward.5} parent=11 // pred_check
          %p372 = pneg %p298
        $region58: #{transformer_forward.5} parent=11 // pred_check_branch
          %374 = sbr.rel (%p372) target = $region60
        $region59: #{transformer_forward.5} parent=11 // pred_region
          %s376 = ssub.s32 16, 16
          %377 = vsyncadd [#allocation3], %s376
          %s379 = sshll.u32 [#allocation2], 4
          %s380 = int_to_ptr.vmem [resolvable:$true] %s379
          %382 = dma.hbm_to_vmem [thread:$0]  %s12, 16, %s380, [#allocation3]
        $region60: #{transformer_forward.5} parent=11 // pred_fallthru
          _
      $region12: #{transformer_forward.5} parent=5 // pred_fallthru
        _
      %p383 = scmp.lt.s32.totalorder %s20, 2
      // Predicated region
      $region61: #{transformer_forward.5} parent=5 // pred_check
        %p384 = pneg %p383
      $region62: #{transformer_forward.5} parent=5 // pred_check_branch
        %386 = sbr.rel (%p384) target = $region64
      $region63: #{transformer_forward.5} parent=5 // pred_region
        // Predicated region
        $region65: #{transformer_forward.5} parent=63 // pred_check
          %p387 = pneg %p40
        $region66: #{transformer_forward.5} parent=63 // pred_check_branch
          %389 = sbr.rel (%p387) target = $region68
        $region67: #{transformer_forward.5} parent=63 // pred_region
          %p390 = scmp.lt.s32.totalorder %s20, 1
          %s391 = scalar_select %p390, %s20, 1
          %s392 = smul.addr %s391, 8
          %s393 = scalar_lea.vmem %s0, %s392
        $region68: #{transformer_forward.5} parent=63 // pred_fallthru
          _
      $region64: #{transformer_forward.5} parent=5 // pred_fallthru
        _
      %p394 = scmp.le.s32.totalorder 1, %s20
      %p395 = scmp.lt.s32.totalorder %s20, 3
      %p396 = pnand %p394, %p395
      %p397 = pneg %p396
      // Predicated region
      $region69: #{transformer_forward.5} parent=5 // pred_check
        _
      $region70: #{transformer_forward.5} parent=5 // pred_check_branch
        %399 = sbr.rel (%p396) target = $region72
      $region71: #{transformer_forward.5} parent=5 // pred_region
        %s400 = ssub.s32 %s20, 1
        // Predicated region
        $region73: #{transformer_forward.5} parent=71 // pred_check
          %p401 = pneg %p298
        $region74: #{transformer_forward.5} parent=71 // pred_check_branch
          %403 = sbr.rel (%p401) target = $region76
        $region75: #{transformer_forward.5} parent=71 // pred_region
          %404 = dma.done [#allocation3], 16
        $region76: #{transformer_forward.5} parent=71 // pred_fallthru
          _
        %p405 = scmp.lt.s32.totalorder %s25, 1
        %s406 = scalar_select %p405, %s25, 1
        %s407 = smul.addr %s406, 8
        %s408 = scalar_lea.vmem %s0, %s407
        %p409 = pneg %p46
        %p410 = pneg %p43
        %p411 = pneg %p67
        %p412 = pneg %p64
        %p413 = pneg %p88
        %p414 = pneg %p85
        %p415 = pneg %p109
        %p416 = pneg %p106
        %p417 = pneg %p130
        %p418 = pneg %p127
        %p419 = pneg %p151
        %p420 = pneg %p148
        %p421 = pneg %p172
        %p422 = pneg %p169
        %p423 = pneg %p193
        %p424 = pneg %p190
        %p425 = pneg %p214
        %p426 = pneg %p211
        %p427 = pneg %p235
        %p428 = pneg %p232
        %p429 = pneg %p256
        %p430 = pneg %p253
        %p431 = pneg %p277
        %p432 = pneg %p274
        %p433 = pneg %p298
        %p434 = pneg %p295
        %p435 = pneg %p324
        %p436 = pneg %p321
        %p437 = scmp.lt.s32.totalorder %s25, 1
        %s438 = scalar_select %p437, %s25, 1
        %s439 = smul.addr %s438, 8
        %s440 = scalar_lea.vmem %s13, %s439
        %p441 = scmp.lt.s32.totalorder %s25, 1
        %s442 = scalar_select %p441, %s25, 1
        %s443 = smul.addr %s442, 8
        %s444 = scalar_lea.vmem %s0, %s443
        %p445 = scmp.lt.s32.totalorder %s25, 1
        %s446 = scalar_select %p445, %s25, 1
        %s447 = smul.addr %s446, 8
        %s448 = scalar_lea.vmem %s13, %s447
        %v450 = vld [vmem:[%s444] sm:$0xff]
        %v451 = vpack.c.bf16 %v450, %v450
        %v452 = vld [vmem:[%s1] sm:$0xf]
        %v453 = vld [vmem:[%s1 + $0x4] sm:$0xf]
        %v454 = vld [vmem:[%s1 + $0x8] sm:$0xf]
        %v455 = vld [vmem:[%s1 + $0xc] sm:$0xf]
        %v456 = vld [vmem:[%s2] sm:$0x1]
        %v458 = vlaneseq
        %v459 = vshrl.u32 %v458, 7
        %v460 = vsub.s32 0, %v459
        %v461 = vrot.slane %v456, %v460
        %v467 = vunpack.c.l.b16 %v452
        %v468 = vunpack.c.l.b16 %v453
        %v469 = vunpack.c.l.b16 %v454
        %v470 = vunpack.c.l.b16 %v455
        %v471 = vpack.c.b16 %v468, %v467
        %v472 = vpack.c.b16 %v470, %v469
        %vm475 = vcmask 261120
        %v477 = vsel %vm475, %v451, 0
        %479 = vmatprep.subr.bf16.mxu0 0
        %480 = vmatpush1.bf16.msra.mxu0 0
        %481 = vmatprep.subr.bf16.mxu0 0
        %482 = vmatpush1.bf16.msra.mxu0 0
        %483 = vmatprep.subr.bf16.mxu0 0
        %484 = vmatpush1.bf16.msra.mxu0 0
        %485 = vmatprep.subr.bf16.mxu0 0
        %486 = vmatpush1.bf16.msra.mxu0 0
        %487 = vmatprep.subr.bf16.mxu0 0
        %488 = vmatpush1.bf16.msra.mxu0 0
        %489 = vmatprep.subr.bf16.mxu0 0
        %490 = vmatpush1.bf16.msra.mxu0 0
        %491 = vmatprep.subr.bf16.mxu0 0
        %492 = vmatpush1.bf16.msra.mxu0 %v472
        %493 = vmatprep.subr.bf16.mxu0 0
        %494 = vmatpush1.bf16.msra.mxu0 %v471
        %495 = vmatprep.subr.bf16.mxu0 0
        %496 = vmatpush2.bf16.msra.mxu0 0
        %497 = vmatprep.subr.bf16.mxu0 0
        %498 = vmatpush2.bf16.msra.mxu0 0
        %499 = vmatprep.subr.bf16.mxu0 0
        %500 = vmatpush2.bf16.msra.mxu0 0
        %501 = vmatprep.subr.bf16.mxu0 0
        %502 = vmatpush2.bf16.msra.mxu0 0
        %503 = vmatprep.subr.bf16.mxu0 0
        %504 = vmatpush2.bf16.msra.mxu0 0
        %505 = vmatprep.subr.bf16.mxu0 0
        %506 = vmatpush2.bf16.msra.mxu0 0
        %507 = vmatprep.subr.bf16.mxu0 0
        %508 = vmatpush2.bf16.msra.mxu0 0
        %509 = vmatprep.subr.bf16.mxu0 0
        %510 = vmatpush2.bf16.msra.mxu0 0
        %511 = vmatprep.mubr.bf16.mxu0 0
        %512 = vmatmul.mubr.bf16.gmra.mxu0 %v477
        %v513 = vpop.f32.mrf.mxu0
        %v514 = vadd.f32 %v461, %v513
        %v515 = vpop.f32.mrf.mxu0
        %v516 = vpop.f32.mrf.mxu0
        %v517 = vpop.f32.mrf.mxu0
        %518 = vdwg.mxu0
        %520 = vrot.lane.b32.xlu0 %v514, 120
        %v521 = vpop.permute.xlu0 %520
        %523 = vrot.lane.b32.xlu0 %v514, 112
        %v524 = vpop.permute.xlu0 %523
        %526 = vrot.lane.b32.xlu0 %v514, 104
        %v527 = vpop.permute.xlu0 %526
        %v529 = vpack.c.bf16 %v514, %v514
        %v530 = vpack.c.bf16 %v521, %v521
        %v531 = vpack.c.bf16 %v524, %v524
        %v532 = vpack.c.bf16 %v527, %v527
        %534 = vrot.lane.b32.xlu0 %v529, 96
        %v535 = vpop.permute.xlu0 %534
        %vm536 = vcmask 64512
        %v538 = vsel %vm536, %v529, 0
        %v541 = vsel %vm536, %v535, 0
        %543 = vmatprep.subr.bf16.mxu0 0
        %544 = vmatpush1.bf16.xpose.msra.mxu0 0
        %545 = vmatprep.subr.bf16.mxu0 0
        %546 = vmatpush1.bf16.xpose.msra.mxu0 0
        %547 = vmatprep.subr.bf16.mxu0 0
        %548 = vmatpush1.bf16.xpose.msra.mxu0 0
        %549 = vmatprep.subr.bf16.mxu0 0
        %550 = vmatpush1.bf16.xpose.msra.mxu0 0
        %551 = vmatprep.subr.bf16.mxu0 0
        %552 = vmatpush1.bf16.xpose.msra.mxu0 0
        %553 = vmatprep.subr.bf16.mxu0 0
        %554 = vmatpush1.bf16.xpose.msra.mxu0 0
        %555 = vmatprep.subr.bf16.mxu0 0
        %556 = vmatpush1.bf16.xpose.msra.mxu0 0
        %557 = vmatprep.subr.bf16.mxu0 0
        %558 = vmatpush1.bf16.xpose.msra.mxu0 %v541
        %559 = vmatprep.subr.bf16.mxu0 0
        %560 = vmatpush2.bf16.xpose.msra.mxu0 0
        %561 = vmatprep.subr.bf16.mxu0 0
        %562 = vmatpush2.bf16.xpose.msra.mxu0 0
        %563 = vmatprep.subr.bf16.mxu0 0
        %564 = vmatpush2.bf16.xpose.msra.mxu0 0
        %565 = vmatprep.subr.bf16.mxu0 0
        %566 = vmatpush2.bf16.xpose.msra.mxu0 0
        %567 = vmatprep.subr.bf16.mxu0 0
        %568 = vmatpush2.bf16.xpose.msra.mxu0 0
        %569 = vmatprep.subr.bf16.mxu0 0
        %570 = vmatpush2.bf16.xpose.msra.mxu0 0
        %571 = vmatprep.subr.bf16.mxu0 0
        %572 = vmatpush2.bf16.xpose.msra.mxu0 0
        %573 = vmatprep.subr.bf16.mxu0 0
        %574 = vmatpush2.bf16.xpose.msra.mxu0 0
        %575 = vmatprep.mubr.bf16.mxu0 0
        %576 = vmatmul.mubr.bf16.gmra.mxu0 %v538
        %v577 = vpop.f32.mrf.mxu0
        %v578 = vadd.f32 0.0, %v577
        %v579 = vpop.f32.mrf.mxu0
        %v580 = vpop.f32.mrf.mxu0
        %v581 = vpop.f32.mrf.mxu0
        %582 = vdwg.mxu0
        %584 = vrot.lane.b32.xlu0 %v530, 96
        %v585 = vpop.permute.xlu0 %584
        %v587 = vsel %vm536, %v530, 0
        %v590 = vsel %vm536, %v585, 0
        %592 = vmatprep.subr.bf16.mxu0 0
        %593 = vmatpush1.bf16.xpose.msra.mxu0 0
        %594 = vmatprep.subr.bf16.mxu0 0
        %595 = vmatpush1.bf16.xpose.msra.mxu0 0
        %596 = vmatprep.subr.bf16.mxu0 0
        %597 = vmatpush1.bf16.xpose.msra.mxu0 0
        %598 = vmatprep.subr.bf16.mxu0 0
        %599 = vmatpush1.bf16.xpose.msra.mxu0 0
        %600 = vmatprep.subr.bf16.mxu0 0
        %601 = vmatpush1.bf16.xpose.msra.mxu0 0
        %602 = vmatprep.subr.bf16.mxu0 0
        %603 = vmatpush1.bf16.xpose.msra.mxu0 0
        %604 = vmatprep.subr.bf16.mxu0 0
        %605 = vmatpush1.bf16.xpose.msra.mxu0 0
        %606 = vmatprep.subr.bf16.mxu0 0
        %607 = vmatpush1.bf16.xpose.msra.mxu0 %v590
        %608 = vmatprep.subr.bf16.mxu0 0
        %609 = vmatpush2.bf16.xpose.msra.mxu0 0
        %610 = vmatprep.subr.bf16.mxu0 0
        %611 = vmatpush2.bf16.xpose.msra.mxu0 0
        %612 = vmatprep.subr.bf16.mxu0 0
        %613 = vmatpush2.bf16.xpose.msra.mxu0 0
        %614 = vmatprep.subr.bf16.mxu0 0
        %615 = vmatpush2.bf16.xpose.msra.mxu0 0
        %616 = vmatprep.subr.bf16.mxu0 0
        %617 = vmatpush2.bf16.xpose.msra.mxu0 0
        %618 = vmatprep.subr.bf16.mxu0 0
        %619 = vmatpush2.bf16.xpose.msra.mxu0 0
        %620 = vmatprep.subr.bf16.mxu0 0
        %621 = vmatpush2.bf16.xpose.msra.mxu0 0
        %622 = vmatprep.subr.bf16.mxu0 0
        %623 = vmatpush2.bf16.xpose.msra.mxu0 0
        %624 = vmatprep.mubr.bf16.mxu0 0
        %625 = vmatmul.mubr.bf16.gmra.mxu0 %v587
        %v626 = vpop.f32.mrf.mxu0
        %v627 = vadd.f32 0.0, %v626
        %v628 = vpop.f32.mrf.mxu0
        %v629 = vpop.f32.mrf.mxu0
        %v630 = vpop.f32.mrf.mxu0
        %631 = vdwg.mxu0
        %633 = vrot.lane.b32.xlu0 %v531, 96
        %v634 = vpop.permute.xlu0 %633
        %v636 = vsel %vm536, %v531, 0
        %v639 = vsel %vm536, %v634, 0
        %641 = vmatprep.subr.bf16.mxu0 0
        %642 = vmatpush1.bf16.xpose.msra.mxu0 0
        %643 = vmatprep.subr.bf16.mxu0 0
        %644 = vmatpush1.bf16.xpose.msra.mxu0 0
        %645 = vmatprep.subr.bf16.mxu0 0
        %646 = vmatpush1.bf16.xpose.msra.mxu0 0
        %647 = vmatprep.subr.bf16.mxu0 0
        %648 = vmatpush1.bf16.xpose.msra.mxu0 0
        %649 = vmatprep.subr.bf16.mxu0 0
        %650 = vmatpush1.bf16.xpose.msra.mxu0 0
        %651 = vmatprep.subr.bf16.mxu0 0
        %652 = vmatpush1.bf16.xpose.msra.mxu0 0
        %653 = vmatprep.subr.bf16.mxu0 0
        %654 = vmatpush1.bf16.xpose.msra.mxu0 0
        %655 = vmatprep.subr.bf16.mxu0 0
        %656 = vmatpush1.bf16.xpose.msra.mxu0 %v639
        %657 = vmatprep.subr.bf16.mxu0 0
        %658 = vmatpush2.bf16.xpose.msra.mxu0 0
        %659 = vmatprep.subr.bf16.mxu0 0
        %660 = vmatpush2.bf16.xpose.msra.mxu0 0
        %661 = vmatprep.subr.bf16.mxu0 0
        %662 = vmatpush2.bf16.xpose.msra.mxu0 0
        %663 = vmatprep.subr.bf16.mxu0 0
        %664 = vmatpush2.bf16.xpose.msra.mxu0 0
        %665 = vmatprep.subr.bf16.mxu0 0
        %666 = vmatpush2.bf16.xpose.msra.mxu0 0
        %667 = vmatprep.subr.bf16.mxu0 0
        %668 = vmatpush2.bf16.xpose.msra.mxu0 0
        %669 = vmatprep.subr.bf16.mxu0 0
        %670 = vmatpush2.bf16.xpose.msra.mxu0 0
        %671 = vmatprep.subr.bf16.mxu0 0
        %672 = vmatpush2.bf16.xpose.msra.mxu0 0
        %673 = vmatprep.mubr.bf16.mxu0 0
        %674 = vmatmul.mubr.bf16.gmra.mxu0 %v636
        %v675 = vpop.f32.mrf.mxu0
        %v676 = vadd.f32 0.0, %v675
        %v677 = vpop.f32.mrf.mxu0
        %v678 = vpop.f32.mrf.mxu0
        %v679 = vpop.f32.mrf.mxu0
        %680 = vdwg.mxu0
        %682 = vrot.lane.b32.xlu0 %v532, 96
        %v683 = vpop.permute.xlu0 %682
        %v685 = vsel %vm536, %v532, 0
        %v688 = vsel %vm536, %v683, 0
        %690 = vmatprep.subr.bf16.mxu0 0
        %691 = vmatpush1.bf16.xpose.msra.mxu0 0
        %692 = vmatprep.subr.bf16.mxu0 0
        %693 = vmatpush1.bf16.xpose.msra.mxu0 0
        %694 = vmatprep.subr.bf16.mxu0 0
        %695 = vmatpush1.bf16.xpose.msra.mxu0 0
        %696 = vmatprep.subr.bf16.mxu0 0
        %697 = vmatpush1.bf16.xpose.msra.mxu0 0
        %698 = vmatprep.subr.bf16.mxu0 0
        %699 = vmatpush1.bf16.xpose.msra.mxu0 0
        %700 = vmatprep.subr.bf16.mxu0 0
        %701 = vmatpush1.bf16.xpose.msra.mxu0 0
        %702 = vmatprep.subr.bf16.mxu0 0
        %703 = vmatpush1.bf16.xpose.msra.mxu0 0
        %704 = vmatprep.subr.bf16.mxu0 0
        %705 = vmatpush1.bf16.xpose.msra.mxu0 %v688
        %706 = vmatprep.subr.bf16.mxu0 0
        %707 = vmatpush2.bf16.xpose.msra.mxu0 0
        %708 = vmatprep.subr.bf16.mxu0 0
        %709 = vmatpush2.bf16.xpose.msra.mxu0 0
        %710 = vmatprep.subr.bf16.mxu0 0
        %711 = vmatpush2.bf16.xpose.msra.mxu0 0
        %712 = vmatprep.subr.bf16.mxu0 0
        %713 = vmatpush2.bf16.xpose.msra.mxu0 0
        %714 = vmatprep.subr.bf16.mxu0 0
        %715 = vmatpush2.bf16.xpose.msra.mxu0 0
        %716 = vmatprep.subr.bf16.mxu0 0
        %717 = vmatpush2.bf16.xpose.msra.mxu0 0
        %718 = vmatprep.subr.bf16.mxu0 0
        %719 = vmatpush2.bf16.xpose.msra.mxu0 0
        %720 = vmatprep.subr.bf16.mxu0 0
        %721 = vmatpush2.bf16.xpose.msra.mxu0 0
        %722 = vmatprep.mubr.bf16.mxu0 0
        %723 = vmatmul.mubr.bf16.gmra.mxu0 %v685
        %v724 = vpop.f32.mrf.mxu0
        %v725 = vadd.f32 0.0, %v724
        %v726 = vpop.f32.mrf.mxu0
        %v727 = vpop.f32.mrf.mxu0
        %v728 = vpop.f32.mrf.mxu0
        %729 = vdwg.mxu0
        %v730 = vmul.f32 %v578, 0.35355338
        %v731 = vmul.f32 %v627, 0.35355338
        %v732 = vmul.f32 %v676, 0.35355338
        %v733 = vmul.f32 %v725, 0.35355338
        %v734 = vsel %vm536, %v730, -inf
        %735 = vmax.xlane.f32.xlu0 %v734
        %v736 = vpop.xlane.xlu0 %735
        %v737 = vsel %vm536, %v731, -inf
        %738 = vmax.xlane.f32.xlu0 %v737
        %v739 = vpop.xlane.xlu0 %738
        %v740 = vsel %vm536, %v732, -inf
        %741 = vmax.xlane.f32.xlu0 %v740
        %v742 = vpop.xlane.xlu0 %741
        %v743 = vsel %vm536, %v733, -inf
        %744 = vmax.xlane.f32.xlu0 %v743
        %v745 = vpop.xlane.xlu0 %744
        %v746 = vsub.f32 %v730, %v736
        %v747 = vsub.f32 %v731, %v739
        %v748 = vsub.f32 %v732, %v742
        %v749 = vsub.f32 %v733, %v745
        %v750 = vmul.f32 %v746, 1.442695
        %v751 = vpow.pop %v750
        %v752 = vmul.f32 %v747, 1.442695
        %v753 = vpow.pop %v752
        %v754 = vmul.f32 %v748, 1.442695
        %v755 = vpow.pop %v754
        %v756 = vmul.f32 %v749, 1.442695
        %v757 = vpow.pop %v756
        %v758 = vsel %vm536, %v751, 0.0
        %759 = vadd.xlane.f32.xlu0 %v758
        %v760 = vpop.xlane.xlu0 %759
        %v761 = vsel %vm536, %v753, 0.0
        %762 = vadd.xlane.f32.xlu0 %v761
        %v763 = vpop.xlane.xlu0 %762
        %v764 = vsel %vm536, %v755, 0.0
        %765 = vadd.xlane.f32.xlu0 %v764
        %v766 = vpop.xlane.xlu0 %765
        %v767 = vsel %vm536, %v757, 0.0
        %768 = vadd.xlane.f32.xlu0 %v767
        %v769 = vpop.xlane.xlu0 %768
        %v770 = vrcp.pop %v760
        %v771 = vrcp.pop %v763
        %v772 = vrcp.pop %v766
        %v773 = vrcp.pop %v769
        %v774 = vmul.f32 %v751, %v770
        %v775 = vmul.f32 %v753, %v771
        %v776 = vmul.f32 %v755, %v772
        %v777 = vmul.f32 %v757, %v773
        %v778 = vpack.c.bf16 %v774, %v774
        %v779 = vpack.c.bf16 %v775, %v775
        %v780 = vpack.c.bf16 %v776, %v776
        %v781 = vpack.c.bf16 %v777, %v777
        %782 = vrot.lane.b32.xlu0 %v529, 64
        %v783 = vpop.permute.xlu0 %782
        %v785 = vsel %vm536, %v778, 0
        %vm787 = vcmask 1043456
        %v789 = vsel %vm787, %v783, 0
        %791 = vmatprep.subr.bf16.mxu0 0
        %792 = vmatpush1.bf16.msra.mxu0 0
        %793 = vmatprep.subr.bf16.mxu0 0
        %794 = vmatpush1.bf16.msra.mxu0 0
        %795 = vmatprep.subr.bf16.mxu0 0
        %796 = vmatpush1.bf16.msra.mxu0 0
        %797 = vmatprep.subr.bf16.mxu0 0
        %798 = vmatpush1.bf16.msra.mxu0 0
        %799 = vmatprep.subr.bf16.mxu0 0
        %800 = vmatpush1.bf16.msra.mxu0 0
        %801 = vmatprep.subr.bf16.mxu0 0
        %802 = vmatpush1.bf16.msra.mxu0 0
        %803 = vmatprep.subr.bf16.mxu0 0
        %804 = vmatpush1.bf16.msra.mxu0 0
        %805 = vmatprep.subr.bf16.mxu0 0
        %806 = vmatpush1.bf16.msra.mxu0 %v789
        %807 = vmatprep.subr.bf16.mxu0 0
        %808 = vmatpush2.bf16.msra.mxu0 0
        %809 = vmatprep.subr.bf16.mxu0 0
        %810 = vmatpush2.bf16.msra.mxu0 0
        %811 = vmatprep.subr.bf16.mxu0 0
        %812 = vmatpush2.bf16.msra.mxu0 0
        %813 = vmatprep.subr.bf16.mxu0 0
        %814 = vmatpush2.bf16.msra.mxu0 0
        %815 = vmatprep.subr.bf16.mxu0 0
        %816 = vmatpush2.bf16.msra.mxu0 0
        %817 = vmatprep.subr.bf16.mxu0 0
        %818 = vmatpush2.bf16.msra.mxu0 0
        %819 = vmatprep.subr.bf16.mxu0 0
        %820 = vmatpush2.bf16.msra.mxu0 0
        %821 = vmatprep.subr.bf16.mxu0 0
        %822 = vmatpush2.bf16.msra.mxu0 0
        %823 = vmatprep.mubr.bf16.mxu0 0
        %824 = vmatmul.mubr.bf16.gmra.mxu0 %v785
        %v825 = vpop.f32.mrf.mxu0
        %v826 = vadd.f32 0.0, %v825
        %v827 = vpop.f32.mrf.mxu0
        %v828 = vpop.f32.mrf.mxu0
        %v829 = vpop.f32.mrf.mxu0
        %830 = vdwg.mxu0
        %831 = vrot.lane.b32.xlu0 %v530, 64
        %v832 = vpop.permute.xlu0 %831
        %v834 = vsel %vm536, %v779, 0
        %v837 = vsel %vm787, %v832, 0
        %839 = vmatprep.subr.bf16.mxu0 0
        %840 = vmatpush1.bf16.msra.mxu0 0
        %841 = vmatprep.subr.bf16.mxu0 0
        %842 = vmatpush1.bf16.msra.mxu0 0
        %843 = vmatprep.subr.bf16.mxu0 0
        %844 = vmatpush1.bf16.msra.mxu0 0
        %845 = vmatprep.subr.bf16.mxu0 0
        %846 = vmatpush1.bf16.msra.mxu0 0
        %847 = vmatprep.subr.bf16.mxu0 0
        %848 = vmatpush1.bf16.msra.mxu0 0
        %849 = vmatprep.subr.bf16.mxu0 0
        %850 = vmatpush1.bf16.msra.mxu0 0
        %851 = vmatprep.subr.bf16.mxu0 0
        %852 = vmatpush1.bf16.msra.mxu0 0
        %853 = vmatprep.subr.bf16.mxu0 0
        %854 = vmatpush1.bf16.msra.mxu0 %v837
        %855 = vmatprep.subr.bf16.mxu0 0
        %856 = vmatpush2.bf16.msra.mxu0 0
        %857 = vmatprep.subr.bf16.mxu0 0
        %858 = vmatpush2.bf16.msra.mxu0 0
        %859 = vmatprep.subr.bf16.mxu0 0
        %860 = vmatpush2.bf16.msra.mxu0 0
        %861 = vmatprep.subr.bf16.mxu0 0
        %862 = vmatpush2.bf16.msra.mxu0 0
        %863 = vmatprep.subr.bf16.mxu0 0
        %864 = vmatpush2.bf16.msra.mxu0 0
        %865 = vmatprep.subr.bf16.mxu0 0
        %866 = vmatpush2.bf16.msra.mxu0 0
        %867 = vmatprep.subr.bf16.mxu0 0
        %868 = vmatpush2.bf16.msra.mxu0 0
        %869 = vmatprep.subr.bf16.mxu0 0
        %870 = vmatpush2.bf16.msra.mxu0 0
        %871 = vmatprep.mubr.bf16.mxu0 0
        %872 = vmatmul.mubr.bf16.gmra.mxu0 %v834
        %v873 = vpop.f32.mrf.mxu0
        %v874 = vadd.f32 0.0, %v873
        %v875 = vpop.f32.mrf.mxu0
        %v876 = vpop.f32.mrf.mxu0
        %v877 = vpop.f32.mrf.mxu0
        %878 = vdwg.mxu0
        %879 = vrot.lane.b32.xlu0 %v531, 64
        %v880 = vpop.permute.xlu0 %879
        %v882 = vsel %vm536, %v780, 0
        %v885 = vsel %vm787, %v880, 0
        %887 = vmatprep.subr.bf16.mxu0 0
        %888 = vmatpush1.bf16.msra.mxu0 0
        %889 = vmatprep.subr.bf16.mxu0 0
        %890 = vmatpush1.bf16.msra.mxu0 0
        %891 = vmatprep.subr.bf16.mxu0 0
        %892 = vmatpush1.bf16.msra.mxu0 0
        %893 = vmatprep.subr.bf16.mxu0 0
        %894 = vmatpush1.bf16.msra.mxu0 0
        %895 = vmatprep.subr.bf16.mxu0 0
        %896 = vmatpush1.bf16.msra.mxu0 0
        %897 = vmatprep.subr.bf16.mxu0 0
        %898 = vmatpush1.bf16.msra.mxu0 0
        %899 = vmatprep.subr.bf16.mxu0 0
        %900 = vmatpush1.bf16.msra.mxu0 0
        %901 = vmatprep.subr.bf16.mxu0 0
        %902 = vmatpush1.bf16.msra.mxu0 %v885
        %903 = vmatprep.subr.bf16.mxu0 0
        %904 = vmatpush2.bf16.msra.mxu0 0
        %905 = vmatprep.subr.bf16.mxu0 0
        %906 = vmatpush2.bf16.msra.mxu0 0
        %907 = vmatprep.subr.bf16.mxu0 0
        %908 = vmatpush2.bf16.msra.mxu0 0
        %909 = vmatprep.subr.bf16.mxu0 0
        %910 = vmatpush2.bf16.msra.mxu0 0
        %911 = vmatprep.subr.bf16.mxu0 0
        %912 = vmatpush2.bf16.msra.mxu0 0
        %913 = vmatprep.subr.bf16.mxu0 0
        %914 = vmatpush2.bf16.msra.mxu0 0
        %915 = vmatprep.subr.bf16.mxu0 0
        %916 = vmatpush2.bf16.msra.mxu0 0
        %917 = vmatprep.subr.bf16.mxu0 0
        %918 = vmatpush2.bf16.msra.mxu0 0
        %919 = vmatprep.mubr.bf16.mxu0 0
        %920 = vmatmul.mubr.bf16.gmra.mxu0 %v882
        %v921 = vpop.f32.mrf.mxu0
        %v922 = vadd.f32 0.0, %v921
        %v923 = vpop.f32.mrf.mxu0
        %v924 = vpop.f32.mrf.mxu0
        %v925 = vpop.f32.mrf.mxu0
        %926 = vdwg.mxu0
        %927 = vrot.lane.b32.xlu0 %v532, 64
        %v928 = vpop.permute.xlu0 %927
        %v930 = vsel %vm536, %v781, 0
        %v933 = vsel %vm787, %v928, 0
        %935 = vmatprep.subr.bf16.mxu0 0
        %936 = vmatpush1.bf16.msra.mxu0 0
        %937 = vmatprep.subr.bf16.mxu0 0
        %938 = vmatpush1.bf16.msra.mxu0 0
        %939 = vmatprep.subr.bf16.mxu0 0
        %940 = vmatpush1.bf16.msra.mxu0 0
        %941 = vmatprep.subr.bf16.mxu0 0
        %942 = vmatpush1.bf16.msra.mxu0 0
        %943 = vmatprep.subr.bf16.mxu0 0
        %944 = vmatpush1.bf16.msra.mxu0 0
        %945 = vmatprep.subr.bf16.mxu0 0
        %946 = vmatpush1.bf16.msra.mxu0 0
        %947 = vmatprep.subr.bf16.mxu0 0
        %948 = vmatpush1.bf16.msra.mxu0 0
        %949 = vmatprep.subr.bf16.mxu0 0
        %950 = vmatpush1.bf16.msra.mxu0 %v933
        %951 = vmatprep.subr.bf16.mxu0 0
        %952 = vmatpush2.bf16.msra.mxu0 0
        %953 = vmatprep.subr.bf16.mxu0 0
        %954 = vmatpush2.bf16.msra.mxu0 0
        %955 = vmatprep.subr.bf16.mxu0 0
        %956 = vmatpush2.bf16.msra.mxu0 0
        %957 = vmatprep.subr.bf16.mxu0 0
        %958 = vmatpush2.bf16.msra.mxu0 0
        %959 = vmatprep.subr.bf16.mxu0 0
        %960 = vmatpush2.bf16.msra.mxu0 0
        %961 = vmatprep.subr.bf16.mxu0 0
        %962 = vmatpush2.bf16.msra.mxu0 0
        %963 = vmatprep.subr.bf16.mxu0 0
        %964 = vmatpush2.bf16.msra.mxu0 0
        %965 = vmatprep.subr.bf16.mxu0 0
        %966 = vmatpush2.bf16.msra.mxu0 0
        %967 = vmatprep.mubr.bf16.mxu0 0
        %968 = vmatmul.mubr.bf16.gmra.mxu0 %v930
        %v969 = vpop.f32.mrf.mxu0
        %v970 = vadd.f32 0.0, %v969
        %v971 = vpop.f32.mrf.mxu0
        %v972 = vpop.f32.mrf.mxu0
        %v973 = vpop.f32.mrf.mxu0
        %974 = vdwg.mxu0
        %976 = vrot.lane.b32.xlu0 %v874, 8
        %v977 = vpop.permute.xlu0 %976
        %980 = vrot.lane.b32.xlu0 %v922, 16
        %v981 = vpop.permute.xlu0 %980
        %984 = vrot.lane.b32.xlu0 %v970, 24
        %v985 = vpop.permute.xlu0 %984
        %v987 = vsel %vm536, %v826, %v977
        %vm988 = vcmask 130048
        %v989 = vsel %vm988, %v987, %v981
        %vm990 = vcmask 195584
        %v991 = vsel %vm990, %v989, %v985
        %v992 = vpack.c.bf16 %v991, %v991
        %v993 = vld [vmem:[%s3] sm:$0xf]
        %v994 = vld [vmem:[%s3 + $0x4] sm:$0xf]
        %v995 = vld [vmem:[%s3 + $0x8] sm:$0xf]
        %v996 = vld [vmem:[%s3 + $0xc] sm:$0xf]
        %v997 = vld [vmem:[%s4] sm:$0x1]
        %v999 = vlaneseq
        %v1000 = vshrl.u32 %v999, 7
        %v1001 = vsub.s32 0, %v1000
        %v1002 = vrot.slane %v997, %v1001
        %v1008 = vunpack.c.l.b16 %v993
        %v1009 = vunpack.c.l.b16 %v994
        %v1010 = vunpack.c.l.b16 %v995
        %v1011 = vunpack.c.l.b16 %v996
        %v1012 = vpack.c.b16 %v1009, %v1008
        %v1013 = vpack.c.b16 %v1011, %v1010
        %v1017 = vsel %vm475, %v992, 0
        %1019 = vmatprep.subr.bf16.mxu0 0
        %1020 = vmatpush1.bf16.msra.mxu0 0
        %1021 = vmatprep.subr.bf16.mxu0 0
        %1022 = vmatpush1.bf16.msra.mxu0 0
        %1023 = vmatprep.subr.bf16.mxu0 0
        %1024 = vmatpush1.bf16.msra.mxu0 0
        %1025 = vmatprep.subr.bf16.mxu0 0
        %1026 = vmatpush1.bf16.msra.mxu0 0
        %1027 = vmatprep.subr.bf16.mxu0 0
        %1028 = vmatpush1.bf16.msra.mxu0 0
        %1029 = vmatprep.subr.bf16.mxu0 0
        %1030 = vmatpush1.bf16.msra.mxu0 0
        %1031 = vmatprep.subr.bf16.mxu0 0
        %1032 = vmatpush1.bf16.msra.mxu0 %v1013
        %1033 = vmatprep.subr.bf16.mxu0 0
        %1034 = vmatpush1.bf16.msra.mxu0 %v1012
        %1035 = vmatprep.subr.bf16.mxu0 0
        %1036 = vmatpush2.bf16.msra.mxu0 0
        %1037 = vmatprep.subr.bf16.mxu0 0
        %1038 = vmatpush2.bf16.msra.mxu0 0
        %1039 = vmatprep.subr.bf16.mxu0 0
        %1040 = vmatpush2.bf16.msra.mxu0 0
        %1041 = vmatprep.subr.bf16.mxu0 0
        %1042 = vmatpush2.bf16.msra.mxu0 0
        %1043 = vmatprep.subr.bf16.mxu0 0
        %1044 = vmatpush2.bf16.msra.mxu0 0
        %1045 = vmatprep.subr.bf16.mxu0 0
        %1046 = vmatpush2.bf16.msra.mxu0 0
        %1047 = vmatprep.subr.bf16.mxu0 0
        %1048 = vmatpush2.bf16.msra.mxu0 0
        %1049 = vmatprep.subr.bf16.mxu0 0
        %1050 = vmatpush2.bf16.msra.mxu0 0
        %1051 = vmatprep.mubr.bf16.mxu0 0
        %1052 = vmatmul.mubr.bf16.gmra.mxu0 %v1017
        %v1053 = vpop.f32.mrf.mxu0
        %v1054 = vadd.f32 %v1002, %v1053
        %v1055 = vpop.f32.mrf.mxu0
        %v1056 = vpop.f32.mrf.mxu0
        %v1057 = vpop.f32.mrf.mxu0
        %1058 = vdwg.mxu0
        %v1059 = vadd.f32 %v450, %v1054
        %v1060 = vld [vmem:[%s5] sm:$0x1]
        %v1061 = vld [vmem:[%s6] sm:$0x1]
        %v1062 = vsel %vm475, %v1059, 0.0
        %1063 = vadd.xlane.f32.xlu0 %v1062
        %v1064 = vpop.xlane.xlu0 %1063
        %v1065 = vrcp.pop 32.0
        %v1066 = vmul.f32 %v1064, %v1065
        %v1067 = vsub.f32 %v1059, %v1066
        %v1068 = vmul.f32 %v1067, %v1067
        %v1069 = vsel %vm475, %v1068, 0.0
        %1070 = vadd.xlane.f32.xlu0 %v1069
        %v1071 = vpop.xlane.xlu0 %1070
        %v1072 = vmul.f32 %v1071, %v1065
        %v1073 = vadd.f32 %v1072, 1e-05
        %v1074 = vrsqrt.pop %v1073
        %v1075 = vmul.f32 %v1067, %v1074
        %v1077 = vlaneseq
        %v1078 = vshrl.u32 %v1077, 7
        %v1079 = vsub.s32 0, %v1078
        %v1080 = vrot.slane %v1060, %v1079
        %v1082 = vmul.f32 %v1075, %v1080
        %v1084 = vlaneseq
        %v1085 = vshrl.u32 %v1084, 7
        %v1086 = vsub.s32 0, %v1085
        %v1087 = vrot.slane %v1061, %v1086
        %v1089 = vadd.f32 %v1082, %v1087
        %v1090 = vpack.c.bf16 %v1089, %v1089
        %v1091 = vld [vmem:[%s7] sm:$0xf]
        %v1092 = vld [vmem:[%s7 + $0x4] sm:$0xf]
        %v1093 = vld [vmem:[%s7 + $0x8] sm:$0xf]
        %v1094 = vld [vmem:[%s7 + $0xc] sm:$0xf]
        %v1095 = vld [vmem:[%s8] sm:$0x1]
        %v1097 = vlaneseq
        %v1098 = vshrl.u32 %v1097, 7
        %v1099 = vsub.s32 0, %v1098
        %v1100 = vrot.slane %v1095, %v1099
        %v1106 = vunpack.c.l.b16 %v1091
        %v1107 = vunpack.c.l.b16 %v1092
        %v1108 = vunpack.c.l.b16 %v1093
        %v1109 = vunpack.c.l.b16 %v1094
        %v1110 = vpack.c.b16 %v1107, %v1106
        %v1111 = vpack.c.b16 %v1109, %v1108
        %v1115 = vsel %vm475, %v1090, 0
        %1117 = vmatprep.subr.bf16.mxu0 0
        %1118 = vmatpush1.bf16.msra.mxu0 0
        %1119 = vmatprep.subr.bf16.mxu0 0
        %1120 = vmatpush1.bf16.msra.mxu0 0
        %1121 = vmatprep.subr.bf16.mxu0 0
        %1122 = vmatpush1.bf16.msra.mxu0 0
        %1123 = vmatprep.subr.bf16.mxu0 0
        %1124 = vmatpush1.bf16.msra.mxu0 0
        %1125 = vmatprep.subr.bf16.mxu0 0
        %1126 = vmatpush1.bf16.msra.mxu0 0
        %1127 = vmatprep.subr.bf16.mxu0 0
        %1128 = vmatpush1.bf16.msra.mxu0 0
        %1129 = vmatprep.subr.bf16.mxu0 0
        %1130 = vmatpush1.bf16.msra.mxu0 %v1111
        %1131 = vmatprep.subr.bf16.mxu0 0
        %1132 = vmatpush1.bf16.msra.mxu0 %v1110
        %1133 = vmatprep.subr.bf16.mxu0 0
        %1134 = vmatpush2.bf16.msra.mxu0 0
        %1135 = vmatprep.subr.bf16.mxu0 0
        %1136 = vmatpush2.bf16.msra.mxu0 0
        %1137 = vmatprep.subr.bf16.mxu0 0
        %1138 = vmatpush2.bf16.msra.mxu0 0
        %1139 = vmatprep.subr.bf16.mxu0 0
        %1140 = vmatpush2.bf16.msra.mxu0 0
        %1141 = vmatprep.subr.bf16.mxu0 0
        %1142 = vmatpush2.bf16.msra.mxu0 0
        %1143 = vmatprep.subr.bf16.mxu0 0
        %1144 = vmatpush2.bf16.msra.mxu0 0
        %1145 = vmatprep.subr.bf16.mxu0 0
        %1146 = vmatpush2.bf16.msra.mxu0 0
        %1147 = vmatprep.subr.bf16.mxu0 0
        %1148 = vmatpush2.bf16.msra.mxu0 0
        %1149 = vmatprep.mubr.bf16.mxu0 0
        %1150 = vmatmul.mubr.bf16.gmra.mxu0 %v1115
        %v1151 = vpop.f32.mrf.mxu0
        %v1152 = vadd.f32 %v1100, %v1151
        %v1153 = vpop.f32.mrf.mxu0
        %v1154 = vpop.f32.mrf.mxu0
        %v1155 = vpop.f32.mrf.mxu0
        %1156 = vdwg.mxu0
        %v1157 = vmax.f32 %v1152, 0.0
        %v1158 = vpack.c.bf16 %v1157, %v1157
        %v1159 = vld [vmem:[%s9] sm:$0xf]
        %v1160 = vld [vmem:[%s9 + $0x4] sm:$0xf]
        %v1161 = vld [vmem:[%s9 + $0x8] sm:$0xf]
        %v1162 = vld [vmem:[%s9 + $0xc] sm:$0xf]
        %v1163 = vld [vmem:[%s9 + $0x10] sm:$0xf]
        %v1164 = vld [vmem:[%s9 + $0x14] sm:$0xf]
        %v1165 = vld [vmem:[%s9 + $0x18] sm:$0xf]
        %v1166 = vld [vmem:[%s9 + $0x1c] sm:$0xf]
        %v1167 = vld [vmem:[%s10] sm:$0x1]
        %v1169 = vlaneseq
        %v1170 = vshrl.u32 %v1169, 7
        %v1171 = vsub.s32 0, %v1170
        %v1172 = vrot.slane %v1167, %v1171
        %v1182 = vunpack.c.l.b16 %v1159
        %v1183 = vunpack.c.l.b16 %v1160
        %v1184 = vunpack.c.l.b16 %v1161
        %v1185 = vunpack.c.l.b16 %v1162
        %v1186 = vunpack.c.l.b16 %v1163
        %v1187 = vunpack.c.l.b16 %v1164
        %v1188 = vunpack.c.l.b16 %v1165
        %v1189 = vunpack.c.l.b16 %v1166
        %v1190 = vpack.c.b16 %v1183, %v1182
        %v1191 = vpack.c.b16 %v1185, %v1184
        %v1192 = vpack.c.b16 %v1187, %v1186
        %v1193 = vpack.c.b16 %v1189, %v1188
        %vm1198 = vcmask 523264
        %v1200 = vsel %vm1198, %v1158, 0
        %1202 = vmatprep.subr.bf16.mxu0 0
        %1203 = vmatpush1.bf16.msra.mxu0 0
        %1204 = vmatprep.subr.bf16.mxu0 0
        %1205 = vmatpush1.bf16.msra.mxu0 0
        %1206 = vmatprep.subr.bf16.mxu0 0
        %1207 = vmatpush1.bf16.msra.mxu0 0
        %1208 = vmatprep.subr.bf16.mxu0 0
        %1209 = vmatpush1.bf16.msra.mxu0 0
        %1210 = vmatprep.subr.bf16.mxu0 0
        %1211 = vmatpush1.bf16.msra.mxu0 %v1193
        %1212 = vmatprep.subr.bf16.mxu0 0
        %1213 = vmatpush1.bf16.msra.mxu0 %v1192
        %1214 = vmatprep.subr.bf16.mxu0 0
        %1215 = vmatpush1.bf16.msra.mxu0 %v1191
        %1216 = vmatprep.subr.bf16.mxu0 0
        %1217 = vmatpush1.bf16.msra.mxu0 %v1190
        %1218 = vmatprep.subr.bf16.mxu0 0
        %1219 = vmatpush2.bf16.msra.mxu0 0
        %1220 = vmatprep.subr.bf16.mxu0 0
        %1221 = vmatpush2.bf16.msra.mxu0 0
        %1222 = vmatprep.subr.bf16.mxu0 0
        %1223 = vmatpush2.bf16.msra.mxu0 0
        %1224 = vmatprep.subr.bf16.mxu0 0
        %1225 = vmatpush2.bf16.msra.mxu0 0
        %1226 = vmatprep.subr.bf16.mxu0 0
        %1227 = vmatpush2.bf16.msra.mxu0 0
        %1228 = vmatprep.subr.bf16.mxu0 0
        %1229 = vmatpush2.bf16.msra.mxu0 0
        %1230 = vmatprep.subr.bf16.mxu0 0
        %1231 = vmatpush2.bf16.msra.mxu0 0
        %1232 = vmatprep.subr.bf16.mxu0 0
        %1233 = vmatpush2.bf16.msra.mxu0 0
        %1234 = vmatprep.mubr.bf16.mxu0 0
        %1235 = vmatmul.mubr.bf16.gmra.mxu0 %v1200
        %v1236 = vpop.f32.mrf.mxu0
        %v1237 = vadd.f32 %v1172, %v1236
        %v1238 = vpop.f32.mrf.mxu0
        %v1239 = vpop.f32.mrf.mxu0
        %v1240 = vpop.f32.mrf.mxu0
        %1241 = vdwg.mxu0
        %v1242 = vadd.f32 %v1089, %v1237
        %v1243 = vld [vmem:[%s11] sm:$0x1]
        %v1244 = vld [vmem:[#allocation2] sm:$0x1]
        %v1245 = vsel %vm475, %v1242, 0.0
        %1246 = vadd.xlane.f32.xlu0 %v1245
        %v1247 = vpop.xlane.xlu0 %1246
        %v1248 = vmul.f32 %v1247, %v1065
        %v1249 = vsub.f32 %v1242, %v1248
        %v1250 = vmul.f32 %v1249, %v1249
        %v1251 = vsel %vm475, %v1250, 0.0
        %1252 = vadd.xlane.f32.xlu0 %v1251
        %v1253 = vpop.xlane.xlu0 %1252
        %v1254 = vmul.f32 %v1253, %v1065
        %v1255 = vadd.f32 %v1254, 1e-05
        %v1256 = vrsqrt.pop %v1255
        %v1257 = vmul.f32 %v1249, %v1256
        %v1259 = vlaneseq
        %v1260 = vshrl.u32 %v1259, 7
        %v1261 = vsub.s32 0, %v1260
        %v1262 = vrot.slane %v1243, %v1261
        %v1264 = vmul.f32 %v1257, %v1262
        %v1266 = vlaneseq
        %v1267 = vshrl.u32 %v1266, 7
        %v1268 = vsub.s32 0, %v1267
        %v1269 = vrot.slane %v1244, %v1268
        %v1271 = vadd.f32 %v1264, %v1269
        %1272 = vst.msk [vmem:[%s448] sm:$0xff] %vm475, %v1271
        %p1273 = scmp.lt.s32.totalorder %s25, 1
        %s1274 = scalar_select %p1273, %s25, 1
        %s1275 = smul.addr %s1274, 8
        %s1276 = scalar_lea.vmem %s13, %s1275
        // Predicated region
        $region77: #{transformer_forward.5} parent=71 // pred_check
          %p1277 = pneg %p321
        $region78: #{transformer_forward.5} parent=71 // pred_check_branch
          %1279 = sbr.rel (%p1277) target = $region80
        $region79: #{transformer_forward.5} parent=71 // pred_region
          _
        $region80: #{transformer_forward.5} parent=71 // pred_fallthru
          _
      $region72: #{transformer_forward.5} parent=5 // pred_fallthru
        _
      %p1280 = scmp.le.s32.totalorder 2, %s20
      // Predicated region
      $region81: #{transformer_forward.5} parent=5 // pred_check
        %p1281 = pneg %p1280
      $region82: #{transformer_forward.5} parent=5 // pred_check_branch
        %1283 = sbr.rel (%p1281) target = $region84
      $region83: #{transformer_forward.5} parent=5 // pred_region
        %s1284 = ssub.s32 %s20, 2
        // Predicated region
        $region85: #{transformer_forward.5} parent=83 // pred_check
          %p1285 = pneg %p327
        $region86: #{transformer_forward.5} parent=83 // pred_check_branch
          %1287 = sbr.rel (%p1285) target = $region88
        $region87: #{transformer_forward.5} parent=83 // pred_region
          %p1288 = scmp.lt.s32.totalorder %s26, 1
          %s1289 = scalar_select %p1288, %s26, 1
          %s1290 = smul.addr %s1289, 8
          %s1291 = scalar_lea.vmem %s13, %s1290
        $region88: #{transformer_forward.5} parent=83 // pred_fallthru
          _
      $region84: #{transformer_forward.5} parent=5 // pred_fallthru
        _
    $region6: #{transformer_forward.5} parent=1 // loop_footer
      %s24 = sadd.s32 1, %s20
    $region7: #{transformer_forward.5} parent=1 // loop_footer_branch
      %19 = sbr.rel target = $region3
    $region8: #{transformer_forward.5} parent=1 // loop_exit
      _
    %1292 = vsyncpa [#allocation3], 1
    %s1293 = scalar_lea.sflag [#allocation3], 1
    %1294 = vsyncpa %s1293, 1

// kernel: transformer_forward.6
$region0: #{transformer_forward.6}
  #allocation0 [shape = 'u32[]', space=smem, size = 0x4, offset = 0x4, fixed_abs, tag = 'smem constant byte address 0x4 - core index']
  #allocation1 [shape = 'u32[144,128]{1,0:T(1,128)}', space=vmem, size = 0x12000, scoped, tag = 'internal scratch']
  %s0 = inlined_call_operand.vmem [shape: f32[2,8,32], index: 0, kind: input, shape index: {}]
  %s1 = inlined_call_operand.vmem [shape: f32[2,8,32], index: 1, kind: input, shape index: {}]
  %s2 = inlined_call_operand.vmem [shape: bf16[32,96], index: 2, kind: input, shape index: {}]
  %s3 = inlined_call_operand.vmem [shape: f32[1,96], index: 3, kind: input, shape index: {}]
  %s4 = inlined_call_operand.vmem [shape: bf16[32,32], index: 4, kind: input, shape index: {}]
  %s5 = inlined_call_operand.vmem [shape: f32[1,32], index: 5, kind: input, shape index: {}]
  %s6 = inlined_call_operand.vmem [shape: f32[1,32], index: 6, kind: input, shape index: {}]
  %s7 = inlined_call_operand.vmem [shape: f32[1,32], index: 7, kind: input, shape index: {}]
  %s8 = inlined_call_operand.vmem [shape: bf16[32,32], index: 8, kind: input, shape index: {}]
  %s9 = inlined_call_operand.vmem [shape: f32[1,32], index: 9, kind: input, shape index: {}]
  %s10 = inlined_call_operand.vmem [shape: bf16[32,64], index: 10, kind: input, shape index: {}]
  %s11 = inlined_call_operand.vmem [shape: f32[1,64], index: 11, kind: input, shape index: {}]
  %s12 = inlined_call_operand.vmem [shape: bf16[32,32], index: 12, kind: input, shape index: {}]
  %s13 = inlined_call_operand.vmem [shape: f32[1,32], index: 13, kind: input, shape index: {}]
  %s14 = inlined_call_operand.vmem [shape: f32[1,32], index: 14, kind: input, shape index: {}]
  %s15 = inlined_call_operand.vmem [shape: f32[1,32], index: 15, kind: input, shape index: {}]
  %s16 = inlined_call_operand.vmem [shape: bf16[32,64], index: 16, kind: input, shape index: {}]
  %s17 = inlined_call_operand.vmem [shape: f32[1,64], index: 17, kind: input, shape index: {}]
  %s18 = inlined_call_operand.vmem [shape: bf16[64,32], index: 18, kind: input, shape index: {}]
  %s19 = inlined_call_operand.vmem [shape: f32[1,32], index: 19, kind: input, shape index: {}]
  %s20 = inlined_call_operand.vmem [shape: f32[1,32], index: 20, kind: input, shape index: {}]
  %s21 = inlined_call_operand.vmem [shape: f32[1,32], index: 21, kind: input, shape index: {}]
  %s22 = inlined_call_operand.vmem [shape: f32[2,8,32], index: 22, kind: output, shape index: {}]
  %s23 = sld [smem:[#allocation0]]
  $region121: #{transformer_forward.6} parent=0
    _
  %s25 = ssub.s32 1, %s23
  %s26 = scalar_select 0, %s25, %s23
  loop: start=0, step=1, limit=4
  $region2: #{transformer_forward.6} parent=0 // loop_pre_header
    _
  $region3: #{transformer_forward.6} parent=0 // loop_header
    %s28 = sphi 0, %s32
    %p29 = scmp.ge.s32.totalorder %s28, 4
    %s38 = sphi 0, %s40
    %s41 = sphi 0, %s38
    %s42 = sphi 0, %s41
    %s58 = sphi 0, %s42
    %s64 = sphi 0, %s66
    %s67 = sphi 0, %s64
    %s68 = sphi 0, %s67
    %s84 = sphi 0, %s68
    %s88 = sphi 0, %s88
    %s90 = sphi 0, %s88
    %s91 = sphi 0, %s90
    %s105 = sphi 0, %s91
    %s109 = sphi 0, %s109
    %s111 = sphi 0, %s109
    %s112 = sphi 0, %s111
    %s126 = sphi 0, %s112
    %s130 = sphi 0, %s130
    %s132 = sphi 0, %s130
    %s133 = sphi 0, %s132
    %s147 = sphi 0, %s133
    %s151 = sphi 0, %s151
    %s153 = sphi 0, %s151
    %s154 = sphi 0, %s153
    %s168 = sphi 0, %s154
    %s172 = sphi 0, %s172
    %s174 = sphi 0, %s172
    %s175 = sphi 0, %s174
    %s189 = sphi 0, %s175
    %s193 = sphi 0, %s193
    %s195 = sphi 0, %s193
    %s196 = sphi 0, %s195
    %s210 = sphi 0, %s196
    %s214 = sphi 0, %s214
    %s216 = sphi 0, %s214
    %s217 = sphi 0, %s216
    %s231 = sphi 0, %s217
    %s235 = sphi 0, %s235
    %s237 = sphi 0, %s235
    %s238 = sphi 0, %s237
    %s252 = sphi 0, %s238
    %s256 = sphi 0, %s256
    %s258 = sphi 0, %s256
    %s259 = sphi 0, %s258
    %s273 = sphi 0, %s259
    %s277 = sphi 0, %s277
    %s279 = sphi 0, %s277
    %s280 = sphi 0, %s279
    %s294 = sphi 0, %s280
    %s298 = sphi 0, %s298
    %s300 = sphi 0, %s298
    %s301 = sphi 0, %s300
    %s315 = sphi 0, %s301
    %s319 = sphi 0, %s319
    %s321 = sphi 0, %s319
    %s322 = sphi 0, %s321
    %s336 = sphi 0, %s322
    %s340 = sphi 0, %s340
    %s342 = sphi 0, %s340
    %s343 = sphi 0, %s342
    %s357 = sphi 0, %s343
    %s361 = sphi 0, %s361
    %s363 = sphi 0, %s361
    %s364 = sphi 0, %s363
    %s378 = sphi 0, %s364
    %s382 = sphi 0, %s382
    %s384 = sphi 0, %s382
    %s385 = sphi 0, %s384
    %s399 = sphi 0, %s385
    %s403 = sphi 0, %s403
    %s405 = sphi 0, %s403
    %s406 = sphi 0, %s405
    %s420 = sphi 0, %s406
    %s424 = sphi 0, %s424
    %s426 = sphi 0, %s424
    %s427 = sphi 0, %s426
    %s441 = sphi 0, %s427
    %s445 = sphi 0, %s445
    %s447 = sphi 0, %s445
    %s448 = sphi 0, %s447
    %s462 = sphi 0, %s448
    %s466 = sphi 0, %s466
    %s468 = sphi 0, %s466
    %s469 = sphi 0, %s468
    %s483 = sphi 0, %s469
    %s487 = sphi 0, %s487
    %s489 = sphi 0, %s487
    %s490 = sphi 0, %s489
    %s504 = sphi 0, %s490
    %s510 = sphi 0, %s512
    %s513 = sphi 0, %s510
    %s514 = sphi 0, %s513
    %s530 = sphi 0, %s514
  $region4: #{transformer_forward.6} parent=0 // loop_header_branch
    %31 = sbr.rel (%p29) target = $region8
  $region5: #{transformer_forward.6} parent=0 // loop_body
    %s33 = ssub.s32 %s28, 1
    %s34 = ssub.s32 %s28, 2
    %s35 = sadd.s32 %s28, 1
    %s36 = ssub.s32 %s28, %s35
    %p37 = scmp.eq.s32.totalorder %s36, 0
    %s39 = sadd.s32 %s38, 1
    %s40 = scalar_select %p37, %s38, %s39
    %p43 = pneg %p37
    %p44 = scmp.eq.s32.totalorder %s28, 1
    %p45 = por %p43, %p44
    %p46 = scmp.ne.s32.totalorder %s38, %s41
    %p47 = scmp.eq.s32.totalorder %s28, 0
    %p48 = por %p46, %p47
    %p49 = scmp.ne.s32.totalorder %s38, %s41
    %p50 = scmp.eq.s32.totalorder %s33, 1
    %p51 = por %p49, %p50
    %p52 = scmp.ne.s32.totalorder %s41, %s42
    %p53 = scmp.eq.s32.totalorder %s33, 0
    %p54 = por %p52, %p53
    %p55 = scmp.ne.s32.totalorder %s41, %s42
    %p56 = scmp.eq.s32.totalorder %s34, 1
    %p57 = por %p55, %p56
    %p59 = scmp.ne.s32.totalorder %s42, %s58
    %p60 = scmp.eq.s32.totalorder %s34, 0
    %p61 = por %p59, %p60
    %s62 = ssub.s32 %s28, %s35
    %p63 = scmp.eq.s32.totalorder %s62, 0
    %s65 = sadd.s32 %s64, 1
    %s66 = scalar_select %p63, %s64, %s65
    %p69 = pneg %p63
    %p70 = scmp.eq.s32.totalorder %s28, 1
    %p71 = por %p69, %p70
    %p72 = scmp.ne.s32.totalorder %s64, %s67
    %p73 = scmp.eq.s32.totalorder %s28, 0
    %p74 = por %p72, %p73
    %p75 = scmp.ne.s32.totalorder %s64, %s67
    %p76 = scmp.eq.s32.totalorder %s33, 1
    %p77 = por %p75, %p76
    %p78 = scmp.ne.s32.totalorder %s67, %s68
    %p79 = scmp.eq.s32.totalorder %s33, 0
    %p80 = por %p78, %p79
    %p81 = scmp.ne.s32.totalorder %s67, %s68
    %p82 = scmp.eq.s32.totalorder %s34, 1
    %p83 = por %p81, %p82
    %p85 = scmp.ne.s32.totalorder %s68, %s84
    %p86 = scmp.eq.s32.totalorder %s34, 0
    %p87 = por %p85, %p86
    %s89 = sadd.s32 %s88, 1
    %p92 = scmp.eq.s32.totalorder %s28, 1
    %p93 = scmp.ne.s32.totalorder %s88, %s90
    %p94 = scmp.eq.s32.totalorder %s28, 0
    %p95 = por %p93, %p94
    %p96 = scmp.ne.s32.totalorder %s88, %s90
    %p97 = scmp.eq.s32.totalorder %s33, 1
    %p98 = por %p96, %p97
    %p99 = scmp.ne.s32.totalorder %s90, %s91
    %p100 = scmp.eq.s32.totalorder %s33, 0
    %p101 = por %p99, %p100
    %p102 = scmp.ne.s32.totalorder %s90, %s91
    %p103 = scmp.eq.s32.totalorder %s34, 1
    %p104 = por %p102, %p103
    %p106 = scmp.ne.s32.totalorder %s91, %s105
    %p107 = scmp.eq.s32.totalorder %s34, 0
    %p108 = por %p106, %p107
    %s110 = sadd.s32 %s109, 1
    %p113 = scmp.eq.s32.totalorder %s28, 1
    %p114 = scmp.ne.s32.totalorder %s109, %s111
    %p115 = scmp.eq.s32.totalorder %s28, 0
    %p116 = por %p114, %p115
    %p117 = scmp.ne.s32.totalorder %s109, %s111
    %p118 = scmp.eq.s32.totalorder %s33, 1
    %p119 = por %p117, %p118
    %p120 = scmp.ne.s32.totalorder %s111, %s112
    %p121 = scmp.eq.s32.totalorder %s33, 0
    %p122 = por %p120, %p121
    %p123 = scmp.ne.s32.totalorder %s111, %s112
    %p124 = scmp.eq.s32.totalorder %s34, 1
    %p125 = por %p123, %p124
    %p127 = scmp.ne.s32.totalorder %s112, %s126
    %p128 = scmp.eq.s32.totalorder %s34, 0
    %p129 = por %p127, %p128
    %s131 = sadd.s32 %s130, 1
    %p134 = scmp.eq.s32.totalorder %s28, 1
    %p135 = scmp.ne.s32.totalorder %s130, %s132
    %p136 = scmp.eq.s32.totalorder %s28, 0
    %p137 = por %p135, %p136
    %p138 = scmp.ne.s32.totalorder %s130, %s132
    %p139 = scmp.eq.s32.totalorder %s33, 1
    %p140 = por %p138, %p139
    %p141 = scmp.ne.s32.totalorder %s132, %s133
    %p142 = scmp.eq.s32.totalorder %s33, 0
    %p143 = por %p141, %p142
    %p144 = scmp.ne.s32.totalorder %s132, %s133
    %p145 = scmp.eq.s32.totalorder %s34, 1
    %p146 = por %p144, %p145
    %p148 = scmp.ne.s32.totalorder %s133, %s147
    %p149 = scmp.eq.s32.totalorder %s34, 0
    %p150 = por %p148, %p149
    %s152 = sadd.s32 %s151, 1
    %p155 = scmp.eq.s32.totalorder %s28, 1
    %p156 = scmp.ne.s32.totalorder %s151, %s153
    %p157 = scmp.eq.s32.totalorder %s28, 0
    %p158 = por %p156, %p157
    %p159 = scmp.ne.s32.totalorder %s151, %s153
    %p160 = scmp.eq.s32.totalorder %s33, 1
    %p161 = por %p159, %p160
    %p162 = scmp.ne.s32.totalorder %s153, %s154
    %p163 = scmp.eq.s32.totalorder %s33, 0
    %p164 = por %p162, %p163
    %p165 = scmp.ne.s32.totalorder %s153, %s154
    %p166 = scmp.eq.s32.totalorder %s34, 1
    %p167 = por %p165, %p166
    %p169 = scmp.ne.s32.totalorder %s154, %s168
    %p170 = scmp.eq.s32.totalorder %s34, 0
    %p171 = por %p169, %p170
    %s173 = sadd.s32 %s172, 1
    %p176 = scmp.eq.s32.totalorder %s28, 1
    %p177 = scmp.ne.s32.totalorder %s172, %s174
    %p178 = scmp.eq.s32.totalorder %s28, 0
    %p179 = por %p177, %p178
    %p180 = scmp.ne.s32.totalorder %s172, %s174
    %p181 = scmp.eq.s32.totalorder %s33, 1
    %p182 = por %p180, %p181
    %p183 = scmp.ne.s32.totalorder %s174, %s175
    %p184 = scmp.eq.s32.totalorder %s33, 0
    %p185 = por %p183, %p184
    %p186 = scmp.ne.s32.totalorder %s174, %s175
    %p187 = scmp.eq.s32.totalorder %s34, 1
    %p188 = por %p186, %p187
    %p190 = scmp.ne.s32.totalorder %s175, %s189
    %p191 = scmp.eq.s32.totalorder %s34, 0
    %p192 = por %p190, %p191
    %s194 = sadd.s32 %s193, 1
    %p197 = scmp.eq.s32.totalorder %s28, 1
    %p198 = scmp.ne.s32.totalorder %s193, %s195
    %p199 = scmp.eq.s32.totalorder %s28, 0
    %p200 = por %p198, %p199
    %p201 = scmp.ne.s32.totalorder %s193, %s195
    %p202 = scmp.eq.s32.totalorder %s33, 1
    %p203 = por %p201, %p202
    %p204 = scmp.ne.s32.totalorder %s195, %s196
    %p205 = scmp.eq.s32.totalorder %s33, 0
    %p206 = por %p204, %p205
    %p207 = scmp.ne.s32.totalorder %s195, %s196
    %p208 = scmp.eq.s32.totalorder %s34, 1
    %p209 = por %p207, %p208
    %p211 = scmp.ne.s32.totalorder %s196, %s210
    %p212 = scmp.eq.s32.totalorder %s34, 0
    %p213 = por %p211, %p212
    %s215 = sadd.s32 %s214, 1
    %p218 = scmp.eq.s32.totalorder %s28, 1
    %p219 = scmp.ne.s32.totalorder %s214, %s216
    %p220 = scmp.eq.s32.totalorder %s28, 0
    %p221 = por %p219, %p220
    %p222 = scmp.ne.s32.totalorder %s214, %s216
    %p223 = scmp.eq.s32.totalorder %s33, 1
    %p224 = por %p222, %p223
    %p225 = scmp.ne.s32.totalorder %s216, %s217
    %p226 = scmp.eq.s32.totalorder %s33, 0
    %p227 = por %p225, %p226
    %p228 = scmp.ne.s32.totalorder %s216, %s217
    %p229 = scmp.eq.s32.totalorder %s34, 1
    %p230 = por %p228, %p229
    %p232 = scmp.ne.s32.totalorder %s217, %s231
    %p233 = scmp.eq.s32.totalorder %s34, 0
    %p234 = por %p232, %p233
    %s236 = sadd.s32 %s235, 1
    %p239 = scmp.eq.s32.totalorder %s28, 1
    %p240 = scmp.ne.s32.totalorder %s235, %s237
    %p241 = scmp.eq.s32.totalorder %s28, 0
    %p242 = por %p240, %p241
    %p243 = scmp.ne.s32.totalorder %s235, %s237
    %p244 = scmp.eq.s32.totalorder %s33, 1
    %p245 = por %p243, %p244
    %p246 = scmp.ne.s32.totalorder %s237, %s238
    %p247 = scmp.eq.s32.totalorder %s33, 0
    %p248 = por %p246, %p247
    %p249 = scmp.ne.s32.totalorder %s237, %s238
    %p250 = scmp.eq.s32.totalorder %s34, 1
    %p251 = por %p249, %p250
    %p253 = scmp.ne.s32.totalorder %s238, %s252
    %p254 = scmp.eq.s32.totalorder %s34, 0
    %p255 = por %p253, %p254
    %s257 = sadd.s32 %s256, 1
    %p260 = scmp.eq.s32.totalorder %s28, 1
    %p261 = scmp.ne.s32.totalorder %s256, %s258
    %p262 = scmp.eq.s32.totalorder %s28, 0
    %p263 = por %p261, %p262
    %p264 = scmp.ne.s32.totalorder %s256, %s258
    %p265 = scmp.eq.s32.totalorder %s33, 1
    %p266 = por %p264, %p265
    %p267 = scmp.ne.s32.totalorder %s258, %s259
    %p268 = scmp.eq.s32.totalorder %s33, 0
    %p269 = por %p267, %p268
    %p270 = scmp.ne.s32.totalorder %s258, %s259
    %p271 = scmp.eq.s32.totalorder %s34, 1
    %p272 = por %p270, %p271
    %p274 = scmp.ne.s32.totalorder %s259, %s273
    %p275 = scmp.eq.s32.totalorder %s34, 0
    %p276 = por %p274, %p275
    %s278 = sadd.s32 %s277, 1
    %p281 = scmp.eq.s32.totalorder %s28, 1
    %p282 = scmp.ne.s32.totalorder %s277, %s279
    %p283 = scmp.eq.s32.totalorder %s28, 0
    %p284 = por %p282, %p283
    %p285 = scmp.ne.s32.totalorder %s277, %s279
    %p286 = scmp.eq.s32.totalorder %s33, 1
    %p287 = por %p285, %p286
    %p288 = scmp.ne.s32.totalorder %s279, %s280
    %p289 = scmp.eq.s32.totalorder %s33, 0
    %p290 = por %p288, %p289
    %p291 = scmp.ne.s32.totalorder %s279, %s280
    %p292 = scmp.eq.s32.totalorder %s34, 1
    %p293 = por %p291, %p292
    %p295 = scmp.ne.s32.totalorder %s280, %s294
    %p296 = scmp.eq.s32.totalorder %s34, 0
    %p297 = por %p295, %p296
    %s299 = sadd.s32 %s298, 1
    %p302 = scmp.eq.s32.totalorder %s28, 1
    %p303 = scmp.ne.s32.totalorder %s298, %s300
    %p304 = scmp.eq.s32.totalorder %s28, 0
    %p305 = por %p303, %p304
    %p306 = scmp.ne.s32.totalorder %s298, %s300
    %p307 = scmp.eq.s32.totalorder %s33, 1
    %p308 = por %p306, %p307
    %p309 = scmp.ne.s32.totalorder %s300, %s301
    %p310 = scmp.eq.s32.totalorder %s33, 0
    %p311 = por %p309, %p310
    %p312 = scmp.ne.s32.totalorder %s300, %s301
    %p313 = scmp.eq.s32.totalorder %s34, 1
    %p314 = por %p312, %p313
    %p316 = scmp.ne.s32.totalorder %s301, %s315
    %p317 = scmp.eq.s32.totalorder %s34, 0
    %p318 = por %p316, %p317
    %s320 = sadd.s32 %s319, 1
    %p323 = scmp.eq.s32.totalorder %s28, 1
    %p324 = scmp.ne.s32.totalorder %s319, %s321
    %p325 = scmp.eq.s32.totalorder %s28, 0
    %p326 = por %p324, %p325
    %p327 = scmp.ne.s32.totalorder %s319, %s321
    %p328 = scmp.eq.s32.totalorder %s33, 1
    %p329 = por %p327, %p328
    %p330 = scmp.ne.s32.totalorder %s321, %s322
    %p331 = scmp.eq.s32.totalorder %s33, 0
    %p332 = por %p330, %p331
    %p333 = scmp.ne.s32.totalorder %s321, %s322
    %p334 = scmp.eq.s32.totalorder %s34, 1
    %p335 = por %p333, %p334
    %p337 = scmp.ne.s32.totalorder %s322, %s336
    %p338 = scmp.eq.s32.totalorder %s34, 0
    %p339 = por %p337, %p338
    %s341 = sadd.s32 %s340, 1
    %p344 = scmp.eq.s32.totalorder %s28, 1
    %p345 = scmp.ne.s32.totalorder %s340, %s342
    %p346 = scmp.eq.s32.totalorder %s28, 0
    %p347 = por %p345, %p346
    %p348 = scmp.ne.s32.totalorder %s340, %s342
    %p349 = scmp.eq.s32.totalorder %s33, 1
    %p350 = por %p348, %p349
    %p351 = scmp.ne.s32.totalorder %s342, %s343
    %p352 = scmp.eq.s32.totalorder %s33, 0
    %p353 = por %p351, %p352
    %p354 = scmp.ne.s32.totalorder %s342, %s343
    %p355 = scmp.eq.s32.totalorder %s34, 1
    %p356 = por %p354, %p355
    %p358 = scmp.ne.s32.totalorder %s343, %s357
    %p359 = scmp.eq.s32.totalorder %s34, 0
    %p360 = por %p358, %p359
    %s362 = sadd.s32 %s361, 1
    %p365 = scmp.eq.s32.totalorder %s28, 1
    %p366 = scmp.ne.s32.totalorder %s361, %s363
    %p367 = scmp.eq.s32.totalorder %s28, 0
    %p368 = por %p366, %p367
    %p369 = scmp.ne.s32.totalorder %s361, %s363
    %p370 = scmp.eq.s32.totalorder %s33, 1
    %p371 = por %p369, %p370
    %p372 = scmp.ne.s32.totalorder %s363, %s364
    %p373 = scmp.eq.s32.totalorder %s33, 0
    %p374 = por %p372, %p373
    %p375 = scmp.ne.s32.totalorder %s363, %s364
    %p376 = scmp.eq.s32.totalorder %s34, 1
    %p377 = por %p375, %p376
    %p379 = scmp.ne.s32.totalorder %s364, %s378
    %p380 = scmp.eq.s32.totalorder %s34, 0
    %p381 = por %p379, %p380
    %s383 = sadd.s32 %s382, 1
    %p386 = scmp.eq.s32.totalorder %s28, 1
    %p387 = scmp.ne.s32.totalorder %s382, %s384
    %p388 = scmp.eq.s32.totalorder %s28, 0
    %p389 = por %p387, %p388
    %p390 = scmp.ne.s32.totalorder %s382, %s384
    %p391 = scmp.eq.s32.totalorder %s33, 1
    %p392 = por %p390, %p391
    %p393 = scmp.ne.s32.totalorder %s384, %s385
    %p394 = scmp.eq.s32.totalorder %s33, 0
    %p395 = por %p393, %p394
    %p396 = scmp.ne.s32.totalorder %s384, %s385
    %p397 = scmp.eq.s32.totalorder %s34, 1
    %p398 = por %p396, %p397
    %p400 = scmp.ne.s32.totalorder %s385, %s399
    %p401 = scmp.eq.s32.totalorder %s34, 0
    %p402 = por %p400, %p401
    %s404 = sadd.s32 %s403, 1
    %p407 = scmp.eq.s32.totalorder %s28, 1
    %p408 = scmp.ne.s32.totalorder %s403, %s405
    %p409 = scmp.eq.s32.totalorder %s28, 0
    %p410 = por %p408, %p409
    %p411 = scmp.ne.s32.totalorder %s403, %s405
    %p412 = scmp.eq.s32.totalorder %s33, 1
    %p413 = por %p411, %p412
    %p414 = scmp.ne.s32.totalorder %s405, %s406
    %p415 = scmp.eq.s32.totalorder %s33, 0
    %p416 = por %p414, %p415
    %p417 = scmp.ne.s32.totalorder %s405, %s406
    %p418 = scmp.eq.s32.totalorder %s34, 1
    %p419 = por %p417, %p418
    %p421 = scmp.ne.s32.totalorder %s406, %s420
    %p422 = scmp.eq.s32.totalorder %s34, 0
    %p423 = por %p421, %p422
    %s425 = sadd.s32 %s424, 1
    %p428 = scmp.eq.s32.totalorder %s28, 1
    %p429 = scmp.ne.s32.totalorder %s424, %s426
    %p430 = scmp.eq.s32.totalorder %s28, 0
    %p431 = por %p429, %p430
    %p432 = scmp.ne.s32.totalorder %s424, %s426
    %p433 = scmp.eq.s32.totalorder %s33, 1
    %p434 = por %p432, %p433
    %p435 = scmp.ne.s32.totalorder %s426, %s427
    %p436 = scmp.eq.s32.totalorder %s33, 0
    %p437 = por %p435, %p436
    %p438 = scmp.ne.s32.totalorder %s426, %s427
    %p439 = scmp.eq.s32.totalorder %s34, 1
    %p440 = por %p438, %p439
    %p442 = scmp.ne.s32.totalorder %s427, %s441
    %p443 = scmp.eq.s32.totalorder %s34, 0
    %p444 = por %p442, %p443
    %s446 = sadd.s32 %s445, 1
    %p449 = scmp.eq.s32.totalorder %s28, 1
    %p450 = scmp.ne.s32.totalorder %s445, %s447
    %p451 = scmp.eq.s32.totalorder %s28, 0
    %p452 = por %p450, %p451
    %p453 = scmp.ne.s32.totalorder %s445, %s447
    %p454 = scmp.eq.s32.totalorder %s33, 1
    %p455 = por %p453, %p454
    %p456 = scmp.ne.s32.totalorder %s447, %s448
    %p457 = scmp.eq.s32.totalorder %s33, 0
    %p458 = por %p456, %p457
    %p459 = scmp.ne.s32.totalorder %s447, %s448
    %p460 = scmp.eq.s32.totalorder %s34, 1
    %p461 = por %p459, %p460
    %p463 = scmp.ne.s32.totalorder %s448, %s462
    %p464 = scmp.eq.s32.totalorder %s34, 0
    %p465 = por %p463, %p464
    %s467 = sadd.s32 %s466, 1
    %p470 = scmp.eq.s32.totalorder %s28, 1
    %p471 = scmp.ne.s32.totalorder %s466, %s468
    %p472 = scmp.eq.s32.totalorder %s28, 0
    %p473 = por %p471, %p472
    %p474 = scmp.ne.s32.totalorder %s466, %s468
    %p475 = scmp.eq.s32.totalorder %s33, 1
    %p476 = por %p474, %p475
    %p477 = scmp.ne.s32.totalorder %s468, %s469
    %p478 = scmp.eq.s32.totalorder %s33, 0
    %p479 = por %p477, %p478
    %p480 = scmp.ne.s32.totalorder %s468, %s469
    %p481 = scmp.eq.s32.totalorder %s34, 1
    %p482 = por %p480, %p481
    %p484 = scmp.ne.s32.totalorder %s469, %s483
    %p485 = scmp.eq.s32.totalorder %s34, 0
    %p486 = por %p484, %p485
    %s488 = sadd.s32 %s487, 1
    %p491 = scmp.eq.s32.totalorder %s28, 1
    %p492 = scmp.ne.s32.totalorder %s487, %s489
    %p493 = scmp.eq.s32.totalorder %s28, 0
    %p494 = por %p492, %p493
    %p495 = scmp.ne.s32.totalorder %s487, %s489
    %p496 = scmp.eq.s32.totalorder %s33, 1
    %p497 = por %p495, %p496
    %p498 = scmp.ne.s32.totalorder %s489, %s490
    %p499 = scmp.eq.s32.totalorder %s33, 0
    %p500 = por %p498, %p499
    %p501 = scmp.ne.s32.totalorder %s489, %s490
    %p502 = scmp.eq.s32.totalorder %s34, 1
    %p503 = por %p501, %p502
    %p505 = scmp.ne.s32.totalorder %s490, %s504
    %p506 = scmp.eq.s32.totalorder %s34, 0
    %p507 = por %p505, %p506
    %s508 = ssub.s32 %s28, %s35
    %p509 = scmp.eq.s32.totalorder %s508, 0
    %s511 = sadd.s32 %s510, 1
    %s512 = scalar_select %p509, %s510, %s511
    %p515 = pneg %p509
    %p516 = scmp.eq.s32.totalorder %s28, 1
    %p517 = por %p515, %p516
    %p518 = scmp.ne.s32.totalorder %s510, %s513
    %p519 = scmp.eq.s32.totalorder %s28, 0
    %p520 = por %p518, %p519
    %p521 = scmp.ne.s32.totalorder %s510, %s513
    %p522 = scmp.eq.s32.totalorder %s33, 1
    %p523 = por %p521, %p522
    %p524 = scmp.ne.s32.totalorder %s513, %s514
    %p525 = scmp.eq.s32.totalorder %s33, 0
    %p526 = por %p524, %p525
    %p527 = scmp.ne.s32.totalorder %s513, %s514
    %p528 = scmp.eq.s32.totalorder %s34, 1
    %p529 = por %p527, %p528
    %p531 = scmp.ne.s32.totalorder %s514, %s530
    %p532 = scmp.eq.s32.totalorder %s34, 0
    %p533 = por %p531, %p532
    %p534 = scmp.le.s32.totalorder 1, %s28
    %p535 = scmp.lt.s32.totalorder %s28, 3
    %p536 = pnand %p534, %p535
    %p537 = pneg %p536
    // Predicated region
    $region9: #{transformer_forward.6} parent=5 // pred_check
      _
    $region10: #{transformer_forward.6} parent=5 // pred_check_branch
      %539 = sbr.rel (%p536) target = $region12
    $region11: #{transformer_forward.6} parent=5 // pred_region
      %s540 = ssub.s32 %s28, 1
      // Predicated region
      $region13: #{transformer_forward.6} parent=11 // pred_check
        %p541 = pneg %p101
      $region14: #{transformer_forward.6} parent=11 // pred_check_branch
        %543 = sbr.rel (%p541) target = $region16
      $region15: #{transformer_forward.6} parent=11 // pred_region
        _
      $region16: #{transformer_forward.6} parent=11 // pred_fallthru
        _
      // Predicated region
      $region17: #{transformer_forward.6} parent=11 // pred_check
        %p544 = pneg %p122
      $region18: #{transformer_forward.6} parent=11 // pred_check_branch
        %546 = sbr.rel (%p544) target = $region20
      $region19: #{transformer_forward.6} parent=11 // pred_region
        _
      $region20: #{transformer_forward.6} parent=11 // pred_fallthru
        _
      // Predicated region
      $region21: #{transformer_forward.6} parent=11 // pred_check
        %p547 = pneg %p143
      $region22: #{transformer_forward.6} parent=11 // pred_check_branch
        %549 = sbr.rel (%p547) target = $region24
      $region23: #{transformer_forward.6} parent=11 // pred_region
        _
      $region24: #{transformer_forward.6} parent=11 // pred_fallthru
        _
      // Predicated region
      $region25: #{transformer_forward.6} parent=11 // pred_check
        %p550 = pneg %p164
      $region26: #{transformer_forward.6} parent=11 // pred_check_branch
        %552 = sbr.rel (%p550) target = $region28
      $region27: #{transformer_forward.6} parent=11 // pred_region
        _
      $region28: #{transformer_forward.6} parent=11 // pred_fallthru
        _
      // Predicated region
      $region29: #{transformer_forward.6} parent=11 // pred_check
        %p553 = pneg %p185
      $region30: #{transformer_forward.6} parent=11 // pred_check_branch
        %555 = sbr.rel (%p553) target = $region32
      $region31: #{transformer_forward.6} parent=11 // pred_region
        _
      $region32: #{transformer_forward.6} parent=11 // pred_fallthru
        _
      // Predicated region
      $region33: #{transformer_forward.6} parent=11 // pred_check
        %p556 = pneg %p206
      $region34: #{transformer_forward.6} parent=11 // pred_check_branch
        %558 = sbr.rel (%p556) target = $region36
      $region35: #{transformer_forward.6} parent=11 // pred_region
        _
      $region36: #{transformer_forward.6} parent=11 // pred_fallthru
        _
      // Predicated region
      $region37: #{transformer_forward.6} parent=11 // pred_check
        %p559 = pneg %p227
      $region38: #{transformer_forward.6} parent=11 // pred_check_branch
        %561 = sbr.rel (%p559) target = $region40
      $region39: #{transformer_forward.6} parent=11 // pred_region
        _
      $region40: #{transformer_forward.6} parent=11 // pred_fallthru
        _
      // Predicated region
      $region41: #{transformer_forward.6} parent=11 // pred_check
        %p562 = pneg %p248
      $region42: #{transformer_forward.6} parent=11 // pred_check_branch
        %564 = sbr.rel (%p562) target = $region44
      $region43: #{transformer_forward.6} parent=11 // pred_region
        _
      $region44: #{transformer_forward.6} parent=11 // pred_fallthru
        _
      // Predicated region
      $region45: #{transformer_forward.6} parent=11 // pred_check
        %p565 = pneg %p269
      $region46: #{transformer_forward.6} parent=11 // pred_check_branch
        %567 = sbr.rel (%p565) target = $region48
      $region47: #{transformer_forward.6} parent=11 // pred_region
        _
      $region48: #{transformer_forward.6} parent=11 // pred_fallthru
        _
      // Predicated region
      $region49: #{transformer_forward.6} parent=11 // pred_check
        %p568 = pneg %p290
      $region50: #{transformer_forward.6} parent=11 // pred_check_branch
        %570 = sbr.rel (%p568) target = $region52
      $region51: #{transformer_forward.6} parent=11 // pred_region
        _
      $region52: #{transformer_forward.6} parent=11 // pred_fallthru
        _
      // Predicated region
      $region53: #{transformer_forward.6} parent=11 // pred_check
        %p571 = pneg %p311
      $region54: #{transformer_forward.6} parent=11 // pred_check_branch
        %573 = sbr.rel (%p571) target = $region56
      $region55: #{transformer_forward.6} parent=11 // pred_region
        _
      $region56: #{transformer_forward.6} parent=11 // pred_fallthru
        _
      // Predicated region
      $region57: #{transformer_forward.6} parent=11 // pred_check
        %p574 = pneg %p332
      $region58: #{transformer_forward.6} parent=11 // pred_check_branch
        %576 = sbr.rel (%p574) target = $region60
      $region59: #{transformer_forward.6} parent=11 // pred_region
        _
      $region60: #{transformer_forward.6} parent=11 // pred_fallthru
        _
      // Predicated region
      $region61: #{transformer_forward.6} parent=11 // pred_check
        %p577 = pneg %p353
      $region62: #{transformer_forward.6} parent=11 // pred_check_branch
        %579 = sbr.rel (%p577) target = $region64
      $region63: #{transformer_forward.6} parent=11 // pred_region
        _
      $region64: #{transformer_forward.6} parent=11 // pred_fallthru
        _
      // Predicated region
      $region65: #{transformer_forward.6} parent=11 // pred_check
        %p580 = pneg %p374
      $region66: #{transformer_forward.6} parent=11 // pred_check_branch
        %582 = sbr.rel (%p580) target = $region68
      $region67: #{transformer_forward.6} parent=11 // pred_region
        _
      $region68: #{transformer_forward.6} parent=11 // pred_fallthru
        _
      // Predicated region
      $region69: #{transformer_forward.6} parent=11 // pred_check
        %p583 = pneg %p395
      $region70: #{transformer_forward.6} parent=11 // pred_check_branch
        %585 = sbr.rel (%p583) target = $region72
      $region71: #{transformer_forward.6} parent=11 // pred_region
        _
      $region72: #{transformer_forward.6} parent=11 // pred_fallthru
        _
      // Predicated region
      $region73: #{transformer_forward.6} parent=11 // pred_check
        %p586 = pneg %p416
      $region74: #{transformer_forward.6} parent=11 // pred_check_branch
        %588 = sbr.rel (%p586) target = $region76
      $region75: #{transformer_forward.6} parent=11 // pred_region
        _
      $region76: #{transformer_forward.6} parent=11 // pred_fallthru
        _
      // Predicated region
      $region77: #{transformer_forward.6} parent=11 // pred_check
        %p589 = pneg %p437
      $region78: #{transformer_forward.6} parent=11 // pred_check_branch
        %591 = sbr.rel (%p589) target = $region80
      $region79: #{transformer_forward.6} parent=11 // pred_region
        _
      $region80: #{transformer_forward.6} parent=11 // pred_fallthru
        _
      // Predicated region
      $region81: #{transformer_forward.6} parent=11 // pred_check
        %p592 = pneg %p458
      $region82: #{transformer_forward.6} parent=11 // pred_check_branch
        %594 = sbr.rel (%p592) target = $region84
      $region83: #{transformer_forward.6} parent=11 // pred_region
        _
      $region84: #{transformer_forward.6} parent=11 // pred_fallthru
        _
      // Predicated region
      $region85: #{transformer_forward.6} parent=11 // pred_check
        %p595 = pneg %p479
      $region86: #{transformer_forward.6} parent=11 // pred_check_branch
        %597 = sbr.rel (%p595) target = $region88
      $region87: #{transformer_forward.6} parent=11 // pred_region
        _
      $region88: #{transformer_forward.6} parent=11 // pred_fallthru
        _
      // Predicated region
      $region89: #{transformer_forward.6} parent=11 // pred_check
        %p598 = pneg %p500
      $region90: #{transformer_forward.6} parent=11 // pred_check_branch
        %600 = sbr.rel (%p598) target = $region92
      $region91: #{transformer_forward.6} parent=11 // pred_region
        _
      $region92: #{transformer_forward.6} parent=11 // pred_fallthru
        _
    $region12: #{transformer_forward.6} parent=5 // pred_fallthru
      _
    %p601 = scmp.lt.s32.totalorder %s28, 2
    // Predicated region
    $region93: #{transformer_forward.6} parent=5 // pred_check
      %p602 = pneg %p601
    $region94: #{transformer_forward.6} parent=5 // pred_check_branch
      %604 = sbr.rel (%p602) target = $region96
    $region95: #{transformer_forward.6} parent=5 // pred_region
      // Predicated region
      $region97: #{transformer_forward.6} parent=95 // pred_check
        %p605 = pneg %p48
      $region98: #{transformer_forward.6} parent=95 // pred_check_branch
        %607 = sbr.rel (%p605) target = $region100
      $region99: #{transformer_forward.6} parent=95 // pred_region
        %p608 = scmp.lt.s32.totalorder %s28, 1
        %s609 = scalar_select %p608, %s28, 1
        %s610 = smul.addr %s609, 8
        %s611 = scalar_lea.vmem %s0, %s610
      $region100: #{transformer_forward.6} parent=95 // pred_fallthru
        _
      // Predicated region
      $region101: #{transformer_forward.6} parent=95 // pred_check
        %p612 = pneg %p74
      $region102: #{transformer_forward.6} parent=95 // pred_check_branch
        %614 = sbr.rel (%p612) target = $region104
      $region103: #{transformer_forward.6} parent=95 // pred_region
        %p615 = scmp.lt.s32.totalorder %s28, 1
        %s616 = scalar_select %p615, %s28, 1
        %s617 = smul.addr %s616, 8
        %s618 = scalar_lea.vmem %s1, %s617
      $region104: #{transformer_forward.6} parent=95 // pred_fallthru
        _
    $region96: #{transformer_forward.6} parent=5 // pred_fallthru
      _
    %p619 = scmp.le.s32.totalorder 1, %s28
    %p620 = scmp.lt.s32.totalorder %s28, 3
    %p621 = pnand %p619, %p620
    %p622 = pneg %p621
    // Predicated region
    $region105: #{transformer_forward.6} parent=5 // pred_check
      _
    $region106: #{transformer_forward.6} parent=5 // pred_check_branch
      %624 = sbr.rel (%p621) target = $region108
    $region107: #{transformer_forward.6} parent=5 // pred_region
      %s625 = ssub.s32 %s28, 1
      %p626 = scmp.lt.s32.totalorder %s33, 1
      %s627 = scalar_select %p626, %s33, 1
      %s628 = smul.addr %s627, 8
      %s629 = scalar_lea.vmem %s0, %s628
      %p630 = pneg %p54
      %p631 = pneg %p51
      %p632 = scmp.lt.s32.totalorder %s33, 1
      %s633 = scalar_select %p632, %s33, 1
      %s634 = smul.addr %s633, 8
      %s635 = scalar_lea.vmem %s1, %s634
      %p636 = pneg %p80
      %p637 = pneg %p77
      %p638 = pneg %p101
      %p639 = pneg %p98
      %p640 = pneg %p122
      %p641 = pneg %p119
      %p642 = pneg %p143
      %p643 = pneg %p140
      %p644 = pneg %p164
      %p645 = pneg %p161
      %p646 = pneg %p185
      %p647 = pneg %p182
      %p648 = pneg %p206
      %p649 = pneg %p203
      %p650 = pneg %p227
      %p651 = pneg %p224
      %p652 = pneg %p248
      %p653 = pneg %p245
      %p654 = pneg %p269
      %p655 = pneg %p266
      %p656 = pneg %p290
      %p657 = pneg %p287
      %p658 = pneg %p311
      %p659 = pneg %p308
      %p660 = pneg %p332
      %p661 = pneg %p329
      %p662 = pneg %p353
      %p663 = pneg %p350
      %p664 = pneg %p374
      %p665 = pneg %p371
      %p666 = pneg %p395
      %p667 = pneg %p392
      %p668 = pneg %p416
      %p669 = pneg %p413
      %p670 = pneg %p437
      %p671 = pneg %p434
      %p672 = pneg %p458
      %p673 = pneg %p455
      %p674 = pneg %p479
      %p675 = pneg %p476
      %p676 = pneg %p500
      %p677 = pneg %p497
      %p678 = pneg %p526
      %p679 = pneg %p523
      %p680 = scmp.lt.s32.totalorder %s33, 1
      %s681 = scalar_select %p680, %s33, 1
      %s682 = smul.addr %s681, 8
      %s683 = scalar_lea.vmem %s22, %s682
      %p684 = scmp.lt.s32.totalorder %s33, 1
      %s685 = scalar_select %p684, %s33, 1
      %s686 = smul.addr %s685, 8
      %s687 = scalar_lea.vmem %s0, %s686
      %p688 = scmp.lt.s32.totalorder %s33, 1
      %s689 = scalar_select %p688, %s33, 1
      %s690 = smul.addr %s689, 8
      %s691 = scalar_lea.vmem %s1, %s690
      %p692 = scmp.lt.s32.totalorder %s33, 1
      %s693 = scalar_select %p692, %s33, 1
      %s694 = smul.addr %s693, 8
      %s695 = scalar_lea.vmem %s22, %s694
      %v697 = vld [vmem:[%s687] sm:$0xff]
      %v698 = vld [vmem:[%s691] sm:$0xff]
      %v699 = vpack.c.bf16 %v697, %v697
      %v700 = vld [vmem:[%s2] sm:$0xf]
      %v701 = vld [vmem:[%s2 + $0x4] sm:$0xf]
      %v702 = vld [vmem:[%s2 + $0x8] sm:$0xf]
      %v703 = vld [vmem:[%s2 + $0xc] sm:$0xf]
      %v704 = vld [vmem:[%s3] sm:$0x1]
      %v706 = vlaneseq
      %v707 = vshrl.u32 %v706, 7
      %v708 = vsub.s32 0, %v707
      %v709 = vrot.slane %v704, %v708
      %v715 = vunpack.c.l.b16 %v700
      %v716 = vunpack.c.l.b16 %v701
      %v717 = vunpack.c.l.b16 %v702
      %v718 = vunpack.c.l.b16 %v703
      %v719 = vpack.c.b16 %v716, %v715
      %v720 = vpack.c.b16 %v718, %v717
      %vm723 = vcmask 261120
      %v725 = vsel %vm723, %v699, 0
      %727 = vmatprep.subr.bf16.mxu0 0
      %728 = vmatpush1.bf16.msra.mxu0 0
      %729 = vmatprep.subr.bf16.mxu0 0
      %730 = vmatpush1.bf16.msra.mxu0 0
      %731 = vmatprep.subr.bf16.mxu0 0
      %732 = vmatpush1.bf16.msra.mxu0 0
      %733 = vmatprep.subr.bf16.mxu0 0
      %734 = vmatpush1.bf16.msra.mxu0 0
      %735 = vmatprep.subr.bf16.mxu0 0
      %736 = vmatpush1.bf16.msra.mxu0 0
      %737 = vmatprep.subr.bf16.mxu0 0
      %738 = vmatpush1.bf16.msra.mxu0 0
      %739 = vmatprep.subr.bf16.mxu0 0
      %740 = vmatpush1.bf16.msra.mxu0 %v720
      %741 = vmatprep.subr.bf16.mxu0 0
      %742 = vmatpush1.bf16.msra.mxu0 %v719
      %743 = vmatprep.subr.bf16.mxu0 0
      %744 = vmatpush2.bf16.msra.mxu0 0
      %745 = vmatprep.subr.bf16.mxu0 0
      %746 = vmatpush2.bf16.msra.mxu0 0
      %747 = vmatprep.subr.bf16.mxu0 0
      %748 = vmatpush2.bf16.msra.mxu0 0
      %749 = vmatprep.subr.bf16.mxu0 0
      %750 = vmatpush2.bf16.msra.mxu0 0
      %751 = vmatprep.subr.bf16.mxu0 0
      %752 = vmatpush2.bf16.msra.mxu0 0
      %753 = vmatprep.subr.bf16.mxu0 0
      %754 = vmatpush2.bf16.msra.mxu0 0
      %755 = vmatprep.subr.bf16.mxu0 0
      %756 = vmatpush2.bf16.msra.mxu0 0
      %757 = vmatprep.subr.bf16.mxu0 0
      %758 = vmatpush2.bf16.msra.mxu0 0
      %759 = vmatprep.mubr.bf16.mxu0 0
      %760 = vmatmul.mubr.bf16.gmra.mxu0 %v725
      %v761 = vpop.f32.mrf.mxu0
      %v762 = vadd.f32 %v709, %v761
      %v763 = vpop.f32.mrf.mxu0
      %v764 = vpop.f32.mrf.mxu0
      %v765 = vpop.f32.mrf.mxu0
      %766 = vdwg.mxu0
      %768 = vrot.lane.b32.xlu0 %v762, 120
      %v769 = vpop.permute.xlu0 %768
      %771 = vrot.lane.b32.xlu0 %v762, 112
      %v772 = vpop.permute.xlu0 %771
      %774 = vrot.lane.b32.xlu0 %v762, 104
      %v775 = vpop.permute.xlu0 %774
      %v777 = vpack.c.bf16 %v762, %v762
      %v778 = vpack.c.bf16 %v769, %v769
      %v779 = vpack.c.bf16 %v772, %v772
      %v780 = vpack.c.bf16 %v775, %v775
      %782 = vrot.lane.b32.xlu0 %v777, 96
      %v783 = vpop.permute.xlu0 %782
      %vm784 = vcmask 64512
      %v786 = vsel %vm784, %v777, 0
      %v789 = vsel %vm784, %v783, 0
      %791 = vmatprep.subr.bf16.mxu0 0
      %792 = vmatpush1.bf16.xpose.msra.mxu0 0
      %793 = vmatprep.subr.bf16.mxu0 0
      %794 = vmatpush1.bf16.xpose.msra.mxu0 0
      %795 = vmatprep.subr.bf16.mxu0 0
      %796 = vmatpush1.bf16.xpose.msra.mxu0 0
      %797 = vmatprep.subr.bf16.mxu0 0
      %798 = vmatpush1.bf16.xpose.msra.mxu0 0
      %799 = vmatprep.subr.bf16.mxu0 0
      %800 = vmatpush1.bf16.xpose.msra.mxu0 0
      %801 = vmatprep.subr.bf16.mxu0 0
      %802 = vmatpush1.bf16.xpose.msra.mxu0 0
      %803 = vmatprep.subr.bf16.mxu0 0
      %804 = vmatpush1.bf16.xpose.msra.mxu0 0
      %805 = vmatprep.subr.bf16.mxu0 0
      %806 = vmatpush1.bf16.xpose.msra.mxu0 %v789
      %807 = vmatprep.subr.bf16.mxu0 0
      %808 = vmatpush2.bf16.xpose.msra.mxu0 0
      %809 = vmatprep.subr.bf16.mxu0 0
      %810 = vmatpush2.bf16.xpose.msra.mxu0 0
      %811 = vmatprep.subr.bf16.mxu0 0
      %812 = vmatpush2.bf16.xpose.msra.mxu0 0
      %813 = vmatprep.subr.bf16.mxu0 0
      %814 = vmatpush2.bf16.xpose.msra.mxu0 0
      %815 = vmatprep.subr.bf16.mxu0 0
      %816 = vmatpush2.bf16.xpose.msra.mxu0 0
      %817 = vmatprep.subr.bf16.mxu0 0
      %818 = vmatpush2.bf16.xpose.msra.mxu0 0
      %819 = vmatprep.subr.bf16.mxu0 0
      %820 = vmatpush2.bf16.xpose.msra.mxu0 0
      %821 = vmatprep.subr.bf16.mxu0 0
      %822 = vmatpush2.bf16.xpose.msra.mxu0 0
      %823 = vmatprep.mubr.bf16.mxu0 0
      %824 = vmatmul.mubr.bf16.gmra.mxu0 %v786
      %v825 = vpop.f32.mrf.mxu0
      %v826 = vadd.f32 0.0, %v825
      %v827 = vpop.f32.mrf.mxu0
      %v828 = vpop.f32.mrf.mxu0
      %v829 = vpop.f32.mrf.mxu0
      %830 = vdwg.mxu0
      %832 = vrot.lane.b32.xlu0 %v778, 96
      %v833 = vpop.permute.xlu0 %832
      %v835 = vsel %vm784, %v778, 0
      %v838 = vsel %vm784, %v833, 0
      %840 = vmatprep.subr.bf16.mxu0 0
      %841 = vmatpush1.bf16.xpose.msra.mxu0 0
      %842 = vmatprep.subr.bf16.mxu0 0
      %843 = vmatpush1.bf16.xpose.msra.mxu0 0
      %844 = vmatprep.subr.bf16.mxu0 0
      %845 = vmatpush1.bf16.xpose.msra.mxu0 0
      %846 = vmatprep.subr.bf16.mxu0 0
      %847 = vmatpush1.bf16.xpose.msra.mxu0 0
      %848 = vmatprep.subr.bf16.mxu0 0
      %849 = vmatpush1.bf16.xpose.msra.mxu0 0
      %850 = vmatprep.subr.bf16.mxu0 0
      %851 = vmatpush1.bf16.xpose.msra.mxu0 0
      %852 = vmatprep.subr.bf16.mxu0 0
      %853 = vmatpush1.bf16.xpose.msra.mxu0 0
      %854 = vmatprep.subr.bf16.mxu0 0
      %855 = vmatpush1.bf16.xpose.msra.mxu0 %v838
      %856 = vmatprep.subr.bf16.mxu0 0
      %857 = vmatpush2.bf16.xpose.msra.mxu0 0
      %858 = vmatprep.subr.bf16.mxu0 0
      %859 = vmatpush2.bf16.xpose.msra.mxu0 0
      %860 = vmatprep.subr.bf16.mxu0 0
      %861 = vmatpush2.bf16.xpose.msra.mxu0 0
      %862 = vmatprep.subr.bf16.mxu0 0
      %863 = vmatpush2.bf16.xpose.msra.mxu0 0
      %864 = vmatprep.subr.bf16.mxu0 0
      %865 = vmatpush2.bf16.xpose.msra.mxu0 0
      %866 = vmatprep.subr.bf16.mxu0 0
      %867 = vmatpush2.bf16.xpose.msra.mxu0 0
      %868 = vmatprep.subr.bf16.mxu0 0
      %869 = vmatpush2.bf16.xpose.msra.mxu0 0
      %870 = vmatprep.subr.bf16.mxu0 0
      %871 = vmatpush2.bf16.xpose.msra.mxu0 0
      %872 = vmatprep.mubr.bf16.mxu0 0
      %873 = vmatmul.mubr.bf16.gmra.mxu0 %v835
      %v874 = vpop.f32.mrf.mxu0
      %v875 = vadd.f32 0.0, %v874
      %v876 = vpop.f32.mrf.mxu0
      %v877 = vpop.f32.mrf.mxu0
      %v878 = vpop.f32.mrf.mxu0
      %879 = vdwg.mxu0
      %881 = vrot.lane.b32.xlu0 %v779, 96
      %v882 = vpop.permute.xlu0 %881
      %v884 = vsel %vm784, %v779, 0
      %v887 = vsel %vm784, %v882, 0
      %889 = vmatprep.subr.bf16.mxu0 0
      %890 = vmatpush1.bf16.xpose.msra.mxu0 0
      %891 = vmatprep.subr.bf16.mxu0 0
      %892 = vmatpush1.bf16.xpose.msra.mxu0 0
      %893 = vmatprep.subr.bf16.mxu0 0
      %894 = vmatpush1.bf16.xpose.msra.mxu0 0
      %895 = vmatprep.subr.bf16.mxu0 0
      %896 = vmatpush1.bf16.xpose.msra.mxu0 0
      %897 = vmatprep.subr.bf16.mxu0 0
      %898 = vmatpush1.bf16.xpose.msra.mxu0 0
      %899 = vmatprep.subr.bf16.mxu0 0
      %900 = vmatpush1.bf16.xpose.msra.mxu0 0
      %901 = vmatprep.subr.bf16.mxu0 0
      %902 = vmatpush1.bf16.xpose.msra.mxu0 0
      %903 = vmatprep.subr.bf16.mxu0 0
      %904 = vmatpush1.bf16.xpose.msra.mxu0 %v887
      %905 = vmatprep.subr.bf16.mxu0 0
      %906 = vmatpush2.bf16.xpose.msra.mxu0 0
      %907 = vmatprep.subr.bf16.mxu0 0
      %908 = vmatpush2.bf16.xpose.msra.mxu0 0
      %909 = vmatprep.subr.bf16.mxu0 0
      %910 = vmatpush2.bf16.xpose.msra.mxu0 0
      %911 = vmatprep.subr.bf16.mxu0 0
      %912 = vmatpush2.bf16.xpose.msra.mxu0 0
      %913 = vmatprep.subr.bf16.mxu0 0
      %914 = vmatpush2.bf16.xpose.msra.mxu0 0
      %915 = vmatprep.subr.bf16.mxu0 0
      %916 = vmatpush2.bf16.xpose.msra.mxu0 0
      %917 = vmatprep.subr.bf16.mxu0 0
      %918 = vmatpush2.bf16.xpose.msra.mxu0 0
      %919 = vmatprep.subr.bf16.mxu0 0
      %920 = vmatpush2.bf16.xpose.msra.mxu0 0
      %921 = vmatprep.mubr.bf16.mxu0 0
      %922 = vmatmul.mubr.bf16.gmra.mxu0 %v884
      %v923 = vpop.f32.mrf.mxu0
      %v924 = vadd.f32 0.0, %v923
      %v925 = vpop.f32.mrf.mxu0
      %v926 = vpop.f32.mrf.mxu0
      %v927 = vpop.f32.mrf.mxu0
      %928 = vdwg.mxu0
      %930 = vrot.lane.b32.xlu0 %v780, 96
      %v931 = vpop.permute.xlu0 %930
      %v933 = vsel %vm784, %v780, 0
      %v936 = vsel %vm784, %v931, 0
      %938 = vmatprep.subr.bf16.mxu0 0
      %939 = vmatpush1.bf16.xpose.msra.mxu0 0
      %940 = vmatprep.subr.bf16.mxu0 0
      %941 = vmatpush1.bf16.xpose.msra.mxu0 0
      %942 = vmatprep.subr.bf16.mxu0 0
      %943 = vmatpush1.bf16.xpose.msra.mxu0 0
      %944 = vmatprep.subr.bf16.mxu0 0
      %945 = vmatpush1.bf16.xpose.msra.mxu0 0
      %946 = vmatprep.subr.bf16.mxu0 0
      %947 = vmatpush1.bf16.xpose.msra.mxu0 0
      %948 = vmatprep.subr.bf16.mxu0 0
      %949 = vmatpush1.bf16.xpose.msra.mxu0 0
      %950 = vmatprep.subr.bf16.mxu0 0
      %951 = vmatpush1.bf16.xpose.msra.mxu0 0
      %952 = vmatprep.subr.bf16.mxu0 0
      %953 = vmatpush1.bf16.xpose.msra.mxu0 %v936
      %954 = vmatprep.subr.bf16.mxu0 0
      %955 = vmatpush2.bf16.xpose.msra.mxu0 0
      %956 = vmatprep.subr.bf16.mxu0 0
      %957 = vmatpush2.bf16.xpose.msra.mxu0 0
      %958 = vmatprep.subr.bf16.mxu0 0
      %959 = vmatpush2.bf16.xpose.msra.mxu0 0
      %960 = vmatprep.subr.bf16.mxu0 0
      %961 = vmatpush2.bf16.xpose.msra.mxu0 0
      %962 = vmatprep.subr.bf16.mxu0 0
      %963 = vmatpush2.bf16.xpose.msra.mxu0 0
      %964 = vmatprep.subr.bf16.mxu0 0
      %965 = vmatpush2.bf16.xpose.msra.mxu0 0
      %966 = vmatprep.subr.bf16.mxu0 0
      %967 = vmatpush2.bf16.xpose.msra.mxu0 0
      %968 = vmatprep.subr.bf16.mxu0 0
      %969 = vmatpush2.bf16.xpose.msra.mxu0 0
      %970 = vmatprep.mubr.bf16.mxu0 0
      %971 = vmatmul.mubr.bf16.gmra.mxu0 %v933
      %v972 = vpop.f32.mrf.mxu0
      %v973 = vadd.f32 0.0, %v972
      %v974 = vpop.f32.mrf.mxu0
      %v975 = vpop.f32.mrf.mxu0
      %v976 = vpop.f32.mrf.mxu0
      %977 = vdwg.mxu0
      %v978 = vmul.f32 %v826, 0.35355338
      %v979 = vmul.f32 %v875, 0.35355338
      %v980 = vmul.f32 %v924, 0.35355338
      %v981 = vmul.f32 %v973, 0.35355338
      %v982 = vlaneseq
      %v983 = vshrl.u32 %v982, 7
      %v984 = vlaneseq
      %v985 = vand.u32 %v984, 127
      %vm986 = vcmp.le.s32.totalorder %v985, %v983
      %v987 = vsel %vm986, 1, 0
      %vm988 = vcmp.eq.s32.totalorder %v987, 1
      %v989 = vsel %vm988, %v978, -1e+09
      %v990 = vsel %vm988, %v979, -1e+09
      %v991 = vsel %vm988, %v980, -1e+09
      %v992 = vsel %vm988, %v981, -1e+09
      %v993 = vsel %vm784, %v989, -inf
      %994 = vmax.xlane.f32.xlu0 %v993
      %v995 = vpop.xlane.xlu0 %994
      %v996 = vsel %vm784, %v990, -inf
      %997 = vmax.xlane.f32.xlu0 %v996
      %v998 = vpop.xlane.xlu0 %997
      %v999 = vsel %vm784, %v991, -inf
      %1000 = vmax.xlane.f32.xlu0 %v999
      %v1001 = vpop.xlane.xlu0 %1000
      %v1002 = vsel %vm784, %v992, -inf
      %1003 = vmax.xlane.f32.xlu0 %v1002
      %v1004 = vpop.xlane.xlu0 %1003
      %v1005 = vsub.f32 %v989, %v995
      %v1006 = vsub.f32 %v990, %v998
      %v1007 = vsub.f32 %v991, %v1001
      %v1008 = vsub.f32 %v992, %v1004
      %v1009 = vmul.f32 %v1005, 1.442695
      %v1010 = vpow.pop %v1009
      %v1011 = vmul.f32 %v1006, 1.442695
      %v1012 = vpow.pop %v1011
      %v1013 = vmul.f32 %v1007, 1.442695
      %v1014 = vpow.pop %v1013
      %v1015 = vmul.f32 %v1008, 1.442695
      %v1016 = vpow.pop %v1015
      %v1017 = vsel %vm784, %v1010, 0.0
      %1018 = vadd.xlane.f32.xlu0 %v1017
      %v1019 = vpop.xlane.xlu0 %1018
      %v1020 = vsel %vm784, %v1012, 0.0
      %1021 = vadd.xlane.f32.xlu0 %v1020
      %v1022 = vpop.xlane.xlu0 %1021
      %v1023 = vsel %vm784, %v1014, 0.0
      %1024 = vadd.xlane.f32.xlu0 %v1023
      %v1025 = vpop.xlane.xlu0 %1024
      %v1026 = vsel %vm784, %v1016, 0.0
      %1027 = vadd.xlane.f32.xlu0 %v1026
      %v1028 = vpop.xlane.xlu0 %1027
      %v1029 = vrcp.pop %v1019
      %v1030 = vrcp.pop %v1022
      %v1031 = vrcp.pop %v1025
      %v1032 = vrcp.pop %v1028
      %v1033 = vmul.f32 %v1010, %v1029
      %v1034 = vmul.f32 %v1012, %v1030
      %v1035 = vmul.f32 %v1014, %v1031
      %v1036 = vmul.f32 %v1016, %v1032
      %v1037 = vpack.c.bf16 %v1033, %v1033
      %v1038 = vpack.c.bf16 %v1034, %v1034
      %v1039 = vpack.c.bf16 %v1035, %v1035
      %v1040 = vpack.c.bf16 %v1036, %v1036
      %1041 = vrot.lane.b32.xlu0 %v777, 64
      %v1042 = vpop.permute.xlu0 %1041
      %v1044 = vsel %vm784, %v1037, 0
      %vm1046 = vcmask 1043456
      %v1048 = vsel %vm1046, %v1042, 0
      %1050 = vmatprep.subr.bf16.mxu0 0
      %1051 = vmatpush1.bf16.msra.mxu0 0
      %1052 = vmatprep.subr.bf16.mxu0 0
      %1053 = vmatpush1.bf16.msra.mxu0 0
      %1054 = vmatprep.subr.bf16.mxu0 0
      %1055 = vmatpush1.bf16.msra.mxu0 0
      %1056 = vmatprep.subr.bf16.mxu0 0
      %1057 = vmatpush1.bf16.msra.mxu0 0
      %1058 = vmatprep.subr.bf16.mxu0 0
      %1059 = vmatpush1.bf16.msra.mxu0 0
      %1060 = vmatprep.subr.bf16.mxu0 0
      %1061 = vmatpush1.bf16.msra.mxu0 0
      %1062 = vmatprep.subr.bf16.mxu0 0
      %1063 = vmatpush1.bf16.msra.mxu0 0
      %1064 = vmatprep.subr.bf16.mxu0 0
      %1065 = vmatpush1.bf16.msra.mxu0 %v1048
      %1066 = vmatprep.subr.bf16.mxu0 0
      %1067 = vmatpush2.bf16.msra.mxu0 0
      %1068 = vmatprep.subr.bf16.mxu0 0
      %1069 = vmatpush2.bf16.msra.mxu0 0
      %1070 = vmatprep.subr.bf16.mxu0 0
      %1071 = vmatpush2.bf16.msra.mxu0 0
      %1072 = vmatprep.subr.bf16.mxu0 0
      %1073 = vmatpush2.bf16.msra.mxu0 0
      %1074 = vmatprep.subr.bf16.mxu0 0
      %1075 = vmatpush2.bf16.msra.mxu0 0
      %1076 = vmatprep.subr.bf16.mxu0 0
      %1077 = vmatpush2.bf16.msra.mxu0 0
      %1078 = vmatprep.subr.bf16.mxu0 0
      %1079 = vmatpush2.bf16.msra.mxu0 0
      %1080 = vmatprep.subr.bf16.mxu0 0
      %1081 = vmatpush2.bf16.msra.mxu0 0
      %1082 = vmatprep.mubr.bf16.mxu0 0
      %1083 = vmatmul.mubr.bf16.gmra.mxu0 %v1044
      %v1084 = vpop.f32.mrf.mxu0
      %v1085 = vadd.f32 0.0, %v1084
      %v1086 = vpop.f32.mrf.mxu0
      %v1087 = vpop.f32.mrf.mxu0
      %v1088 = vpop.f32.mrf.mxu0
      %1089 = vdwg.mxu0
      %1090 = vrot.lane.b32.xlu0 %v778, 64
      %v1091 = vpop.permute.xlu0 %1090
      %v1093 = vsel %vm784, %v1038, 0
      %v1096 = vsel %vm1046, %v1091, 0
      %1098 = vmatprep.subr.bf16.mxu0 0
      %1099 = vmatpush1.bf16.msra.mxu0 0
      %1100 = vmatprep.subr.bf16.mxu0 0
      %1101 = vmatpush1.bf16.msra.mxu0 0
      %1102 = vmatprep.subr.bf16.mxu0 0
      %1103 = vmatpush1.bf16.msra.mxu0 0
      %1104 = vmatprep.subr.bf16.mxu0 0
      %1105 = vmatpush1.bf16.msra.mxu0 0
      %1106 = vmatprep.subr.bf16.mxu0 0
      %1107 = vmatpush1.bf16.msra.mxu0 0
      %1108 = vmatprep.subr.bf16.mxu0 0
      %1109 = vmatpush1.bf16.msra.mxu0 0
      %1110 = vmatprep.subr.bf16.mxu0 0
      %1111 = vmatpush1.bf16.msra.mxu0 0
      %1112 = vmatprep.subr.bf16.mxu0 0
      %1113 = vmatpush1.bf16.msra.mxu0 %v1096
      %1114 = vmatprep.subr.bf16.mxu0 0
      %1115 = vmatpush2.bf16.msra.mxu0 0
      %1116 = vmatprep.subr.bf16.mxu0 0
      %1117 = vmatpush2.bf16.msra.mxu0 0
      %1118 = vmatprep.subr.bf16.mxu0 0
      %1119 = vmatpush2.bf16.msra.mxu0 0
      %1120 = vmatprep.subr.bf16.mxu0 0
      %1121 = vmatpush2.bf16.msra.mxu0 0
      %1122 = vmatprep.subr.bf16.mxu0 0
      %1123 = vmatpush2.bf16.msra.mxu0 0
      %1124 = vmatprep.subr.bf16.mxu0 0
      %1125 = vmatpush2.bf16.msra.mxu0 0
      %1126 = vmatprep.subr.bf16.mxu0 0
      %1127 = vmatpush2.bf16.msra.mxu0 0
      %1128 = vmatprep.subr.bf16.mxu0 0
      %1129 = vmatpush2.bf16.msra.mxu0 0
      %1130 = vmatprep.mubr.bf16.mxu0 0
      %1131 = vmatmul.mubr.bf16.gmra.mxu0 %v1093
      %v1132 = vpop.f32.mrf.mxu0
      %v1133 = vadd.f32 0.0, %v1132
      %v1134 = vpop.f32.mrf.mxu0
      %v1135 = vpop.f32.mrf.mxu0
      %v1136 = vpop.f32.mrf.mxu0
      %1137 = vdwg.mxu0
      %1138 = vrot.lane.b32.xlu0 %v779, 64
      %v1139 = vpop.permute.xlu0 %1138
      %v1141 = vsel %vm784, %v1039, 0
      %v1144 = vsel %vm1046, %v1139, 0
      %1146 = vmatprep.subr.bf16.mxu0 0
      %1147 = vmatpush1.bf16.msra.mxu0 0
      %1148 = vmatprep.subr.bf16.mxu0 0
      %1149 = vmatpush1.bf16.msra.mxu0 0
      %1150 = vmatprep.subr.bf16.mxu0 0
      %1151 = vmatpush1.bf16.msra.mxu0 0
      %1152 = vmatprep.subr.bf16.mxu0 0
      %1153 = vmatpush1.bf16.msra.mxu0 0
      %1154 = vmatprep.subr.bf16.mxu0 0
      %1155 = vmatpush1.bf16.msra.mxu0 0
      %1156 = vmatprep.subr.bf16.mxu0 0
      %1157 = vmatpush1.bf16.msra.mxu0 0
      %1158 = vmatprep.subr.bf16.mxu0 0
      %1159 = vmatpush1.bf16.msra.mxu0 0
      %1160 = vmatprep.subr.bf16.mxu0 0
      %1161 = vmatpush1.bf16.msra.mxu0 %v1144
      %1162 = vmatprep.subr.bf16.mxu0 0
      %1163 = vmatpush2.bf16.msra.mxu0 0
      %1164 = vmatprep.subr.bf16.mxu0 0
      %1165 = vmatpush2.bf16.msra.mxu0 0
      %1166 = vmatprep.subr.bf16.mxu0 0
      %1167 = vmatpush2.bf16.msra.mxu0 0
      %1168 = vmatprep.subr.bf16.mxu0 0
      %1169 = vmatpush2.bf16.msra.mxu0 0
      %1170 = vmatprep.subr.bf16.mxu0 0
      %1171 = vmatpush2.bf16.msra.mxu0 0
      %1172 = vmatprep.subr.bf16.mxu0 0
      %1173 = vmatpush2.bf16.msra.mxu0 0
      %1174 = vmatprep.subr.bf16.mxu0 0
      %1175 = vmatpush2.bf16.msra.mxu0 0
      %1176 = vmatprep.subr.bf16.mxu0 0
      %1177 = vmatpush2.bf16.msra.mxu0 0
      %1178 = vmatprep.mubr.bf16.mxu0 0
      %1179 = vmatmul.mubr.bf16.gmra.mxu0 %v1141
      %v1180 = vpop.f32.mrf.mxu0
      %v1181 = vadd.f32 0.0, %v1180
      %v1182 = vpop.f32.mrf.mxu0
      %v1183 = vpop.f32.mrf.mxu0
      %v1184 = vpop.f32.mrf.mxu0
      %1185 = vdwg.mxu0
      %1186 = vrot.lane.b32.xlu0 %v780, 64
      %v1187 = vpop.permute.xlu0 %1186
      %v1189 = vsel %vm784, %v1040, 0
      %v1192 = vsel %vm1046, %v1187, 0
      %1194 = vmatprep.subr.bf16.mxu0 0
      %1195 = vmatpush1.bf16.msra.mxu0 0
      %1196 = vmatprep.subr.bf16.mxu0 0
      %1197 = vmatpush1.bf16.msra.mxu0 0
      %1198 = vmatprep.subr.bf16.mxu0 0
      %1199 = vmatpush1.bf16.msra.mxu0 0
      %1200 = vmatprep.subr.bf16.mxu0 0
      %1201 = vmatpush1.bf16.msra.mxu0 0
      %1202 = vmatprep.subr.bf16.mxu0 0
      %1203 = vmatpush1.bf16.msra.mxu0 0
      %1204 = vmatprep.subr.bf16.mxu0 0
      %1205 = vmatpush1.bf16.msra.mxu0 0
      %1206 = vmatprep.subr.bf16.mxu0 0
      %1207 = vmatpush1.bf16.msra.mxu0 0
      %1208 = vmatprep.subr.bf16.mxu0 0
      %1209 = vmatpush1.bf16.msra.mxu0 %v1192
      %1210 = vmatprep.subr.bf16.mxu0 0
      %1211 = vmatpush2.bf16.msra.mxu0 0
      %1212 = vmatprep.subr.bf16.mxu0 0
      %1213 = vmatpush2.bf16.msra.mxu0 0
      %1214 = vmatprep.subr.bf16.mxu0 0
      %1215 = vmatpush2.bf16.msra.mxu0 0
      %1216 = vmatprep.subr.bf16.mxu0 0
      %1217 = vmatpush2.bf16.msra.mxu0 0
      %1218 = vmatprep.subr.bf16.mxu0 0
      %1219 = vmatpush2.bf16.msra.mxu0 0
      %1220 = vmatprep.subr.bf16.mxu0 0
      %1221 = vmatpush2.bf16.msra.mxu0 0
      %1222 = vmatprep.subr.bf16.mxu0 0
      %1223 = vmatpush2.bf16.msra.mxu0 0
      %1224 = vmatprep.subr.bf16.mxu0 0
      %1225 = vmatpush2.bf16.msra.mxu0 0
      %1226 = vmatprep.mubr.bf16.mxu0 0
      %1227 = vmatmul.mubr.bf16.gmra.mxu0 %v1189
      %v1228 = vpop.f32.mrf.mxu0
      %v1229 = vadd.f32 0.0, %v1228
      %v1230 = vpop.f32.mrf.mxu0
      %v1231 = vpop.f32.mrf.mxu0
      %v1232 = vpop.f32.mrf.mxu0
      %1233 = vdwg.mxu0
      %1235 = vrot.lane.b32.xlu0 %v1133, 8
      %v1236 = vpop.permute.xlu0 %1235
      %1239 = vrot.lane.b32.xlu0 %v1181, 16
      %v1240 = vpop.permute.xlu0 %1239
      %1243 = vrot.lane.b32.xlu0 %v1229, 24
      %v1244 = vpop.permute.xlu0 %1243
      %v1246 = vsel %vm784, %v1085, %v1236
      %vm1247 = vcmask 130048
      %v1248 = vsel %vm1247, %v1246, %v1240
      %vm1249 = vcmask 195584
      %v1250 = vsel %vm1249, %v1248, %v1244
      %v1251 = vpack.c.bf16 %v1250, %v1250
      %v1252 = vld [vmem:[%s4] sm:$0xf]
      %v1253 = vld [vmem:[%s4 + $0x4] sm:$0xf]
      %v1254 = vld [vmem:[%s4 + $0x8] sm:$0xf]
      %v1255 = vld [vmem:[%s4 + $0xc] sm:$0xf]
      %v1256 = vld [vmem:[%s5] sm:$0x1]
      %v1258 = vlaneseq
      %v1259 = vshrl.u32 %v1258, 7
      %v1260 = vsub.s32 0, %v1259
      %v1261 = vrot.slane %v1256, %v1260
      %v1267 = vunpack.c.l.b16 %v1252
      %v1268 = vunpack.c.l.b16 %v1253
      %v1269 = vunpack.c.l.b16 %v1254
      %v1270 = vunpack.c.l.b16 %v1255
      %v1271 = vpack.c.b16 %v1268, %v1267
      %v1272 = vpack.c.b16 %v1270, %v1269
      %v1276 = vsel %vm723, %v1251, 0
      %1278 = vmatprep.subr.bf16.mxu0 0
      %1279 = vmatpush1.bf16.msra.mxu0 0
      %1280 = vmatprep.subr.bf16.mxu0 0
      %1281 = vmatpush1.bf16.msra.mxu0 0
      %1282 = vmatprep.subr.bf16.mxu0 0
      %1283 = vmatpush1.bf16.msra.mxu0 0
      %1284 = vmatprep.subr.bf16.mxu0 0
      %1285 = vmatpush1.bf16.msra.mxu0 0
      %1286 = vmatprep.subr.bf16.mxu0 0
      %1287 = vmatpush1.bf16.msra.mxu0 0
      %1288 = vmatprep.subr.bf16.mxu0 0
      %1289 = vmatpush1.bf16.msra.mxu0 0
      %1290 = vmatprep.subr.bf16.mxu0 0
      %1291 = vmatpush1.bf16.msra.mxu0 %v1272
      %1292 = vmatprep.subr.bf16.mxu0 0
      %1293 = vmatpush1.bf16.msra.mxu0 %v1271
      %1294 = vmatprep.subr.bf16.mxu0 0
      %1295 = vmatpush2.bf16.msra.mxu0 0
      %1296 = vmatprep.subr.bf16.mxu0 0
      %1297 = vmatpush2.bf16.msra.mxu0 0
      %1298 = vmatprep.subr.bf16.mxu0 0
      %1299 = vmatpush2.bf16.msra.mxu0 0
      %1300 = vmatprep.subr.bf16.mxu0 0
      %1301 = vmatpush2.bf16.msra.mxu0 0
      %1302 = vmatprep.subr.bf16.mxu0 0
      %1303 = vmatpush2.bf16.msra.mxu0 0
      %1304 = vmatprep.subr.bf16.mxu0 0
      %1305 = vmatpush2.bf16.msra.mxu0 0
      %1306 = vmatprep.subr.bf16.mxu0 0
      %1307 = vmatpush2.bf16.msra.mxu0 0
      %1308 = vmatprep.subr.bf16.mxu0 0
      %1309 = vmatpush2.bf16.msra.mxu0 0
      %1310 = vmatprep.mubr.bf16.mxu0 0
      %1311 = vmatmul.mubr.bf16.gmra.mxu0 %v1276
      %v1312 = vpop.f32.mrf.mxu0
      %v1313 = vadd.f32 %v1261, %v1312
      %v1314 = vpop.f32.mrf.mxu0
      %v1315 = vpop.f32.mrf.mxu0
      %v1316 = vpop.f32.mrf.mxu0
      %1317 = vdwg.mxu0
      %v1318 = vadd.f32 %v697, %v1313
      %v1319 = vld [vmem:[%s6] sm:$0x1]
      %v1320 = vld [vmem:[%s7] sm:$0x1]
      %v1321 = vsel %vm723, %v1318, 0.0
      %1322 = vadd.xlane.f32.xlu0 %v1321
      %v1323 = vpop.xlane.xlu0 %1322
      %v1324 = vrcp.pop 32.0
      %v1325 = vmul.f32 %v1323, %v1324
      %v1326 = vsub.f32 %v1318, %v1325
      %v1327 = vmul.f32 %v1326, %v1326
      %v1328 = vsel %vm723, %v1327, 0.0
      %1329 = vadd.xlane.f32.xlu0 %v1328
      %v1330 = vpop.xlane.xlu0 %1329
      %v1331 = vmul.f32 %v1330, %v1324
      %v1332 = vadd.f32 %v1331, 1e-05
      %v1333 = vrsqrt.pop %v1332
      %v1334 = vmul.f32 %v1326, %v1333
      %v1336 = vlaneseq
      %v1337 = vshrl.u32 %v1336, 7
      %v1338 = vsub.s32 0, %v1337
      %v1339 = vrot.slane %v1319, %v1338
      %v1341 = vmul.f32 %v1334, %v1339
      %v1343 = vlaneseq
      %v1344 = vshrl.u32 %v1343, 7
      %v1345 = vsub.s32 0, %v1344
      %v1346 = vrot.slane %v1320, %v1345
      %v1348 = vadd.f32 %v1341, %v1346
      %v1349 = vpack.c.bf16 %v1348, %v1348
      %v1350 = vld [vmem:[%s8] sm:$0xf]
      %v1351 = vld [vmem:[%s8 + $0x4] sm:$0xf]
      %v1352 = vld [vmem:[%s8 + $0x8] sm:$0xf]
      %v1353 = vld [vmem:[%s8 + $0xc] sm:$0xf]
      %v1354 = vld [vmem:[%s9] sm:$0x1]
      %v1356 = vlaneseq
      %v1357 = vshrl.u32 %v1356, 7
      %v1358 = vsub.s32 0, %v1357
      %v1359 = vrot.slane %v1354, %v1358
      %v1365 = vunpack.c.l.b16 %v1350
      %v1366 = vunpack.c.l.b16 %v1351
      %v1367 = vunpack.c.l.b16 %v1352
      %v1368 = vunpack.c.l.b16 %v1353
      %v1369 = vpack.c.b16 %v1366, %v1365
      %v1370 = vpack.c.b16 %v1368, %v1367
      %v1374 = vsel %vm723, %v1349, 0
      %1376 = vmatprep.subr.bf16.mxu0 0
      %1377 = vmatpush1.bf16.msra.mxu0 0
      %1378 = vmatprep.subr.bf16.mxu0 0
      %1379 = vmatpush1.bf16.msra.mxu0 0
      %1380 = vmatprep.subr.bf16.mxu0 0
      %1381 = vmatpush1.bf16.msra.mxu0 0
      %1382 = vmatprep.subr.bf16.mxu0 0
      %1383 = vmatpush1.bf16.msra.mxu0 0
      %1384 = vmatprep.subr.bf16.mxu0 0
      %1385 = vmatpush1.bf16.msra.mxu0 0
      %1386 = vmatprep.subr.bf16.mxu0 0
      %1387 = vmatpush1.bf16.msra.mxu0 0
      %1388 = vmatprep.subr.bf16.mxu0 0
      %1389 = vmatpush1.bf16.msra.mxu0 %v1370
      %1390 = vmatprep.subr.bf16.mxu0 0
      %1391 = vmatpush1.bf16.msra.mxu0 %v1369
      %1392 = vmatprep.subr.bf16.mxu0 0
      %1393 = vmatpush2.bf16.msra.mxu0 0
      %1394 = vmatprep.subr.bf16.mxu0 0
      %1395 = vmatpush2.bf16.msra.mxu0 0
      %1396 = vmatprep.subr.bf16.mxu0 0
      %1397 = vmatpush2.bf16.msra.mxu0 0
      %1398 = vmatprep.subr.bf16.mxu0 0
      %1399 = vmatpush2.bf16.msra.mxu0 0
      %1400 = vmatprep.subr.bf16.mxu0 0
      %1401 = vmatpush2.bf16.msra.mxu0 0
      %1402 = vmatprep.subr.bf16.mxu0 0
      %1403 = vmatpush2.bf16.msra.mxu0 0
      %1404 = vmatprep.subr.bf16.mxu0 0
      %1405 = vmatpush2.bf16.msra.mxu0 0
      %1406 = vmatprep.subr.bf16.mxu0 0
      %1407 = vmatpush2.bf16.msra.mxu0 0
      %1408 = vmatprep.mubr.bf16.mxu0 0
      %1409 = vmatmul.mubr.bf16.gmra.mxu0 %v1374
      %v1410 = vpop.f32.mrf.mxu0
      %v1411 = vadd.f32 %v1359, %v1410
      %v1412 = vpop.f32.mrf.mxu0
      %v1413 = vpop.f32.mrf.mxu0
      %v1414 = vpop.f32.mrf.mxu0
      %1415 = vdwg.mxu0
      %v1416 = vpack.c.bf16 %v698, %v698
      %v1417 = vld [vmem:[%s10] sm:$0xf]
      %v1418 = vld [vmem:[%s10 + $0x4] sm:$0xf]
      %v1419 = vld [vmem:[%s10 + $0x8] sm:$0xf]
      %v1420 = vld [vmem:[%s10 + $0xc] sm:$0xf]
      %v1421 = vld [vmem:[%s11] sm:$0x1]
      %v1423 = vlaneseq
      %v1424 = vshrl.u32 %v1423, 7
      %v1425 = vsub.s32 0, %v1424
      %v1426 = vrot.slane %v1421, %v1425
      %v1432 = vunpack.c.l.b16 %v1417
      %v1433 = vunpack.c.l.b16 %v1418
      %v1434 = vunpack.c.l.b16 %v1419
      %v1435 = vunpack.c.l.b16 %v1420
      %v1436 = vpack.c.b16 %v1433, %v1432
      %v1437 = vpack.c.b16 %v1435, %v1434
      %v1441 = vsel %vm723, %v1416, 0
      %1443 = vmatprep.subr.bf16.mxu0 0
      %1444 = vmatpush1.bf16.msra.mxu0 0
      %1445 = vmatprep.subr.bf16.mxu0 0
      %1446 = vmatpush1.bf16.msra.mxu0 0
      %1447 = vmatprep.subr.bf16.mxu0 0
      %1448 = vmatpush1.bf16.msra.mxu0 0
      %1449 = vmatprep.subr.bf16.mxu0 0
      %1450 = vmatpush1.bf16.msra.mxu0 0
      %1451 = vmatprep.subr.bf16.mxu0 0
      %1452 = vmatpush1.bf16.msra.mxu0 0
      %1453 = vmatprep.subr.bf16.mxu0 0
      %1454 = vmatpush1.bf16.msra.mxu0 0
      %1455 = vmatprep.subr.bf16.mxu0 0
      %1456 = vmatpush1.bf16.msra.mxu0 %v1437
      %1457 = vmatprep.subr.bf16.mxu0 0
      %1458 = vmatpush1.bf16.msra.mxu0 %v1436
      %1459 = vmatprep.subr.bf16.mxu0 0
      %1460 = vmatpush2.bf16.msra.mxu0 0
      %1461 = vmatprep.subr.bf16.mxu0 0
      %1462 = vmatpush2.bf16.msra.mxu0 0
      %1463 = vmatprep.subr.bf16.mxu0 0
      %1464 = vmatpush2.bf16.msra.mxu0 0
      %1465 = vmatprep.subr.bf16.mxu0 0
      %1466 = vmatpush2.bf16.msra.mxu0 0
      %1467 = vmatprep.subr.bf16.mxu0 0
      %1468 = vmatpush2.bf16.msra.mxu0 0
      %1469 = vmatprep.subr.bf16.mxu0 0
      %1470 = vmatpush2.bf16.msra.mxu0 0
      %1471 = vmatprep.subr.bf16.mxu0 0
      %1472 = vmatpush2.bf16.msra.mxu0 0
      %1473 = vmatprep.subr.bf16.mxu0 0
      %1474 = vmatpush2.bf16.msra.mxu0 0
      %1475 = vmatprep.mubr.bf16.mxu0 0
      %1476 = vmatmul.mubr.bf16.gmra.mxu0 %v1441
      %v1477 = vpop.f32.mrf.mxu0
      %v1478 = vadd.f32 %v1426, %v1477
      %v1479 = vpop.f32.mrf.mxu0
      %v1480 = vpop.f32.mrf.mxu0
      %v1481 = vpop.f32.mrf.mxu0
      %1482 = vdwg.mxu0
      %1484 = vrot.lane.b32.xlu0 %v1411, 120
      %v1485 = vpop.permute.xlu0 %1484
      %1487 = vrot.lane.b32.xlu0 %v1411, 112
      %v1488 = vpop.permute.xlu0 %1487
      %1490 = vrot.lane.b32.xlu0 %v1411, 104
      %v1491 = vpop.permute.xlu0 %1490
      %v1493 = vpack.c.bf16 %v1411, %v1411
      %v1494 = vpack.c.bf16 %v1485, %v1485
      %v1495 = vpack.c.bf16 %v1488, %v1488
      %v1496 = vpack.c.bf16 %v1491, %v1491
      %1498 = vrot.lane.b32.xlu0 %v1478, 120
      %v1499 = vpop.permute.xlu0 %1498
      %1501 = vrot.lane.b32.xlu0 %v1478, 112
      %v1502 = vpop.permute.xlu0 %1501
      %1504 = vrot.lane.b32.xlu0 %v1478, 104
      %v1505 = vpop.permute.xlu0 %1504
      %v1507 = vpack.c.bf16 %v1478, %v1478
      %v1508 = vpack.c.bf16 %v1499, %v1499
      %v1509 = vpack.c.bf16 %v1502, %v1502
      %v1510 = vpack.c.bf16 %v1505, %v1505
      %v1512 = vsel %vm784, %v1493, 0
      %v1515 = vsel %vm784, %v1507, 0
      %1517 = vmatprep.subr.bf16.mxu0 0
      %1518 = vmatpush1.bf16.xpose.msra.mxu0 0
      %1519 = vmatprep.subr.bf16.mxu0 0
      %1520 = vmatpush1.bf16.xpose.msra.mxu0 0
      %1521 = vmatprep.subr.bf16.mxu0 0
      %1522 = vmatpush1.bf16.xpose.msra.mxu0 0
      %1523 = vmatprep.subr.bf16.mxu0 0
      %1524 = vmatpush1.bf16.xpose.msra.mxu0 0
      %1525 = vmatprep.subr.bf16.mxu0 0
      %1526 = vmatpush1.bf16.xpose.msra.mxu0 0
      %1527 = vmatprep.subr.bf16.mxu0 0
      %1528 = vmatpush1.bf16.xpose.msra.mxu0 0
      %1529 = vmatprep.subr.bf16.mxu0 0
      %1530 = vmatpush1.bf16.xpose.msra.mxu0 0
      %1531 = vmatprep.subr.bf16.mxu0 0
      %1532 = vmatpush1.bf16.xpose.msra.mxu0 %v1515
      %1533 = vmatprep.subr.bf16.mxu0 0
      %1534 = vmatpush2.bf16.xpose.msra.mxu0 0
      %1535 = vmatprep.subr.bf16.mxu0 0
      %1536 = vmatpush2.bf16.xpose.msra.mxu0 0
      %1537 = vmatprep.subr.bf16.mxu0 0
      %1538 = vmatpush2.bf16.xpose.msra.mxu0 0
      %1539 = vmatprep.subr.bf16.mxu0 0
      %1540 = vmatpush2.bf16.xpose.msra.mxu0 0
      %1541 = vmatprep.subr.bf16.mxu0 0
      %1542 = vmatpush2.bf16.xpose.msra.mxu0 0
      %1543 = vmatprep.subr.bf16.mxu0 0
      %1544 = vmatpush2.bf16.xpose.msra.mxu0 0
      %1545 = vmatprep.subr.bf16.mxu0 0
      %1546 = vmatpush2.bf16.xpose.msra.mxu0 0
      %1547 = vmatprep.subr.bf16.mxu0 0
      %1548 = vmatpush2.bf16.xpose.msra.mxu0 0
      %1549 = vmatprep.mubr.bf16.mxu0 0
      %1550 = vmatmul.mubr.bf16.gmra.mxu0 %v1512
      %v1551 = vpop.f32.mrf.mxu0
      %v1552 = vadd.f32 0.0, %v1551
      %v1553 = vpop.f32.mrf.mxu0
      %v1554 = vpop.f32.mrf.mxu0
      %v1555 = vpop.f32.mrf.mxu0
      %1556 = vdwg.mxu0
      %v1558 = vsel %vm784, %v1494, 0
      %v1561 = vsel %vm784, %v1508, 0
      %1563 = vmatprep.subr.bf16.mxu0 0
      %1564 = vmatpush1.bf16.xpose.msra.mxu0 0
      %1565 = vmatprep.subr.bf16.mxu0 0
      %1566 = vmatpush1.bf16.xpose.msra.mxu0 0
      %1567 = vmatprep.subr.bf16.mxu0 0
      %1568 = vmatpush1.bf16.xpose.msra.mxu0 0
      %1569 = vmatprep.subr.bf16.mxu0 0
      %1570 = vmatpush1.bf16.xpose.msra.mxu0 0
      %1571 = vmatprep.subr.bf16.mxu0 0
      %1572 = vmatpush1.bf16.xpose.msra.mxu0 0
      %1573 = vmatprep.subr.bf16.mxu0 0
      %1574 = vmatpush1.bf16.xpose.msra.mxu0 0
      %1575 = vmatprep.subr.bf16.mxu0 0
      %1576 = vmatpush1.bf16.xpose.msra.mxu0 0
      %1577 = vmatprep.subr.bf16.mxu0 0
      %1578 = vmatpush1.bf16.xpose.msra.mxu0 %v1561
      %1579 = vmatprep.subr.bf16.mxu0 0
      %1580 = vmatpush2.bf16.xpose.msra.mxu0 0
      %1581 = vmatprep.subr.bf16.mxu0 0
      %1582 = vmatpush2.bf16.xpose.msra.mxu0 0
      %1583 = vmatprep.subr.bf16.mxu0 0
      %1584 = vmatpush2.bf16.xpose.msra.mxu0 0
      %1585 = vmatprep.subr.bf16.mxu0 0
      %1586 = vmatpush2.bf16.xpose.msra.mxu0 0
      %1587 = vmatprep.subr.bf16.mxu0 0
      %1588 = vmatpush2.bf16.xpose.msra.mxu0 0
      %1589 = vmatprep.subr.bf16.mxu0 0
      %1590 = vmatpush2.bf16.xpose.msra.mxu0 0
      %1591 = vmatprep.subr.bf16.mxu0 0
      %1592 = vmatpush2.bf16.xpose.msra.mxu0 0
      %1593 = vmatprep.subr.bf16.mxu0 0
      %1594 = vmatpush2.bf16.xpose.msra.mxu0 0
      %1595 = vmatprep.mubr.bf16.mxu0 0
      %1596 = vmatmul.mubr.bf16.gmra.mxu0 %v1558
      %v1597 = vpop.f32.mrf.mxu0
      %v1598 = vadd.f32 0.0, %v1597
      %v1599 = vpop.f32.mrf.mxu0
      %v1600 = vpop.f32.mrf.mxu0
      %v1601 = vpop.f32.mrf.mxu0
      %1602 = vdwg.mxu0
      %v1604 = vsel %vm784, %v1495, 0
      %v1607 = vsel %vm784, %v1509, 0
      %1609 = vmatprep.subr.bf16.mxu0 0
      %1610 = vmatpush1.bf16.xpose.msra.mxu0 0
      %1611 = vmatprep.subr.bf16.mxu0 0
      %1612 = vmatpush1.bf16.xpose.msra.mxu0 0
      %1613 = vmatprep.subr.bf16.mxu0 0
      %1614 = vmatpush1.bf16.xpose.msra.mxu0 0
      %1615 = vmatprep.subr.bf16.mxu0 0
      %1616 = vmatpush1.bf16.xpose.msra.mxu0 0
      %1617 = vmatprep.subr.bf16.mxu0 0
      %1618 = vmatpush1.bf16.xpose.msra.mxu0 0
      %1619 = vmatprep.subr.bf16.mxu0 0
      %1620 = vmatpush1.bf16.xpose.msra.mxu0 0
      %1621 = vmatprep.subr.bf16.mxu0 0
      %1622 = vmatpush1.bf16.xpose.msra.mxu0 0
      %1623 = vmatprep.subr.bf16.mxu0 0
      %1624 = vmatpush1.bf16.xpose.msra.mxu0 %v1607
      %1625 = vmatprep.subr.bf16.mxu0 0
      %1626 = vmatpush2.bf16.xpose.msra.mxu0 0
      %1627 = vmatprep.subr.bf16.mxu0 0
      %1628 = vmatpush2.bf16.xpose.msra.mxu0 0
      %1629 = vmatprep.subr.bf16.mxu0 0
      %1630 = vmatpush2.bf16.xpose.msra.mxu0 0
      %1631 = vmatprep.subr.bf16.mxu0 0
      %1632 = vmatpush2.bf16.xpose.msra.mxu0 0
      %1633 = vmatprep.subr.bf16.mxu0 0
      %1634 = vmatpush2.bf16.xpose.msra.mxu0 0
      %1635 = vmatprep.subr.bf16.mxu0 0
      %1636 = vmatpush2.bf16.xpose.msra.mxu0 0
      %1637 = vmatprep.subr.bf16.mxu0 0
      %1638 = vmatpush2.bf16.xpose.msra.mxu0 0
      %1639 = vmatprep.subr.bf16.mxu0 0
      %1640 = vmatpush2.bf16.xpose.msra.mxu0 0
      %1641 = vmatprep.mubr.bf16.mxu0 0
      %1642 = vmatmul.mubr.bf16.gmra.mxu0 %v1604
      %v1643 = vpop.f32.mrf.mxu0
      %v1644 = vadd.f32 0.0, %v1643
      %v1645 = vpop.f32.mrf.mxu0
      %v1646 = vpop.f32.mrf.mxu0
      %v1647 = vpop.f32.mrf.mxu0
      %1648 = vdwg.mxu0
      %v1650 = vsel %vm784, %v1496, 0
      %v1653 = vsel %vm784, %v1510, 0
      %1655 = vmatprep.subr.bf16.mxu0 0
      %1656 = vmatpush1.bf16.xpose.msra.mxu0 0
      %1657 = vmatprep.subr.bf16.mxu0 0
      %1658 = vmatpush1.bf16.xpose.msra.mxu0 0
      %1659 = vmatprep.subr.bf16.mxu0 0
      %1660 = vmatpush1.bf16.xpose.msra.mxu0 0
      %1661 = vmatprep.subr.bf16.mxu0 0
      %1662 = vmatpush1.bf16.xpose.msra.mxu0 0
      %1663 = vmatprep.subr.bf16.mxu0 0
      %1664 = vmatpush1.bf16.xpose.msra.mxu0 0
      %1665 = vmatprep.subr.bf16.mxu0 0
      %1666 = vmatpush1.bf16.xpose.msra.mxu0 0
      %1667 = vmatprep.subr.bf16.mxu0 0
      %1668 = vmatpush1.bf16.xpose.msra.mxu0 0
      %1669 = vmatprep.subr.bf16.mxu0 0
      %1670 = vmatpush1.bf16.xpose.msra.mxu0 %v1653
      %1671 = vmatprep.subr.bf16.mxu0 0
      %1672 = vmatpush2.bf16.xpose.msra.mxu0 0
      %1673 = vmatprep.subr.bf16.mxu0 0
      %1674 = vmatpush2.bf16.xpose.msra.mxu0 0
      %1675 = vmatprep.subr.bf16.mxu0 0
      %1676 = vmatpush2.bf16.xpose.msra.mxu0 0
      %1677 = vmatprep.subr.bf16.mxu0 0
      %1678 = vmatpush2.bf16.xpose.msra.mxu0 0
      %1679 = vmatprep.subr.bf16.mxu0 0
      %1680 = vmatpush2.bf16.xpose.msra.mxu0 0
      %1681 = vmatprep.subr.bf16.mxu0 0
      %1682 = vmatpush2.bf16.xpose.msra.mxu0 0
      %1683 = vmatprep.subr.bf16.mxu0 0
      %1684 = vmatpush2.bf16.xpose.msra.mxu0 0
      %1685 = vmatprep.subr.bf16.mxu0 0
      %1686 = vmatpush2.bf16.xpose.msra.mxu0 0
      %1687 = vmatprep.mubr.bf16.mxu0 0
      %1688 = vmatmul.mubr.bf16.gmra.mxu0 %v1650
      %v1689 = vpop.f32.mrf.mxu0
      %v1690 = vadd.f32 0.0, %v1689
      %v1691 = vpop.f32.mrf.mxu0
      %v1692 = vpop.f32.mrf.mxu0
      %v1693 = vpop.f32.mrf.mxu0
      %1694 = vdwg.mxu0
      %v1695 = vmul.f32 %v1552, 0.35355338
      %v1696 = vmul.f32 %v1598, 0.35355338
      %v1697 = vmul.f32 %v1644, 0.35355338
      %v1698 = vmul.f32 %v1690, 0.35355338
      %v1699 = vsel %vm784, %v1695, -inf
      %1700 = vmax.xlane.f32.xlu0 %v1699
      %v1701 = vpop.xlane.xlu0 %1700
      %v1702 = vsel %vm784, %v1696, -inf
      %1703 = vmax.xlane.f32.xlu0 %v1702
      %v1704 = vpop.xlane.xlu0 %1703
      %v1705 = vsel %vm784, %v1697, -inf
      %1706 = vmax.xlane.f32.xlu0 %v1705
      %v1707 = vpop.xlane.xlu0 %1706
      %v1708 = vsel %vm784, %v1698, -inf
      %1709 = vmax.xlane.f32.xlu0 %v1708
      %v1710 = vpop.xlane.xlu0 %1709
      %v1711 = vsub.f32 %v1695, %v1701
      %v1712 = vsub.f32 %v1696, %v1704
      %v1713 = vsub.f32 %v1697, %v1707
      %v1714 = vsub.f32 %v1698, %v1710
      %v1715 = vmul.f32 %v1711, 1.442695
      %v1716 = vpow.pop %v1715
      %v1717 = vmul.f32 %v1712, 1.442695
      %v1718 = vpow.pop %v1717
      %v1719 = vmul.f32 %v1713, 1.442695
      %v1720 = vpow.pop %v1719
      %v1721 = vmul.f32 %v1714, 1.442695
      %v1722 = vpow.pop %v1721
      %v1723 = vsel %vm784, %v1716, 0.0
      %1724 = vadd.xlane.f32.xlu0 %v1723
      %v1725 = vpop.xlane.xlu0 %1724
      %v1726 = vsel %vm784, %v1718, 0.0
      %1727 = vadd.xlane.f32.xlu0 %v1726
      %v1728 = vpop.xlane.xlu0 %1727
      %v1729 = vsel %vm784, %v1720, 0.0
      %1730 = vadd.xlane.f32.xlu0 %v1729
      %v1731 = vpop.xlane.xlu0 %1730
      %v1732 = vsel %vm784, %v1722, 0.0
      %1733 = vadd.xlane.f32.xlu0 %v1732
      %v1734 = vpop.xlane.xlu0 %1733
      %v1735 = vrcp.pop %v1725
      %v1736 = vrcp.pop %v1728
      %v1737 = vrcp.pop %v1731
      %v1738 = vrcp.pop %v1734
      %v1739 = vmul.f32 %v1716, %v1735
      %v1740 = vmul.f32 %v1718, %v1736
      %v1741 = vmul.f32 %v1720, %v1737
      %v1742 = vmul.f32 %v1722, %v1738
      %v1743 = vpack.c.bf16 %v1739, %v1739
      %v1744 = vpack.c.bf16 %v1740, %v1740
      %v1745 = vpack.c.bf16 %v1741, %v1741
      %v1746 = vpack.c.bf16 %v1742, %v1742
      %1748 = vrot.lane.b32.xlu0 %v1507, 96
      %v1749 = vpop.permute.xlu0 %1748
      %v1751 = vsel %vm784, %v1743, 0
      %v1754 = vsel %vm1046, %v1749, 0
      %1756 = vmatprep.subr.bf16.mxu0 0
      %1757 = vmatpush1.bf16.msra.mxu0 0
      %1758 = vmatprep.subr.bf16.mxu0 0
      %1759 = vmatpush1.bf16.msra.mxu0 0
      %1760 = vmatprep.subr.bf16.mxu0 0
      %1761 = vmatpush1.bf16.msra.mxu0 0
      %1762 = vmatprep.subr.bf16.mxu0 0
      %1763 = vmatpush1.bf16.msra.mxu0 0
      %1764 = vmatprep.subr.bf16.mxu0 0
      %1765 = vmatpush1.bf16.msra.mxu0 0
      %1766 = vmatprep.subr.bf16.mxu0 0
      %1767 = vmatpush1.bf16.msra.mxu0 0
      %1768 = vmatprep.subr.bf16.mxu0 0
      %1769 = vmatpush1.bf16.msra.mxu0 0
      %1770 = vmatprep.subr.bf16.mxu0 0
      %1771 = vmatpush1.bf16.msra.mxu0 %v1754
      %1772 = vmatprep.subr.bf16.mxu0 0
      %1773 = vmatpush2.bf16.msra.mxu0 0
      %1774 = vmatprep.subr.bf16.mxu0 0
      %1775 = vmatpush2.bf16.msra.mxu0 0
      %1776 = vmatprep.subr.bf16.mxu0 0
      %1777 = vmatpush2.bf16.msra.mxu0 0
      %1778 = vmatprep.subr.bf16.mxu0 0
      %1779 = vmatpush2.bf16.msra.mxu0 0
      %1780 = vmatprep.subr.bf16.mxu0 0
      %1781 = vmatpush2.bf16.msra.mxu0 0
      %1782 = vmatprep.subr.bf16.mxu0 0
      %1783 = vmatpush2.bf16.msra.mxu0 0
      %1784 = vmatprep.subr.bf16.mxu0 0
      %1785 = vmatpush2.bf16.msra.mxu0 0
      %1786 = vmatprep.subr.bf16.mxu0 0
      %1787 = vmatpush2.bf16.msra.mxu0 0
      %1788 = vmatprep.mubr.bf16.mxu0 0
      %1789 = vmatmul.mubr.bf16.gmra.mxu0 %v1751
      %v1790 = vpop.f32.mrf.mxu0
      %v1791 = vadd.f32 0.0, %v1790
      %v1792 = vpop.f32.mrf.mxu0
      %v1793 = vpop.f32.mrf.mxu0
      %v1794 = vpop.f32.mrf.mxu0
      %1795 = vdwg.mxu0
      %1797 = vrot.lane.b32.xlu0 %v1508, 96
      %v1798 = vpop.permute.xlu0 %1797
      %v1800 = vsel %vm784, %v1744, 0
      %v1803 = vsel %vm1046, %v1798, 0
      %1805 = vmatprep.subr.bf16.mxu0 0
      %1806 = vmatpush1.bf16.msra.mxu0 0
      %1807 = vmatprep.subr.bf16.mxu0 0
      %1808 = vmatpush1.bf16.msra.mxu0 0
      %1809 = vmatprep.subr.bf16.mxu0 0
      %1810 = vmatpush1.bf16.msra.mxu0 0
      %1811 = vmatprep.subr.bf16.mxu0 0
      %1812 = vmatpush1.bf16.msra.mxu0 0
      %1813 = vmatprep.subr.bf16.mxu0 0
      %1814 = vmatpush1.bf16.msra.mxu0 0
      %1815 = vmatprep.subr.bf16.mxu0 0
      %1816 = vmatpush1.bf16.msra.mxu0 0
      %1817 = vmatprep.subr.bf16.mxu0 0
      %1818 = vmatpush1.bf16.msra.mxu0 0
      %1819 = vmatprep.subr.bf16.mxu0 0
      %1820 = vmatpush1.bf16.msra.mxu0 %v1803
      %1821 = vmatprep.subr.bf16.mxu0 0
      %1822 = vmatpush2.bf16.msra.mxu0 0
      %1823 = vmatprep.subr.bf16.mxu0 0
      %1824 = vmatpush2.bf16.msra.mxu0 0
      %1825 = vmatprep.subr.bf16.mxu0 0
      %1826 = vmatpush2.bf16.msra.mxu0 0
      %1827 = vmatprep.subr.bf16.mxu0 0
      %1828 = vmatpush2.bf16.msra.mxu0 0
      %1829 = vmatprep.subr.bf16.mxu0 0
      %1830 = vmatpush2.bf16.msra.mxu0 0
      %1831 = vmatprep.subr.bf16.mxu0 0
      %1832 = vmatpush2.bf16.msra.mxu0 0
      %1833 = vmatprep.subr.bf16.mxu0 0
      %1834 = vmatpush2.bf16.msra.mxu0 0
      %1835 = vmatprep.subr.bf16.mxu0 0
      %1836 = vmatpush2.bf16.msra.mxu0 0
      %1837 = vmatprep.mubr.bf16.mxu0 0
      %1838 = vmatmul.mubr.bf16.gmra.mxu0 %v1800
      %v1839 = vpop.f32.mrf.mxu0
      %v1840 = vadd.f32 0.0, %v1839
      %v1841 = vpop.f32.mrf.mxu0
      %v1842 = vpop.f32.mrf.mxu0
      %v1843 = vpop.f32.mrf.mxu0
      %1844 = vdwg.mxu0
      %1846 = vrot.lane.b32.xlu0 %v1509, 96
      %v1847 = vpop.permute.xlu0 %1846
      %v1849 = vsel %vm784, %v1745, 0
      %v1852 = vsel %vm1046, %v1847, 0
      %1854 = vmatprep.subr.bf16.mxu0 0
      %1855 = vmatpush1.bf16.msra.mxu0 0
      %1856 = vmatprep.subr.bf16.mxu0 0
      %1857 = vmatpush1.bf16.msra.mxu0 0
      %1858 = vmatprep.subr.bf16.mxu0 0
      %1859 = vmatpush1.bf16.msra.mxu0 0
      %1860 = vmatprep.subr.bf16.mxu0 0
      %1861 = vmatpush1.bf16.msra.mxu0 0
      %1862 = vmatprep.subr.bf16.mxu0 0
      %1863 = vmatpush1.bf16.msra.mxu0 0
      %1864 = vmatprep.subr.bf16.mxu0 0
      %1865 = vmatpush1.bf16.msra.mxu0 0
      %1866 = vmatprep.subr.bf16.mxu0 0
      %1867 = vmatpush1.bf16.msra.mxu0 0
      %1868 = vmatprep.subr.bf16.mxu0 0
      %1869 = vmatpush1.bf16.msra.mxu0 %v1852
      %1870 = vmatprep.subr.bf16.mxu0 0
      %1871 = vmatpush2.bf16.msra.mxu0 0
      %1872 = vmatprep.subr.bf16.mxu0 0
      %1873 = vmatpush2.bf16.msra.mxu0 0
      %1874 = vmatprep.subr.bf16.mxu0 0
      %1875 = vmatpush2.bf16.msra.mxu0 0
      %1876 = vmatprep.subr.bf16.mxu0 0
      %1877 = vmatpush2.bf16.msra.mxu0 0
      %1878 = vmatprep.subr.bf16.mxu0 0
      %1879 = vmatpush2.bf16.msra.mxu0 0
      %1880 = vmatprep.subr.bf16.mxu0 0
      %1881 = vmatpush2.bf16.msra.mxu0 0
      %1882 = vmatprep.subr.bf16.mxu0 0
      %1883 = vmatpush2.bf16.msra.mxu0 0
      %1884 = vmatprep.subr.bf16.mxu0 0
      %1885 = vmatpush2.bf16.msra.mxu0 0
      %1886 = vmatprep.mubr.bf16.mxu0 0
      %1887 = vmatmul.mubr.bf16.gmra.mxu0 %v1849
      %v1888 = vpop.f32.mrf.mxu0
      %v1889 = vadd.f32 0.0, %v1888
      %v1890 = vpop.f32.mrf.mxu0
      %v1891 = vpop.f32.mrf.mxu0
      %v1892 = vpop.f32.mrf.mxu0
      %1893 = vdwg.mxu0
      %1895 = vrot.lane.b32.xlu0 %v1510, 96
      %v1896 = vpop.permute.xlu0 %1895
      %v1898 = vsel %vm784, %v1746, 0
      %v1901 = vsel %vm1046, %v1896, 0
      %1903 = vmatprep.subr.bf16.mxu0 0
      %1904 = vmatpush1.bf16.msra.mxu0 0
      %1905 = vmatprep.subr.bf16.mxu0 0
      %1906 = vmatpush1.bf16.msra.mxu0 0
      %1907 = vmatprep.subr.bf16.mxu0 0
      %1908 = vmatpush1.bf16.msra.mxu0 0
      %1909 = vmatprep.subr.bf16.mxu0 0
      %1910 = vmatpush1.bf16.msra.mxu0 0
      %1911 = vmatprep.subr.bf16.mxu0 0
      %1912 = vmatpush1.bf16.msra.mxu0 0
      %1913 = vmatprep.subr.bf16.mxu0 0
      %1914 = vmatpush1.bf16.msra.mxu0 0
      %1915 = vmatprep.subr.bf16.mxu0 0
      %1916 = vmatpush1.bf16.msra.mxu0 0
      %1917 = vmatprep.subr.bf16.mxu0 0
      %1918 = vmatpush1.bf16.msra.mxu0 %v1901
      %1919 = vmatprep.subr.bf16.mxu0 0
      %1920 = vmatpush2.bf16.msra.mxu0 0
      %1921 = vmatprep.subr.bf16.mxu0 0
      %1922 = vmatpush2.bf16.msra.mxu0 0
      %1923 = vmatprep.subr.bf16.mxu0 0
      %1924 = vmatpush2.bf16.msra.mxu0 0
      %1925 = vmatprep.subr.bf16.mxu0 0
      %1926 = vmatpush2.bf16.msra.mxu0 0
      %1927 = vmatprep.subr.bf16.mxu0 0
      %1928 = vmatpush2.bf16.msra.mxu0 0
      %1929 = vmatprep.subr.bf16.mxu0 0
      %1930 = vmatpush2.bf16.msra.mxu0 0
      %1931 = vmatprep.subr.bf16.mxu0 0
      %1932 = vmatpush2.bf16.msra.mxu0 0
      %1933 = vmatprep.subr.bf16.mxu0 0
      %1934 = vmatpush2.bf16.msra.mxu0 0
      %1935 = vmatprep.mubr.bf16.mxu0 0
      %1936 = vmatmul.mubr.bf16.gmra.mxu0 %v1898
      %v1937 = vpop.f32.mrf.mxu0
      %v1938 = vadd.f32 0.0, %v1937
      %v1939 = vpop.f32.mrf.mxu0
      %v1940 = vpop.f32.mrf.mxu0
      %v1941 = vpop.f32.mrf.mxu0
      %1942 = vdwg.mxu0
      %1944 = vrot.lane.b32.xlu0 %v1840, 8
      %v1945 = vpop.permute.xlu0 %1944
      %1948 = vrot.lane.b32.xlu0 %v1889, 16
      %v1949 = vpop.permute.xlu0 %1948
      %1952 = vrot.lane.b32.xlu0 %v1938, 24
      %v1953 = vpop.permute.xlu0 %1952
      %v1955 = vsel %vm784, %v1791, %v1945
      %v1956 = vsel %vm1247, %v1955, %v1949
      %v1957 = vsel %vm1249, %v1956, %v1953
      %v1958 = vpack.c.bf16 %v1957, %v1957
      %v1959 = vld [vmem:[%s12] sm:$0xf]
      %v1960 = vld [vmem:[%s12 + $0x4] sm:$0xf]
      %v1961 = vld [vmem:[%s12 + $0x8] sm:$0xf]
      %v1962 = vld [vmem:[%s12 + $0xc] sm:$0xf]
      %v1963 = vld [vmem:[%s13] sm:$0x1]
      %v1965 = vlaneseq
      %v1966 = vshrl.u32 %v1965, 7
      %v1967 = vsub.s32 0, %v1966
      %v1968 = vrot.slane %v1963, %v1967
      %v1974 = vunpack.c.l.b16 %v1959
      %v1975 = vunpack.c.l.b16 %v1960
      %v1976 = vunpack.c.l.b16 %v1961
      %v1977 = vunpack.c.l.b16 %v1962
      %v1978 = vpack.c.b16 %v1975, %v1974
      %v1979 = vpack.c.b16 %v1977, %v1976
      %v1983 = vsel %vm723, %v1958, 0
      %1985 = vmatprep.subr.bf16.mxu0 0
      %1986 = vmatpush1.bf16.msra.mxu0 0
      %1987 = vmatprep.subr.bf16.mxu0 0
      %1988 = vmatpush1.bf16.msra.mxu0 0
      %1989 = vmatprep.subr.bf16.mxu0 0
      %1990 = vmatpush1.bf16.msra.mxu0 0
      %1991 = vmatprep.subr.bf16.mxu0 0
      %1992 = vmatpush1.bf16.msra.mxu0 0
      %1993 = vmatprep.subr.bf16.mxu0 0
      %1994 = vmatpush1.bf16.msra.mxu0 0
      %1995 = vmatprep.subr.bf16.mxu0 0
      %1996 = vmatpush1.bf16.msra.mxu0 0
      %1997 = vmatprep.subr.bf16.mxu0 0
      %1998 = vmatpush1.bf16.msra.mxu0 %v1979
      %1999 = vmatprep.subr.bf16.mxu0 0
      %2000 = vmatpush1.bf16.msra.mxu0 %v1978
      %2001 = vmatprep.subr.bf16.mxu0 0
      %2002 = vmatpush2.bf16.msra.mxu0 0
      %2003 = vmatprep.subr.bf16.mxu0 0
      %2004 = vmatpush2.bf16.msra.mxu0 0
      %2005 = vmatprep.subr.bf16.mxu0 0
      %2006 = vmatpush2.bf16.msra.mxu0 0
      %2007 = vmatprep.subr.bf16.mxu0 0
      %2008 = vmatpush2.bf16.msra.mxu0 0
      %2009 = vmatprep.subr.bf16.mxu0 0
      %2010 = vmatpush2.bf16.msra.mxu0 0
      %2011 = vmatprep.subr.bf16.mxu0 0
      %2012 = vmatpush2.bf16.msra.mxu0 0
      %2013 = vmatprep.subr.bf16.mxu0 0
      %2014 = vmatpush2.bf16.msra.mxu0 0
      %2015 = vmatprep.subr.bf16.mxu0 0
      %2016 = vmatpush2.bf16.msra.mxu0 0
      %2017 = vmatprep.mubr.bf16.mxu0 0
      %2018 = vmatmul.mubr.bf16.gmra.mxu0 %v1983
      %v2019 = vpop.f32.mrf.mxu0
      %v2020 = vadd.f32 %v1968, %v2019
      %v2021 = vpop.f32.mrf.mxu0
      %v2022 = vpop.f32.mrf.mxu0
      %v2023 = vpop.f32.mrf.mxu0
      %2024 = vdwg.mxu0
      %v2025 = vadd.f32 %v1348, %v2020
      %v2026 = vld [vmem:[%s14] sm:$0x1]
      %v2027 = vld [vmem:[%s15] sm:$0x1]
      %v2028 = vsel %vm723, %v2025, 0.0
      %2029 = vadd.xlane.f32.xlu0 %v2028
      %v2030 = vpop.xlane.xlu0 %2029
      %v2031 = vmul.f32 %v2030, %v1324
      %v2032 = vsub.f32 %v2025, %v2031
      %v2033 = vmul.f32 %v2032, %v2032
      %v2034 = vsel %vm723, %v2033, 0.0
      %2035 = vadd.xlane.f32.xlu0 %v2034
      %v2036 = vpop.xlane.xlu0 %2035
      %v2037 = vmul.f32 %v2036, %v1324
      %v2038 = vadd.f32 %v2037, 1e-05
      %v2039 = vrsqrt.pop %v2038
      %v2040 = vmul.f32 %v2032, %v2039
      %v2042 = vlaneseq
      %v2043 = vshrl.u32 %v2042, 7
      %v2044 = vsub.s32 0, %v2043
      %v2045 = vrot.slane %v2026, %v2044
      %v2047 = vmul.f32 %v2040, %v2045
      %v2049 = vlaneseq
      %v2050 = vshrl.u32 %v2049, 7
      %v2051 = vsub.s32 0, %v2050
      %v2052 = vrot.slane %v2027, %v2051
      %v2054 = vadd.f32 %v2047, %v2052
      %v2055 = vpack.c.bf16 %v2054, %v2054
      %v2056 = vld [vmem:[%s16] sm:$0xf]
      %v2057 = vld [vmem:[%s16 + $0x4] sm:$0xf]
      %v2058 = vld [vmem:[%s16 + $0x8] sm:$0xf]
      %v2059 = vld [vmem:[%s16 + $0xc] sm:$0xf]
      %v2060 = vld [vmem:[%s17] sm:$0x1]
      %v2062 = vlaneseq
      %v2063 = vshrl.u32 %v2062, 7
      %v2064 = vsub.s32 0, %v2063
      %v2065 = vrot.slane %v2060, %v2064
      %v2071 = vunpack.c.l.b16 %v2056
      %v2072 = vunpack.c.l.b16 %v2057
      %v2073 = vunpack.c.l.b16 %v2058
      %v2074 = vunpack.c.l.b16 %v2059
      %v2075 = vpack.c.b16 %v2072, %v2071
      %v2076 = vpack.c.b16 %v2074, %v2073
      %v2080 = vsel %vm723, %v2055, 0
      %2082 = vmatprep.subr.bf16.mxu0 0
      %2083 = vmatpush1.bf16.msra.mxu0 0
      %2084 = vmatprep.subr.bf16.mxu0 0
      %2085 = vmatpush1.bf16.msra.mxu0 0
      %2086 = vmatprep.subr.bf16.mxu0 0
      %2087 = vmatpush1.bf16.msra.mxu0 0
      %2088 = vmatprep.subr.bf16.mxu0 0
      %2089 = vmatpush1.bf16.msra.mxu0 0
      %2090 = vmatprep.subr.bf16.mxu0 0
      %2091 = vmatpush1.bf16.msra.mxu0 0
      %2092 = vmatprep.subr.bf16.mxu0 0
      %2093 = vmatpush1.bf16.msra.mxu0 0
      %2094 = vmatprep.subr.bf16.mxu0 0
      %2095 = vmatpush1.bf16.msra.mxu0 %v2076
      %2096 = vmatprep.subr.bf16.mxu0 0
      %2097 = vmatpush1.bf16.msra.mxu0 %v2075
      %2098 = vmatprep.subr.bf16.mxu0 0
      %2099 = vmatpush2.bf16.msra.mxu0 0
      %2100 = vmatprep.subr.bf16.mxu0 0
      %2101 = vmatpush2.bf16.msra.mxu0 0
      %2102 = vmatprep.subr.bf16.mxu0 0
      %2103 = vmatpush2.bf16.msra.mxu0 0
      %2104 = vmatprep.subr.bf16.mxu0 0
      %2105 = vmatpush2.bf16.msra.mxu0 0
      %2106 = vmatprep.subr.bf16.mxu0 0
      %2107 = vmatpush2.bf16.msra.mxu0 0
      %2108 = vmatprep.subr.bf16.mxu0 0
      %2109 = vmatpush2.bf16.msra.mxu0 0
      %2110 = vmatprep.subr.bf16.mxu0 0
      %2111 = vmatpush2.bf16.msra.mxu0 0
      %2112 = vmatprep.subr.bf16.mxu0 0
      %2113 = vmatpush2.bf16.msra.mxu0 0
      %2114 = vmatprep.mubr.bf16.mxu0 0
      %2115 = vmatmul.mubr.bf16.gmra.mxu0 %v2080
      %v2116 = vpop.f32.mrf.mxu0
      %v2117 = vadd.f32 %v2065, %v2116
      %v2118 = vpop.f32.mrf.mxu0
      %v2119 = vpop.f32.mrf.mxu0
      %v2120 = vpop.f32.mrf.mxu0
      %2121 = vdwg.mxu0
      %v2122 = vmax.f32 %v2117, 0.0
      %v2123 = vpack.c.bf16 %v2122, %v2122
      %v2124 = vld [vmem:[%s18] sm:$0xf]
      %v2125 = vld [vmem:[%s18 + $0x4] sm:$0xf]
      %v2126 = vld [vmem:[%s18 + $0x8] sm:$0xf]
      %v2127 = vld [vmem:[%s18 + $0xc] sm:$0xf]
      %v2128 = vld [vmem:[%s18 + $0x10] sm:$0xf]
      %v2129 = vld [vmem:[%s18 + $0x14] sm:$0xf]
      %v2130 = vld [vmem:[%s18 + $0x18] sm:$0xf]
      %v2131 = vld [vmem:[%s18 + $0x1c] sm:$0xf]
      %v2132 = vld [vmem:[%s19] sm:$0x1]
      %v2134 = vlaneseq
      %v2135 = vshrl.u32 %v2134, 7
      %v2136 = vsub.s32 0, %v2135
      %v2137 = vrot.slane %v2132, %v2136
      %v2147 = vunpack.c.l.b16 %v2124
      %v2148 = vunpack.c.l.b16 %v2125
      %v2149 = vunpack.c.l.b16 %v2126
      %v2150 = vunpack.c.l.b16 %v2127
      %v2151 = vunpack.c.l.b16 %v2128
      %v2152 = vunpack.c.l.b16 %v2129
      %v2153 = vunpack.c.l.b16 %v2130
      %v2154 = vunpack.c.l.b16 %v2131
      %v2155 = vpack.c.b16 %v2148, %v2147
      %v2156 = vpack.c.b16 %v2150, %v2149
      %v2157 = vpack.c.b16 %v2152, %v2151
      %v2158 = vpack.c.b16 %v2154, %v2153
      %vm2163 = vcmask 523264
      %v2165 = vsel %vm2163, %v2123, 0
      %2167 = vmatprep.subr.bf16.mxu0 0
      %2168 = vmatpush1.bf16.msra.mxu0 0
      %2169 = vmatprep.subr.bf16.mxu0 0
      %2170 = vmatpush1.bf16.msra.mxu0 0
      %2171 = vmatprep.subr.bf16.mxu0 0
      %2172 = vmatpush1.bf16.msra.mxu0 0
      %2173 = vmatprep.subr.bf16.mxu0 0
      %2174 = vmatpush1.bf16.msra.mxu0 0
      %2175 = vmatprep.subr.bf16.mxu0 0
      %2176 = vmatpush1.bf16.msra.mxu0 %v2158
      %2177 = vmatprep.subr.bf16.mxu0 0
      %2178 = vmatpush1.bf16.msra.mxu0 %v2157
      %2179 = vmatprep.subr.bf16.mxu0 0
      %2180 = vmatpush1.bf16.msra.mxu0 %v2156
      %2181 = vmatprep.subr.bf16.mxu0 0
      %2182 = vmatpush1.bf16.msra.mxu0 %v2155
      %2183 = vmatprep.subr.bf16.mxu0 0
      %2184 = vmatpush2.bf16.msra.mxu0 0
      %2185 = vmatprep.subr.bf16.mxu0 0
      %2186 = vmatpush2.bf16.msra.mxu0 0
      %2187 = vmatprep.subr.bf16.mxu0 0
      %2188 = vmatpush2.bf16.msra.mxu0 0
      %2189 = vmatprep.subr.bf16.mxu0 0
      %2190 = vmatpush2.bf16.msra.mxu0 0
      %2191 = vmatprep.subr.bf16.mxu0 0
      %2192 = vmatpush2.bf16.msra.mxu0 0
      %2193 = vmatprep.subr.bf16.mxu0 0
      %2194 = vmatpush2.bf16.msra.mxu0 0
      %2195 = vmatprep.subr.bf16.mxu0 0
      %2196 = vmatpush2.bf16.msra.mxu0 0
      %2197 = vmatprep.subr.bf16.mxu0 0
      %2198 = vmatpush2.bf16.msra.mxu0 0
      %2199 = vmatprep.mubr.bf16.mxu0 0
      %2200 = vmatmul.mubr.bf16.gmra.mxu0 %v2165
      %v2201 = vpop.f32.mrf.mxu0
      %v2202 = vadd.f32 %v2137, %v2201
      %v2203 = vpop.f32.mrf.mxu0
      %v2204 = vpop.f32.mrf.mxu0
      %v2205 = vpop.f32.mrf.mxu0
      %2206 = vdwg.mxu0
      %v2207 = vadd.f32 %v2054, %v2202
      %v2208 = vld [vmem:[%s20] sm:$0x1]
      %v2209 = vld [vmem:[%s21] sm:$0x1]
      %v2210 = vsel %vm723, %v2207, 0.0
      %2211 = vadd.xlane.f32.xlu0 %v2210
      %v2212 = vpop.xlane.xlu0 %2211
      %v2213 = vmul.f32 %v2212, %v1324
      %v2214 = vsub.f32 %v2207, %v2213
      %v2215 = vmul.f32 %v2214, %v2214
      %v2216 = vsel %vm723, %v2215, 0.0
      %2217 = vadd.xlane.f32.xlu0 %v2216
      %v2218 = vpop.xlane.xlu0 %2217
      %v2219 = vmul.f32 %v2218, %v1324
      %v2220 = vadd.f32 %v2219, 1e-05
      %v2221 = vrsqrt.pop %v2220
      %v2222 = vmul.f32 %v2214, %v2221
      %v2224 = vlaneseq
      %v2225 = vshrl.u32 %v2224, 7
      %v2226 = vsub.s32 0, %v2225
      %v2227 = vrot.slane %v2208, %v2226
      %v2229 = vmul.f32 %v2222, %v2227
      %v2231 = vlaneseq
      %v2232 = vshrl.u32 %v2231, 7
      %v2233 = vsub.s32 0, %v2232
      %v2234 = vrot.slane %v2209, %v2233
      %v2236 = vadd.f32 %v2229, %v2234
      %2237 = vst.msk [vmem:[%s695] sm:$0xff] %vm723, %v2236
      %p2238 = scmp.lt.s32.totalorder %s33, 1
      %s2239 = scalar_select %p2238, %s33, 1
      %s2240 = smul.addr %s2239, 8
      %s2241 = scalar_lea.vmem %s22, %s2240
      // Predicated region
      $region109: #{transformer_forward.6} parent=107 // pred_check
        %p2242 = pneg %p523
      $region110: #{transformer_forward.6} parent=107 // pred_check_branch
        %2244 = sbr.rel (%p2242) target = $region112
      $region111: #{transformer_forward.6} parent=107 // pred_region
        _
      $region112: #{transformer_forward.6} parent=107 // pred_fallthru
        _
    $region108: #{transformer_forward.6} parent=5 // pred_fallthru
      _
    %p2245 = scmp.le.s32.totalorder 2, %s28
    // Predicated region
    $region113: #{transformer_forward.6} parent=5 // pred_check
      %p2246 = pneg %p2245
    $region114: #{transformer_forward.6} parent=5 // pred_check_branch
      %2248 = sbr.rel (%p2246) target = $region116
    $region115: #{transformer_forward.6} parent=5 // pred_region
      %s2249 = ssub.s32 %s28, 2
      // Predicated region
      $region117: #{transformer_forward.6} parent=115 // pred_check
        %p2250 = pneg %p529
      $region118: #{transformer_forward.6} parent=115 // pred_check_branch
        %2252 = sbr.rel (%p2250) target = $region120
      $region119: #{transformer_forward.6} parent=115 // pred_region
        %p2253 = scmp.lt.s32.totalorder %s34, 1
        %s2254 = scalar_select %p2253, %s34, 1
        %s2255 = smul.addr %s2254, 8
        %s2256 = scalar_lea.vmem %s22, %s2255
      $region120: #{transformer_forward.6} parent=115 // pred_fallthru
        _
    $region116: #{transformer_forward.6} parent=5 // pred_fallthru
      _
  $region6: #{transformer_forward.6} parent=0 // loop_footer
    %s32 = sadd.s32 1, %s28
  $region7: #{transformer_forward.6} parent=0 // loop_footer_branch
    %27 = sbr.rel target = $region3
  $region8: #{transformer_forward.6} parent=0 // loop_exit
    _

// kernel: transformer_forward.7
$region0: #{transformer_forward.7}
  #allocation0 [shape = 'u32[]', space=smem, size = 0x4, offset = 0x4, fixed_abs, tag = 'smem constant byte address 0x4 - core index']
  #allocation1 [shape = 'u32[144,128]{1,0:T(1,128)}', space=vmem, size = 0x12000, scoped, tag = 'internal scratch']
  %s0 = inlined_call_operand.vmem [shape: f32[2,8,32], index: 0, kind: input, shape index: {}]
  %s1 = inlined_call_operand.vmem [shape: f32[2,8,32], index: 1, kind: input, shape index: {}]
  %s2 = inlined_call_operand.vmem [shape: bf16[32,96], index: 2, kind: input, shape index: {}]
  %s3 = inlined_call_operand.vmem [shape: f32[1,96], index: 3, kind: input, shape index: {}]
  %s4 = inlined_call_operand.vmem [shape: bf16[32,32], index: 4, kind: input, shape index: {}]
  %s5 = inlined_call_operand.vmem [shape: f32[1,32], index: 5, kind: input, shape index: {}]
  %s6 = inlined_call_operand.vmem [shape: f32[1,32], index: 6, kind: input, shape index: {}]
  %s7 = inlined_call_operand.vmem [shape: f32[1,32], index: 7, kind: input, shape index: {}]
  %s8 = inlined_call_operand.vmem [shape: bf16[32,32], index: 8, kind: input, shape index: {}]
  %s9 = inlined_call_operand.vmem [shape: f32[1,32], index: 9, kind: input, shape index: {}]
  %s10 = inlined_call_operand.vmem [shape: bf16[32,64], index: 10, kind: input, shape index: {}]
  %s11 = inlined_call_operand.vmem [shape: f32[1,64], index: 11, kind: input, shape index: {}]
  %s12 = inlined_call_operand.vmem [shape: bf16[32,32], index: 12, kind: input, shape index: {}]
  %s13 = inlined_call_operand.vmem [shape: f32[1,32], index: 13, kind: input, shape index: {}]
  %s14 = inlined_call_operand.vmem [shape: f32[1,32], index: 14, kind: input, shape index: {}]
  %s15 = inlined_call_operand.vmem [shape: f32[1,32], index: 15, kind: input, shape index: {}]
  %s16 = inlined_call_operand.vmem [shape: bf16[32,64], index: 16, kind: input, shape index: {}]
  %s17 = inlined_call_operand.vmem [shape: f32[1,64], index: 17, kind: input, shape index: {}]
  %s18 = inlined_call_operand.vmem [shape: bf16[64,32], index: 18, kind: input, shape index: {}]
  %s19 = inlined_call_operand.vmem [shape: f32[1,32], index: 19, kind: input, shape index: {}]
  %s20 = inlined_call_operand.vmem [shape: f32[1,32], index: 20, kind: input, shape index: {}]
  %s21 = inlined_call_operand.vmem [shape: f32[1,32], index: 21, kind: input, shape index: {}]
  %s22 = inlined_call_operand.hbm [shape: f32[2,8,32], index: 22, kind: output, shape index: {}]
  %s23 = sld [smem:[#allocation0]]
  $region121: #{transformer_forward.7} parent=0
    _
  %s25 = ssub.s32 1, %s23
  %s26 = scalar_select 0, %s25, %s23
  $region1: #{transformer_forward.7} parent=0
    #allocation2 [shape = 'u8[8192]{0}', space=vmem, size = 0x2000, scoped, tag = 'output window, operand 0']
    #allocation3 [shape = 's32[2]{0}', space=sflag, size = 0x8, scoped, tag = 'scoped memory for transformer_forward.7']
    %27 = vsyncpa [#allocation3], 0
    %s28 = scalar_lea.sflag [#allocation3], 1
    %29 = vsyncpa %s28, 0
    loop: start=0, step=1, limit=4
    $region2: #{transformer_forward.7} parent=1 // loop_pre_header
      _
    $region3: #{transformer_forward.7} parent=1 // loop_header
      %s31 = sphi 0, %s35
      %p32 = scmp.ge.s32.totalorder %s31, 4
      %s41 = sphi 0, %s43
      %s44 = sphi 0, %s41
      %s45 = sphi 0, %s44
      %s61 = sphi 0, %s45
      %s67 = sphi 0, %s69
      %s70 = sphi 0, %s67
      %s71 = sphi 0, %s70
      %s87 = sphi 0, %s71
      %s91 = sphi 0, %s91
      %s93 = sphi 0, %s91
      %s94 = sphi 0, %s93
      %s108 = sphi 0, %s94
      %s112 = sphi 0, %s112
      %s114 = sphi 0, %s112
      %s115 = sphi 0, %s114
      %s129 = sphi 0, %s115
      %s133 = sphi 0, %s133
      %s135 = sphi 0, %s133
      %s136 = sphi 0, %s135
      %s150 = sphi 0, %s136
      %s154 = sphi 0, %s154
      %s156 = sphi 0, %s154
      %s157 = sphi 0, %s156
      %s171 = sphi 0, %s157
      %s175 = sphi 0, %s175
      %s177 = sphi 0, %s175
      %s178 = sphi 0, %s177
      %s192 = sphi 0, %s178
      %s196 = sphi 0, %s196
      %s198 = sphi 0, %s196
      %s199 = sphi 0, %s198
      %s213 = sphi 0, %s199
      %s217 = sphi 0, %s217
      %s219 = sphi 0, %s217
      %s220 = sphi 0, %s219
      %s234 = sphi 0, %s220
      %s238 = sphi 0, %s238
      %s240 = sphi 0, %s238
      %s241 = sphi 0, %s240
      %s255 = sphi 0, %s241
      %s259 = sphi 0, %s259
      %s261 = sphi 0, %s259
      %s262 = sphi 0, %s261
      %s276 = sphi 0, %s262
      %s280 = sphi 0, %s280
      %s282 = sphi 0, %s280
      %s283 = sphi 0, %s282
      %s297 = sphi 0, %s283
      %s301 = sphi 0, %s301
      %s303 = sphi 0, %s301
      %s304 = sphi 0, %s303
      %s318 = sphi 0, %s304
      %s322 = sphi 0, %s322
      %s324 = sphi 0, %s322
      %s325 = sphi 0, %s324
      %s339 = sphi 0, %s325
      %s343 = sphi 0, %s343
      %s345 = sphi 0, %s343
      %s346 = sphi 0, %s345
      %s360 = sphi 0, %s346
      %s364 = sphi 0, %s364
      %s366 = sphi 0, %s364
      %s367 = sphi 0, %s366
      %s381 = sphi 0, %s367
      %s385 = sphi 0, %s385
      %s387 = sphi 0, %s385
      %s388 = sphi 0, %s387
      %s402 = sphi 0, %s388
      %s406 = sphi 0, %s406
      %s408 = sphi 0, %s406
      %s409 = sphi 0, %s408
      %s423 = sphi 0, %s409
      %s427 = sphi 0, %s427
      %s429 = sphi 0, %s427
      %s430 = sphi 0, %s429
      %s444 = sphi 0, %s430
      %s448 = sphi 0, %s448
      %s450 = sphi 0, %s448
      %s451 = sphi 0, %s450
      %s465 = sphi 0, %s451
      %s469 = sphi 0, %s469
      %s471 = sphi 0, %s469
      %s472 = sphi 0, %s471
      %s486 = sphi 0, %s472
      %s490 = sphi 0, %s490
      %s492 = sphi 0, %s490
      %s493 = sphi 0, %s492
      %s507 = sphi 0, %s493
      %s513 = sphi 0, %s515
      %s516 = sphi 0, %s513
      %s517 = sphi 0, %s516
      %s533 = sphi 0, %s517
    $region4: #{transformer_forward.7} parent=1 // loop_header_branch
      %34 = sbr.rel (%p32) target = $region8
    $region5: #{transformer_forward.7} parent=1 // loop_body
      %s36 = ssub.s32 %s31, 1
      %s37 = ssub.s32 %s31, 2
      %s38 = sadd.s32 %s31, 1
      %s39 = ssub.s32 %s31, %s38
      %p40 = scmp.eq.s32.totalorder %s39, 0
      %s42 = sadd.s32 %s41, 1
      %s43 = scalar_select %p40, %s41, %s42
      %p46 = pneg %p40
      %p47 = scmp.eq.s32.totalorder %s31, 1
      %p48 = por %p46, %p47
      %p49 = scmp.ne.s32.totalorder %s41, %s44
      %p50 = scmp.eq.s32.totalorder %s31, 0
      %p51 = por %p49, %p50
      %p52 = scmp.ne.s32.totalorder %s41, %s44
      %p53 = scmp.eq.s32.totalorder %s36, 1
      %p54 = por %p52, %p53
      %p55 = scmp.ne.s32.totalorder %s44, %s45
      %p56 = scmp.eq.s32.totalorder %s36, 0
      %p57 = por %p55, %p56
      %p58 = scmp.ne.s32.totalorder %s44, %s45
      %p59 = scmp.eq.s32.totalorder %s37, 1
      %p60 = por %p58, %p59
      %p62 = scmp.ne.s32.totalorder %s45, %s61
      %p63 = scmp.eq.s32.totalorder %s37, 0
      %p64 = por %p62, %p63
      %s65 = ssub.s32 %s31, %s38
      %p66 = scmp.eq.s32.totalorder %s65, 0
      %s68 = sadd.s32 %s67, 1
      %s69 = scalar_select %p66, %s67, %s68
      %p72 = pneg %p66
      %p73 = scmp.eq.s32.totalorder %s31, 1
      %p74 = por %p72, %p73
      %p75 = scmp.ne.s32.totalorder %s67, %s70
      %p76 = scmp.eq.s32.totalorder %s31, 0
      %p77 = por %p75, %p76
      %p78 = scmp.ne.s32.totalorder %s67, %s70
      %p79 = scmp.eq.s32.totalorder %s36, 1
      %p80 = por %p78, %p79
      %p81 = scmp.ne.s32.totalorder %s70, %s71
      %p82 = scmp.eq.s32.totalorder %s36, 0
      %p83 = por %p81, %p82
      %p84 = scmp.ne.s32.totalorder %s70, %s71
      %p85 = scmp.eq.s32.totalorder %s37, 1
      %p86 = por %p84, %p85
      %p88 = scmp.ne.s32.totalorder %s71, %s87
      %p89 = scmp.eq.s32.totalorder %s37, 0
      %p90 = por %p88, %p89
      %s92 = sadd.s32 %s91, 1
      %p95 = scmp.eq.s32.totalorder %s31, 1
      %p96 = scmp.ne.s32.totalorder %s91, %s93
      %p97 = scmp.eq.s32.totalorder %s31, 0
      %p98 = por %p96, %p97
      %p99 = scmp.ne.s32.totalorder %s91, %s93
      %p100 = scmp.eq.s32.totalorder %s36, 1
      %p101 = por %p99, %p100
      %p102 = scmp.ne.s32.totalorder %s93, %s94
      %p103 = scmp.eq.s32.totalorder %s36, 0
      %p104 = por %p102, %p103
      %p105 = scmp.ne.s32.totalorder %s93, %s94
      %p106 = scmp.eq.s32.totalorder %s37, 1
      %p107 = por %p105, %p106
      %p109 = scmp.ne.s32.totalorder %s94, %s108
      %p110 = scmp.eq.s32.totalorder %s37, 0
      %p111 = por %p109, %p110
      %s113 = sadd.s32 %s112, 1
      %p116 = scmp.eq.s32.totalorder %s31, 1
      %p117 = scmp.ne.s32.totalorder %s112, %s114
      %p118 = scmp.eq.s32.totalorder %s31, 0
      %p119 = por %p117, %p118
      %p120 = scmp.ne.s32.totalorder %s112, %s114
      %p121 = scmp.eq.s32.totalorder %s36, 1
      %p122 = por %p120, %p121
      %p123 = scmp.ne.s32.totalorder %s114, %s115
      %p124 = scmp.eq.s32.totalorder %s36, 0
      %p125 = por %p123, %p124
      %p126 = scmp.ne.s32.totalorder %s114, %s115
      %p127 = scmp.eq.s32.totalorder %s37, 1
      %p128 = por %p126, %p127
      %p130 = scmp.ne.s32.totalorder %s115, %s129
      %p131 = scmp.eq.s32.totalorder %s37, 0
      %p132 = por %p130, %p131
      %s134 = sadd.s32 %s133, 1
      %p137 = scmp.eq.s32.totalorder %s31, 1
      %p138 = scmp.ne.s32.totalorder %s133, %s135
      %p139 = scmp.eq.s32.totalorder %s31, 0
      %p140 = por %p138, %p139
      %p141 = scmp.ne.s32.totalorder %s133, %s135
      %p142 = scmp.eq.s32.totalorder %s36, 1
      %p143 = por %p141, %p142
      %p144 = scmp.ne.s32.totalorder %s135, %s136
      %p145 = scmp.eq.s32.totalorder %s36, 0
      %p146 = por %p144, %p145
      %p147 = scmp.ne.s32.totalorder %s135, %s136
      %p148 = scmp.eq.s32.totalorder %s37, 1
      %p149 = por %p147, %p148
      %p151 = scmp.ne.s32.totalorder %s136, %s150
      %p152 = scmp.eq.s32.totalorder %s37, 0
      %p153 = por %p151, %p152
      %s155 = sadd.s32 %s154, 1
      %p158 = scmp.eq.s32.totalorder %s31, 1
      %p159 = scmp.ne.s32.totalorder %s154, %s156
      %p160 = scmp.eq.s32.totalorder %s31, 0
      %p161 = por %p159, %p160
      %p162 = scmp.ne.s32.totalorder %s154, %s156
      %p163 = scmp.eq.s32.totalorder %s36, 1
      %p164 = por %p162, %p163
      %p165 = scmp.ne.s32.totalorder %s156, %s157
      %p166 = scmp.eq.s32.totalorder %s36, 0
      %p167 = por %p165, %p166
      %p168 = scmp.ne.s32.totalorder %s156, %s157
      %p169 = scmp.eq.s32.totalorder %s37, 1
      %p170 = por %p168, %p169
      %p172 = scmp.ne.s32.totalorder %s157, %s171
      %p173 = scmp.eq.s32.totalorder %s37, 0
      %p174 = por %p172, %p173
      %s176 = sadd.s32 %s175, 1
      %p179 = scmp.eq.s32.totalorder %s31, 1
      %p180 = scmp.ne.s32.totalorder %s175, %s177
      %p181 = scmp.eq.s32.totalorder %s31, 0
      %p182 = por %p180, %p181
      %p183 = scmp.ne.s32.totalorder %s175, %s177
      %p184 = scmp.eq.s32.totalorder %s36, 1
      %p185 = por %p183, %p184
      %p186 = scmp.ne.s32.totalorder %s177, %s178
      %p187 = scmp.eq.s32.totalorder %s36, 0
      %p188 = por %p186, %p187
      %p189 = scmp.ne.s32.totalorder %s177, %s178
      %p190 = scmp.eq.s32.totalorder %s37, 1
      %p191 = por %p189, %p190
      %p193 = scmp.ne.s32.totalorder %s178, %s192
      %p194 = scmp.eq.s32.totalorder %s37, 0
      %p195 = por %p193, %p194
      %s197 = sadd.s32 %s196, 1
      %p200 = scmp.eq.s32.totalorder %s31, 1
      %p201 = scmp.ne.s32.totalorder %s196, %s198
      %p202 = scmp.eq.s32.totalorder %s31, 0
      %p203 = por %p201, %p202
      %p204 = scmp.ne.s32.totalorder %s196, %s198
      %p205 = scmp.eq.s32.totalorder %s36, 1
      %p206 = por %p204, %p205
      %p207 = scmp.ne.s32.totalorder %s198, %s199
      %p208 = scmp.eq.s32.totalorder %s36, 0
      %p209 = por %p207, %p208
      %p210 = scmp.ne.s32.totalorder %s198, %s199
      %p211 = scmp.eq.s32.totalorder %s37, 1
      %p212 = por %p210, %p211
      %p214 = scmp.ne.s32.totalorder %s199, %s213
      %p215 = scmp.eq.s32.totalorder %s37, 0
      %p216 = por %p214, %p215
      %s218 = sadd.s32 %s217, 1
      %p221 = scmp.eq.s32.totalorder %s31, 1
      %p222 = scmp.ne.s32.totalorder %s217, %s219
      %p223 = scmp.eq.s32.totalorder %s31, 0
      %p224 = por %p222, %p223
      %p225 = scmp.ne.s32.totalorder %s217, %s219
      %p226 = scmp.eq.s32.totalorder %s36, 1
      %p227 = por %p225, %p226
      %p228 = scmp.ne.s32.totalorder %s219, %s220
      %p229 = scmp.eq.s32.totalorder %s36, 0
      %p230 = por %p228, %p229
      %p231 = scmp.ne.s32.totalorder %s219, %s220
      %p232 = scmp.eq.s32.totalorder %s37, 1
      %p233 = por %p231, %p232
      %p235 = scmp.ne.s32.totalorder %s220, %s234
      %p236 = scmp.eq.s32.totalorder %s37, 0
      %p237 = por %p235, %p236
      %s239 = sadd.s32 %s238, 1
      %p242 = scmp.eq.s32.totalorder %s31, 1
      %p243 = scmp.ne.s32.totalorder %s238, %s240
      %p244 = scmp.eq.s32.totalorder %s31, 0
      %p245 = por %p243, %p244
      %p246 = scmp.ne.s32.totalorder %s238, %s240
      %p247 = scmp.eq.s32.totalorder %s36, 1
      %p248 = por %p246, %p247
      %p249 = scmp.ne.s32.totalorder %s240, %s241
      %p250 = scmp.eq.s32.totalorder %s36, 0
      %p251 = por %p249, %p250
      %p252 = scmp.ne.s32.totalorder %s240, %s241
      %p253 = scmp.eq.s32.totalorder %s37, 1
      %p254 = por %p252, %p253
      %p256 = scmp.ne.s32.totalorder %s241, %s255
      %p257 = scmp.eq.s32.totalorder %s37, 0
      %p258 = por %p256, %p257
      %s260 = sadd.s32 %s259, 1
      %p263 = scmp.eq.s32.totalorder %s31, 1
      %p264 = scmp.ne.s32.totalorder %s259, %s261
      %p265 = scmp.eq.s32.totalorder %s31, 0
      %p266 = por %p264, %p265
      %p267 = scmp.ne.s32.totalorder %s259, %s261
      %p268 = scmp.eq.s32.totalorder %s36, 1
      %p269 = por %p267, %p268
      %p270 = scmp.ne.s32.totalorder %s261, %s262
      %p271 = scmp.eq.s32.totalorder %s36, 0
      %p272 = por %p270, %p271
      %p273 = scmp.ne.s32.totalorder %s261, %s262
      %p274 = scmp.eq.s32.totalorder %s37, 1
      %p275 = por %p273, %p274
      %p277 = scmp.ne.s32.totalorder %s262, %s276
      %p278 = scmp.eq.s32.totalorder %s37, 0
      %p279 = por %p277, %p278
      %s281 = sadd.s32 %s280, 1
      %p284 = scmp.eq.s32.totalorder %s31, 1
      %p285 = scmp.ne.s32.totalorder %s280, %s282
      %p286 = scmp.eq.s32.totalorder %s31, 0
      %p287 = por %p285, %p286
      %p288 = scmp.ne.s32.totalorder %s280, %s282
      %p289 = scmp.eq.s32.totalorder %s36, 1
      %p290 = por %p288, %p289
      %p291 = scmp.ne.s32.totalorder %s282, %s283
      %p292 = scmp.eq.s32.totalorder %s36, 0
      %p293 = por %p291, %p292
      %p294 = scmp.ne.s32.totalorder %s282, %s283
      %p295 = scmp.eq.s32.totalorder %s37, 1
      %p296 = por %p294, %p295
      %p298 = scmp.ne.s32.totalorder %s283, %s297
      %p299 = scmp.eq.s32.totalorder %s37, 0
      %p300 = por %p298, %p299
      %s302 = sadd.s32 %s301, 1
      %p305 = scmp.eq.s32.totalorder %s31, 1
      %p306 = scmp.ne.s32.totalorder %s301, %s303
      %p307 = scmp.eq.s32.totalorder %s31, 0
      %p308 = por %p306, %p307
      %p309 = scmp.ne.s32.totalorder %s301, %s303
      %p310 = scmp.eq.s32.totalorder %s36, 1
      %p311 = por %p309, %p310
      %p312 = scmp.ne.s32.totalorder %s303, %s304
      %p313 = scmp.eq.s32.totalorder %s36, 0
      %p314 = por %p312, %p313
      %p315 = scmp.ne.s32.totalorder %s303, %s304
      %p316 = scmp.eq.s32.totalorder %s37, 1
      %p317 = por %p315, %p316
      %p319 = scmp.ne.s32.totalorder %s304, %s318
      %p320 = scmp.eq.s32.totalorder %s37, 0
      %p321 = por %p319, %p320
      %s323 = sadd.s32 %s322, 1
      %p326 = scmp.eq.s32.totalorder %s31, 1
      %p327 = scmp.ne.s32.totalorder %s322, %s324
      %p328 = scmp.eq.s32.totalorder %s31, 0
      %p329 = por %p327, %p328
      %p330 = scmp.ne.s32.totalorder %s322, %s324
      %p331 = scmp.eq.s32.totalorder %s36, 1
      %p332 = por %p330, %p331
      %p333 = scmp.ne.s32.totalorder %s324, %s325
      %p334 = scmp.eq.s32.totalorder %s36, 0
      %p335 = por %p333, %p334
      %p336 = scmp.ne.s32.totalorder %s324, %s325
      %p337 = scmp.eq.s32.totalorder %s37, 1
      %p338 = por %p336, %p337
      %p340 = scmp.ne.s32.totalorder %s325, %s339
      %p341 = scmp.eq.s32.totalorder %s37, 0
      %p342 = por %p340, %p341
      %s344 = sadd.s32 %s343, 1
      %p347 = scmp.eq.s32.totalorder %s31, 1
      %p348 = scmp.ne.s32.totalorder %s343, %s345
      %p349 = scmp.eq.s32.totalorder %s31, 0
      %p350 = por %p348, %p349
      %p351 = scmp.ne.s32.totalorder %s343, %s345
      %p352 = scmp.eq.s32.totalorder %s36, 1
      %p353 = por %p351, %p352
      %p354 = scmp.ne.s32.totalorder %s345, %s346
      %p355 = scmp.eq.s32.totalorder %s36, 0
      %p356 = por %p354, %p355
      %p357 = scmp.ne.s32.totalorder %s345, %s346
      %p358 = scmp.eq.s32.totalorder %s37, 1
      %p359 = por %p357, %p358
      %p361 = scmp.ne.s32.totalorder %s346, %s360
      %p362 = scmp.eq.s32.totalorder %s37, 0
      %p363 = por %p361, %p362
      %s365 = sadd.s32 %s364, 1
      %p368 = scmp.eq.s32.totalorder %s31, 1
      %p369 = scmp.ne.s32.totalorder %s364, %s366
      %p370 = scmp.eq.s32.totalorder %s31, 0
      %p371 = por %p369, %p370
      %p372 = scmp.ne.s32.totalorder %s364, %s366
      %p373 = scmp.eq.s32.totalorder %s36, 1
      %p374 = por %p372, %p373
      %p375 = scmp.ne.s32.totalorder %s366, %s367
      %p376 = scmp.eq.s32.totalorder %s36, 0
      %p377 = por %p375, %p376
      %p378 = scmp.ne.s32.totalorder %s366, %s367
      %p379 = scmp.eq.s32.totalorder %s37, 1
      %p380 = por %p378, %p379
      %p382 = scmp.ne.s32.totalorder %s367, %s381
      %p383 = scmp.eq.s32.totalorder %s37, 0
      %p384 = por %p382, %p383
      %s386 = sadd.s32 %s385, 1
      %p389 = scmp.eq.s32.totalorder %s31, 1
      %p390 = scmp.ne.s32.totalorder %s385, %s387
      %p391 = scmp.eq.s32.totalorder %s31, 0
      %p392 = por %p390, %p391
      %p393 = scmp.ne.s32.totalorder %s385, %s387
      %p394 = scmp.eq.s32.totalorder %s36, 1
      %p395 = por %p393, %p394
      %p396 = scmp.ne.s32.totalorder %s387, %s388
      %p397 = scmp.eq.s32.totalorder %s36, 0
      %p398 = por %p396, %p397
      %p399 = scmp.ne.s32.totalorder %s387, %s388
      %p400 = scmp.eq.s32.totalorder %s37, 1
      %p401 = por %p399, %p400
      %p403 = scmp.ne.s32.totalorder %s388, %s402
      %p404 = scmp.eq.s32.totalorder %s37, 0
      %p405 = por %p403, %p404
      %s407 = sadd.s32 %s406, 1
      %p410 = scmp.eq.s32.totalorder %s31, 1
      %p411 = scmp.ne.s32.totalorder %s406, %s408
      %p412 = scmp.eq.s32.totalorder %s31, 0
      %p413 = por %p411, %p412
      %p414 = scmp.ne.s32.totalorder %s406, %s408
      %p415 = scmp.eq.s32.totalorder %s36, 1
      %p416 = por %p414, %p415
      %p417 = scmp.ne.s32.totalorder %s408, %s409
      %p418 = scmp.eq.s32.totalorder %s36, 0
      %p419 = por %p417, %p418
      %p420 = scmp.ne.s32.totalorder %s408, %s409
      %p421 = scmp.eq.s32.totalorder %s37, 1
      %p422 = por %p420, %p421
      %p424 = scmp.ne.s32.totalorder %s409, %s423
      %p425 = scmp.eq.s32.totalorder %s37, 0
      %p426 = por %p424, %p425
      %s428 = sadd.s32 %s427, 1
      %p431 = scmp.eq.s32.totalorder %s31, 1
      %p432 = scmp.ne.s32.totalorder %s427, %s429
      %p433 = scmp.eq.s32.totalorder %s31, 0
      %p434 = por %p432, %p433
      %p435 = scmp.ne.s32.totalorder %s427, %s429
      %p436 = scmp.eq.s32.totalorder %s36, 1
      %p437 = por %p435, %p436
      %p438 = scmp.ne.s32.totalorder %s429, %s430
      %p439 = scmp.eq.s32.totalorder %s36, 0
      %p440 = por %p438, %p439
      %p441 = scmp.ne.s32.totalorder %s429, %s430
      %p442 = scmp.eq.s32.totalorder %s37, 1
      %p443 = por %p441, %p442
      %p445 = scmp.ne.s32.totalorder %s430, %s444
      %p446 = scmp.eq.s32.totalorder %s37, 0
      %p447 = por %p445, %p446
      %s449 = sadd.s32 %s448, 1
      %p452 = scmp.eq.s32.totalorder %s31, 1
      %p453 = scmp.ne.s32.totalorder %s448, %s450
      %p454 = scmp.eq.s32.totalorder %s31, 0
      %p455 = por %p453, %p454
      %p456 = scmp.ne.s32.totalorder %s448, %s450
      %p457 = scmp.eq.s32.totalorder %s36, 1
      %p458 = por %p456, %p457
      %p459 = scmp.ne.s32.totalorder %s450, %s451
      %p460 = scmp.eq.s32.totalorder %s36, 0
      %p461 = por %p459, %p460
      %p462 = scmp.ne.s32.totalorder %s450, %s451
      %p463 = scmp.eq.s32.totalorder %s37, 1
      %p464 = por %p462, %p463
      %p466 = scmp.ne.s32.totalorder %s451, %s465
      %p467 = scmp.eq.s32.totalorder %s37, 0
      %p468 = por %p466, %p467
      %s470 = sadd.s32 %s469, 1
      %p473 = scmp.eq.s32.totalorder %s31, 1
      %p474 = scmp.ne.s32.totalorder %s469, %s471
      %p475 = scmp.eq.s32.totalorder %s31, 0
      %p476 = por %p474, %p475
      %p477 = scmp.ne.s32.totalorder %s469, %s471
      %p478 = scmp.eq.s32.totalorder %s36, 1
      %p479 = por %p477, %p478
      %p480 = scmp.ne.s32.totalorder %s471, %s472
      %p481 = scmp.eq.s32.totalorder %s36, 0
      %p482 = por %p480, %p481
      %p483 = scmp.ne.s32.totalorder %s471, %s472
      %p484 = scmp.eq.s32.totalorder %s37, 1
      %p485 = por %p483, %p484
      %p487 = scmp.ne.s32.totalorder %s472, %s486
      %p488 = scmp.eq.s32.totalorder %s37, 0
      %p489 = por %p487, %p488
      %s491 = sadd.s32 %s490, 1
      %p494 = scmp.eq.s32.totalorder %s31, 1
      %p495 = scmp.ne.s32.totalorder %s490, %s492
      %p496 = scmp.eq.s32.totalorder %s31, 0
      %p497 = por %p495, %p496
      %p498 = scmp.ne.s32.totalorder %s490, %s492
      %p499 = scmp.eq.s32.totalorder %s36, 1
      %p500 = por %p498, %p499
      %p501 = scmp.ne.s32.totalorder %s492, %s493
      %p502 = scmp.eq.s32.totalorder %s36, 0
      %p503 = por %p501, %p502
      %p504 = scmp.ne.s32.totalorder %s492, %s493
      %p505 = scmp.eq.s32.totalorder %s37, 1
      %p506 = por %p504, %p505
      %p508 = scmp.ne.s32.totalorder %s493, %s507
      %p509 = scmp.eq.s32.totalorder %s37, 0
      %p510 = por %p508, %p509
      %s511 = ssub.s32 %s31, %s38
      %p512 = scmp.eq.s32.totalorder %s511, 0
      %s514 = sadd.s32 %s513, 1
      %s515 = scalar_select %p512, %s513, %s514
      %p518 = pneg %p512
      %p519 = scmp.eq.s32.totalorder %s31, 1
      %p520 = por %p518, %p519
      %p521 = scmp.ne.s32.totalorder %s513, %s516
      %p522 = scmp.eq.s32.totalorder %s31, 0
      %p523 = por %p521, %p522
      %p524 = scmp.ne.s32.totalorder %s513, %s516
      %p525 = scmp.eq.s32.totalorder %s36, 1
      %p526 = por %p524, %p525
      %p527 = scmp.ne.s32.totalorder %s516, %s517
      %p528 = scmp.eq.s32.totalorder %s36, 0
      %p529 = por %p527, %p528
      %p530 = scmp.ne.s32.totalorder %s516, %s517
      %p531 = scmp.eq.s32.totalorder %s37, 1
      %p532 = por %p530, %p531
      %p534 = scmp.ne.s32.totalorder %s517, %s533
      %p535 = scmp.eq.s32.totalorder %s37, 0
      %p536 = por %p534, %p535
      %p537 = scmp.le.s32.totalorder 1, %s31
      %p538 = scmp.lt.s32.totalorder %s31, 3
      %p539 = pnand %p537, %p538
      %p540 = pneg %p539
      // Predicated region
      $region9: #{transformer_forward.7} parent=5 // pred_check
        _
      $region10: #{transformer_forward.7} parent=5 // pred_check_branch
        %542 = sbr.rel (%p539) target = $region12
      $region11: #{transformer_forward.7} parent=5 // pred_region
        %s543 = ssub.s32 %s31, 1
        // Predicated region
        $region13: #{transformer_forward.7} parent=11 // pred_check
          %p544 = pneg %p104
        $region14: #{transformer_forward.7} parent=11 // pred_check_branch
          %546 = sbr.rel (%p544) target = $region16
        $region15: #{transformer_forward.7} parent=11 // pred_region
          _
        $region16: #{transformer_forward.7} parent=11 // pred_fallthru
          _
        // Predicated region
        $region17: #{transformer_forward.7} parent=11 // pred_check
          %p547 = pneg %p125
        $region18: #{transformer_forward.7} parent=11 // pred_check_branch
          %549 = sbr.rel (%p547) target = $region20
        $region19: #{transformer_forward.7} parent=11 // pred_region
          _
        $region20: #{transformer_forward.7} parent=11 // pred_fallthru
          _
        // Predicated region
        $region21: #{transformer_forward.7} parent=11 // pred_check
          %p550 = pneg %p146
        $region22: #{transformer_forward.7} parent=11 // pred_check_branch
          %552 = sbr.rel (%p550) target = $region24
        $region23: #{transformer_forward.7} parent=11 // pred_region
          _
        $region24: #{transformer_forward.7} parent=11 // pred_fallthru
          _
        // Predicated region
        $region25: #{transformer_forward.7} parent=11 // pred_check
          %p553 = pneg %p167
        $region26: #{transformer_forward.7} parent=11 // pred_check_branch
          %555 = sbr.rel (%p553) target = $region28
        $region27: #{transformer_forward.7} parent=11 // pred_region
          _
        $region28: #{transformer_forward.7} parent=11 // pred_fallthru
          _
        // Predicated region
        $region29: #{transformer_forward.7} parent=11 // pred_check
          %p556 = pneg %p188
        $region30: #{transformer_forward.7} parent=11 // pred_check_branch
          %558 = sbr.rel (%p556) target = $region32
        $region31: #{transformer_forward.7} parent=11 // pred_region
          _
        $region32: #{transformer_forward.7} parent=11 // pred_fallthru
          _
        // Predicated region
        $region33: #{transformer_forward.7} parent=11 // pred_check
          %p559 = pneg %p209
        $region34: #{transformer_forward.7} parent=11 // pred_check_branch
          %561 = sbr.rel (%p559) target = $region36
        $region35: #{transformer_forward.7} parent=11 // pred_region
          _
        $region36: #{transformer_forward.7} parent=11 // pred_fallthru
          _
        // Predicated region
        $region37: #{transformer_forward.7} parent=11 // pred_check
          %p562 = pneg %p230
        $region38: #{transformer_forward.7} parent=11 // pred_check_branch
          %564 = sbr.rel (%p562) target = $region40
        $region39: #{transformer_forward.7} parent=11 // pred_region
          _
        $region40: #{transformer_forward.7} parent=11 // pred_fallthru
          _
        // Predicated region
        $region41: #{transformer_forward.7} parent=11 // pred_check
          %p565 = pneg %p251
        $region42: #{transformer_forward.7} parent=11 // pred_check_branch
          %567 = sbr.rel (%p565) target = $region44
        $region43: #{transformer_forward.7} parent=11 // pred_region
          _
        $region44: #{transformer_forward.7} parent=11 // pred_fallthru
          _
        // Predicated region
        $region45: #{transformer_forward.7} parent=11 // pred_check
          %p568 = pneg %p272
        $region46: #{transformer_forward.7} parent=11 // pred_check_branch
          %570 = sbr.rel (%p568) target = $region48
        $region47: #{transformer_forward.7} parent=11 // pred_region
          _
        $region48: #{transformer_forward.7} parent=11 // pred_fallthru
          _
        // Predicated region
        $region49: #{transformer_forward.7} parent=11 // pred_check
          %p571 = pneg %p293
        $region50: #{transformer_forward.7} parent=11 // pred_check_branch
          %573 = sbr.rel (%p571) target = $region52
        $region51: #{transformer_forward.7} parent=11 // pred_region
          _
        $region52: #{transformer_forward.7} parent=11 // pred_fallthru
          _
        // Predicated region
        $region53: #{transformer_forward.7} parent=11 // pred_check
          %p574 = pneg %p314
        $region54: #{transformer_forward.7} parent=11 // pred_check_branch
          %576 = sbr.rel (%p574) target = $region56
        $region55: #{transformer_forward.7} parent=11 // pred_region
          _
        $region56: #{transformer_forward.7} parent=11 // pred_fallthru
          _
        // Predicated region
        $region57: #{transformer_forward.7} parent=11 // pred_check
          %p577 = pneg %p335
        $region58: #{transformer_forward.7} parent=11 // pred_check_branch
          %579 = sbr.rel (%p577) target = $region60
        $region59: #{transformer_forward.7} parent=11 // pred_region
          _
        $region60: #{transformer_forward.7} parent=11 // pred_fallthru
          _
        // Predicated region
        $region61: #{transformer_forward.7} parent=11 // pred_check
          %p580 = pneg %p356
        $region62: #{transformer_forward.7} parent=11 // pred_check_branch
          %582 = sbr.rel (%p580) target = $region64
        $region63: #{transformer_forward.7} parent=11 // pred_region
          _
        $region64: #{transformer_forward.7} parent=11 // pred_fallthru
          _
        // Predicated region
        $region65: #{transformer_forward.7} parent=11 // pred_check
          %p583 = pneg %p377
        $region66: #{transformer_forward.7} parent=11 // pred_check_branch
          %585 = sbr.rel (%p583) target = $region68
        $region67: #{transformer_forward.7} parent=11 // pred_region
          _
        $region68: #{transformer_forward.7} parent=11 // pred_fallthru
          _
        // Predicated region
        $region69: #{transformer_forward.7} parent=11 // pred_check
          %p586 = pneg %p398
        $region70: #{transformer_forward.7} parent=11 // pred_check_branch
          %588 = sbr.rel (%p586) target = $region72
        $region71: #{transformer_forward.7} parent=11 // pred_region
          _
        $region72: #{transformer_forward.7} parent=11 // pred_fallthru
          _
        // Predicated region
        $region73: #{transformer_forward.7} parent=11 // pred_check
          %p589 = pneg %p419
        $region74: #{transformer_forward.7} parent=11 // pred_check_branch
          %591 = sbr.rel (%p589) target = $region76
        $region75: #{transformer_forward.7} parent=11 // pred_region
          _
        $region76: #{transformer_forward.7} parent=11 // pred_fallthru
          _
        // Predicated region
        $region77: #{transformer_forward.7} parent=11 // pred_check
          %p592 = pneg %p440
        $region78: #{transformer_forward.7} parent=11 // pred_check_branch
          %594 = sbr.rel (%p592) target = $region80
        $region79: #{transformer_forward.7} parent=11 // pred_region
          _
        $region80: #{transformer_forward.7} parent=11 // pred_fallthru
          _
        // Predicated region
        $region81: #{transformer_forward.7} parent=11 // pred_check
          %p595 = pneg %p461
        $region82: #{transformer_forward.7} parent=11 // pred_check_branch
          %597 = sbr.rel (%p595) target = $region84
        $region83: #{transformer_forward.7} parent=11 // pred_region
          _
        $region84: #{transformer_forward.7} parent=11 // pred_fallthru
          _
        // Predicated region
        $region85: #{transformer_forward.7} parent=11 // pred_check
          %p598 = pneg %p482
        $region86: #{transformer_forward.7} parent=11 // pred_check_branch
          %600 = sbr.rel (%p598) target = $region88
        $region87: #{transformer_forward.7} parent=11 // pred_region
          _
        $region88: #{transformer_forward.7} parent=11 // pred_fallthru
          _
        // Predicated region
        $region89: #{transformer_forward.7} parent=11 // pred_check
          %p601 = pneg %p503
        $region90: #{transformer_forward.7} parent=11 // pred_check_branch
          %603 = sbr.rel (%p601) target = $region92
        $region91: #{transformer_forward.7} parent=11 // pred_region
          _
        $region92: #{transformer_forward.7} parent=11 // pred_fallthru
          _
      $region12: #{transformer_forward.7} parent=5 // pred_fallthru
        _
      %p604 = scmp.lt.s32.totalorder %s31, 2
      // Predicated region
      $region93: #{transformer_forward.7} parent=5 // pred_check
        %p605 = pneg %p604
      $region94: #{transformer_forward.7} parent=5 // pred_check_branch
        %607 = sbr.rel (%p605) target = $region96
      $region95: #{transformer_forward.7} parent=5 // pred_region
        // Predicated region
        $region97: #{transformer_forward.7} parent=95 // pred_check
          %p608 = pneg %p51
        $region98: #{transformer_forward.7} parent=95 // pred_check_branch
          %610 = sbr.rel (%p608) target = $region100
        $region99: #{transformer_forward.7} parent=95 // pred_region
          %p611 = scmp.lt.s32.totalorder %s31, 1
          %s612 = scalar_select %p611, %s31, 1
          %s613 = smul.addr %s612, 8
          %s614 = scalar_lea.vmem %s0, %s613
        $region100: #{transformer_forward.7} parent=95 // pred_fallthru
          _
        // Predicated region
        $region101: #{transformer_forward.7} parent=95 // pred_check
          %p615 = pneg %p77
        $region102: #{transformer_forward.7} parent=95 // pred_check_branch
          %617 = sbr.rel (%p615) target = $region104
        $region103: #{transformer_forward.7} parent=95 // pred_region
          %p618 = scmp.lt.s32.totalorder %s31, 1
          %s619 = scalar_select %p618, %s31, 1
          %s620 = smul.addr %s619, 8
          %s621 = scalar_lea.vmem %s1, %s620
        $region104: #{transformer_forward.7} parent=95 // pred_fallthru
          _
      $region96: #{transformer_forward.7} parent=5 // pred_fallthru
        _
      %p622 = scmp.le.s32.totalorder 1, %s31
      %p623 = scmp.lt.s32.totalorder %s31, 3
      %p624 = pnand %p622, %p623
      %p625 = pneg %p624
      // Predicated region
      $region105: #{transformer_forward.7} parent=5 // pred_check
        _
      $region106: #{transformer_forward.7} parent=5 // pred_check_branch
        %627 = sbr.rel (%p624) target = $region108
      $region107: #{transformer_forward.7} parent=5 // pred_region
        %s628 = ssub.s32 %s31, 1
        %p629 = scmp.lt.s32.totalorder %s36, 1
        %s630 = scalar_select %p629, %s36, 1
        %s631 = smul.addr %s630, 8
        %s632 = scalar_lea.vmem %s0, %s631
        %p633 = pneg %p57
        %p634 = pneg %p54
        %p635 = scmp.lt.s32.totalorder %s36, 1
        %s636 = scalar_select %p635, %s36, 1
        %s637 = smul.addr %s636, 8
        %s638 = scalar_lea.vmem %s1, %s637
        %p639 = pneg %p83
        %p640 = pneg %p80
        %p641 = pneg %p104
        %p642 = pneg %p101
        %p643 = pneg %p125
        %p644 = pneg %p122
        %p645 = pneg %p146
        %p646 = pneg %p143
        %p647 = pneg %p167
        %p648 = pneg %p164
        %p649 = pneg %p188
        %p650 = pneg %p185
        %p651 = pneg %p209
        %p652 = pneg %p206
        %p653 = pneg %p230
        %p654 = pneg %p227
        %p655 = pneg %p251
        %p656 = pneg %p248
        %p657 = pneg %p272
        %p658 = pneg %p269
        %p659 = pneg %p293
        %p660 = pneg %p290
        %p661 = pneg %p314
        %p662 = pneg %p311
        %p663 = pneg %p335
        %p664 = pneg %p332
        %p665 = pneg %p356
        %p666 = pneg %p353
        %p667 = pneg %p377
        %p668 = pneg %p374
        %p669 = pneg %p398
        %p670 = pneg %p395
        %p671 = pneg %p419
        %p672 = pneg %p416
        %p673 = pneg %p440
        %p674 = pneg %p437
        %p675 = pneg %p461
        %p676 = pneg %p458
        %p677 = pneg %p482
        %p678 = pneg %p479
        %p679 = pneg %p503
        %p680 = pneg %p500
        %p681 = pneg %p529
        %p682 = pneg %p526
        %s683 = sand.u32 %s516, 1
        %s684 = scalar_lea.sflag [#allocation3], %s683
        %s685 = sand.u32 %s516, 1
        %s686 = smul.addr %s685, 8
        %s687 = scalar_lea.vmem [#allocation2], %s686
        %p688 = scmp.lt.s32.totalorder %s36, 1
        %s689 = scalar_select %p688, %s36, 1
        %s690 = smul.addr %s689, 8
        %s691 = scalar_lea.vmem %s0, %s690
        %p692 = scmp.lt.s32.totalorder %s36, 1
        %s693 = scalar_select %p692, %s36, 1
        %s694 = smul.addr %s693, 8
        %s695 = scalar_lea.vmem %s1, %s694
        %v697 = vld [vmem:[%s691] sm:$0xff]
        %v698 = vld [vmem:[%s695] sm:$0xff]
        %v699 = vpack.c.bf16 %v697, %v697
        %v700 = vld [vmem:[%s2] sm:$0xf]
        %v701 = vld [vmem:[%s2 + $0x4] sm:$0xf]
        %v702 = vld [vmem:[%s2 + $0x8] sm:$0xf]
        %v703 = vld [vmem:[%s2 + $0xc] sm:$0xf]
        %v704 = vld [vmem:[%s3] sm:$0x1]
        %v706 = vlaneseq
        %v707 = vshrl.u32 %v706, 7
        %v708 = vsub.s32 0, %v707
        %v709 = vrot.slane %v704, %v708
        %v715 = vunpack.c.l.b16 %v700
        %v716 = vunpack.c.l.b16 %v701
        %v717 = vunpack.c.l.b16 %v702
        %v718 = vunpack.c.l.b16 %v703
        %v719 = vpack.c.b16 %v716, %v715
        %v720 = vpack.c.b16 %v718, %v717
        %vm723 = vcmask 261120
        %v725 = vsel %vm723, %v699, 0
        %727 = vmatprep.subr.bf16.mxu0 0
        %728 = vmatpush1.bf16.msra.mxu0 0
        %729 = vmatprep.subr.bf16.mxu0 0
        %730 = vmatpush1.bf16.msra.mxu0 0
        %731 = vmatprep.subr.bf16.mxu0 0
        %732 = vmatpush1.bf16.msra.mxu0 0
        %733 = vmatprep.subr.bf16.mxu0 0
        %734 = vmatpush1.bf16.msra.mxu0 0
        %735 = vmatprep.subr.bf16.mxu0 0
        %736 = vmatpush1.bf16.msra.mxu0 0
        %737 = vmatprep.subr.bf16.mxu0 0
        %738 = vmatpush1.bf16.msra.mxu0 0
        %739 = vmatprep.subr.bf16.mxu0 0
        %740 = vmatpush1.bf16.msra.mxu0 %v720
        %741 = vmatprep.subr.bf16.mxu0 0
        %742 = vmatpush1.bf16.msra.mxu0 %v719
        %743 = vmatprep.subr.bf16.mxu0 0
        %744 = vmatpush2.bf16.msra.mxu0 0
        %745 = vmatprep.subr.bf16.mxu0 0
        %746 = vmatpush2.bf16.msra.mxu0 0
        %747 = vmatprep.subr.bf16.mxu0 0
        %748 = vmatpush2.bf16.msra.mxu0 0
        %749 = vmatprep.subr.bf16.mxu0 0
        %750 = vmatpush2.bf16.msra.mxu0 0
        %751 = vmatprep.subr.bf16.mxu0 0
        %752 = vmatpush2.bf16.msra.mxu0 0
        %753 = vmatprep.subr.bf16.mxu0 0
        %754 = vmatpush2.bf16.msra.mxu0 0
        %755 = vmatprep.subr.bf16.mxu0 0
        %756 = vmatpush2.bf16.msra.mxu0 0
        %757 = vmatprep.subr.bf16.mxu0 0
        %758 = vmatpush2.bf16.msra.mxu0 0
        %759 = vmatprep.mubr.bf16.mxu0 0
        %760 = vmatmul.mubr.bf16.gmra.mxu0 %v725
        %v761 = vpop.f32.mrf.mxu0
        %v762 = vadd.f32 %v709, %v761
        %v763 = vpop.f32.mrf.mxu0
        %v764 = vpop.f32.mrf.mxu0
        %v765 = vpop.f32.mrf.mxu0
        %766 = vdwg.mxu0
        %768 = vrot.lane.b32.xlu0 %v762, 120
        %v769 = vpop.permute.xlu0 %768
        %771 = vrot.lane.b32.xlu0 %v762, 112
        %v772 = vpop.permute.xlu0 %771
        %774 = vrot.lane.b32.xlu0 %v762, 104
        %v775 = vpop.permute.xlu0 %774
        %v777 = vpack.c.bf16 %v762, %v762
        %v778 = vpack.c.bf16 %v769, %v769
        %v779 = vpack.c.bf16 %v772, %v772
        %v780 = vpack.c.bf16 %v775, %v775
        %782 = vrot.lane.b32.xlu0 %v777, 96
        %v783 = vpop.permute.xlu0 %782
        %vm784 = vcmask 64512
        %v786 = vsel %vm784, %v777, 0
        %v789 = vsel %vm784, %v783, 0
        %791 = vmatprep.subr.bf16.mxu0 0
        %792 = vmatpush1.bf16.xpose.msra.mxu0 0
        %793 = vmatprep.subr.bf16.mxu0 0
        %794 = vmatpush1.bf16.xpose.msra.mxu0 0
        %795 = vmatprep.subr.bf16.mxu0 0
        %796 = vmatpush1.bf16.xpose.msra.mxu0 0
        %797 = vmatprep.subr.bf16.mxu0 0
        %798 = vmatpush1.bf16.xpose.msra.mxu0 0
        %799 = vmatprep.subr.bf16.mxu0 0
        %800 = vmatpush1.bf16.xpose.msra.mxu0 0
        %801 = vmatprep.subr.bf16.mxu0 0
        %802 = vmatpush1.bf16.xpose.msra.mxu0 0
        %803 = vmatprep.subr.bf16.mxu0 0
        %804 = vmatpush1.bf16.xpose.msra.mxu0 0
        %805 = vmatprep.subr.bf16.mxu0 0
        %806 = vmatpush1.bf16.xpose.msra.mxu0 %v789
        %807 = vmatprep.subr.bf16.mxu0 0
        %808 = vmatpush2.bf16.xpose.msra.mxu0 0
        %809 = vmatprep.subr.bf16.mxu0 0
        %810 = vmatpush2.bf16.xpose.msra.mxu0 0
        %811 = vmatprep.subr.bf16.mxu0 0
        %812 = vmatpush2.bf16.xpose.msra.mxu0 0
        %813 = vmatprep.subr.bf16.mxu0 0
        %814 = vmatpush2.bf16.xpose.msra.mxu0 0
        %815 = vmatprep.subr.bf16.mxu0 0
        %816 = vmatpush2.bf16.xpose.msra.mxu0 0
        %817 = vmatprep.subr.bf16.mxu0 0
        %818 = vmatpush2.bf16.xpose.msra.mxu0 0
        %819 = vmatprep.subr.bf16.mxu0 0
        %820 = vmatpush2.bf16.xpose.msra.mxu0 0
        %821 = vmatprep.subr.bf16.mxu0 0
        %822 = vmatpush2.bf16.xpose.msra.mxu0 0
        %823 = vmatprep.mubr.bf16.mxu0 0
        %824 = vmatmul.mubr.bf16.gmra.mxu0 %v786
        %v825 = vpop.f32.mrf.mxu0
        %v826 = vadd.f32 0.0, %v825
        %v827 = vpop.f32.mrf.mxu0
        %v828 = vpop.f32.mrf.mxu0
        %v829 = vpop.f32.mrf.mxu0
        %830 = vdwg.mxu0
        %832 = vrot.lane.b32.xlu0 %v778, 96
        %v833 = vpop.permute.xlu0 %832
        %v835 = vsel %vm784, %v778, 0
        %v838 = vsel %vm784, %v833, 0
        %840 = vmatprep.subr.bf16.mxu0 0
        %841 = vmatpush1.bf16.xpose.msra.mxu0 0
        %842 = vmatprep.subr.bf16.mxu0 0
        %843 = vmatpush1.bf16.xpose.msra.mxu0 0
        %844 = vmatprep.subr.bf16.mxu0 0
        %845 = vmatpush1.bf16.xpose.msra.mxu0 0
        %846 = vmatprep.subr.bf16.mxu0 0
        %847 = vmatpush1.bf16.xpose.msra.mxu0 0
        %848 = vmatprep.subr.bf16.mxu0 0
        %849 = vmatpush1.bf16.xpose.msra.mxu0 0
        %850 = vmatprep.subr.bf16.mxu0 0
        %851 = vmatpush1.bf16.xpose.msra.mxu0 0
        %852 = vmatprep.subr.bf16.mxu0 0
        %853 = vmatpush1.bf16.xpose.msra.mxu0 0
        %854 = vmatprep.subr.bf16.mxu0 0
        %855 = vmatpush1.bf16.xpose.msra.mxu0 %v838
        %856 = vmatprep.subr.bf16.mxu0 0
        %857 = vmatpush2.bf16.xpose.msra.mxu0 0
        %858 = vmatprep.subr.bf16.mxu0 0
        %859 = vmatpush2.bf16.xpose.msra.mxu0 0
        %860 = vmatprep.subr.bf16.mxu0 0
        %861 = vmatpush2.bf16.xpose.msra.mxu0 0
        %862 = vmatprep.subr.bf16.mxu0 0
        %863 = vmatpush2.bf16.xpose.msra.mxu0 0
        %864 = vmatprep.subr.bf16.mxu0 0
        %865 = vmatpush2.bf16.xpose.msra.mxu0 0
        %866 = vmatprep.subr.bf16.mxu0 0
        %867 = vmatpush2.bf16.xpose.msra.mxu0 0
        %868 = vmatprep.subr.bf16.mxu0 0
        %869 = vmatpush2.bf16.xpose.msra.mxu0 0
        %870 = vmatprep.subr.bf16.mxu0 0
        %871 = vmatpush2.bf16.xpose.msra.mxu0 0
        %872 = vmatprep.mubr.bf16.mxu0 0
        %873 = vmatmul.mubr.bf16.gmra.mxu0 %v835
        %v874 = vpop.f32.mrf.mxu0
        %v875 = vadd.f32 0.0, %v874
        %v876 = vpop.f32.mrf.mxu0
        %v877 = vpop.f32.mrf.mxu0
        %v878 = vpop.f32.mrf.mxu0
        %879 = vdwg.mxu0
        %881 = vrot.lane.b32.xlu0 %v779, 96
        %v882 = vpop.permute.xlu0 %881
        %v884 = vsel %vm784, %v779, 0
        %v887 = vsel %vm784, %v882, 0
        %889 = vmatprep.subr.bf16.mxu0 0
        %890 = vmatpush1.bf16.xpose.msra.mxu0 0
        %891 = vmatprep.subr.bf16.mxu0 0
        %892 = vmatpush1.bf16.xpose.msra.mxu0 0
        %893 = vmatprep.subr.bf16.mxu0 0
        %894 = vmatpush1.bf16.xpose.msra.mxu0 0
        %895 = vmatprep.subr.bf16.mxu0 0
        %896 = vmatpush1.bf16.xpose.msra.mxu0 0
        %897 = vmatprep.subr.bf16.mxu0 0
        %898 = vmatpush1.bf16.xpose.msra.mxu0 0
        %899 = vmatprep.subr.bf16.mxu0 0
        %900 = vmatpush1.bf16.xpose.msra.mxu0 0
        %901 = vmatprep.subr.bf16.mxu0 0
        %902 = vmatpush1.bf16.xpose.msra.mxu0 0
        %903 = vmatprep.subr.bf16.mxu0 0
        %904 = vmatpush1.bf16.xpose.msra.mxu0 %v887
        %905 = vmatprep.subr.bf16.mxu0 0
        %906 = vmatpush2.bf16.xpose.msra.mxu0 0
        %907 = vmatprep.subr.bf16.mxu0 0
        %908 = vmatpush2.bf16.xpose.msra.mxu0 0
        %909 = vmatprep.subr.bf16.mxu0 0
        %910 = vmatpush2.bf16.xpose.msra.mxu0 0
        %911 = vmatprep.subr.bf16.mxu0 0
        %912 = vmatpush2.bf16.xpose.msra.mxu0 0
        %913 = vmatprep.subr.bf16.mxu0 0
        %914 = vmatpush2.bf16.xpose.msra.mxu0 0
        %915 = vmatprep.subr.bf16.mxu0 0
        %916 = vmatpush2.bf16.xpose.msra.mxu0 0
        %917 = vmatprep.subr.bf16.mxu0 0
        %918 = vmatpush2.bf16.xpose.msra.mxu0 0
        %919 = vmatprep.subr.bf16.mxu0 0
        %920 = vmatpush2.bf16.xpose.msra.mxu0 0
        %921 = vmatprep.mubr.bf16.mxu0 0
        %922 = vmatmul.mubr.bf16.gmra.mxu0 %v884
        %v923 = vpop.f32.mrf.mxu0
        %v924 = vadd.f32 0.0, %v923
        %v925 = vpop.f32.mrf.mxu0
        %v926 = vpop.f32.mrf.mxu0
        %v927 = vpop.f32.mrf.mxu0
        %928 = vdwg.mxu0
        %930 = vrot.lane.b32.xlu0 %v780, 96
        %v931 = vpop.permute.xlu0 %930
        %v933 = vsel %vm784, %v780, 0
        %v936 = vsel %vm784, %v931, 0
        %938 = vmatprep.subr.bf16.mxu0 0
        %939 = vmatpush1.bf16.xpose.msra.mxu0 0
        %940 = vmatprep.subr.bf16.mxu0 0
        %941 = vmatpush1.bf16.xpose.msra.mxu0 0
        %942 = vmatprep.subr.bf16.mxu0 0
        %943 = vmatpush1.bf16.xpose.msra.mxu0 0
        %944 = vmatprep.subr.bf16.mxu0 0
        %945 = vmatpush1.bf16.xpose.msra.mxu0 0
        %946 = vmatprep.subr.bf16.mxu0 0
        %947 = vmatpush1.bf16.xpose.msra.mxu0 0
        %948 = vmatprep.subr.bf16.mxu0 0
        %949 = vmatpush1.bf16.xpose.msra.mxu0 0
        %950 = vmatprep.subr.bf16.mxu0 0
        %951 = vmatpush1.bf16.xpose.msra.mxu0 0
        %952 = vmatprep.subr.bf16.mxu0 0
        %953 = vmatpush1.bf16.xpose.msra.mxu0 %v936
        %954 = vmatprep.subr.bf16.mxu0 0
        %955 = vmatpush2.bf16.xpose.msra.mxu0 0
        %956 = vmatprep.subr.bf16.mxu0 0
        %957 = vmatpush2.bf16.xpose.msra.mxu0 0
        %958 = vmatprep.subr.bf16.mxu0 0
        %959 = vmatpush2.bf16.xpose.msra.mxu0 0
        %960 = vmatprep.subr.bf16.mxu0 0
        %961 = vmatpush2.bf16.xpose.msra.mxu0 0
        %962 = vmatprep.subr.bf16.mxu0 0
        %963 = vmatpush2.bf16.xpose.msra.mxu0 0
        %964 = vmatprep.subr.bf16.mxu0 0
        %965 = vmatpush2.bf16.xpose.msra.mxu0 0
        %966 = vmatprep.subr.bf16.mxu0 0
        %967 = vmatpush2.bf16.xpose.msra.mxu0 0
        %968 = vmatprep.subr.bf16.mxu0 0
        %969 = vmatpush2.bf16.xpose.msra.mxu0 0
        %970 = vmatprep.mubr.bf16.mxu0 0
        %971 = vmatmul.mubr.bf16.gmra.mxu0 %v933
        %v972 = vpop.f32.mrf.mxu0
        %v973 = vadd.f32 0.0, %v972
        %v974 = vpop.f32.mrf.mxu0
        %v975 = vpop.f32.mrf.mxu0
        %v976 = vpop.f32.mrf.mxu0
        %977 = vdwg.mxu0
        %v978 = vmul.f32 %v826, 0.35355338
        %v979 = vmul.f32 %v875, 0.35355338
        %v980 = vmul.f32 %v924, 0.35355338
        %v981 = vmul.f32 %v973, 0.35355338
        %v982 = vlaneseq
        %v983 = vshrl.u32 %v982, 7
        %v984 = vlaneseq
        %v985 = vand.u32 %v984, 127
        %vm986 = vcmp.le.s32.totalorder %v985, %v983
        %v987 = vsel %vm986, 1, 0
        %vm988 = vcmp.eq.s32.totalorder %v987, 1
        %v989 = vsel %vm988, %v978, -1e+09
        %v990 = vsel %vm988, %v979, -1e+09
        %v991 = vsel %vm988, %v980, -1e+09
        %v992 = vsel %vm988, %v981, -1e+09
        %v993 = vsel %vm784, %v989, -inf
        %994 = vmax.xlane.f32.xlu0 %v993
        %v995 = vpop.xlane.xlu0 %994
        %v996 = vsel %vm784, %v990, -inf
        %997 = vmax.xlane.f32.xlu0 %v996
        %v998 = vpop.xlane.xlu0 %997
        %v999 = vsel %vm784, %v991, -inf
        %1000 = vmax.xlane.f32.xlu0 %v999
        %v1001 = vpop.xlane.xlu0 %1000
        %v1002 = vsel %vm784, %v992, -inf
        %1003 = vmax.xlane.f32.xlu0 %v1002
        %v1004 = vpop.xlane.xlu0 %1003
        %v1005 = vsub.f32 %v989, %v995
        %v1006 = vsub.f32 %v990, %v998
        %v1007 = vsub.f32 %v991, %v1001
        %v1008 = vsub.f32 %v992, %v1004
        %v1009 = vmul.f32 %v1005, 1.442695
        %v1010 = vpow.pop %v1009
        %v1011 = vmul.f32 %v1006, 1.442695
        %v1012 = vpow.pop %v1011
        %v1013 = vmul.f32 %v1007, 1.442695
        %v1014 = vpow.pop %v1013
        %v1015 = vmul.f32 %v1008, 1.442695
        %v1016 = vpow.pop %v1015
        %v1017 = vsel %vm784, %v1010, 0.0
        %1018 = vadd.xlane.f32.xlu0 %v1017
        %v1019 = vpop.xlane.xlu0 %1018
        %v1020 = vsel %vm784, %v1012, 0.0
        %1021 = vadd.xlane.f32.xlu0 %v1020
        %v1022 = vpop.xlane.xlu0 %1021
        %v1023 = vsel %vm784, %v1014, 0.0
        %1024 = vadd.xlane.f32.xlu0 %v1023
        %v1025 = vpop.xlane.xlu0 %1024
        %v1026 = vsel %vm784, %v1016, 0.0
        %1027 = vadd.xlane.f32.xlu0 %v1026
        %v1028 = vpop.xlane.xlu0 %1027
        %v1029 = vrcp.pop %v1019
        %v1030 = vrcp.pop %v1022
        %v1031 = vrcp.pop %v1025
        %v1032 = vrcp.pop %v1028
        %v1033 = vmul.f32 %v1010, %v1029
        %v1034 = vmul.f32 %v1012, %v1030
        %v1035 = vmul.f32 %v1014, %v1031
        %v1036 = vmul.f32 %v1016, %v1032
        %v1037 = vpack.c.bf16 %v1033, %v1033
        %v1038 = vpack.c.bf16 %v1034, %v1034
        %v1039 = vpack.c.bf16 %v1035, %v1035
        %v1040 = vpack.c.bf16 %v1036, %v1036
        %1041 = vrot.lane.b32.xlu0 %v777, 64
        %v1042 = vpop.permute.xlu0 %1041
        %v1044 = vsel %vm784, %v1037, 0
        %vm1046 = vcmask 1043456
        %v1048 = vsel %vm1046, %v1042, 0
        %1050 = vmatprep.subr.bf16.mxu0 0
        %1051 = vmatpush1.bf16.msra.mxu0 0
        %1052 = vmatprep.subr.bf16.mxu0 0
        %1053 = vmatpush1.bf16.msra.mxu0 0
        %1054 = vmatprep.subr.bf16.mxu0 0
        %1055 = vmatpush1.bf16.msra.mxu0 0
        %1056 = vmatprep.subr.bf16.mxu0 0
        %1057 = vmatpush1.bf16.msra.mxu0 0
        %1058 = vmatprep.subr.bf16.mxu0 0
        %1059 = vmatpush1.bf16.msra.mxu0 0
        %1060 = vmatprep.subr.bf16.mxu0 0
        %1061 = vmatpush1.bf16.msra.mxu0 0
        %1062 = vmatprep.subr.bf16.mxu0 0
        %1063 = vmatpush1.bf16.msra.mxu0 0
        %1064 = vmatprep.subr.bf16.mxu0 0
        %1065 = vmatpush1.bf16.msra.mxu0 %v1048
        %1066 = vmatprep.subr.bf16.mxu0 0
        %1067 = vmatpush2.bf16.msra.mxu0 0
        %1068 = vmatprep.subr.bf16.mxu0 0
        %1069 = vmatpush2.bf16.msra.mxu0 0
        %1070 = vmatprep.subr.bf16.mxu0 0
        %1071 = vmatpush2.bf16.msra.mxu0 0
        %1072 = vmatprep.subr.bf16.mxu0 0
        %1073 = vmatpush2.bf16.msra.mxu0 0
        %1074 = vmatprep.subr.bf16.mxu0 0
        %1075 = vmatpush2.bf16.msra.mxu0 0
        %1076 = vmatprep.subr.bf16.mxu0 0
        %1077 = vmatpush2.bf16.msra.mxu0 0
        %1078 = vmatprep.subr.bf16.mxu0 0
        %1079 = vmatpush2.bf16.msra.mxu0 0
        %1080 = vmatprep.subr.bf16.mxu0 0
        %1081 = vmatpush2.bf16.msra.mxu0 0
        %1082 = vmatprep.mubr.bf16.mxu0 0
        %1083 = vmatmul.mubr.bf16.gmra.mxu0 %v1044
        %v1084 = vpop.f32.mrf.mxu0
        %v1085 = vadd.f32 0.0, %v1084
        %v1086 = vpop.f32.mrf.mxu0
        %v1087 = vpop.f32.mrf.mxu0
        %v1088 = vpop.f32.mrf.mxu0
        %1089 = vdwg.mxu0
        %1090 = vrot.lane.b32.xlu0 %v778, 64
        %v1091 = vpop.permute.xlu0 %1090
        %v1093 = vsel %vm784, %v1038, 0
        %v1096 = vsel %vm1046, %v1091, 0
        %1098 = vmatprep.subr.bf16.mxu0 0
        %1099 = vmatpush1.bf16.msra.mxu0 0
        %1100 = vmatprep.subr.bf16.mxu0 0
        %1101 = vmatpush1.bf16.msra.mxu0 0
        %1102 = vmatprep.subr.bf16.mxu0 0
        %1103 = vmatpush1.bf16.msra.mxu0 0
        %1104 = vmatprep.subr.bf16.mxu0 0
        %1105 = vmatpush1.bf16.msra.mxu0 0
        %1106 = vmatprep.subr.bf16.mxu0 0
        %1107 = vmatpush1.bf16.msra.mxu0 0
        %1108 = vmatprep.subr.bf16.mxu0 0
        %1109 = vmatpush1.bf16.msra.mxu0 0
        %1110 = vmatprep.subr.bf16.mxu0 0
        %1111 = vmatpush1.bf16.msra.mxu0 0
        %1112 = vmatprep.subr.bf16.mxu0 0
        %1113 = vmatpush1.bf16.msra.mxu0 %v1096
        %1114 = vmatprep.subr.bf16.mxu0 0
        %1115 = vmatpush2.bf16.msra.mxu0 0
        %1116 = vmatprep.subr.bf16.mxu0 0
        %1117 = vmatpush2.bf16.msra.mxu0 0
        %1118 = vmatprep.subr.bf16.mxu0 0
        %1119 = vmatpush2.bf16.msra.mxu0 0
        %1120 = vmatprep.subr.bf16.mxu0 0
        %1121 = vmatpush2.bf16.msra.mxu0 0
        %1122 = vmatprep.subr.bf16.mxu0 0
        %1123 = vmatpush2.bf16.msra.mxu0 0
        %1124 = vmatprep.subr.bf16.mxu0 0
        %1125 = vmatpush2.bf16.msra.mxu0 0
        %1126 = vmatprep.subr.bf16.mxu0 0
        %1127 = vmatpush2.bf16.msra.mxu0 0
        %1128 = vmatprep.subr.bf16.mxu0 0
        %1129 = vmatpush2.bf16.msra.mxu0 0
        %1130 = vmatprep.mubr.bf16.mxu0 0
        %1131 = vmatmul.mubr.bf16.gmra.mxu0 %v1093
        %v1132 = vpop.f32.mrf.mxu0
        %v1133 = vadd.f32 0.0, %v1132
        %v1134 = vpop.f32.mrf.mxu0
        %v1135 = vpop.f32.mrf.mxu0
        %v1136 = vpop.f32.mrf.mxu0
        %1137 = vdwg.mxu0
        %1138 = vrot.lane.b32.xlu0 %v779, 64
        %v1139 = vpop.permute.xlu0 %1138
        %v1141 = vsel %vm784, %v1039, 0
        %v1144 = vsel %vm1046, %v1139, 0
        %1146 = vmatprep.subr.bf16.mxu0 0
        %1147 = vmatpush1.bf16.msra.mxu0 0
        %1148 = vmatprep.subr.bf16.mxu0 0
        %1149 = vmatpush1.bf16.msra.mxu0 0
        %1150 = vmatprep.subr.bf16.mxu0 0
        %1151 = vmatpush1.bf16.msra.mxu0 0
        %1152 = vmatprep.subr.bf16.mxu0 0
        %1153 = vmatpush1.bf16.msra.mxu0 0
        %1154 = vmatprep.subr.bf16.mxu0 0
        %1155 = vmatpush1.bf16.msra.mxu0 0
        %1156 = vmatprep.subr.bf16.mxu0 0
        %1157 = vmatpush1.bf16.msra.mxu0 0
        %1158 = vmatprep.subr.bf16.mxu0 0
        %1159 = vmatpush1.bf16.msra.mxu0 0
        %1160 = vmatprep.subr.bf16.mxu0 0
        %1161 = vmatpush1.bf16.msra.mxu0 %v1144
        %1162 = vmatprep.subr.bf16.mxu0 0
        %1163 = vmatpush2.bf16.msra.mxu0 0
        %1164 = vmatprep.subr.bf16.mxu0 0
        %1165 = vmatpush2.bf16.msra.mxu0 0
        %1166 = vmatprep.subr.bf16.mxu0 0
        %1167 = vmatpush2.bf16.msra.mxu0 0
        %1168 = vmatprep.subr.bf16.mxu0 0
        %1169 = vmatpush2.bf16.msra.mxu0 0
        %1170 = vmatprep.subr.bf16.mxu0 0
        %1171 = vmatpush2.bf16.msra.mxu0 0
        %1172 = vmatprep.subr.bf16.mxu0 0
        %1173 = vmatpush2.bf16.msra.mxu0 0
        %1174 = vmatprep.subr.bf16.mxu0 0
        %1175 = vmatpush2.bf16.msra.mxu0 0
        %1176 = vmatprep.subr.bf16.mxu0 0
        %1177 = vmatpush2.bf16.msra.mxu0 0
        %1178 = vmatprep.mubr.bf16.mxu0 0
        %1179 = vmatmul.mubr.bf16.gmra.mxu0 %v1141
        %v1180 = vpop.f32.mrf.mxu0
        %v1181 = vadd.f32 0.0, %v1180
        %v1182 = vpop.f32.mrf.mxu0
        %v1183 = vpop.f32.mrf.mxu0
        %v1184 = vpop.f32.mrf.mxu0
        %1185 = vdwg.mxu0
        %1186 = vrot.lane.b32.xlu0 %v780, 64
        %v1187 = vpop.permute.xlu0 %1186
        %v1189 = vsel %vm784, %v1040, 0
        %v1192 = vsel %vm1046, %v1187, 0
        %1194 = vmatprep.subr.bf16.mxu0 0
        %1195 = vmatpush1.bf16.msra.mxu0 0
        %1196 = vmatprep.subr.bf16.mxu0 0
        %1197 = vmatpush1.bf16.msra.mxu0 0
        %1198 = vmatprep.subr.bf16.mxu0 0
        %1199 = vmatpush1.bf16.msra.mxu0 0
        %1200 = vmatprep.subr.bf16.mxu0 0
        %1201 = vmatpush1.bf16.msra.mxu0 0
        %1202 = vmatprep.subr.bf16.mxu0 0
        %1203 = vmatpush1.bf16.msra.mxu0 0
        %1204 = vmatprep.subr.bf16.mxu0 0
        %1205 = vmatpush1.bf16.msra.mxu0 0
        %1206 = vmatprep.subr.bf16.mxu0 0
        %1207 = vmatpush1.bf16.msra.mxu0 0
        %1208 = vmatprep.subr.bf16.mxu0 0
        %1209 = vmatpush1.bf16.msra.mxu0 %v1192
        %1210 = vmatprep.subr.bf16.mxu0 0
        %1211 = vmatpush2.bf16.msra.mxu0 0
        %1212 = vmatprep.subr.bf16.mxu0 0
        %1213 = vmatpush2.bf16.msra.mxu0 0
        %1214 = vmatprep.subr.bf16.mxu0 0
        %1215 = vmatpush2.bf16.msra.mxu0 0
        %1216 = vmatprep.subr.bf16.mxu0 0
        %1217 = vmatpush2.bf16.msra.mxu0 0
        %1218 = vmatprep.subr.bf16.mxu0 0
        %1219 = vmatpush2.bf16.msra.mxu0 0
        %1220 = vmatprep.subr.bf16.mxu0 0
        %1221 = vmatpush2.bf16.msra.mxu0 0
        %1222 = vmatprep.subr.bf16.mxu0 0
        %1223 = vmatpush2.bf16.msra.mxu0 0
        %1224 = vmatprep.subr.bf16.mxu0 0
        %1225 = vmatpush2.bf16.msra.mxu0 0
        %1226 = vmatprep.mubr.bf16.mxu0 0
        %1227 = vmatmul.mubr.bf16.gmra.mxu0 %v1189
        %v1228 = vpop.f32.mrf.mxu0
        %v1229 = vadd.f32 0.0, %v1228
        %v1230 = vpop.f32.mrf.mxu0
        %v1231 = vpop.f32.mrf.mxu0
        %v1232 = vpop.f32.mrf.mxu0
        %1233 = vdwg.mxu0
        %1235 = vrot.lane.b32.xlu0 %v1133, 8
        %v1236 = vpop.permute.xlu0 %1235
        %1239 = vrot.lane.b32.xlu0 %v1181, 16
        %v1240 = vpop.permute.xlu0 %1239
        %1243 = vrot.lane.b32.xlu0 %v1229, 24
        %v1244 = vpop.permute.xlu0 %1243
        %v1246 = vsel %vm784, %v1085, %v1236
        %vm1247 = vcmask 130048
        %v1248 = vsel %vm1247, %v1246, %v1240
        %vm1249 = vcmask 195584
        %v1250 = vsel %vm1249, %v1248, %v1244
        %v1251 = vpack.c.bf16 %v1250, %v1250
        %v1252 = vld [vmem:[%s4] sm:$0xf]
        %v1253 = vld [vmem:[%s4 + $0x4] sm:$0xf]
        %v1254 = vld [vmem:[%s4 + $0x8] sm:$0xf]
        %v1255 = vld [vmem:[%s4 + $0xc] sm:$0xf]
        %v1256 = vld [vmem:[%s5] sm:$0x1]
        %v1258 = vlaneseq
        %v1259 = vshrl.u32 %v1258, 7
        %v1260 = vsub.s32 0, %v1259
        %v1261 = vrot.slane %v1256, %v1260
        %v1267 = vunpack.c.l.b16 %v1252
        %v1268 = vunpack.c.l.b16 %v1253
        %v1269 = vunpack.c.l.b16 %v1254
        %v1270 = vunpack.c.l.b16 %v1255
        %v1271 = vpack.c.b16 %v1268, %v1267
        %v1272 = vpack.c.b16 %v1270, %v1269
        %v1276 = vsel %vm723, %v1251, 0
        %1278 = vmatprep.subr.bf16.mxu0 0
        %1279 = vmatpush1.bf16.msra.mxu0 0
        %1280 = vmatprep.subr.bf16.mxu0 0
        %1281 = vmatpush1.bf16.msra.mxu0 0
        %1282 = vmatprep.subr.bf16.mxu0 0
        %1283 = vmatpush1.bf16.msra.mxu0 0
        %1284 = vmatprep.subr.bf16.mxu0 0
        %1285 = vmatpush1.bf16.msra.mxu0 0
        %1286 = vmatprep.subr.bf16.mxu0 0
        %1287 = vmatpush1.bf16.msra.mxu0 0
        %1288 = vmatprep.subr.bf16.mxu0 0
        %1289 = vmatpush1.bf16.msra.mxu0 0
        %1290 = vmatprep.subr.bf16.mxu0 0
        %1291 = vmatpush1.bf16.msra.mxu0 %v1272
        %1292 = vmatprep.subr.bf16.mxu0 0
        %1293 = vmatpush1.bf16.msra.mxu0 %v1271
        %1294 = vmatprep.subr.bf16.mxu0 0
        %1295 = vmatpush2.bf16.msra.mxu0 0
        %1296 = vmatprep.subr.bf16.mxu0 0
        %1297 = vmatpush2.bf16.msra.mxu0 0
        %1298 = vmatprep.subr.bf16.mxu0 0
        %1299 = vmatpush2.bf16.msra.mxu0 0
        %1300 = vmatprep.subr.bf16.mxu0 0
        %1301 = vmatpush2.bf16.msra.mxu0 0
        %1302 = vmatprep.subr.bf16.mxu0 0
        %1303 = vmatpush2.bf16.msra.mxu0 0
        %1304 = vmatprep.subr.bf16.mxu0 0
        %1305 = vmatpush2.bf16.msra.mxu0 0
        %1306 = vmatprep.subr.bf16.mxu0 0
        %1307 = vmatpush2.bf16.msra.mxu0 0
        %1308 = vmatprep.subr.bf16.mxu0 0
        %1309 = vmatpush2.bf16.msra.mxu0 0
        %1310 = vmatprep.mubr.bf16.mxu0 0
        %1311 = vmatmul.mubr.bf16.gmra.mxu0 %v1276
        %v1312 = vpop.f32.mrf.mxu0
        %v1313 = vadd.f32 %v1261, %v1312
        %v1314 = vpop.f32.mrf.mxu0
        %v1315 = vpop.f32.mrf.mxu0
        %v1316 = vpop.f32.mrf.mxu0
        %1317 = vdwg.mxu0
        %v1318 = vadd.f32 %v697, %v1313
        %v1319 = vld [vmem:[%s6] sm:$0x1]
        %v1320 = vld [vmem:[%s7] sm:$0x1]
        %v1321 = vsel %vm723, %v1318, 0.0
        %1322 = vadd.xlane.f32.xlu0 %v1321
        %v1323 = vpop.xlane.xlu0 %1322
        %v1324 = vrcp.pop 32.0
        %v1325 = vmul.f32 %v1323, %v1324
        %v1326 = vsub.f32 %v1318, %v1325
        %v1327 = vmul.f32 %v1326, %v1326
        %v1328 = vsel %vm723, %v1327, 0.0
        %1329 = vadd.xlane.f32.xlu0 %v1328
        %v1330 = vpop.xlane.xlu0 %1329
        %v1331 = vmul.f32 %v1330, %v1324
        %v1332 = vadd.f32 %v1331, 1e-05
        %v1333 = vrsqrt.pop %v1332
        %v1334 = vmul.f32 %v1326, %v1333
        %v1336 = vlaneseq
        %v1337 = vshrl.u32 %v1336, 7
        %v1338 = vsub.s32 0, %v1337
        %v1339 = vrot.slane %v1319, %v1338
        %v1341 = vmul.f32 %v1334, %v1339
        %v1343 = vlaneseq
        %v1344 = vshrl.u32 %v1343, 7
        %v1345 = vsub.s32 0, %v1344
        %v1346 = vrot.slane %v1320, %v1345
        %v1348 = vadd.f32 %v1341, %v1346
        %v1349 = vpack.c.bf16 %v1348, %v1348
        %v1350 = vld [vmem:[%s8] sm:$0xf]
        %v1351 = vld [vmem:[%s8 + $0x4] sm:$0xf]
        %v1352 = vld [vmem:[%s8 + $0x8] sm:$0xf]
        %v1353 = vld [vmem:[%s8 + $0xc] sm:$0xf]
        %v1354 = vld [vmem:[%s9] sm:$0x1]
        %v1356 = vlaneseq
        %v1357 = vshrl.u32 %v1356, 7
        %v1358 = vsub.s32 0, %v1357
        %v1359 = vrot.slane %v1354, %v1358
        %v1365 = vunpack.c.l.b16 %v1350
        %v1366 = vunpack.c.l.b16 %v1351
        %v1367 = vunpack.c.l.b16 %v1352
        %v1368 = vunpack.c.l.b16 %v1353
        %v1369 = vpack.c.b16 %v1366, %v1365
        %v1370 = vpack.c.b16 %v1368, %v1367
        %v1374 = vsel %vm723, %v1349, 0
        %1376 = vmatprep.subr.bf16.mxu0 0
        %1377 = vmatpush1.bf16.msra.mxu0 0
        %1378 = vmatprep.subr.bf16.mxu0 0
        %1379 = vmatpush1.bf16.msra.mxu0 0
        %1380 = vmatprep.subr.bf16.mxu0 0
        %1381 = vmatpush1.bf16.msra.mxu0 0
        %1382 = vmatprep.subr.bf16.mxu0 0
        %1383 = vmatpush1.bf16.msra.mxu0 0
        %1384 = vmatprep.subr.bf16.mxu0 0
        %1385 = vmatpush1.bf16.msra.mxu0 0
        %1386 = vmatprep.subr.bf16.mxu0 0
        %1387 = vmatpush1.bf16.msra.mxu0 0
        %1388 = vmatprep.subr.bf16.mxu0 0
        %1389 = vmatpush1.bf16.msra.mxu0 %v1370
        %1390 = vmatprep.subr.bf16.mxu0 0
        %1391 = vmatpush1.bf16.msra.mxu0 %v1369
        %1392 = vmatprep.subr.bf16.mxu0 0
        %1393 = vmatpush2.bf16.msra.mxu0 0
        %1394 = vmatprep.subr.bf16.mxu0 0
        %1395 = vmatpush2.bf16.msra.mxu0 0
        %1396 = vmatprep.subr.bf16.mxu0 0
        %1397 = vmatpush2.bf16.msra.mxu0 0
        %1398 = vmatprep.subr.bf16.mxu0 0
        %1399 = vmatpush2.bf16.msra.mxu0 0
        %1400 = vmatprep.subr.bf16.mxu0 0
        %1401 = vmatpush2.bf16.msra.mxu0 0
        %1402 = vmatprep.subr.bf16.mxu0 0
        %1403 = vmatpush2.bf16.msra.mxu0 0
        %1404 = vmatprep.subr.bf16.mxu0 0
        %1405 = vmatpush2.bf16.msra.mxu0 0
        %1406 = vmatprep.subr.bf16.mxu0 0
        %1407 = vmatpush2.bf16.msra.mxu0 0
        %1408 = vmatprep.mubr.bf16.mxu0 0
        %1409 = vmatmul.mubr.bf16.gmra.mxu0 %v1374
        %v1410 = vpop.f32.mrf.mxu0
        %v1411 = vadd.f32 %v1359, %v1410
        %v1412 = vpop.f32.mrf.mxu0
        %v1413 = vpop.f32.mrf.mxu0
        %v1414 = vpop.f32.mrf.mxu0
        %1415 = vdwg.mxu0
        %v1416 = vpack.c.bf16 %v698, %v698
        %v1417 = vld [vmem:[%s10] sm:$0xf]
        %v1418 = vld [vmem:[%s10 + $0x4] sm:$0xf]
        %v1419 = vld [vmem:[%s10 + $0x8] sm:$0xf]
        %v1420 = vld [vmem:[%s10 + $0xc] sm:$0xf]
        %v1421 = vld [vmem:[%s11] sm:$0x1]
        %v1423 = vlaneseq
        %v1424 = vshrl.u32 %v1423, 7
        %v1425 = vsub.s32 0, %v1424
        %v1426 = vrot.slane %v1421, %v1425
        %v1432 = vunpack.c.l.b16 %v1417
        %v1433 = vunpack.c.l.b16 %v1418
        %v1434 = vunpack.c.l.b16 %v1419
        %v1435 = vunpack.c.l.b16 %v1420
        %v1436 = vpack.c.b16 %v1433, %v1432
        %v1437 = vpack.c.b16 %v1435, %v1434
        %v1441 = vsel %vm723, %v1416, 0
        %1443 = vmatprep.subr.bf16.mxu0 0
        %1444 = vmatpush1.bf16.msra.mxu0 0
        %1445 = vmatprep.subr.bf16.mxu0 0
        %1446 = vmatpush1.bf16.msra.mxu0 0
        %1447 = vmatprep.subr.bf16.mxu0 0
        %1448 = vmatpush1.bf16.msra.mxu0 0
        %1449 = vmatprep.subr.bf16.mxu0 0
        %1450 = vmatpush1.bf16.msra.mxu0 0
        %1451 = vmatprep.subr.bf16.mxu0 0
        %1452 = vmatpush1.bf16.msra.mxu0 0
        %1453 = vmatprep.subr.bf16.mxu0 0
        %1454 = vmatpush1.bf16.msra.mxu0 0
        %1455 = vmatprep.subr.bf16.mxu0 0
        %1456 = vmatpush1.bf16.msra.mxu0 %v1437
        %1457 = vmatprep.subr.bf16.mxu0 0
        %1458 = vmatpush1.bf16.msra.mxu0 %v1436
        %1459 = vmatprep.subr.bf16.mxu0 0
        %1460 = vmatpush2.bf16.msra.mxu0 0
        %1461 = vmatprep.subr.bf16.mxu0 0
        %1462 = vmatpush2.bf16.msra.mxu0 0
        %1463 = vmatprep.subr.bf16.mxu0 0
        %1464 = vmatpush2.bf16.msra.mxu0 0
        %1465 = vmatprep.subr.bf16.mxu0 0
        %1466 = vmatpush2.bf16.msra.mxu0 0
        %1467 = vmatprep.subr.bf16.mxu0 0
        %1468 = vmatpush2.bf16.msra.mxu0 0
        %1469 = vmatprep.subr.bf16.mxu0 0
        %1470 = vmatpush2.bf16.msra.mxu0 0
        %1471 = vmatprep.subr.bf16.mxu0 0
        %1472 = vmatpush2.bf16.msra.mxu0 0
        %1473 = vmatprep.subr.bf16.mxu0 0
        %1474 = vmatpush2.bf16.msra.mxu0 0
        %1475 = vmatprep.mubr.bf16.mxu0 0
        %1476 = vmatmul.mubr.bf16.gmra.mxu0 %v1441
        %v1477 = vpop.f32.mrf.mxu0
        %v1478 = vadd.f32 %v1426, %v1477
        %v1479 = vpop.f32.mrf.mxu0
        %v1480 = vpop.f32.mrf.mxu0
        %v1481 = vpop.f32.mrf.mxu0
        %1482 = vdwg.mxu0
        %1484 = vrot.lane.b32.xlu0 %v1411, 120
        %v1485 = vpop.permute.xlu0 %1484
        %1487 = vrot.lane.b32.xlu0 %v1411, 112
        %v1488 = vpop.permute.xlu0 %1487
        %1490 = vrot.lane.b32.xlu0 %v1411, 104
        %v1491 = vpop.permute.xlu0 %1490
        %v1493 = vpack.c.bf16 %v1411, %v1411
        %v1494 = vpack.c.bf16 %v1485, %v1485
        %v1495 = vpack.c.bf16 %v1488, %v1488
        %v1496 = vpack.c.bf16 %v1491, %v1491
        %1498 = vrot.lane.b32.xlu0 %v1478, 120
        %v1499 = vpop.permute.xlu0 %1498
        %1501 = vrot.lane.b32.xlu0 %v1478, 112
        %v1502 = vpop.permute.xlu0 %1501
        %1504 = vrot.lane.b32.xlu0 %v1478, 104
        %v1505 = vpop.permute.xlu0 %1504
        %v1507 = vpack.c.bf16 %v1478, %v1478
        %v1508 = vpack.c.bf16 %v1499, %v1499
        %v1509 = vpack.c.bf16 %v1502, %v1502
        %v1510 = vpack.c.bf16 %v1505, %v1505
        %v1512 = vsel %vm784, %v1493, 0
        %v1515 = vsel %vm784, %v1507, 0
        %1517 = vmatprep.subr.bf16.mxu0 0
        %1518 = vmatpush1.bf16.xpose.msra.mxu0 0
        %1519 = vmatprep.subr.bf16.mxu0 0
        %1520 = vmatpush1.bf16.xpose.msra.mxu0 0
        %1521 = vmatprep.subr.bf16.mxu0 0
        %1522 = vmatpush1.bf16.xpose.msra.mxu0 0
        %1523 = vmatprep.subr.bf16.mxu0 0
        %1524 = vmatpush1.bf16.xpose.msra.mxu0 0
        %1525 = vmatprep.subr.bf16.mxu0 0
        %1526 = vmatpush1.bf16.xpose.msra.mxu0 0
        %1527 = vmatprep.subr.bf16.mxu0 0
        %1528 = vmatpush1.bf16.xpose.msra.mxu0 0
        %1529 = vmatprep.subr.bf16.mxu0 0
        %1530 = vmatpush1.bf16.xpose.msra.mxu0 0
        %1531 = vmatprep.subr.bf16.mxu0 0
        %1532 = vmatpush1.bf16.xpose.msra.mxu0 %v1515
        %1533 = vmatprep.subr.bf16.mxu0 0
        %1534 = vmatpush2.bf16.xpose.msra.mxu0 0
        %1535 = vmatprep.subr.bf16.mxu0 0
        %1536 = vmatpush2.bf16.xpose.msra.mxu0 0
        %1537 = vmatprep.subr.bf16.mxu0 0
        %1538 = vmatpush2.bf16.xpose.msra.mxu0 0
        %1539 = vmatprep.subr.bf16.mxu0 0
        %1540 = vmatpush2.bf16.xpose.msra.mxu0 0
        %1541 = vmatprep.subr.bf16.mxu0 0
        %1542 = vmatpush2.bf16.xpose.msra.mxu0 0
        %1543 = vmatprep.subr.bf16.mxu0 0
        %1544 = vmatpush2.bf16.xpose.msra.mxu0 0
        %1545 = vmatprep.subr.bf16.mxu0 0
        %1546 = vmatpush2.bf16.xpose.msra.mxu0 0
        %1547 = vmatprep.subr.bf16.mxu0 0
        %1548 = vmatpush2.bf16.xpose.msra.mxu0 0
        %1549 = vmatprep.mubr.bf16.mxu0 0
        %1550 = vmatmul.mubr.bf16.gmra.mxu0 %v1512
        %v1551 = vpop.f32.mrf.mxu0
        %v1552 = vadd.f32 0.0, %v1551
        %v1553 = vpop.f32.mrf.mxu0
        %v1554 = vpop.f32.mrf.mxu0
        %v1555 = vpop.f32.mrf.mxu0
        %1556 = vdwg.mxu0
        %v1558 = vsel %vm784, %v1494, 0
        %v1561 = vsel %vm784, %v1508, 0
        %1563 = vmatprep.subr.bf16.mxu0 0
        %1564 = vmatpush1.bf16.xpose.msra.mxu0 0
        %1565 = vmatprep.subr.bf16.mxu0 0
        %1566 = vmatpush1.bf16.xpose.msra.mxu0 0
        %1567 = vmatprep.subr.bf16.mxu0 0
        %1568 = vmatpush1.bf16.xpose.msra.mxu0 0
        %1569 = vmatprep.subr.bf16.mxu0 0
        %1570 = vmatpush1.bf16.xpose.msra.mxu0 0
        %1571 = vmatprep.subr.bf16.mxu0 0
        %1572 = vmatpush1.bf16.xpose.msra.mxu0 0
        %1573 = vmatprep.subr.bf16.mxu0 0
        %1574 = vmatpush1.bf16.xpose.msra.mxu0 0
        %1575 = vmatprep.subr.bf16.mxu0 0
        %1576 = vmatpush1.bf16.xpose.msra.mxu0 0
        %1577 = vmatprep.subr.bf16.mxu0 0
        %1578 = vmatpush1.bf16.xpose.msra.mxu0 %v1561
        %1579 = vmatprep.subr.bf16.mxu0 0
        %1580 = vmatpush2.bf16.xpose.msra.mxu0 0
        %1581 = vmatprep.subr.bf16.mxu0 0
        %1582 = vmatpush2.bf16.xpose.msra.mxu0 0
        %1583 = vmatprep.subr.bf16.mxu0 0
        %1584 = vmatpush2.bf16.xpose.msra.mxu0 0
        %1585 = vmatprep.subr.bf16.mxu0 0
        %1586 = vmatpush2.bf16.xpose.msra.mxu0 0
        %1587 = vmatprep.subr.bf16.mxu0 0
        %1588 = vmatpush2.bf16.xpose.msra.mxu0 0
        %1589 = vmatprep.subr.bf16.mxu0 0
        %1590 = vmatpush2.bf16.xpose.msra.mxu0 0
        %1591 = vmatprep.subr.bf16.mxu0 0
        %1592 = vmatpush2.bf16.xpose.msra.mxu0 0
        %1593 = vmatprep.subr.bf16.mxu0 0
        %1594 = vmatpush2.bf16.xpose.msra.mxu0 0
        %1595 = vmatprep.mubr.bf16.mxu0 0
        %1596 = vmatmul.mubr.bf16.gmra.mxu0 %v1558
        %v1597 = vpop.f32.mrf.mxu0
        %v1598 = vadd.f32 0.0, %v1597
        %v1599 = vpop.f32.mrf.mxu0
        %v1600 = vpop.f32.mrf.mxu0
        %v1601 = vpop.f32.mrf.mxu0
        %1602 = vdwg.mxu0
        %v1604 = vsel %vm784, %v1495, 0
        %v1607 = vsel %vm784, %v1509, 0
        %1609 = vmatprep.subr.bf16.mxu0 0
        %1610 = vmatpush1.bf16.xpose.msra.mxu0 0
        %1611 = vmatprep.subr.bf16.mxu0 0
        %1612 = vmatpush1.bf16.xpose.msra.mxu0 0
        %1613 = vmatprep.subr.bf16.mxu0 0
        %1614 = vmatpush1.bf16.xpose.msra.mxu0 0
        %1615 = vmatprep.subr.bf16.mxu0 0
        %1616 = vmatpush1.bf16.xpose.msra.mxu0 0
        %1617 = vmatprep.subr.bf16.mxu0 0
        %1618 = vmatpush1.bf16.xpose.msra.mxu0 0
        %1619 = vmatprep.subr.bf16.mxu0 0
        %1620 = vmatpush1.bf16.xpose.msra.mxu0 0
        %1621 = vmatprep.subr.bf16.mxu0 0
        %1622 = vmatpush1.bf16.xpose.msra.mxu0 0
        %1623 = vmatprep.subr.bf16.mxu0 0
        %1624 = vmatpush1.bf16.xpose.msra.mxu0 %v1607
        %1625 = vmatprep.subr.bf16.mxu0 0
        %1626 = vmatpush2.bf16.xpose.msra.mxu0 0
        %1627 = vmatprep.subr.bf16.mxu0 0
        %1628 = vmatpush2.bf16.xpose.msra.mxu0 0
        %1629 = vmatprep.subr.bf16.mxu0 0
        %1630 = vmatpush2.bf16.xpose.msra.mxu0 0
        %1631 = vmatprep.subr.bf16.mxu0 0
        %1632 = vmatpush2.bf16.xpose.msra.mxu0 0
        %1633 = vmatprep.subr.bf16.mxu0 0
        %1634 = vmatpush2.bf16.xpose.msra.mxu0 0
        %1635 = vmatprep.subr.bf16.mxu0 0
        %1636 = vmatpush2.bf16.xpose.msra.mxu0 0
        %1637 = vmatprep.subr.bf16.mxu0 0
        %1638 = vmatpush2.bf16.xpose.msra.mxu0 0
        %1639 = vmatprep.subr.bf16.mxu0 0
        %1640 = vmatpush2.bf16.xpose.msra.mxu0 0
        %1641 = vmatprep.mubr.bf16.mxu0 0
        %1642 = vmatmul.mubr.bf16.gmra.mxu0 %v1604
        %v1643 = vpop.f32.mrf.mxu0
        %v1644 = vadd.f32 0.0, %v1643
        %v1645 = vpop.f32.mrf.mxu0
        %v1646 = vpop.f32.mrf.mxu0
        %v1647 = vpop.f32.mrf.mxu0
        %1648 = vdwg.mxu0
        %v1650 = vsel %vm784, %v1496, 0
        %v1653 = vsel %vm784, %v1510, 0
        %1655 = vmatprep.subr.bf16.mxu0 0
        %1656 = vmatpush1.bf16.xpose.msra.mxu0 0
        %1657 = vmatprep.subr.bf16.mxu0 0
        %1658 = vmatpush1.bf16.xpose.msra.mxu0 0
        %1659 = vmatprep.subr.bf16.mxu0 0
        %1660 = vmatpush1.bf16.xpose.msra.mxu0 0
        %1661 = vmatprep.subr.bf16.mxu0 0
        %1662 = vmatpush1.bf16.xpose.msra.mxu0 0
        %1663 = vmatprep.subr.bf16.mxu0 0
        %1664 = vmatpush1.bf16.xpose.msra.mxu0 0
        %1665 = vmatprep.subr.bf16.mxu0 0
        %1666 = vmatpush1.bf16.xpose.msra.mxu0 0
        %1667 = vmatprep.subr.bf16.mxu0 0
        %1668 = vmatpush1.bf16.xpose.msra.mxu0 0
        %1669 = vmatprep.subr.bf16.mxu0 0
        %1670 = vmatpush1.bf16.xpose.msra.mxu0 %v1653
        %1671 = vmatprep.subr.bf16.mxu0 0
        %1672 = vmatpush2.bf16.xpose.msra.mxu0 0
        %1673 = vmatprep.subr.bf16.mxu0 0
        %1674 = vmatpush2.bf16.xpose.msra.mxu0 0
        %1675 = vmatprep.subr.bf16.mxu0 0
        %1676 = vmatpush2.bf16.xpose.msra.mxu0 0
        %1677 = vmatprep.subr.bf16.mxu0 0
        %1678 = vmatpush2.bf16.xpose.msra.mxu0 0
        %1679 = vmatprep.subr.bf16.mxu0 0
        %1680 = vmatpush2.bf16.xpose.msra.mxu0 0
        %1681 = vmatprep.subr.bf16.mxu0 0
        %1682 = vmatpush2.bf16.xpose.msra.mxu0 0
        %1683 = vmatprep.subr.bf16.mxu0 0
        %1684 = vmatpush2.bf16.xpose.msra.mxu0 0
        %1685 = vmatprep.subr.bf16.mxu0 0
        %1686 = vmatpush2.bf16.xpose.msra.mxu0 0
        %1687 = vmatprep.mubr.bf16.mxu0 0
        %1688 = vmatmul.mubr.bf16.gmra.mxu0 %v1650
        %v1689 = vpop.f32.mrf.mxu0
        %v1690 = vadd.f32 0.0, %v1689
        %v1691 = vpop.f32.mrf.mxu0
        %v1692 = vpop.f32.mrf.mxu0
        %v1693 = vpop.f32.mrf.mxu0
        %1694 = vdwg.mxu0
        %v1695 = vmul.f32 %v1552, 0.35355338
        %v1696 = vmul.f32 %v1598, 0.35355338
        %v1697 = vmul.f32 %v1644, 0.35355338
        %v1698 = vmul.f32 %v1690, 0.35355338
        %v1699 = vsel %vm784, %v1695, -inf
        %1700 = vmax.xlane.f32.xlu0 %v1699
        %v1701 = vpop.xlane.xlu0 %1700
        %v1702 = vsel %vm784, %v1696, -inf
        %1703 = vmax.xlane.f32.xlu0 %v1702
        %v1704 = vpop.xlane.xlu0 %1703
        %v1705 = vsel %vm784, %v1697, -inf
        %1706 = vmax.xlane.f32.xlu0 %v1705
        %v1707 = vpop.xlane.xlu0 %1706
        %v1708 = vsel %vm784, %v1698, -inf
        %1709 = vmax.xlane.f32.xlu0 %v1708
        %v1710 = vpop.xlane.xlu0 %1709
        %v1711 = vsub.f32 %v1695, %v1701
        %v1712 = vsub.f32 %v1696, %v1704
        %v1713 = vsub.f32 %v1697, %v1707
        %v1714 = vsub.f32 %v1698, %v1710
        %v1715 = vmul.f32 %v1711, 1.442695
        %v1716 = vpow.pop %v1715
        %v1717 = vmul.f32 %v1712, 1.442695
        %v1718 = vpow.pop %v1717
        %v1719 = vmul.f32 %v1713, 1.442695
        %v1720 = vpow.pop %v1719
        %v1721 = vmul.f32 %v1714, 1.442695
        %v1722 = vpow.pop %v1721
        %v1723 = vsel %vm784, %v1716, 0.0
        %1724 = vadd.xlane.f32.xlu0 %v1723
        %v1725 = vpop.xlane.xlu0 %1724
        %v1726 = vsel %vm784, %v1718, 0.0
        %1727 = vadd.xlane.f32.xlu0 %v1726
        %v1728 = vpop.xlane.xlu0 %1727
        %v1729 = vsel %vm784, %v1720, 0.0
        %1730 = vadd.xlane.f32.xlu0 %v1729
        %v1731 = vpop.xlane.xlu0 %1730
        %v1732 = vsel %vm784, %v1722, 0.0
        %1733 = vadd.xlane.f32.xlu0 %v1732
        %v1734 = vpop.xlane.xlu0 %1733
        %v1735 = vrcp.pop %v1725
        %v1736 = vrcp.pop %v1728
        %v1737 = vrcp.pop %v1731
        %v1738 = vrcp.pop %v1734
        %v1739 = vmul.f32 %v1716, %v1735
        %v1740 = vmul.f32 %v1718, %v1736
        %v1741 = vmul.f32 %v1720, %v1737
        %v1742 = vmul.f32 %v1722, %v1738
        %v1743 = vpack.c.bf16 %v1739, %v1739
        %v1744 = vpack.c.bf16 %v1740, %v1740
        %v1745 = vpack.c.bf16 %v1741, %v1741
        %v1746 = vpack.c.bf16 %v1742, %v1742
        %1748 = vrot.lane.b32.xlu0 %v1507, 96
        %v1749 = vpop.permute.xlu0 %1748
        %v1751 = vsel %vm784, %v1743, 0
        %v1754 = vsel %vm1046, %v1749, 0
        %1756 = vmatprep.subr.bf16.mxu0 0
        %1757 = vmatpush1.bf16.msra.mxu0 0
        %1758 = vmatprep.subr.bf16.mxu0 0
        %1759 = vmatpush1.bf16.msra.mxu0 0
        %1760 = vmatprep.subr.bf16.mxu0 0
        %1761 = vmatpush1.bf16.msra.mxu0 0
        %1762 = vmatprep.subr.bf16.mxu0 0
        %1763 = vmatpush1.bf16.msra.mxu0 0
        %1764 = vmatprep.subr.bf16.mxu0 0
        %1765 = vmatpush1.bf16.msra.mxu0 0
        %1766 = vmatprep.subr.bf16.mxu0 0
        %1767 = vmatpush1.bf16.msra.mxu0 0
        %1768 = vmatprep.subr.bf16.mxu0 0
        %1769 = vmatpush1.bf16.msra.mxu0 0
        %1770 = vmatprep.subr.bf16.mxu0 0
        %1771 = vmatpush1.bf16.msra.mxu0 %v1754
        %1772 = vmatprep.subr.bf16.mxu0 0
        %1773 = vmatpush2.bf16.msra.mxu0 0
        %1774 = vmatprep.subr.bf16.mxu0 0
        %1775 = vmatpush2.bf16.msra.mxu0 0
        %1776 = vmatprep.subr.bf16.mxu0 0
        %1777 = vmatpush2.bf16.msra.mxu0 0
        %1778 = vmatprep.subr.bf16.mxu0 0
        %1779 = vmatpush2.bf16.msra.mxu0 0
        %1780 = vmatprep.subr.bf16.mxu0 0
        %1781 = vmatpush2.bf16.msra.mxu0 0
        %1782 = vmatprep.subr.bf16.mxu0 0
        %1783 = vmatpush2.bf16.msra.mxu0 0
        %1784 = vmatprep.subr.bf16.mxu0 0
        %1785 = vmatpush2.bf16.msra.mxu0 0
        %1786 = vmatprep.subr.bf16.mxu0 0
        %1787 = vmatpush2.bf16.msra.mxu0 0
        %1788 = vmatprep.mubr.bf16.mxu0 0
        %1789 = vmatmul.mubr.bf16.gmra.mxu0 %v1751
        %v1790 = vpop.f32.mrf.mxu0
        %v1791 = vadd.f32 0.0, %v1790
        %v1792 = vpop.f32.mrf.mxu0
        %v1793 = vpop.f32.mrf.mxu0
        %v1794 = vpop.f32.mrf.mxu0
        %1795 = vdwg.mxu0
        %1797 = vrot.lane.b32.xlu0 %v1508, 96
        %v1798 = vpop.permute.xlu0 %1797
        %v1800 = vsel %vm784, %v1744, 0
        %v1803 = vsel %vm1046, %v1798, 0
        %1805 = vmatprep.subr.bf16.mxu0 0
        %1806 = vmatpush1.bf16.msra.mxu0 0
        %1807 = vmatprep.subr.bf16.mxu0 0
        %1808 = vmatpush1.bf16.msra.mxu0 0
        %1809 = vmatprep.subr.bf16.mxu0 0
        %1810 = vmatpush1.bf16.msra.mxu0 0
        %1811 = vmatprep.subr.bf16.mxu0 0
        %1812 = vmatpush1.bf16.msra.mxu0 0
        %1813 = vmatprep.subr.bf16.mxu0 0
        %1814 = vmatpush1.bf16.msra.mxu0 0
        %1815 = vmatprep.subr.bf16.mxu0 0
        %1816 = vmatpush1.bf16.msra.mxu0 0
        %1817 = vmatprep.subr.bf16.mxu0 0
        %1818 = vmatpush1.bf16.msra.mxu0 0
        %1819 = vmatprep.subr.bf16.mxu0 0
        %1820 = vmatpush1.bf16.msra.mxu0 %v1803
        %1821 = vmatprep.subr.bf16.mxu0 0
        %1822 = vmatpush2.bf16.msra.mxu0 0
        %1823 = vmatprep.subr.bf16.mxu0 0
        %1824 = vmatpush2.bf16.msra.mxu0 0
        %1825 = vmatprep.subr.bf16.mxu0 0
        %1826 = vmatpush2.bf16.msra.mxu0 0
        %1827 = vmatprep.subr.bf16.mxu0 0
        %1828 = vmatpush2.bf16.msra.mxu0 0
        %1829 = vmatprep.subr.bf16.mxu0 0
        %1830 = vmatpush2.bf16.msra.mxu0 0
        %1831 = vmatprep.subr.bf16.mxu0 0
        %1832 = vmatpush2.bf16.msra.mxu0 0
        %1833 = vmatprep.subr.bf16.mxu0 0
        %1834 = vmatpush2.bf16.msra.mxu0 0
        %1835 = vmatprep.subr.bf16.mxu0 0
        %1836 = vmatpush2.bf16.msra.mxu0 0
        %1837 = vmatprep.mubr.bf16.mxu0 0
        %1838 = vmatmul.mubr.bf16.gmra.mxu0 %v1800
        %v1839 = vpop.f32.mrf.mxu0
        %v1840 = vadd.f32 0.0, %v1839
        %v1841 = vpop.f32.mrf.mxu0
        %v1842 = vpop.f32.mrf.mxu0
        %v1843 = vpop.f32.mrf.mxu0
        %1844 = vdwg.mxu0
        %1846 = vrot.lane.b32.xlu0 %v1509, 96
        %v1847 = vpop.permute.xlu0 %1846
        %v1849 = vsel %vm784, %v1745, 0
        %v1852 = vsel %vm1046, %v1847, 0
        %1854 = vmatprep.subr.bf16.mxu0 0
        %1855 = vmatpush1.bf16.msra.mxu0 0
        %1856 = vmatprep.subr.bf16.mxu0 0
        %1857 = vmatpush1.bf16.msra.mxu0 0
        %1858 = vmatprep.subr.bf16.mxu0 0
        %1859 = vmatpush1.bf16.msra.mxu0 0
        %1860 = vmatprep.subr.bf16.mxu0 0
        %1861 = vmatpush1.bf16.msra.mxu0 0
        %1862 = vmatprep.subr.bf16.mxu0 0
        %1863 = vmatpush1.bf16.msra.mxu0 0
        %1864 = vmatprep.subr.bf16.mxu0 0
        %1865 = vmatpush1.bf16.msra.mxu0 0
        %1866 = vmatprep.subr.bf16.mxu0 0
        %1867 = vmatpush1.bf16.msra.mxu0 0
        %1868 = vmatprep.subr.bf16.mxu0 0
        %1869 = vmatpush1.bf16.msra.mxu0 %v1852
        %1870 = vmatprep.subr.bf16.mxu0 0
        %1871 = vmatpush2.bf16.msra.mxu0 0
        %1872 = vmatprep.subr.bf16.mxu0 0
        %1873 = vmatpush2.bf16.msra.mxu0 0
        %1874 = vmatprep.subr.bf16.mxu0 0
        %1875 = vmatpush2.bf16.msra.mxu0 0
        %1876 = vmatprep.subr.bf16.mxu0 0
        %1877 = vmatpush2.bf16.msra.mxu0 0
        %1878 = vmatprep.subr.bf16.mxu0 0
        %1879 = vmatpush2.bf16.msra.mxu0 0
        %1880 = vmatprep.subr.bf16.mxu0 0
        %1881 = vmatpush2.bf16.msra.mxu0 0
        %1882 = vmatprep.subr.bf16.mxu0 0
        %1883 = vmatpush2.bf16.msra.mxu0 0
        %1884 = vmatprep.subr.bf16.mxu0 0
        %1885 = vmatpush2.bf16.msra.mxu0 0
        %1886 = vmatprep.mubr.bf16.mxu0 0
        %1887 = vmatmul.mubr.bf16.gmra.mxu0 %v1849
        %v1888 = vpop.f32.mrf.mxu0
        %v1889 = vadd.f32 0.0, %v1888
        %v1890 = vpop.f32.mrf.mxu0
        %v1891 = vpop.f32.mrf.mxu0
        %v1892 = vpop.f32.mrf.mxu0
        %1893 = vdwg.mxu0
        %1895 = vrot.lane.b32.xlu0 %v1510, 96
        %v1896 = vpop.permute.xlu0 %1895
        %v1898 = vsel %vm784, %v1746, 0
        %v1901 = vsel %vm1046, %v1896, 0
        %1903 = vmatprep.subr.bf16.mxu0 0
        %1904 = vmatpush1.bf16.msra.mxu0 0
        %1905 = vmatprep.subr.bf16.mxu0 0
        %1906 = vmatpush1.bf16.msra.mxu0 0
        %1907 = vmatprep.subr.bf16.mxu0 0
        %1908 = vmatpush1.bf16.msra.mxu0 0
        %1909 = vmatprep.subr.bf16.mxu0 0
        %1910 = vmatpush1.bf16.msra.mxu0 0
        %1911 = vmatprep.subr.bf16.mxu0 0
        %1912 = vmatpush1.bf16.msra.mxu0 0
        %1913 = vmatprep.subr.bf16.mxu0 0
        %1914 = vmatpush1.bf16.msra.mxu0 0
        %1915 = vmatprep.subr.bf16.mxu0 0
        %1916 = vmatpush1.bf16.msra.mxu0 0
        %1917 = vmatprep.subr.bf16.mxu0 0
        %1918 = vmatpush1.bf16.msra.mxu0 %v1901
        %1919 = vmatprep.subr.bf16.mxu0 0
        %1920 = vmatpush2.bf16.msra.mxu0 0
        %1921 = vmatprep.subr.bf16.mxu0 0
        %1922 = vmatpush2.bf16.msra.mxu0 0
        %1923 = vmatprep.subr.bf16.mxu0 0
        %1924 = vmatpush2.bf16.msra.mxu0 0
        %1925 = vmatprep.subr.bf16.mxu0 0
        %1926 = vmatpush2.bf16.msra.mxu0 0
        %1927 = vmatprep.subr.bf16.mxu0 0
        %1928 = vmatpush2.bf16.msra.mxu0 0
        %1929 = vmatprep.subr.bf16.mxu0 0
        %1930 = vmatpush2.bf16.msra.mxu0 0
        %1931 = vmatprep.subr.bf16.mxu0 0
        %1932 = vmatpush2.bf16.msra.mxu0 0
        %1933 = vmatprep.subr.bf16.mxu0 0
        %1934 = vmatpush2.bf16.msra.mxu0 0
        %1935 = vmatprep.mubr.bf16.mxu0 0
        %1936 = vmatmul.mubr.bf16.gmra.mxu0 %v1898
        %v1937 = vpop.f32.mrf.mxu0
        %v1938 = vadd.f32 0.0, %v1937
        %v1939 = vpop.f32.mrf.mxu0
        %v1940 = vpop.f32.mrf.mxu0
        %v1941 = vpop.f32.mrf.mxu0
        %1942 = vdwg.mxu0
        %1944 = vrot.lane.b32.xlu0 %v1840, 8
        %v1945 = vpop.permute.xlu0 %1944
        %1948 = vrot.lane.b32.xlu0 %v1889, 16
        %v1949 = vpop.permute.xlu0 %1948
        %1952 = vrot.lane.b32.xlu0 %v1938, 24
        %v1953 = vpop.permute.xlu0 %1952
        %v1955 = vsel %vm784, %v1791, %v1945
        %v1956 = vsel %vm1247, %v1955, %v1949
        %v1957 = vsel %vm1249, %v1956, %v1953
        %v1958 = vpack.c.bf16 %v1957, %v1957
        %v1959 = vld [vmem:[%s12] sm:$0xf]
        %v1960 = vld [vmem:[%s12 + $0x4] sm:$0xf]
        %v1961 = vld [vmem:[%s12 + $0x8] sm:$0xf]
        %v1962 = vld [vmem:[%s12 + $0xc] sm:$0xf]
        %v1963 = vld [vmem:[%s13] sm:$0x1]
        %v1965 = vlaneseq
        %v1966 = vshrl.u32 %v1965, 7
        %v1967 = vsub.s32 0, %v1966
        %v1968 = vrot.slane %v1963, %v1967
        %v1974 = vunpack.c.l.b16 %v1959
        %v1975 = vunpack.c.l.b16 %v1960
        %v1976 = vunpack.c.l.b16 %v1961
        %v1977 = vunpack.c.l.b16 %v1962
        %v1978 = vpack.c.b16 %v1975, %v1974
        %v1979 = vpack.c.b16 %v1977, %v1976
        %v1983 = vsel %vm723, %v1958, 0
        %1985 = vmatprep.subr.bf16.mxu0 0
        %1986 = vmatpush1.bf16.msra.mxu0 0
        %1987 = vmatprep.subr.bf16.mxu0 0
        %1988 = vmatpush1.bf16.msra.mxu0 0
        %1989 = vmatprep.subr.bf16.mxu0 0
        %1990 = vmatpush1.bf16.msra.mxu0 0
        %1991 = vmatprep.subr.bf16.mxu0 0
        %1992 = vmatpush1.bf16.msra.mxu0 0
        %1993 = vmatprep.subr.bf16.mxu0 0
        %1994 = vmatpush1.bf16.msra.mxu0 0
        %1995 = vmatprep.subr.bf16.mxu0 0
        %1996 = vmatpush1.bf16.msra.mxu0 0
        %1997 = vmatprep.subr.bf16.mxu0 0
        %1998 = vmatpush1.bf16.msra.mxu0 %v1979
        %1999 = vmatprep.subr.bf16.mxu0 0
        %2000 = vmatpush1.bf16.msra.mxu0 %v1978
        %2001 = vmatprep.subr.bf16.mxu0 0
        %2002 = vmatpush2.bf16.msra.mxu0 0
        %2003 = vmatprep.subr.bf16.mxu0 0
        %2004 = vmatpush2.bf16.msra.mxu0 0
        %2005 = vmatprep.subr.bf16.mxu0 0
        %2006 = vmatpush2.bf16.msra.mxu0 0
        %2007 = vmatprep.subr.bf16.mxu0 0
        %2008 = vmatpush2.bf16.msra.mxu0 0
        %2009 = vmatprep.subr.bf16.mxu0 0
        %2010 = vmatpush2.bf16.msra.mxu0 0
        %2011 = vmatprep.subr.bf16.mxu0 0
        %2012 = vmatpush2.bf16.msra.mxu0 0
        %2013 = vmatprep.subr.bf16.mxu0 0
        %2014 = vmatpush2.bf16.msra.mxu0 0
        %2015 = vmatprep.subr.bf16.mxu0 0
        %2016 = vmatpush2.bf16.msra.mxu0 0
        %2017 = vmatprep.mubr.bf16.mxu0 0
        %2018 = vmatmul.mubr.bf16.gmra.mxu0 %v1983
        %v2019 = vpop.f32.mrf.mxu0
        %v2020 = vadd.f32 %v1968, %v2019
        %v2021 = vpop.f32.mrf.mxu0
        %v2022 = vpop.f32.mrf.mxu0
        %v2023 = vpop.f32.mrf.mxu0
        %2024 = vdwg.mxu0
        %v2025 = vadd.f32 %v1348, %v2020
        %v2026 = vld [vmem:[%s14] sm:$0x1]
        %v2027 = vld [vmem:[%s15] sm:$0x1]
        %v2028 = vsel %vm723, %v2025, 0.0
        %2029 = vadd.xlane.f32.xlu0 %v2028
        %v2030 = vpop.xlane.xlu0 %2029
        %v2031 = vmul.f32 %v2030, %v1324
        %v2032 = vsub.f32 %v2025, %v2031
        %v2033 = vmul.f32 %v2032, %v2032
        %v2034 = vsel %vm723, %v2033, 0.0
        %2035 = vadd.xlane.f32.xlu0 %v2034
        %v2036 = vpop.xlane.xlu0 %2035
        %v2037 = vmul.f32 %v2036, %v1324
        %v2038 = vadd.f32 %v2037, 1e-05
        %v2039 = vrsqrt.pop %v2038
        %v2040 = vmul.f32 %v2032, %v2039
        %v2042 = vlaneseq
        %v2043 = vshrl.u32 %v2042, 7
        %v2044 = vsub.s32 0, %v2043
        %v2045 = vrot.slane %v2026, %v2044
        %v2047 = vmul.f32 %v2040, %v2045
        %v2049 = vlaneseq
        %v2050 = vshrl.u32 %v2049, 7
        %v2051 = vsub.s32 0, %v2050
        %v2052 = vrot.slane %v2027, %v2051
        %v2054 = vadd.f32 %v2047, %v2052
        %v2055 = vpack.c.bf16 %v2054, %v2054
        %v2056 = vld [vmem:[%s16] sm:$0xf]
        %v2057 = vld [vmem:[%s16 + $0x4] sm:$0xf]
        %v2058 = vld [vmem:[%s16 + $0x8] sm:$0xf]
        %v2059 = vld [vmem:[%s16 + $0xc] sm:$0xf]
        %v2060 = vld [vmem:[%s17] sm:$0x1]
        %v2062 = vlaneseq
        %v2063 = vshrl.u32 %v2062, 7
        %v2064 = vsub.s32 0, %v2063
        %v2065 = vrot.slane %v2060, %v2064
        %v2071 = vunpack.c.l.b16 %v2056
        %v2072 = vunpack.c.l.b16 %v2057
        %v2073 = vunpack.c.l.b16 %v2058
        %v2074 = vunpack.c.l.b16 %v2059
        %v2075 = vpack.c.b16 %v2072, %v2071
        %v2076 = vpack.c.b16 %v2074, %v2073
        %v2080 = vsel %vm723, %v2055, 0
        %2082 = vmatprep.subr.bf16.mxu0 0
        %2083 = vmatpush1.bf16.msra.mxu0 0
        %2084 = vmatprep.subr.bf16.mxu0 0
        %2085 = vmatpush1.bf16.msra.mxu0 0
        %2086 = vmatprep.subr.bf16.mxu0 0
        %2087 = vmatpush1.bf16.msra.mxu0 0
        %2088 = vmatprep.subr.bf16.mxu0 0
        %2089 = vmatpush1.bf16.msra.mxu0 0
        %2090 = vmatprep.subr.bf16.mxu0 0
        %2091 = vmatpush1.bf16.msra.mxu0 0
        %2092 = vmatprep.subr.bf16.mxu0 0
        %2093 = vmatpush1.bf16.msra.mxu0 0
        %2094 = vmatprep.subr.bf16.mxu0 0
        %2095 = vmatpush1.bf16.msra.mxu0 %v2076
        %2096 = vmatprep.subr.bf16.mxu0 0
        %2097 = vmatpush1.bf16.msra.mxu0 %v2075
        %2098 = vmatprep.subr.bf16.mxu0 0
        %2099 = vmatpush2.bf16.msra.mxu0 0
        %2100 = vmatprep.subr.bf16.mxu0 0
        %2101 = vmatpush2.bf16.msra.mxu0 0
        %2102 = vmatprep.subr.bf16.mxu0 0
        %2103 = vmatpush2.bf16.msra.mxu0 0
        %2104 = vmatprep.subr.bf16.mxu0 0
        %2105 = vmatpush2.bf16.msra.mxu0 0
        %2106 = vmatprep.subr.bf16.mxu0 0
        %2107 = vmatpush2.bf16.msra.mxu0 0
        %2108 = vmatprep.subr.bf16.mxu0 0
        %2109 = vmatpush2.bf16.msra.mxu0 0
        %2110 = vmatprep.subr.bf16.mxu0 0
        %2111 = vmatpush2.bf16.msra.mxu0 0
        %2112 = vmatprep.subr.bf16.mxu0 0
        %2113 = vmatpush2.bf16.msra.mxu0 0
        %2114 = vmatprep.mubr.bf16.mxu0 0
        %2115 = vmatmul.mubr.bf16.gmra.mxu0 %v2080
        %v2116 = vpop.f32.mrf.mxu0
        %v2117 = vadd.f32 %v2065, %v2116
        %v2118 = vpop.f32.mrf.mxu0
        %v2119 = vpop.f32.mrf.mxu0
        %v2120 = vpop.f32.mrf.mxu0
        %2121 = vdwg.mxu0
        %v2122 = vmax.f32 %v2117, 0.0
        %v2123 = vpack.c.bf16 %v2122, %v2122
        %v2124 = vld [vmem:[%s18] sm:$0xf]
        %v2125 = vld [vmem:[%s18 + $0x4] sm:$0xf]
        %v2126 = vld [vmem:[%s18 + $0x8] sm:$0xf]
        %v2127 = vld [vmem:[%s18 + $0xc] sm:$0xf]
        %v2128 = vld [vmem:[%s18 + $0x10] sm:$0xf]
        %v2129 = vld [vmem:[%s18 + $0x14] sm:$0xf]
        %v2130 = vld [vmem:[%s18 + $0x18] sm:$0xf]
        %v2131 = vld [vmem:[%s18 + $0x1c] sm:$0xf]
        %v2132 = vld [vmem:[%s19] sm:$0x1]
        %v2134 = vlaneseq
        %v2135 = vshrl.u32 %v2134, 7
        %v2136 = vsub.s32 0, %v2135
        %v2137 = vrot.slane %v2132, %v2136
        %v2147 = vunpack.c.l.b16 %v2124
        %v2148 = vunpack.c.l.b16 %v2125
        %v2149 = vunpack.c.l.b16 %v2126
        %v2150 = vunpack.c.l.b16 %v2127
        %v2151 = vunpack.c.l.b16 %v2128
        %v2152 = vunpack.c.l.b16 %v2129
        %v2153 = vunpack.c.l.b16 %v2130
        %v2154 = vunpack.c.l.b16 %v2131
        %v2155 = vpack.c.b16 %v2148, %v2147
        %v2156 = vpack.c.b16 %v2150, %v2149
        %v2157 = vpack.c.b16 %v2152, %v2151
        %v2158 = vpack.c.b16 %v2154, %v2153
        %vm2163 = vcmask 523264
        %v2165 = vsel %vm2163, %v2123, 0
        %2167 = vmatprep.subr.bf16.mxu0 0
        %2168 = vmatpush1.bf16.msra.mxu0 0
        %2169 = vmatprep.subr.bf16.mxu0 0
        %2170 = vmatpush1.bf16.msra.mxu0 0
        %2171 = vmatprep.subr.bf16.mxu0 0
        %2172 = vmatpush1.bf16.msra.mxu0 0
        %2173 = vmatprep.subr.bf16.mxu0 0
        %2174 = vmatpush1.bf16.msra.mxu0 0
        %2175 = vmatprep.subr.bf16.mxu0 0
        %2176 = vmatpush1.bf16.msra.mxu0 %v2158
        %2177 = vmatprep.subr.bf16.mxu0 0
        %2178 = vmatpush1.bf16.msra.mxu0 %v2157
        %2179 = vmatprep.subr.bf16.mxu0 0
        %2180 = vmatpush1.bf16.msra.mxu0 %v2156
        %2181 = vmatprep.subr.bf16.mxu0 0
        %2182 = vmatpush1.bf16.msra.mxu0 %v2155
        %2183 = vmatprep.subr.bf16.mxu0 0
        %2184 = vmatpush2.bf16.msra.mxu0 0
        %2185 = vmatprep.subr.bf16.mxu0 0
        %2186 = vmatpush2.bf16.msra.mxu0 0
        %2187 = vmatprep.subr.bf16.mxu0 0
        %2188 = vmatpush2.bf16.msra.mxu0 0
        %2189 = vmatprep.subr.bf16.mxu0 0
        %2190 = vmatpush2.bf16.msra.mxu0 0
        %2191 = vmatprep.subr.bf16.mxu0 0
        %2192 = vmatpush2.bf16.msra.mxu0 0
        %2193 = vmatprep.subr.bf16.mxu0 0
        %2194 = vmatpush2.bf16.msra.mxu0 0
        %2195 = vmatprep.subr.bf16.mxu0 0
        %2196 = vmatpush2.bf16.msra.mxu0 0
        %2197 = vmatprep.subr.bf16.mxu0 0
        %2198 = vmatpush2.bf16.msra.mxu0 0
        %2199 = vmatprep.mubr.bf16.mxu0 0
        %2200 = vmatmul.mubr.bf16.gmra.mxu0 %v2165
        %v2201 = vpop.f32.mrf.mxu0
        %v2202 = vadd.f32 %v2137, %v2201
        %v2203 = vpop.f32.mrf.mxu0
        %v2204 = vpop.f32.mrf.mxu0
        %v2205 = vpop.f32.mrf.mxu0
        %2206 = vdwg.mxu0
        %v2207 = vadd.f32 %v2054, %v2202
        %v2208 = vld [vmem:[%s20] sm:$0x1]
        %v2209 = vld [vmem:[%s21] sm:$0x1]
        %v2210 = vsel %vm723, %v2207, 0.0
        %2211 = vadd.xlane.f32.xlu0 %v2210
        %v2212 = vpop.xlane.xlu0 %2211
        %v2213 = vmul.f32 %v2212, %v1324
        %v2214 = vsub.f32 %v2207, %v2213
        %v2215 = vmul.f32 %v2214, %v2214
        %v2216 = vsel %vm723, %v2215, 0.0
        %2217 = vadd.xlane.f32.xlu0 %v2216
        %v2218 = vpop.xlane.xlu0 %2217
        %v2219 = vmul.f32 %v2218, %v1324
        %v2220 = vadd.f32 %v2219, 1e-05
        %v2221 = vrsqrt.pop %v2220
        %v2222 = vmul.f32 %v2214, %v2221
        %v2224 = vlaneseq
        %v2225 = vshrl.u32 %v2224, 7
        %v2226 = vsub.s32 0, %v2225
        %v2227 = vrot.slane %v2208, %v2226
        %v2229 = vmul.f32 %v2222, %v2227
        %v2231 = vlaneseq
        %v2232 = vshrl.u32 %v2231, 7
        %v2233 = vsub.s32 0, %v2232
        %v2234 = vrot.slane %v2209, %v2233
        %v2236 = vadd.f32 %v2229, %v2234
        %2237 = vst.msk [vmem:[%s687] sm:$0xff] %vm723, %v2236
        %s2238 = sand.u32 %s516, 1
        %s2239 = scalar_lea.sflag [#allocation3], %s2238
        %s2240 = sand.u32 %s516, 1
        %s2241 = smul.addr %s2240, 8
        %s2242 = scalar_lea.vmem [#allocation2], %s2241
        // Predicated region
        $region109: #{transformer_forward.7} parent=107 // pred_check
          %p2243 = pneg %p526
        $region110: #{transformer_forward.7} parent=107 // pred_check_branch
          %2245 = sbr.rel (%p2243) target = $region112
        $region111: #{transformer_forward.7} parent=107 // pred_region
          %s2247 = ssub.s32 128, 128
          %2248 = vsyncadd %s2239, %s2247
          %s2249 = smul.addr %s36, 128
          %s2250 = scalar_lea.hbm %s22, %s2249
          %s2252 = sshll.u32 %s2242, 4
          %s2253 = int_to_ptr.vmem [resolvable:$true] %s2252
          %2255 = dma.vmem_to_hbm [thread:$0]  %s2253, 128, %s2250, %s2239
        $region112: #{transformer_forward.7} parent=107 // pred_fallthru
          _
      $region108: #{transformer_forward.7} parent=5 // pred_fallthru
        _
      %p2256 = scmp.le.s32.totalorder 2, %s31
      // Predicated region
      $region113: #{transformer_forward.7} parent=5 // pred_check
        %p2257 = pneg %p2256
      $region114: #{transformer_forward.7} parent=5 // pred_check_branch
        %2259 = sbr.rel (%p2257) target = $region116
      $region115: #{transformer_forward.7} parent=5 // pred_region
        %s2260 = ssub.s32 %s31, 2
        // Predicated region
        $region117: #{transformer_forward.7} parent=115 // pred_check
          %p2261 = pneg %p532
        $region118: #{transformer_forward.7} parent=115 // pred_check_branch
          %2263 = sbr.rel (%p2261) target = $region120
        $region119: #{transformer_forward.7} parent=115 // pred_region
          %s2264 = sand.u32 %s517, 1
          %s2265 = scalar_lea.sflag [#allocation3], %s2264
          %s2266 = sand.u32 %s517, 1
          %s2267 = smul.addr %s2266, 8
          %s2268 = scalar_lea.vmem [#allocation2], %s2267
          %2269 = dma.done %s2265, 128
        $region120: #{transformer_forward.7} parent=115 // pred_fallthru
          _
      $region116: #{transformer_forward.7} parent=5 // pred_fallthru
        _
    $region6: #{transformer_forward.7} parent=1 // loop_footer
      %s35 = sadd.s32 1, %s31
    $region7: #{transformer_forward.7} parent=1 // loop_footer_branch
      %30 = sbr.rel target = $region3
    $region8: #{transformer_forward.7} parent=1 // loop_exit
      _
    %2270 = vsyncpa [#allocation3], 1
    %s2271 = scalar_lea.sflag [#allocation3], 1
    %2272 = vsyncpa %s2271, 1

</llo_original>
